<compile_context>
chip_gen: v6e
topology: v6e:2x2x1
jax: 0.10.0
libtpu: 0.0.40
codegen_flags: <defaults>
</compile_context>

<pallas_src>
import functools

import jax
import jax.numpy as jnp
from jax.experimental import pallas as pl
from jax.experimental.pallas import tpu as pltpu


# ---------------------------------------------------------------------------
# Fused Pallas kernel: lstm1 -> lstm2 -> Linear(T->1) -> ReLU
# ---------------------------------------------------------------------------

def _fused_lstm_kernel(x_flat_ref, wih1_ref, whh1_ref, b1_ref,
                       wih2_ref, whh2_ref, b2_ref,
                       w_head_ref, b_head_ref,
                       out_ref,
                       gx1_ref,
                       *, seq_len, batch, hidden1, hidden2):
    T, B, H1, H2 = seq_len, batch, hidden1, hidden2

    # ---- Prologue: hoist the layer-1 input projection out of the recurrence.
    # One (T*B, D_in) @ (D_in, H1) matmul per gate, bias folded in, stored
    # gate-major so the per-step read is a cheap ref slice.
    x_flat = x_flat_ref[...]                                     # (T*B, D_in)
    for k in range(4):
        gx1_ref[k] = (
            jnp.dot(x_flat, wih1_ref[k], preferred_element_type=jnp.float32)
            + b1_ref[k]
        )

    # ---- Hoist loop-invariant weight loads / bias broadcasts out of the loop.
    whh1 = [whh1_ref[k] for k in range(4)]                       # (H1, H1)
    wih2 = [wih2_ref[k] for k in range(4)]                       # (H1, H2)
    whh2 = [whh2_ref[k] for k in range(4)]                       # (H2, H2)
    b2 = [jnp.broadcast_to(b2_ref[k], (B, H2)) for k in range(4)]

    def step(t, carry):
        h1_c, c1_c, h2_c, c2_c, acc = carry
        row = t * B
        if not isinstance(row, int):
            row = pl.multiple_of(row, B)

        # ---- layer 1: gates_x precomputed, only h @ W_hh remains per gate.
        def pre1(k):
            return gx1_ref[k, pl.ds(row, B), :] + jnp.dot(
                h1_c, whh1[k], preferred_element_type=jnp.float32)

        i1 = jax.nn.sigmoid(pre1(0))
        f1 = jax.nn.sigmoid(pre1(1))
        g1 = jnp.tanh(pre1(2))
        o1 = jax.nn.sigmoid(pre1(3))
        c1_n = f1 * c1_c + i1 * g1
        h1_n = o1 * jnp.tanh(c1_n)

        # ---- layer 2 (input is layer-1 output at this step).
        def pre2(k):
            return (jnp.dot(h1_n, wih2[k], preferred_element_type=jnp.float32)
                    + jnp.dot(h2_c, whh2[k], preferred_element_type=jnp.float32)
                    + b2[k])

        i2 = jax.nn.sigmoid(pre2(0))
        f2 = jax.nn.sigmoid(pre2(1))
        g2 = jnp.tanh(pre2(2))
        o2 = jax.nn.sigmoid(pre2(3))
        c2_n = f2 * c2_c + i2 * g2
        h2_n = o2 * jnp.tanh(c2_n)

        # ---- fused hidden2label: one multiply-add per step on resident data.
        acc = acc + w_head_ref[t] * h2_n
        return h1_n, c1_n, h2_n, c2_n, acc

    z1 = jnp.zeros((B, H1), jnp.float32)
    z2 = jnp.zeros((B, H2), jnp.float32)
    carry = (z1, z1, z2, z2, z2)

    if T <= 16:
        # Small static T: fully unrolled, every slice start is compile-time.
        for t in range(T):
            carry = step(t, carry)
    else:
        carry = jax.lax.fori_loop(0, T, step, carry)

    acc = carry[4]
    out_ref[...] = jnp.maximum(acc + b_head_ref[0], 0.0)


# ---------------------------------------------------------------------------
# Wrapper
# ---------------------------------------------------------------------------

def _gate_major(w_ih, w_hh, b_ih, b_hh):
    """PyTorch (4H, D)/(4H, H) weights -> gate-major, pre-transposed layout."""
    four_h, d_in = w_ih.shape
    h = four_h // 4
    wih_g = jnp.transpose(w_ih.reshape(4, h, d_in).astype(jnp.float32),
                          (0, 2, 1))                              # (4, D, H)
    whh_g = jnp.transpose(w_hh.reshape(4, h, h).astype(jnp.float32),
                          (0, 2, 1))                              # (4, H, H)
    b_g = (b_ih + b_hh).astype(jnp.float32).reshape(4, 1, h)      # (4, 1, H)
    return wih_g, whh_g, b_g


@jax.jit
def lstm_forward(params, x):
    """x: (T, B, D_in) -> logits (B, H2). Single fused pallas_call."""
    T, B, D_in = x.shape
    H1 = params["w_hh1"].shape[1]
    H2 = params["w_hh2"].shape[1]

    wih1_g, whh1_g, b1_g = _gate_major(params["w_ih1"], params["w_hh1"],
                                       params["b_ih1"], params["b_hh1"])
    wih2_g, whh2_g, b2_g = _gate_major(params["w_ih2"], params["w_hh2"],
                                       params["b_ih2"], params["b_hh2"])

    x_flat = x.astype(jnp.float32).reshape(T * B, D_in)
    w_head = params["w_head"].astype(jnp.float32).reshape(T)     # SMEM scalars
    b_head = params["b_head"].astype(jnp.float32).reshape(1)

    kernel = functools.partial(_fused_lstm_kernel,
                               seq_len=T, batch=B, hidden1=H1, hidden2=H2)

    vmem = pl.BlockSpec(memory_space=pltpu.MemorySpace.VMEM)
    smem = pl.BlockSpec(memory_space=pltpu.MemorySpace.SMEM)

    return pl.pallas_call(
        kernel,
        out_shape=jax.ShapeDtypeStruct((B, H2), jnp.float32),
        in_specs=[vmem,                # x_flat
                  vmem, vmem, vmem,    # lstm1: W_ih, W_hh, bias (gate-major)
                  vmem, vmem, vmem,    # lstm2: W_ih, W_hh, bias (gate-major)
                  smem, smem],         # head:  w_head (T,), b_head (1,)
        out_specs=vmem,
        scratch_shapes=[
            pltpu.VMEM((4, T * B, H1), jnp.float32),  # hoisted layer-1 gates_x
        ],
    )(x_flat, wih1_g, whh1_g, b1_g, wih2_g, whh2_g, b2_g, w_head, b_head)


# ---------------------------------------------------------------------------
# Params + pure-JAX reference (sanity check)
# ---------------------------------------------------------------------------

def init_params(key, d_in, h1, h2, seq_len):
    """Deterministic params mirroring PyTorch's uniform(-1/sqrt(H), 1/sqrt(H))."""
    ks = jax.random.split(key, 11)

    def u(k, shape, bound):
        return jax.random.uniform(k, shape, jnp.float32, -bound, bound)

    b1 = 1.0 / jnp.sqrt(h1)
    b2 = 1.0 / jnp.sqrt(h2)
    bh = 1.0 / jnp.sqrt(seq_len)
    return {
        "w_ih1": u(ks[0], (4 * h1, d_in), b1),
        "w_hh1": u(ks[1], (4 * h1, h1), b1),
        "b_ih1": u(ks[2], (4 * h1,), b1),
        "b_hh1": u(ks[3], (4 * h1,), b1),
        "w_ih2": u(ks[4], (4 * h2, h1), b2),
        "w_hh2": u(ks[5], (4 * h2, h2), b2),
        "b_ih2": u(ks[6], (4 * h2,), b2),
        "b_hh2": u(ks[7], (4 * h2,), b2),
        "w_head": u(ks[8], (seq_len, 1), bh),
        "b_head": u(ks[9], (1, 1), bh),
    }


def _ref_lstm_layer(x, w_ih, w_hh, b_ih, b_hh):
    T, B, _ = x.shape
    H = w_hh.shape[1]

    def step(carry, x_t):
        h, c = carry
        g = x_t @ w_ih.T + h @ w_hh.T + b_ih + b_hh
        i, f, gg, o = jnp.split(g, 4, axis=-1)
        i, f, o = jax.nn.sigmoid(i), jax.nn.sigmoid(f), jax.nn.sigmoid(o)
        gg = jnp.tanh(gg)
        c = f * c + i * gg
        h = o * jnp.tanh(c)
        return (h, c), h

    init = (jnp.zeros((B, H), jnp.float32), jnp.zeros((B, H), jnp.float32))
    _, outs = jax.lax.scan(step, init, x)
    return outs


def _ref_forward(params, x):
    o1 = _ref_lstm_layer(x, params["w_ih1"], params["w_hh1"],
                         params["b_ih1"], params["b_hh1"])
    o2 = _ref_lstm_layer(o1, params["w_ih2"], params["w_hh2"],
                         params["b_ih2"], params["b_hh2"])
    T, B, H2 = o2.shape
    feat = jnp.transpose(o2, (1, 2, 0)).reshape(B * H2, T)
    y = feat @ params["w_head"] + params["b_head"]
    return jnp.maximum(y.reshape(B, H2), 0.0)


# ---------------------------------------------------------------------------

if __name__ == "__main__":
    T = 8      # time steps
    B = 2      # batch
    D_IN = 16  # "seq_length" ctor arg == nn.LSTM input feature size
    H1 = 32    # hidden_size
    H2 = 32    # opt.hidden_size2

    key = jax.random.PRNGKey(0)
    k_param, k_x = jax.random.split(key)

    params = init_params(k_param, D_IN, H1, H2, T)
    x = jax.random.normal(k_x, (T, B, D_IN), jnp.float32)

    logit = lstm_forward(params, x)
    logit = jax.block_until_ready(logit)

    ref = _ref_forward(params, x)
    assert logit.shape == (B, H2), logit.shape
    assert jnp.allclose(logit, ref, atol=1e-4, rtol=1e-4), "mismatch vs reference"

    print("KERNEL_OK")
</pallas_src>

<mosaic_0001>
module attributes {stable_mosaic.version = 11 : i64} {
  func.func @_fused_lstm_kernel(%arg0: memref<16x16xf32, #tpu.memory_space<vmem>>, %arg1: memref<4x16x32xf32, #tpu.memory_space<vmem>>, %arg2: memref<4x32x32xf32, #tpu.memory_space<vmem>>, %arg3: memref<4x1x32xf32, #tpu.memory_space<vmem>>, %arg4: memref<4x32x32xf32, #tpu.memory_space<vmem>>, %arg5: memref<4x32x32xf32, #tpu.memory_space<vmem>>, %arg6: memref<4x1x32xf32, #tpu.memory_space<vmem>>, %arg7: memref<8xf32, #tpu.memory_space<smem>>, %arg8: memref<1xf32, #tpu.memory_space<smem>>, %arg9: memref<2x32xf32, #tpu.memory_space<vmem>>, %arg10: memref<4x16x32xf32, #tpu.memory_space<vmem>>) attributes {dimension_semantics = [], scalar_prefetch = 0 : i64, scratch_operands = 1 : i64, tpu.core_type = #tpu.core_type<tc>} {
    %c0 = arith.constant 0 : index
    %c0_0 = arith.constant 0 : index
    %0 = vector.load %arg0[%c0, %c0_0] : memref<16x16xf32, #tpu.memory_space<vmem>>, vector<16x16xf32>
    %c0_1 = arith.constant 0 : index
    %c0_2 = arith.constant 0 : index
    %c0_3 = arith.constant 0 : index
    %1 = vector.load %arg1[%c0_1, %c0_2, %c0_3] : memref<4x16x32xf32, #tpu.memory_space<vmem>>, vector<1x16x32xf32>
    %2 = vector.shape_cast %1 : vector<1x16x32xf32> to vector<16x32xf32>
    %cst = arith.constant dense<0.000000e+00> : vector<16x32xf32>
    %3 = tpu.matmul %0, %2, %cst {dimension_numbers = #tpu.dot_dimension_numbers<[1], [0], [0], [1], [0, 0, 1, 1], [], []>} : vector<16x16xf32>, vector<16x32xf32>, vector<16x32xf32> -> vector<16x32xf32>
    %c0_4 = arith.constant 0 : index
    %c0_5 = arith.constant 0 : index
    %c0_6 = arith.constant 0 : index
    %4 = vector.load %arg3[%c0_4, %c0_5, %c0_6] : memref<4x1x32xf32, #tpu.memory_space<vmem>>, vector<1x1x32xf32>
    %5 = vector.shape_cast %4 : vector<1x1x32xf32> to vector<1x32xf32>
    %6 = vector.broadcast %5 : vector<1x32xf32> to vector<16x32xf32>
    %7 = arith.addf %3, %6 : vector<16x32xf32>
    %c0_7 = arith.constant 0 : index
    %c0_8 = arith.constant 0 : index
    %c0_9 = arith.constant 0 : index
    %8 = vector.load %arg10[%c0_7, %c0_8, %c0_9] : memref<4x16x32xf32, #tpu.memory_space<vmem>>, vector<1x16x32xf32>
    %9 = vector.shape_cast %8 : vector<1x16x32xf32> to vector<16x32xf32>
    %10 = vector.shape_cast %7 : vector<16x32xf32> to vector<1x16x32xf32>
    tpu.vector_store %arg10[%c0_7, %c0_8, %c0_9], %10 {strides = array<i32>} : memref<4x16x32xf32, #tpu.memory_space<vmem>>, vector<1x16x32xf32>,
    %c1 = arith.constant 1 : index
    %c0_10 = arith.constant 0 : index
    %c0_11 = arith.constant 0 : index
    %11 = vector.load %arg1[%c1, %c0_10, %c0_11] : memref<4x16x32xf32, #tpu.memory_space<vmem>>, vector<1x16x32xf32>
    %12 = vector.shape_cast %11 : vector<1x16x32xf32> to vector<16x32xf32>
    %cst_12 = arith.constant dense<0.000000e+00> : vector<16x32xf32>
    %13 = tpu.matmul %0, %12, %cst_12 {dimension_numbers = #tpu.dot_dimension_numbers<[1], [0], [0], [1], [0, 0, 1, 1], [], []>} : vector<16x16xf32>, vector<16x32xf32>, vector<16x32xf32> -> vector<16x32xf32>
    %c1_13 = arith.constant 1 : index
    %c0_14 = arith.constant 0 : index
    %c0_15 = arith.constant 0 : index
    %14 = vector.load %arg3[%c1_13, %c0_14, %c0_15] : memref<4x1x32xf32, #tpu.memory_space<vmem>>, vector<1x1x32xf32>
    %15 = vector.shape_cast %14 : vector<1x1x32xf32> to vector<1x32xf32>
    %16 = vector.broadcast %15 : vector<1x32xf32> to vector<16x32xf32>
    %17 = arith.addf %13, %16 : vector<16x32xf32>
    %c1_16 = arith.constant 1 : index
    %c0_17 = arith.constant 0 : index
    %c0_18 = arith.constant 0 : index
    %18 = vector.load %arg10[%c1_16, %c0_17, %c0_18] : memref<4x16x32xf32, #tpu.memory_space<vmem>>, vector<1x16x32xf32>
    %19 = vector.shape_cast %18 : vector<1x16x32xf32> to vector<16x32xf32>
    %20 = vector.shape_cast %17 : vector<16x32xf32> to vector<1x16x32xf32>
    tpu.vector_store %arg10[%c1_16, %c0_17, %c0_18], %20 {strides = array<i32>} : memref<4x16x32xf32, #tpu.memory_space<vmem>>, vector<1x16x32xf32>,
    %c2 = arith.constant 2 : index
    %c0_19 = arith.constant 0 : index
    %c0_20 = arith.constant 0 : index
    %21 = vector.load %arg1[%c2, %c0_19, %c0_20] : memref<4x16x32xf32, #tpu.memory_space<vmem>>, vector<1x16x32xf32>
    %22 = vector.shape_cast %21 : vector<1x16x32xf32> to vector<16x32xf32>
    %cst_21 = arith.constant dense<0.000000e+00> : vector<16x32xf32>
    %23 = tpu.matmul %0, %22, %cst_21 {dimension_numbers = #tpu.dot_dimension_numbers<[1], [0], [0], [1], [0, 0, 1, 1], [], []>} : vector<16x16xf32>, vector<16x32xf32>, vector<16x32xf32> -> vector<16x32xf32>
    %c2_22 = arith.constant 2 : index
    %c0_23 = arith.constant 0 : index
    %c0_24 = arith.constant 0 : index
    %24 = vector.load %arg3[%c2_22, %c0_23, %c0_24] : memref<4x1x32xf32, #tpu.memory_space<vmem>>, vector<1x1x32xf32>
    %25 = vector.shape_cast %24 : vector<1x1x32xf32> to vector<1x32xf32>
    %26 = vector.broadcast %25 : vector<1x32xf32> to vector<16x32xf32>
    %27 = arith.addf %23, %26 : vector<16x32xf32>
    %c2_25 = arith.constant 2 : index
    %c0_26 = arith.constant 0 : index
    %c0_27 = arith.constant 0 : index
    %28 = vector.load %arg10[%c2_25, %c0_26, %c0_27] : memref<4x16x32xf32, #tpu.memory_space<vmem>>, vector<1x16x32xf32>
    %29 = vector.shape_cast %28 : vector<1x16x32xf32> to vector<16x32xf32>
    %30 = vector.shape_cast %27 : vector<16x32xf32> to vector<1x16x32xf32>
    tpu.vector_store %arg10[%c2_25, %c0_26, %c0_27], %30 {strides = array<i32>} : memref<4x16x32xf32, #tpu.memory_space<vmem>>, vector<1x16x32xf32>,
    %c3 = arith.constant 3 : index
    %c0_28 = arith.constant 0 : index
    %c0_29 = arith.constant 0 : index
    %31 = vector.load %arg1[%c3, %c0_28, %c0_29] : memref<4x16x32xf32, #tpu.memory_space<vmem>>, vector<1x16x32xf32>
    %32 = vector.shape_cast %31 : vector<1x16x32xf32> to vector<16x32xf32>
    %cst_30 = arith.constant dense<0.000000e+00> : vector<16x32xf32>
    %33 = tpu.matmul %0, %32, %cst_30 {dimension_numbers = #tpu.dot_dimension_numbers<[1], [0], [0], [1], [0, 0, 1, 1], [], []>} : vector<16x16xf32>, vector<16x32xf32>, vector<16x32xf32> -> vector<16x32xf32>
    %c3_31 = arith.constant 3 : index
    %c0_32 = arith.constant 0 : index
    %c0_33 = arith.constant 0 : index
    %34 = vector.load %arg3[%c3_31, %c0_32, %c0_33] : memref<4x1x32xf32, #tpu.memory_space<vmem>>, vector<1x1x32xf32>
    %35 = vector.shape_cast %34 : vector<1x1x32xf32> to vector<1x32xf32>
    %36 = vector.broadcast %35 : vector<1x32xf32> to vector<16x32xf32>
    %37 = arith.addf %33, %36 : vector<16x32xf32>
    %c3_34 = arith.constant 3 : index
    %c0_35 = arith.constant 0 : index
    %c0_36 = arith.constant 0 : index
    %38 = vector.load %arg10[%c3_34, %c0_35, %c0_36] : memref<4x16x32xf32, #tpu.memory_space<vmem>>, vector<1x16x32xf32>
    %39 = vector.shape_cast %38 : vector<1x16x32xf32> to vector<16x32xf32>
    %40 = vector.shape_cast %37 : vector<16x32xf32> to vector<1x16x32xf32>
    tpu.vector_store %arg10[%c3_34, %c0_35, %c0_36], %40 {strides = array<i32>} : memref<4x16x32xf32, #tpu.memory_space<vmem>>, vector<1x16x32xf32>,
    %c0_37 = arith.constant 0 : index
    %c0_38 = arith.constant 0 : index
    %c0_39 = arith.constant 0 : index
    %41 = vector.load %arg2[%c0_37, %c0_38, %c0_39] : memref<4x32x32xf32, #tpu.memory_space<vmem>>, vector<1x32x32xf32>
    %42 = vector.shape_cast %41 : vector<1x32x32xf32> to vector<32x32xf32>
    %c1_40 = arith.constant 1 : index
    %c0_41 = arith.constant 0 : index
    %c0_42 = arith.constant 0 : index
    %43 = vector.load %arg2[%c1_40, %c0_41, %c0_42] : memref<4x32x32xf32, #tpu.memory_space<vmem>>, vector<1x32x32xf32>
    %44 = vector.shape_cast %43 : vector<1x32x32xf32> to vector<32x32xf32>
    %c2_43 = arith.constant 2 : index
    %c0_44 = arith.constant 0 : index
    %c0_45 = arith.constant 0 : index
    %45 = vector.load %arg2[%c2_43, %c0_44, %c0_45] : memref<4x32x32xf32, #tpu.memory_space<vmem>>, vector<1x32x32xf32>
    %46 = vector.shape_cast %45 : vector<1x32x32xf32> to vector<32x32xf32>
    %c3_46 = arith.constant 3 : index
    %c0_47 = arith.constant 0 : index
    %c0_48 = arith.constant 0 : index
    %47 = vector.load %arg2[%c3_46, %c0_47, %c0_48] : memref<4x32x32xf32, #tpu.memory_space<vmem>>, vector<1x32x32xf32>
    %48 = vector.shape_cast %47 : vector<1x32x32xf32> to vector<32x32xf32>
    %c0_49 = arith.constant 0 : index
    %c0_50 = arith.constant 0 : index
    %c0_51 = arith.constant 0 : index
    %49 = vector.load %arg4[%c0_49, %c0_50, %c0_51] : memref<4x32x32xf32, #tpu.memory_space<vmem>>, vector<1x32x32xf32>
    %50 = vector.shape_cast %49 : vector<1x32x32xf32> to vector<32x32xf32>
    %c1_52 = arith.constant 1 : index
    %c0_53 = arith.constant 0 : index
    %c0_54 = arith.constant 0 : index
    %51 = vector.load %arg4[%c1_52, %c0_53, %c0_54] : memref<4x32x32xf32, #tpu.memory_space<vmem>>, vector<1x32x32xf32>
    %52 = vector.shape_cast %51 : vector<1x32x32xf32> to vector<32x32xf32>
    %c2_55 = arith.constant 2 : index
    %c0_56 = arith.constant 0 : index
    %c0_57 = arith.constant 0 : index
    %53 = vector.load %arg4[%c2_55, %c0_56, %c0_57] : memref<4x32x32xf32, #tpu.memory_space<vmem>>, vector<1x32x32xf32>
    %54 = vector.shape_cast %53 : vector<1x32x32xf32> to vector<32x32xf32>
    %c3_58 = arith.constant 3 : index
    %c0_59 = arith.constant 0 : index
    %c0_60 = arith.constant 0 : index
    %55 = vector.load %arg4[%c3_58, %c0_59, %c0_60] : memref<4x32x32xf32, #tpu.memory_space<vmem>>, vector<1x32x32xf32>
    %56 = vector.shape_cast %55 : vector<1x32x32xf32> to vector<32x32xf32>
    %c0_61 = arith.constant 0 : index
    %c0_62 = arith.constant 0 : index
    %c0_63 = arith.constant 0 : index
    %57 = vector.load %arg5[%c0_61, %c0_62, %c0_63] : memref<4x32x32xf32, #tpu.memory_space<vmem>>, vector<1x32x32xf32>
    %58 = vector.shape_cast %57 : vector<1x32x32xf32> to vector<32x32xf32>
    %c1_64 = arith.constant 1 : index
    %c0_65 = arith.constant 0 : index
    %c0_66 = arith.constant 0 : index
    %59 = vector.load %arg5[%c1_64, %c0_65, %c0_66] : memref<4x32x32xf32, #tpu.memory_space<vmem>>, vector<1x32x32xf32>
    %60 = vector.shape_cast %59 : vector<1x32x32xf32> to vector<32x32xf32>
    %c2_67 = arith.constant 2 : index
    %c0_68 = arith.constant 0 : index
    %c0_69 = arith.constant 0 : index
    %61 = vector.load %arg5[%c2_67, %c0_68, %c0_69] : memref<4x32x32xf32, #tpu.memory_space<vmem>>, vector<1x32x32xf32>
    %62 = vector.shape_cast %61 : vector<1x32x32xf32> to vector<32x32xf32>
    %c3_70 = arith.constant 3 : index
    %c0_71 = arith.constant 0 : index
    %c0_72 = arith.constant 0 : index
    %63 = vector.load %arg5[%c3_70, %c0_71, %c0_72] : memref<4x32x32xf32, #tpu.memory_space<vmem>>, vector<1x32x32xf32>
    %64 = vector.shape_cast %63 : vector<1x32x32xf32> to vector<32x32xf32>
    %c0_73 = arith.constant 0 : index
    %c0_74 = arith.constant 0 : index
    %c0_75 = arith.constant 0 : index
    %65 = vector.load %arg6[%c0_73, %c0_74, %c0_75] : memref<4x1x32xf32, #tpu.memory_space<vmem>>, vector<1x1x32xf32>
    %66 = vector.shape_cast %65 : vector<1x1x32xf32> to vector<1x32xf32>
    %67 = vector.shape_cast %66 : vector<1x32xf32> to vector<1x32xf32>
    %68 = vector.broadcast %67 : vector<1x32xf32> to vector<2x32xf32>
    %c1_76 = arith.constant 1 : index
    %c0_77 = arith.constant 0 : index
    %c0_78 = arith.constant 0 : index
    %69 = vector.load %arg6[%c1_76, %c0_77, %c0_78] : memref<4x1x32xf32, #tpu.memory_space<vmem>>, vector<1x1x32xf32>
    %70 = vector.shape_cast %69 : vector<1x1x32xf32> to vector<1x32xf32>
    %71 = vector.shape_cast %70 : vector<1x32xf32> to vector<1x32xf32>
    %72 = vector.broadcast %71 : vector<1x32xf32> to vector<2x32xf32>
    %c2_79 = arith.constant 2 : index
    %c0_80 = arith.constant 0 : index
    %c0_81 = arith.constant 0 : index
    %73 = vector.load %arg6[%c2_79, %c0_80, %c0_81] : memref<4x1x32xf32, #tpu.memory_space<vmem>>, vector<1x1x32xf32>
    %74 = vector.shape_cast %73 : vector<1x1x32xf32> to vector<1x32xf32>
    %75 = vector.shape_cast %74 : vector<1x32xf32> to vector<1x32xf32>
    %76 = vector.broadcast %75 : vector<1x32xf32> to vector<2x32xf32>
    %c3_82 = arith.constant 3 : index
    %c0_83 = arith.constant 0 : index
    %c0_84 = arith.constant 0 : index
    %77 = vector.load %arg6[%c3_82, %c0_83, %c0_84] : memref<4x1x32xf32, #tpu.memory_space<vmem>>, vector<1x1x32xf32>
    %78 = vector.shape_cast %77 : vector<1x1x32xf32> to vector<1x32xf32>
    %79 = vector.shape_cast %78 : vector<1x32xf32> to vector<1x32xf32>
    %80 = vector.broadcast %79 : vector<1x32xf32> to vector<2x32xf32>
    %cst_85 = arith.constant 0.000000e+00 : f32
    %81 = vector.broadcast %cst_85 : f32 to vector<2x32xf32>
    %cst_86 = arith.constant 0.000000e+00 : f32
    %82 = vector.broadcast %cst_86 : f32 to vector<2x32xf32>
    %c0_87 = arith.constant 0 : index
    %c0_88 = arith.constant 0 : index
    %c0_89 = arith.constant 0 : index
    %83 = vector.load %arg10[%c0_87, %c0_88, %c0_89] : memref<4x16x32xf32, #tpu.memory_space<vmem>>, vector<1x2x32xf32>
    %84 = vector.shape_cast %83 : vector<1x2x32xf32> to vector<2x32xf32>
    %cst_90 = arith.constant dense<0.000000e+00> : vector<2x32xf32>
    %85 = tpu.matmul %81, %42, %cst_90 {dimension_numbers = #tpu.dot_dimension_numbers<[1], [0], [0], [1], [0, 0, 1, 1], [], []>} : vector<2x32xf32>, vector<32x32xf32>, vector<2x32xf32> -> vector<2x32xf32>
    %86 = arith.addf %84, %85 : vector<2x32xf32>
    %87 = arith.negf %86 : vector<2x32xf32>
    %88 = math.exp %87 : vector<2x32xf32>
    %cst_91 = arith.constant 1.000000e+00 : f32
    %89 = vector.broadcast %cst_91 : f32 to vector<2x32xf32>
    %90 = arith.addf %89, %88 : vector<2x32xf32>
    %91 = arith.divf %89, %90 : vector<2x32xf32>
    %c1_92 = arith.constant 1 : index
    %c0_93 = arith.constant 0 : index
    %c0_94 = arith.constant 0 : index
    %92 = vector.load %arg10[%c1_92, %c0_93, %c0_94] : memref<4x16x32xf32, #tpu.memory_space<vmem>>, vector<1x2x32xf32>
    %93 = vector.shape_cast %92 : vector<1x2x32xf32> to vector<2x32xf32>
    %cst_95 = arith.constant dense<0.000000e+00> : vector<2x32xf32>
    %94 = tpu.matmul %81, %44, %cst_95 {dimension_numbers = #tpu.dot_dimension_numbers<[1], [0], [0], [1], [0, 0, 1, 1], [], []>} : vector<2x32xf32>, vector<32x32xf32>, vector<2x32xf32> -> vector<2x32xf32>
    %95 = arith.addf %93, %94 : vector<2x32xf32>
    %96 = arith.negf %95 : vector<2x32xf32>
    %97 = math.exp %96 : vector<2x32xf32>
    %cst_96 = arith.constant 1.000000e+00 : f32
    %98 = vector.broadcast %cst_96 : f32 to vector<2x32xf32>
    %99 = arith.addf %98, %97 : vector<2x32xf32>
    %100 = arith.divf %98, %99 : vector<2x32xf32>
    %c2_97 = arith.constant 2 : index
    %c0_98 = arith.constant 0 : index
    %c0_99 = arith.constant 0 : index
    %101 = vector.load %arg10[%c2_97, %c0_98, %c0_99] : memref<4x16x32xf32, #tpu.memory_space<vmem>>, vector<1x2x32xf32>
    %102 = vector.shape_cast %101 : vector<1x2x32xf32> to vector<2x32xf32>
    %cst_100 = arith.constant dense<0.000000e+00> : vector<2x32xf32>
    %103 = tpu.matmul %81, %46, %cst_100 {dimension_numbers = #tpu.dot_dimension_numbers<[1], [0], [0], [1], [0, 0, 1, 1], [], []>} : vector<2x32xf32>, vector<32x32xf32>, vector<2x32xf32> -> vector<2x32xf32>
    %104 = arith.addf %102, %103 : vector<2x32xf32>
    %105 = math.tanh %104 : vector<2x32xf32>
    %c3_101 = arith.constant 3 : index
    %c0_102 = arith.constant 0 : index
    %c0_103 = arith.constant 0 : index
    %106 = vector.load %arg10[%c3_101, %c0_102, %c0_103] : memref<4x16x32xf32, #tpu.memory_space<vmem>>, vector<1x2x32xf32>
    %107 = vector.shape_cast %106 : vector<1x2x32xf32> to vector<2x32xf32>
    %cst_104 = arith.constant dense<0.000000e+00> : vector<2x32xf32>
    %108 = tpu.matmul %81, %48, %cst_104 {dimension_numbers = #tpu.dot_dimension_numbers<[1], [0], [0], [1], [0, 0, 1, 1], [], []>} : vector<2x32xf32>, vector<32x32xf32>, vector<2x32xf32> -> vector<2x32xf32>
    %109 = arith.addf %107, %108 : vector<2x32xf32>
    %110 = arith.negf %109 : vector<2x32xf32>
    %111 = math.exp %110 : vector<2x32xf32>
    %cst_105 = arith.constant 1.000000e+00 : f32
    %112 = vector.broadcast %cst_105 : f32 to vector<2x32xf32>
    %113 = arith.addf %112, %111 : vector<2x32xf32>
    %114 = arith.divf %112, %113 : vector<2x32xf32>
    %115 = arith.mulf %100, %81 : vector<2x32xf32>
    %116 = arith.mulf %91, %105 : vector<2x32xf32>
    %117 = arith.addf %115, %116 : vector<2x32xf32>
    %118 = math.tanh %117 : vector<2x32xf32>
    %119 = arith.mulf %114, %118 : vector<2x32xf32>
    %cst_106 = arith.constant dense<0.000000e+00> : vector<2x32xf32>
    %120 = tpu.matmul %119, %50, %cst_106 {dimension_numbers = #tpu.dot_dimension_numbers<[1], [0], [0], [1], [0, 0, 1, 1], [], []>} : vector<2x32xf32>, vector<32x32xf32>, vector<2x32xf32> -> vector<2x32xf32>
    %cst_107 = arith.constant dense<0.000000e+00> : vector<2x32xf32>
    %121 = tpu.matmul %82, %58, %cst_107 {dimension_numbers = #tpu.dot_dimension_numbers<[1], [0], [0], [1], [0, 0, 1, 1], [], []>} : vector<2x32xf32>, vector<32x32xf32>, vector<2x32xf32> -> vector<2x32xf32>
    %122 = arith.addf %120, %121 : vector<2x32xf32>
    %123 = arith.addf %122, %68 : vector<2x32xf32>
    %124 = arith.negf %123 : vector<2x32xf32>
    %125 = math.exp %124 : vector<2x32xf32>
    %cst_108 = arith.constant 1.000000e+00 : f32
    %126 = vector.broadcast %cst_108 : f32 to vector<2x32xf32>
    %127 = arith.addf %126, %125 : vector<2x32xf32>
    %128 = arith.divf %126, %127 : vector<2x32xf32>
    %cst_109 = arith.constant dense<0.000000e+00> : vector<2x32xf32>
    %129 = tpu.matmul %119, %52, %cst_109 {dimension_numbers = #tpu.dot_dimension_numbers<[1], [0], [0], [1], [0, 0, 1, 1], [], []>} : vector<2x32xf32>, vector<32x32xf32>, vector<2x32xf32> -> vector<2x32xf32>
    %cst_110 = arith.constant dense<0.000000e+00> : vector<2x32xf32>
    %130 = tpu.matmul %82, %60, %cst_110 {dimension_numbers = #tpu.dot_dimension_numbers<[1], [0], [0], [1], [0, 0, 1, 1], [], []>} : vector<2x32xf32>, vector<32x32xf32>, vector<2x32xf32> -> vector<2x32xf32>
    %131 = arith.addf %129, %130 : vector<2x32xf32>
    %132 = arith.addf %131, %72 : vector<2x32xf32>
    %133 = arith.negf %132 : vector<2x32xf32>
    %134 = math.exp %133 : vector<2x32xf32>
    %cst_111 = arith.constant 1.000000e+00 : f32
    %135 = vector.broadcast %cst_111 : f32 to vector<2x32xf32>
    %136 = arith.addf %135, %134 : vector<2x32xf32>
    %137 = arith.divf %135, %136 : vector<2x32xf32>
    %cst_112 = arith.constant dense<0.000000e+00> : vector<2x32xf32>
    %138 = tpu.matmul %119, %54, %cst_112 {dimension_numbers = #tpu.dot_dimension_numbers<[1], [0], [0], [1], [0, 0, 1, 1], [], []>} : vector<2x32xf32>, vector<32x32xf32>, vector<2x32xf32> -> vector<2x32xf32>
    %cst_113 = arith.constant dense<0.000000e+00> : vector<2x32xf32>
    %139 = tpu.matmul %82, %62, %cst_113 {dimension_numbers = #tpu.dot_dimension_numbers<[1], [0], [0], [1], [0, 0, 1, 1], [], []>} : vector<2x32xf32>, vector<32x32xf32>, vector<2x32xf32> -> vector<2x32xf32>
    %140 = arith.addf %138, %139 : vector<2x32xf32>
    %141 = arith.addf %140, %76 : vector<2x32xf32>
    %142 = math.tanh %141 : vector<2x32xf32>
    %cst_114 = arith.constant dense<0.000000e+00> : vector<2x32xf32>
    %143 = tpu.matmul %119, %56, %cst_114 {dimension_numbers = #tpu.dot_dimension_numbers<[1], [0], [0], [1], [0, 0, 1, 1], [], []>} : vector<2x32xf32>, vector<32x32xf32>, vector<2x32xf32> -> vector<2x32xf32>
    %cst_115 = arith.constant dense<0.000000e+00> : vector<2x32xf32>
    %144 = tpu.matmul %82, %64, %cst_115 {dimension_numbers = #tpu.dot_dimension_numbers<[1], [0], [0], [1], [0, 0, 1, 1], [], []>} : vector<2x32xf32>, vector<32x32xf32>, vector<2x32xf32> -> vector<2x32xf32>
    %145 = arith.addf %143, %144 : vector<2x32xf32>
    %146 = arith.addf %145, %80 : vector<2x32xf32>
    %147 = arith.negf %146 : vector<2x32xf32>
    %148 = math.exp %147 : vector<2x32xf32>
    %cst_116 = arith.constant 1.000000e+00 : f32
    %149 = vector.broadcast %cst_116 : f32 to vector<2x32xf32>
    %150 = arith.addf %149, %148 : vector<2x32xf32>
    %151 = arith.divf %149, %150 : vector<2x32xf32>
    %152 = arith.mulf %137, %82 : vector<2x32xf32>
    %153 = arith.mulf %128, %142 : vector<2x32xf32>
    %154 = arith.addf %152, %153 : vector<2x32xf32>
    %155 = math.tanh %154 : vector<2x32xf32>
    %156 = arith.mulf %151, %155 : vector<2x32xf32>
    %c0_117 = arith.constant 0 : index
    %157 = memref.load %arg7[%c0_117] : memref<8xf32, #tpu.memory_space<smem>>
    %158 = vector.broadcast %157 : f32 to vector<2x32xf32>
    %159 = arith.mulf %158, %156 : vector<2x32xf32>
    %160 = arith.addf %82, %159 : vector<2x32xf32>
    %c0_118 = arith.constant 0 : index
    %c2_119 = arith.constant 2 : index
    %c0_120 = arith.constant 0 : index
    %161 = vector.load %arg10[%c0_118, %c2_119, %c0_120] : memref<4x16x32xf32, #tpu.memory_space<vmem>>, vector<1x2x32xf32>
    %162 = vector.shape_cast %161 : vector<1x2x32xf32> to vector<2x32xf32>
    %cst_121 = arith.constant dense<0.000000e+00> : vector<2x32xf32>
    %163 = tpu.matmul %119, %42, %cst_121 {dimension_numbers = #tpu.dot_dimension_numbers<[1], [0], [0], [1], [0, 0, 1, 1], [], []>} : vector<2x32xf32>, vector<32x32xf32>, vector<2x32xf32> -> vector<2x32xf32>
    %164 = arith.addf %162, %163 : vector<2x32xf32>
    %165 = arith.negf %164 : vector<2x32xf32>
    %166 = math.exp %165 : vector<2x32xf32>
    %cst_122 = arith.constant 1.000000e+00 : f32
    %167 = vector.broadcast %cst_122 : f32 to vector<2x32xf32>
    %168 = arith.addf %167, %166 : vector<2x32xf32>
    %169 = arith.divf %167, %168 : vector<2x32xf32>
    %c1_123 = arith.constant 1 : index
    %c2_124 = arith.constant 2 : index
    %c0_125 = arith.constant 0 : index
    %170 = vector.load %arg10[%c1_123, %c2_124, %c0_125] : memref<4x16x32xf32, #tpu.memory_space<vmem>>, vector<1x2x32xf32>
    %171 = vector.shape_cast %170 : vector<1x2x32xf32> to vector<2x32xf32>
    %cst_126 = arith.constant dense<0.000000e+00> : vector<2x32xf32>
    %172 = tpu.matmul %119, %44, %cst_126 {dimension_numbers = #tpu.dot_dimension_numbers<[1], [0], [0], [1], [0, 0, 1, 1], [], []>} : vector<2x32xf32>, vector<32x32xf32>, vector<2x32xf32> -> vector<2x32xf32>
    %173 = arith.addf %171, %172 : vector<2x32xf32>
    %174 = arith.negf %173 : vector<2x32xf32>
    %175 = math.exp %174 : vector<2x32xf32>
    %cst_127 = arith.constant 1.000000e+00 : f32
    %176 = vector.broadcast %cst_127 : f32 to vector<2x32xf32>
    %177 = arith.addf %176, %175 : vector<2x32xf32>
    %178 = arith.divf %176, %177 : vector<2x32xf32>
    %c2_128 = arith.constant 2 : index
    %c2_129 = arith.constant 2 : index
    %c0_130 = arith.constant 0 : index
    %179 = vector.load %arg10[%c2_128, %c2_129, %c0_130] : memref<4x16x32xf32, #tpu.memory_space<vmem>>, vector<1x2x32xf32>
    %180 = vector.shape_cast %179 : vector<1x2x32xf32> to vector<2x32xf32>
    %cst_131 = arith.constant dense<0.000000e+00> : vector<2x32xf32>
    %181 = tpu.matmul %119, %46, %cst_131 {dimension_numbers = #tpu.dot_dimension_numbers<[1], [0], [0], [1], [0, 0, 1, 1], [], []>} : vector<2x32xf32>, vector<32x32xf32>, vector<2x32xf32> -> vector<2x32xf32>
    %182 = arith.addf %180, %181 : vector<2x32xf32>
    %183 = math.tanh %182 : vector<2x32xf32>
    %c3_132 = arith.constant 3 : index
    %c2_133 = arith.constant 2 : index
    %c0_134 = arith.constant 0 : index
    %184 = vector.load %arg10[%c3_132, %c2_133, %c0_134] : memref<4x16x32xf32, #tpu.memory_space<vmem>>, vector<1x2x32xf32>
    %185 = vector.shape_cast %184 : vector<1x2x32xf32> to vector<2x32xf32>
    %cst_135 = arith.constant dense<0.000000e+00> : vector<2x32xf32>
    %186 = tpu.matmul %119, %48, %cst_135 {dimension_numbers = #tpu.dot_dimension_numbers<[1], [0], [0], [1], [0, 0, 1, 1], [], []>} : vector<2x32xf32>, vector<32x32xf32>, vector<2x32xf32> -> vector<2x32xf32>
    %187 = arith.addf %185, %186 : vector<2x32xf32>
    %188 = arith.negf %187 : vector<2x32xf32>
    %189 = math.exp %188 : vector<2x32xf32>
    %cst_136 = arith.constant 1.000000e+00 : f32
    %190 = vector.broadcast %cst_136 : f32 to vector<2x32xf32>
    %191 = arith.addf %190, %189 : vector<2x32xf32>
    %192 = arith.divf %190, %191 : vector<2x32xf32>
    %193 = arith.mulf %178, %117 : vector<2x32xf32>
    %194 = arith.mulf %169, %183 : vector<2x32xf32>
    %195 = arith.addf %193, %194 : vector<2x32xf32>
    %196 = math.tanh %195 : vector<2x32xf32>
    %197 = arith.mulf %192, %196 : vector<2x32xf32>
    %cst_137 = arith.constant dense<0.000000e+00> : vector<2x32xf32>
    %198 = tpu.matmul %197, %50, %cst_137 {dimension_numbers = #tpu.dot_dimension_numbers<[1], [0], [0], [1], [0, 0, 1, 1], [], []>} : vector<2x32xf32>, vector<32x32xf32>, vector<2x32xf32> -> vector<2x32xf32>
    %cst_138 = arith.constant dense<0.000000e+00> : vector<2x32xf32>
    %199 = tpu.matmul %156, %58, %cst_138 {dimension_numbers = #tpu.dot_dimension_numbers<[1], [0], [0], [1], [0, 0, 1, 1], [], []>} : vector<2x32xf32>, vector<32x32xf32>, vector<2x32xf32> -> vector<2x32xf32>
    %200 = arith.addf %198, %199 : vector<2x32xf32>
    %201 = arith.addf %200, %68 : vector<2x32xf32>
    %202 = arith.negf %201 : vector<2x32xf32>
    %203 = math.exp %202 : vector<2x32xf32>
    %cst_139 = arith.constant 1.000000e+00 : f32
    %204 = vector.broadcast %cst_139 : f32 to vector<2x32xf32>
    %205 = arith.addf %204, %203 : vector<2x32xf32>
    %206 = arith.divf %204, %205 : vector<2x32xf32>
    %cst_140 = arith.constant dense<0.000000e+00> : vector<2x32xf32>
    %207 = tpu.matmul %197, %52, %cst_140 {dimension_numbers = #tpu.dot_dimension_numbers<[1], [0], [0], [1], [0, 0, 1, 1], [], []>} : vector<2x32xf32>, vector<32x32xf32>, vector<2x32xf32> -> vector<2x32xf32>
    %cst_141 = arith.constant dense<0.000000e+00> : vector<2x32xf32>
    %208 = tpu.matmul %156, %60, %cst_141 {dimension_numbers = #tpu.dot_dimension_numbers<[1], [0], [0], [1], [0, 0, 1, 1], [], []>} : vector<2x32xf32>, vector<32x32xf32>, vector<2x32xf32> -> vector<2x32xf32>
    %209 = arith.addf %207, %208 : vector<2x32xf32>
    %210 = arith.addf %209, %72 : vector<2x32xf32>
    %211 = arith.negf %210 : vector<2x32xf32>
    %212 = math.exp %211 : vector<2x32xf32>
    %cst_142 = arith.constant 1.000000e+00 : f32
    %213 = vector.broadcast %cst_142 : f32 to vector<2x32xf32>
    %214 = arith.addf %213, %212 : vector<2x32xf32>
    %215 = arith.divf %213, %214 : vector<2x32xf32>
    %cst_143 = arith.constant dense<0.000000e+00> : vector<2x32xf32>
    %216 = tpu.matmul %197, %54, %cst_143 {dimension_numbers = #tpu.dot_dimension_numbers<[1], [0], [0], [1], [0, 0, 1, 1], [], []>} : vector<2x32xf32>, vector<32x32xf32>, vector<2x32xf32> -> vector<2x32xf32>
    %cst_144 = arith.constant dense<0.000000e+00> : vector<2x32xf32>
    %217 = tpu.matmul %156, %62, %cst_144 {dimension_numbers = #tpu.dot_dimension_numbers<[1], [0], [0], [1], [0, 0, 1, 1], [], []>} : vector<2x32xf32>, vector<32x32xf32>, vector<2x32xf32> -> vector<2x32xf32>
    %218 = arith.addf %216, %217 : vector<2x32xf32>
    %219 = arith.addf %218, %76 : vector<2x32xf32>
    %220 = math.tanh %219 : vector<2x32xf32>
    %cst_145 = arith.constant dense<0.000000e+00> : vector<2x32xf32>
    %221 = tpu.matmul %197, %56, %cst_145 {dimension_numbers = #tpu.dot_dimension_numbers<[1], [0], [0], [1], [0, 0, 1, 1], [], []>} : vector<2x32xf32>, vector<32x32xf32>, vector<2x32xf32> -> vector<2x32xf32>
    %cst_146 = arith.constant dense<0.000000e+00> : vector<2x32xf32>
    %222 = tpu.matmul %156, %64, %cst_146 {dimension_numbers = #tpu.dot_dimension_numbers<[1], [0], [0], [1], [0, 0, 1, 1], [], []>} : vector<2x32xf32>, vector<32x32xf32>, vector<2x32xf32> -> vector<2x32xf32>
    %223 = arith.addf %221, %222 : vector<2x32xf32>
    %224 = arith.addf %223, %80 : vector<2x32xf32>
    %225 = arith.negf %224 : vector<2x32xf32>
    %226 = math.exp %225 : vector<2x32xf32>
    %cst_147 = arith.constant 1.000000e+00 : f32
    %227 = vector.broadcast %cst_147 : f32 to vector<2x32xf32>
    %228 = arith.addf %227, %226 : vector<2x32xf32>
    %229 = arith.divf %227, %228 : vector<2x32xf32>
    %230 = arith.mulf %215, %154 : vector<2x32xf32>
    %231 = arith.mulf %206, %220 : vector<2x32xf32>
    %232 = arith.addf %230, %231 : vector<2x32xf32>
    %233 = math.tanh %232 : vector<2x32xf32>
    %234 = arith.mulf %229, %233 : vector<2x32xf32>
    %c1_148 = arith.constant 1 : index
    %235 = memref.load %arg7[%c1_148] : memref<8xf32, #tpu.memory_space<smem>>
    %236 = vector.broadcast %235 : f32 to vector<2x32xf32>
    %237 = arith.mulf %236, %234 : vector<2x32xf32>
    %238 = arith.addf %160, %237 : vector<2x32xf32>
    %c0_149 = arith.constant 0 : index
    %c4 = arith.constant 4 : index
    %c0_150 = arith.constant 0 : index
    %239 = vector.load %arg10[%c0_149, %c4, %c0_150] : memref<4x16x32xf32, #tpu.memory_space<vmem>>, vector<1x2x32xf32>
    %240 = vector.shape_cast %239 : vector<1x2x32xf32> to vector<2x32xf32>
    %cst_151 = arith.constant dense<0.000000e+00> : vector<2x32xf32>
    %241 = tpu.matmul %197, %42, %cst_151 {dimension_numbers = #tpu.dot_dimension_numbers<[1], [0], [0], [1], [0, 0, 1, 1], [], []>} : vector<2x32xf32>, vector<32x32xf32>, vector<2x32xf32> -> vector<2x32xf32>
    %242 = arith.addf %240, %241 : vector<2x32xf32>
    %243 = arith.negf %242 : vector<2x32xf32>
    %244 = math.exp %243 : vector<2x32xf32>
    %cst_152 = arith.constant 1.000000e+00 : f32
    %245 = vector.broadcast %cst_152 : f32 to vector<2x32xf32>
    %246 = arith.addf %245, %244 : vector<2x32xf32>
    %247 = arith.divf %245, %246 : vector<2x32xf32>
    %c1_153 = arith.constant 1 : index
    %c4_154 = arith.constant 4 : index
    %c0_155 = arith.constant 0 : index
    %248 = vector.load %arg10[%c1_153, %c4_154, %c0_155] : memref<4x16x32xf32, #tpu.memory_space<vmem>>, vector<1x2x32xf32>
    %249 = vector.shape_cast %248 : vector<1x2x32xf32> to vector<2x32xf32>
    %cst_156 = arith.constant dense<0.000000e+00> : vector<2x32xf32>
    %250 = tpu.matmul %197, %44, %cst_156 {dimension_numbers = #tpu.dot_dimension_numbers<[1], [0], [0], [1], [0, 0, 1, 1], [], []>} : vector<2x32xf32>, vector<32x32xf32>, vector<2x32xf32> -> vector<2x32xf32>
    %251 = arith.addf %249, %250 : vector<2x32xf32>
    %252 = arith.negf %251 : vector<2x32xf32>
    %253 = math.exp %252 : vector<2x32xf32>
    %cst_157 = arith.constant 1.000000e+00 : f32
    %254 = vector.broadcast %cst_157 : f32 to vector<2x32xf32>
    %255 = arith.addf %254, %253 : vector<2x32xf32>
    %256 = arith.divf %254, %255 : vector<2x32xf32>
    %c2_158 = arith.constant 2 : index
    %c4_159 = arith.constant 4 : index
    %c0_160 = arith.constant 0 : index
    %257 = vector.load %arg10[%c2_158, %c4_159, %c0_160] : memref<4x16x32xf32, #tpu.memory_space<vmem>>, vector<1x2x32xf32>
    %258 = vector.shape_cast %257 : vector<1x2x32xf32> to vector<2x32xf32>
    %cst_161 = arith.constant dense<0.000000e+00> : vector<2x32xf32>
    %259 = tpu.matmul %197, %46, %cst_161 {dimension_numbers = #tpu.dot_dimension_numbers<[1], [0], [0], [1], [0, 0, 1, 1], [], []>} : vector<2x32xf32>, vector<32x32xf32>, vector<2x32xf32> -> vector<2x32xf32>
    %260 = arith.addf %258, %259 : vector<2x32xf32>
    %261 = math.tanh %260 : vector<2x32xf32>
    %c3_162 = arith.constant 3 : index
    %c4_163 = arith.constant 4 : index
    %c0_164 = arith.constant 0 : index
    %262 = vector.load %arg10[%c3_162, %c4_163, %c0_164] : memref<4x16x32xf32, #tpu.memory_space<vmem>>, vector<1x2x32xf32>
    %263 = vector.shape_cast %262 : vector<1x2x32xf32> to vector<2x32xf32>
    %cst_165 = arith.constant dense<0.000000e+00> : vector<2x32xf32>
    %264 = tpu.matmul %197, %48, %cst_165 {dimension_numbers = #tpu.dot_dimension_numbers<[1], [0], [0], [1], [0, 0, 1, 1], [], []>} : vector<2x32xf32>, vector<32x32xf32>, vector<2x32xf32> -> vector<2x32xf32>
    %265 = arith.addf %263, %264 : vector<2x32xf32>
    %266 = arith.negf %265 : vector<2x32xf32>
    %267 = math.exp %266 : vector<2x32xf32>
    %cst_166 = arith.constant 1.000000e+00 : f32
    %268 = vector.broadcast %cst_166 : f32 to vector<2x32xf32>
    %269 = arith.addf %268, %267 : vector<2x32xf32>
    %270 = arith.divf %268, %269 : vector<2x32xf32>
    %271 = arith.mulf %256, %195 : vector<2x32xf32>
    %272 = arith.mulf %247, %261 : vector<2x32xf32>
    %273 = arith.addf %271, %272 : vector<2x32xf32>
    %274 = math.tanh %273 : vector<2x32xf32>
    %275 = arith.mulf %270, %274 : vector<2x32xf32>
    %cst_167 = arith.constant dense<0.000000e+00> : vector<2x32xf32>
    %276 = tpu.matmul %275, %50, %cst_167 {dimension_numbers = #tpu.dot_dimension_numbers<[1], [0], [0], [1], [0, 0, 1, 1], [], []>} : vector<2x32xf32>, vector<32x32xf32>, vector<2x32xf32> -> vector<2x32xf32>
    %cst_168 = arith.constant dense<0.000000e+00> : vector<2x32xf32>
    %277 = tpu.matmul %234, %58, %cst_168 {dimension_numbers = #tpu.dot_dimension_numbers<[1], [0], [0], [1], [0, 0, 1, 1], [], []>} : vector<2x32xf32>, vector<32x32xf32>, vector<2x32xf32> -> vector<2x32xf32>
    %278 = arith.addf %276, %277 : vector<2x32xf32>
    %279 = arith.addf %278, %68 : vector<2x32xf32>
    %280 = arith.negf %279 : vector<2x32xf32>
    %281 = math.exp %280 : vector<2x32xf32>
    %cst_169 = arith.constant 1.000000e+00 : f32
    %282 = vector.broadcast %cst_169 : f32 to vector<2x32xf32>
    %283 = arith.addf %282, %281 : vector<2x32xf32>
    %284 = arith.divf %282, %283 : vector<2x32xf32>
    %cst_170 = arith.constant dense<0.000000e+00> : vector<2x32xf32>
    %285 = tpu.matmul %275, %52, %cst_170 {dimension_numbers = #tpu.dot_dimension_numbers<[1], [0], [0], [1], [0, 0, 1, 1], [], []>} : vector<2x32xf32>, vector<32x32xf32>, vector<2x32xf32> -> vector<2x32xf32>
    %cst_171 = arith.constant dense<0.000000e+00> : vector<2x32xf32>
    %286 = tpu.matmul %234, %60, %cst_171 {dimension_numbers = #tpu.dot_dimension_numbers<[1], [0], [0], [1], [0, 0, 1, 1], [], []>} : vector<2x32xf32>, vector<32x32xf32>, vector<2x32xf32> -> vector<2x32xf32>
    %287 = arith.addf %285, %286 : vector<2x32xf32>
    %288 = arith.addf %287, %72 : vector<2x32xf32>
    %289 = arith.negf %288 : vector<2x32xf32>
    %290 = math.exp %289 : vector<2x32xf32>
    %cst_172 = arith.constant 1.000000e+00 : f32
    %291 = vector.broadcast %cst_172 : f32 to vector<2x32xf32>
    %292 = arith.addf %291, %290 : vector<2x32xf32>
    %293 = arith.divf %291, %292 : vector<2x32xf32>
    %cst_173 = arith.constant dense<0.000000e+00> : vector<2x32xf32>
    %294 = tpu.matmul %275, %54, %cst_173 {dimension_numbers = #tpu.dot_dimension_numbers<[1], [0], [0], [1], [0, 0, 1, 1], [], []>} : vector<2x32xf32>, vector<32x32xf32>, vector<2x32xf32> -> vector<2x32xf32>
    %cst_174 = arith.constant dense<0.000000e+00> : vector<2x32xf32>
    %295 = tpu.matmul %234, %62, %cst_174 {dimension_numbers = #tpu.dot_dimension_numbers<[1], [0], [0], [1], [0, 0, 1, 1], [], []>} : vector<2x32xf32>, vector<32x32xf32>, vector<2x32xf32> -> vector<2x32xf32>
    %296 = arith.addf %294, %295 : vector<2x32xf32>
    %297 = arith.addf %296, %76 : vector<2x32xf32>
    %298 = math.tanh %297 : vector<2x32xf32>
    %cst_175 = arith.constant dense<0.000000e+00> : vector<2x32xf32>
    %299 = tpu.matmul %275, %56, %cst_175 {dimension_numbers = #tpu.dot_dimension_numbers<[1], [0], [0], [1], [0, 0, 1, 1], [], []>} : vector<2x32xf32>, vector<32x32xf32>, vector<2x32xf32> -> vector<2x32xf32>
    %cst_176 = arith.constant dense<0.000000e+00> : vector<2x32xf32>
    %300 = tpu.matmul %234, %64, %cst_176 {dimension_numbers = #tpu.dot_dimension_numbers<[1], [0], [0], [1], [0, 0, 1, 1], [], []>} : vector<2x32xf32>, vector<32x32xf32>, vector<2x32xf32> -> vector<2x32xf32>
    %301 = arith.addf %299, %300 : vector<2x32xf32>
    %302 = arith.addf %301, %80 : vector<2x32xf32>
    %303 = arith.negf %302 : vector<2x32xf32>
    %304 = math.exp %303 : vector<2x32xf32>
    %cst_177 = arith.constant 1.000000e+00 : f32
    %305 = vector.broadcast %cst_177 : f32 to vector<2x32xf32>
    %306 = arith.addf %305, %304 : vector<2x32xf32>
    %307 = arith.divf %305, %306 : vector<2x32xf32>
    %308 = arith.mulf %293, %232 : vector<2x32xf32>
    %309 = arith.mulf %284, %298 : vector<2x32xf32>
    %310 = arith.addf %308, %309 : vector<2x32xf32>
    %311 = math.tanh %310 : vector<2x32xf32>
    %312 = arith.mulf %307, %311 : vector<2x32xf32>
    %c2_178 = arith.constant 2 : index
    %313 = memref.load %arg7[%c2_178] : memref<8xf32, #tpu.memory_space<smem>>
    %314 = vector.broadcast %313 : f32 to vector<2x32xf32>
    %315 = arith.mulf %314, %312 : vector<2x32xf32>
    %316 = arith.addf %238, %315 : vector<2x32xf32>
    %c0_179 = arith.constant 0 : index
    %c6 = arith.constant 6 : index
    %c0_180 = arith.constant 0 : index
    %317 = vector.load %arg10[%c0_179, %c6, %c0_180] : memref<4x16x32xf32, #tpu.memory_space<vmem>>, vector<1x2x32xf32>
    %318 = vector.shape_cast %317 : vector<1x2x32xf32> to vector<2x32xf32>
    %cst_181 = arith.constant dense<0.000000e+00> : vector<2x32xf32>
    %319 = tpu.matmul %275, %42, %cst_181 {dimension_numbers = #tpu.dot_dimension_numbers<[1], [0], [0], [1], [0, 0, 1, 1], [], []>} : vector<2x32xf32>, vector<32x32xf32>, vector<2x32xf32> -> vector<2x32xf32>
    %320 = arith.addf %318, %319 : vector<2x32xf32>
    %321 = arith.negf %320 : vector<2x32xf32>
    %322 = math.exp %321 : vector<2x32xf32>
    %cst_182 = arith.constant 1.000000e+00 : f32
    %323 = vector.broadcast %cst_182 : f32 to vector<2x32xf32>
    %324 = arith.addf %323, %322 : vector<2x32xf32>
    %325 = arith.divf %323, %324 : vector<2x32xf32>
    %c1_183 = arith.constant 1 : index
    %c6_184 = arith.constant 6 : index
    %c0_185 = arith.constant 0 : index
    %326 = vector.load %arg10[%c1_183, %c6_184, %c0_185] : memref<4x16x32xf32, #tpu.memory_space<vmem>>, vector<1x2x32xf32>
    %327 = vector.shape_cast %326 : vector<1x2x32xf32> to vector<2x32xf32>
    %cst_186 = arith.constant dense<0.000000e+00> : vector<2x32xf32>
    %328 = tpu.matmul %275, %44, %cst_186 {dimension_numbers = #tpu.dot_dimension_numbers<[1], [0], [0], [1], [0, 0, 1, 1], [], []>} : vector<2x32xf32>, vector<32x32xf32>, vector<2x32xf32> -> vector<2x32xf32>
    %329 = arith.addf %327, %328 : vector<2x32xf32>
    %330 = arith.negf %329 : vector<2x32xf32>
    %331 = math.exp %330 : vector<2x32xf32>
    %cst_187 = arith.constant 1.000000e+00 : f32
    %332 = vector.broadcast %cst_187 : f32 to vector<2x32xf32>
    %333 = arith.addf %332, %331 : vector<2x32xf32>
    %334 = arith.divf %332, %333 : vector<2x32xf32>
    %c2_188 = arith.constant 2 : index
    %c6_189 = arith.constant 6 : index
    %c0_190 = arith.constant 0 : index
    %335 = vector.load %arg10[%c2_188, %c6_189, %c0_190] : memref<4x16x32xf32, #tpu.memory_space<vmem>>, vector<1x2x32xf32>
    %336 = vector.shape_cast %335 : vector<1x2x32xf32> to vector<2x32xf32>
    %cst_191 = arith.constant dense<0.000000e+00> : vector<2x32xf32>
    %337 = tpu.matmul %275, %46, %cst_191 {dimension_numbers = #tpu.dot_dimension_numbers<[1], [0], [0], [1], [0, 0, 1, 1], [], []>} : vector<2x32xf32>, vector<32x32xf32>, vector<2x32xf32> -> vector<2x32xf32>
    %338 = arith.addf %336, %337 : vector<2x32xf32>
    %339 = math.tanh %338 : vector<2x32xf32>
    %c3_192 = arith.constant 3 : index
    %c6_193 = arith.constant 6 : index
    %c0_194 = arith.constant 0 : index
    %340 = vector.load %arg10[%c3_192, %c6_193, %c0_194] : memref<4x16x32xf32, #tpu.memory_space<vmem>>, vector<1x2x32xf32>
    %341 = vector.shape_cast %340 : vector<1x2x32xf32> to vector<2x32xf32>
    %cst_195 = arith.constant dense<0.000000e+00> : vector<2x32xf32>
    %342 = tpu.matmul %275, %48, %cst_195 {dimension_numbers = #tpu.dot_dimension_numbers<[1], [0], [0], [1], [0, 0, 1, 1], [], []>} : vector<2x32xf32>, vector<32x32xf32>, vector<2x32xf32> -> vector<2x32xf32>
    %343 = arith.addf %341, %342 : vector<2x32xf32>
    %344 = arith.negf %343 : vector<2x32xf32>
    %345 = math.exp %344 : vector<2x32xf32>
    %cst_196 = arith.constant 1.000000e+00 : f32
    %346 = vector.broadcast %cst_196 : f32 to vector<2x32xf32>
    %347 = arith.addf %346, %345 : vector<2x32xf32>
    %348 = arith.divf %346, %347 : vector<2x32xf32>
    %349 = arith.mulf %334, %273 : vector<2x32xf32>
    %350 = arith.mulf %325, %339 : vector<2x32xf32>
    %351 = arith.addf %349, %350 : vector<2x32xf32>
    %352 = math.tanh %351 : vector<2x32xf32>
    %353 = arith.mulf %348, %352 : vector<2x32xf32>
    %cst_197 = arith.constant dense<0.000000e+00> : vector<2x32xf32>
    %354 = tpu.matmul %353, %50, %cst_197 {dimension_numbers = #tpu.dot_dimension_numbers<[1], [0], [0], [1], [0, 0, 1, 1], [], []>} : vector<2x32xf32>, vector<32x32xf32>, vector<2x32xf32> -> vector<2x32xf32>
    %cst_198 = arith.constant dense<0.000000e+00> : vector<2x32xf32>
    %355 = tpu.matmul %312, %58, %cst_198 {dimension_numbers = #tpu.dot_dimension_numbers<[1], [0], [0], [1], [0, 0, 1, 1], [], []>} : vector<2x32xf32>, vector<32x32xf32>, vector<2x32xf32> -> vector<2x32xf32>
    %356 = arith.addf %354, %355 : vector<2x32xf32>
    %357 = arith.addf %356, %68 : vector<2x32xf32>
    %358 = arith.negf %357 : vector<2x32xf32>
    %359 = math.exp %358 : vector<2x32xf32>
    %cst_199 = arith.constant 1.000000e+00 : f32
    %360 = vector.broadcast %cst_199 : f32 to vector<2x32xf32>
    %361 = arith.addf %360, %359 : vector<2x32xf32>
    %362 = arith.divf %360, %361 : vector<2x32xf32>
    %cst_200 = arith.constant dense<0.000000e+00> : vector<2x32xf32>
    %363 = tpu.matmul %353, %52, %cst_200 {dimension_numbers = #tpu.dot_dimension_numbers<[1], [0], [0], [1], [0, 0, 1, 1], [], []>} : vector<2x32xf32>, vector<32x32xf32>, vector<2x32xf32> -> vector<2x32xf32>
    %cst_201 = arith.constant dense<0.000000e+00> : vector<2x32xf32>
    %364 = tpu.matmul %312, %60, %cst_201 {dimension_numbers = #tpu.dot_dimension_numbers<[1], [0], [0], [1], [0, 0, 1, 1], [], []>} : vector<2x32xf32>, vector<32x32xf32>, vector<2x32xf32> -> vector<2x32xf32>
    %365 = arith.addf %363, %364 : vector<2x32xf32>
    %366 = arith.addf %365, %72 : vector<2x32xf32>
    %367 = arith.negf %366 : vector<2x32xf32>
    %368 = math.exp %367 : vector<2x32xf32>
    %cst_202 = arith.constant 1.000000e+00 : f32
    %369 = vector.broadcast %cst_202 : f32 to vector<2x32xf32>
    %370 = arith.addf %369, %368 : vector<2x32xf32>
    %371 = arith.divf %369, %370 : vector<2x32xf32>
    %cst_203 = arith.constant dense<0.000000e+00> : vector<2x32xf32>
    %372 = tpu.matmul %353, %54, %cst_203 {dimension_numbers = #tpu.dot_dimension_numbers<[1], [0], [0], [1], [0, 0, 1, 1], [], []>} : vector<2x32xf32>, vector<32x32xf32>, vector<2x32xf32> -> vector<2x32xf32>
    %cst_204 = arith.constant dense<0.000000e+00> : vector<2x32xf32>
    %373 = tpu.matmul %312, %62, %cst_204 {dimension_numbers = #tpu.dot_dimension_numbers<[1], [0], [0], [1], [0, 0, 1, 1], [], []>} : vector<2x32xf32>, vector<32x32xf32>, vector<2x32xf32> -> vector<2x32xf32>
    %374 = arith.addf %372, %373 : vector<2x32xf32>
    %375 = arith.addf %374, %76 : vector<2x32xf32>
    %376 = math.tanh %375 : vector<2x32xf32>
    %cst_205 = arith.constant dense<0.000000e+00> : vector<2x32xf32>
    %377 = tpu.matmul %353, %56, %cst_205 {dimension_numbers = #tpu.dot_dimension_numbers<[1], [0], [0], [1], [0, 0, 1, 1], [], []>} : vector<2x32xf32>, vector<32x32xf32>, vector<2x32xf32> -> vector<2x32xf32>
    %cst_206 = arith.constant dense<0.000000e+00> : vector<2x32xf32>
    %378 = tpu.matmul %312, %64, %cst_206 {dimension_numbers = #tpu.dot_dimension_numbers<[1], [0], [0], [1], [0, 0, 1, 1], [], []>} : vector<2x32xf32>, vector<32x32xf32>, vector<2x32xf32> -> vector<2x32xf32>
    %379 = arith.addf %377, %378 : vector<2x32xf32>
    %380 = arith.addf %379, %80 : vector<2x32xf32>
    %381 = arith.negf %380 : vector<2x32xf32>
    %382 = math.exp %381 : vector<2x32xf32>
    %cst_207 = arith.constant 1.000000e+00 : f32
    %383 = vector.broadcast %cst_207 : f32 to vector<2x32xf32>
    %384 = arith.addf %383, %382 : vector<2x32xf32>
    %385 = arith.divf %383, %384 : vector<2x32xf32>
    %386 = arith.mulf %371, %310 : vector<2x32xf32>
    %387 = arith.mulf %362, %376 : vector<2x32xf32>
    %388 = arith.addf %386, %387 : vector<2x32xf32>
    %389 = math.tanh %388 : vector<2x32xf32>
    %390 = arith.mulf %385, %389 : vector<2x32xf32>
    %c3_208 = arith.constant 3 : index
    %391 = memref.load %arg7[%c3_208] : memref<8xf32, #tpu.memory_space<smem>>
    %392 = vector.broadcast %391 : f32 to vector<2x32xf32>
    %393 = arith.mulf %392, %390 : vector<2x32xf32>
    %394 = arith.addf %316, %393 : vector<2x32xf32>
    %c0_209 = arith.constant 0 : index
    %c8 = arith.constant 8 : index
    %c0_210 = arith.constant 0 : index
    %395 = vector.load %arg10[%c0_209, %c8, %c0_210] : memref<4x16x32xf32, #tpu.memory_space<vmem>>, vector<1x2x32xf32>
    %396 = vector.shape_cast %395 : vector<1x2x32xf32> to vector<2x32xf32>
    %cst_211 = arith.constant dense<0.000000e+00> : vector<2x32xf32>
    %397 = tpu.matmul %353, %42, %cst_211 {dimension_numbers = #tpu.dot_dimension_numbers<[1], [0], [0], [1], [0, 0, 1, 1], [], []>} : vector<2x32xf32>, vector<32x32xf32>, vector<2x32xf32> -> vector<2x32xf32>
    %398 = arith.addf %396, %397 : vector<2x32xf32>
    %399 = arith.negf %398 : vector<2x32xf32>
    %400 = math.exp %399 : vector<2x32xf32>
    %cst_212 = arith.constant 1.000000e+00 : f32
    %401 = vector.broadcast %cst_212 : f32 to vector<2x32xf32>
    %402 = arith.addf %401, %400 : vector<2x32xf32>
    %403 = arith.divf %401, %402 : vector<2x32xf32>
    %c1_213 = arith.constant 1 : index
    %c8_214 = arith.constant 8 : index
    %c0_215 = arith.constant 0 : index
    %404 = vector.load %arg10[%c1_213, %c8_214, %c0_215] : memref<4x16x32xf32, #tpu.memory_space<vmem>>, vector<1x2x32xf32>
    %405 = vector.shape_cast %404 : vector<1x2x32xf32> to vector<2x32xf32>
    %cst_216 = arith.constant dense<0.000000e+00> : vector<2x32xf32>
    %406 = tpu.matmul %353, %44, %cst_216 {dimension_numbers = #tpu.dot_dimension_numbers<[1], [0], [0], [1], [0, 0, 1, 1], [], []>} : vector<2x32xf32>, vector<32x32xf32>, vector<2x32xf32> -> vector<2x32xf32>
    %407 = arith.addf %405, %406 : vector<2x32xf32>
    %408 = arith.negf %407 : vector<2x32xf32>
    %409 = math.exp %408 : vector<2x32xf32>
    %cst_217 = arith.constant 1.000000e+00 : f32
    %410 = vector.broadcast %cst_217 : f32 to vector<2x32xf32>
    %411 = arith.addf %410, %409 : vector<2x32xf32>
    %412 = arith.divf %410, %411 : vector<2x32xf32>
    %c2_218 = arith.constant 2 : index
    %c8_219 = arith.constant 8 : index
    %c0_220 = arith.constant 0 : index
    %413 = vector.load %arg10[%c2_218, %c8_219, %c0_220] : memref<4x16x32xf32, #tpu.memory_space<vmem>>, vector<1x2x32xf32>
    %414 = vector.shape_cast %413 : vector<1x2x32xf32> to vector<2x32xf32>
    %cst_221 = arith.constant dense<0.000000e+00> : vector<2x32xf32>
    %415 = tpu.matmul %353, %46, %cst_221 {dimension_numbers = #tpu.dot_dimension_numbers<[1], [0], [0], [1], [0, 0, 1, 1], [], []>} : vector<2x32xf32>, vector<32x32xf32>, vector<2x32xf32> -> vector<2x32xf32>
    %416 = arith.addf %414, %415 : vector<2x32xf32>
    %417 = math.tanh %416 : vector<2x32xf32>
    %c3_222 = arith.constant 3 : index
    %c8_223 = arith.constant 8 : index
    %c0_224 = arith.constant 0 : index
    %418 = vector.load %arg10[%c3_222, %c8_223, %c0_224] : memref<4x16x32xf32, #tpu.memory_space<vmem>>, vector<1x2x32xf32>
    %419 = vector.shape_cast %418 : vector<1x2x32xf32> to vector<2x32xf32>
    %cst_225 = arith.constant dense<0.000000e+00> : vector<2x32xf32>
    %420 = tpu.matmul %353, %48, %cst_225 {dimension_numbers = #tpu.dot_dimension_numbers<[1], [0], [0], [1], [0, 0, 1, 1], [], []>} : vector<2x32xf32>, vector<32x32xf32>, vector<2x32xf32> -> vector<2x32xf32>
    %421 = arith.addf %419, %420 : vector<2x32xf32>
    %422 = arith.negf %421 : vector<2x32xf32>
    %423 = math.exp %422 : vector<2x32xf32>
    %cst_226 = arith.constant 1.000000e+00 : f32
    %424 = vector.broadcast %cst_226 : f32 to vector<2x32xf32>
    %425 = arith.addf %424, %423 : vector<2x32xf32>
    %426 = arith.divf %424, %425 : vector<2x32xf32>
    %427 = arith.mulf %412, %351 : vector<2x32xf32>
    %428 = arith.mulf %403, %417 : vector<2x32xf32>
    %429 = arith.addf %427, %428 : vector<2x32xf32>
    %430 = math.tanh %429 : vector<2x32xf32>
    %431 = arith.mulf %426, %430 : vector<2x32xf32>
    %cst_227 = arith.constant dense<0.000000e+00> : vector<2x32xf32>
    %432 = tpu.matmul %431, %50, %cst_227 {dimension_numbers = #tpu.dot_dimension_numbers<[1], [0], [0], [1], [0, 0, 1, 1], [], []>} : vector<2x32xf32>, vector<32x32xf32>, vector<2x32xf32> -> vector<2x32xf32>
    %cst_228 = arith.constant dense<0.000000e+00> : vector<2x32xf32>
    %433 = tpu.matmul %390, %58, %cst_228 {dimension_numbers = #tpu.dot_dimension_numbers<[1], [0], [0], [1], [0, 0, 1, 1], [], []>} : vector<2x32xf32>, vector<32x32xf32>, vector<2x32xf32> -> vector<2x32xf32>
    %434 = arith.addf %432, %433 : vector<2x32xf32>
    %435 = arith.addf %434, %68 : vector<2x32xf32>
    %436 = arith.negf %435 : vector<2x32xf32>
    %437 = math.exp %436 : vector<2x32xf32>
    %cst_229 = arith.constant 1.000000e+00 : f32
    %438 = vector.broadcast %cst_229 : f32 to vector<2x32xf32>
    %439 = arith.addf %438, %437 : vector<2x32xf32>
    %440 = arith.divf %438, %439 : vector<2x32xf32>
    %cst_230 = arith.constant dense<0.000000e+00> : vector<2x32xf32>
    %441 = tpu.matmul %431, %52, %cst_230 {dimension_numbers = #tpu.dot_dimension_numbers<[1], [0], [0], [1], [0, 0, 1, 1], [], []>} : vector<2x32xf32>, vector<32x32xf32>, vector<2x32xf32> -> vector<2x32xf32>
    %cst_231 = arith.constant dense<0.000000e+00> : vector<2x32xf32>
    %442 = tpu.matmul %390, %60, %cst_231 {dimension_numbers = #tpu.dot_dimension_numbers<[1], [0], [0], [1], [0, 0, 1, 1], [], []>} : vector<2x32xf32>, vector<32x32xf32>, vector<2x32xf32> -> vector<2x32xf32>
    %443 = arith.addf %441, %442 : vector<2x32xf32>
    %444 = arith.addf %443, %72 : vector<2x32xf32>
    %445 = arith.negf %444 : vector<2x32xf32>
    %446 = math.exp %445 : vector<2x32xf32>
    %cst_232 = arith.constant 1.000000e+00 : f32
    %447 = vector.broadcast %cst_232 : f32 to vector<2x32xf32>
    %448 = arith.addf %447, %446 : vector<2x32xf32>
    %449 = arith.divf %447, %448 : vector<2x32xf32>
    %cst_233 = arith.constant dense<0.000000e+00> : vector<2x32xf32>
    %450 = tpu.matmul %431, %54, %cst_233 {dimension_numbers = #tpu.dot_dimension_numbers<[1], [0], [0], [1], [0, 0, 1, 1], [], []>} : vector<2x32xf32>, vector<32x32xf32>, vector<2x32xf32> -> vector<2x32xf32>
    %cst_234 = arith.constant dense<0.000000e+00> : vector<2x32xf32>
    %451 = tpu.matmul %390, %62, %cst_234 {dimension_numbers = #tpu.dot_dimension_numbers<[1], [0], [0], [1], [0, 0, 1, 1], [], []>} : vector<2x32xf32>, vector<32x32xf32>, vector<2x32xf32> -> vector<2x32xf32>
    %452 = arith.addf %450, %451 : vector<2x32xf32>
    %453 = arith.addf %452, %76 : vector<2x32xf32>
    %454 = math.tanh %453 : vector<2x32xf32>
    %cst_235 = arith.constant dense<0.000000e+00> : vector<2x32xf32>
    %455 = tpu.matmul %431, %56, %cst_235 {dimension_numbers = #tpu.dot_dimension_numbers<[1], [0], [0], [1], [0, 0, 1, 1], [], []>} : vector<2x32xf32>, vector<32x32xf32>, vector<2x32xf32> -> vector<2x32xf32>
    %cst_236 = arith.constant dense<0.000000e+00> : vector<2x32xf32>
    %456 = tpu.matmul %390, %64, %cst_236 {dimension_numbers = #tpu.dot_dimension_numbers<[1], [0], [0], [1], [0, 0, 1, 1], [], []>} : vector<2x32xf32>, vector<32x32xf32>, vector<2x32xf32> -> vector<2x32xf32>
    %457 = arith.addf %455, %456 : vector<2x32xf32>
    %458 = arith.addf %457, %80 : vector<2x32xf32>
    %459 = arith.negf %458 : vector<2x32xf32>
    %460 = math.exp %459 : vector<2x32xf32>
    %cst_237 = arith.constant 1.000000e+00 : f32
    %461 = vector.broadcast %cst_237 : f32 to vector<2x32xf32>
    %462 = arith.addf %461, %460 : vector<2x32xf32>
    %463 = arith.divf %461, %462 : vector<2x32xf32>
    %464 = arith.mulf %449, %388 : vector<2x32xf32>
    %465 = arith.mulf %440, %454 : vector<2x32xf32>
    %466 = arith.addf %464, %465 : vector<2x32xf32>
    %467 = math.tanh %466 : vector<2x32xf32>
    %468 = arith.mulf %463, %467 : vector<2x32xf32>
    %c4_238 = arith.constant 4 : index
    %469 = memref.load %arg7[%c4_238] : memref<8xf32, #tpu.memory_space<smem>>
    %470 = vector.broadcast %469 : f32 to vector<2x32xf32>
    %471 = arith.mulf %470, %468 : vector<2x32xf32>
    %472 = arith.addf %394, %471 : vector<2x32xf32>
    %c0_239 = arith.constant 0 : index
    %c10 = arith.constant 10 : index
    %c0_240 = arith.constant 0 : index
    %473 = vector.load %arg10[%c0_239, %c10, %c0_240] : memref<4x16x32xf32, #tpu.memory_space<vmem>>, vector<1x2x32xf32>
    %474 = vector.shape_cast %473 : vector<1x2x32xf32> to vector<2x32xf32>
    %cst_241 = arith.constant dense<0.000000e+00> : vector<2x32xf32>
    %475 = tpu.matmul %431, %42, %cst_241 {dimension_numbers = #tpu.dot_dimension_numbers<[1], [0], [0], [1], [0, 0, 1, 1], [], []>} : vector<2x32xf32>, vector<32x32xf32>, vector<2x32xf32> -> vector<2x32xf32>
    %476 = arith.addf %474, %475 : vector<2x32xf32>
    %477 = arith.negf %476 : vector<2x32xf32>
    %478 = math.exp %477 : vector<2x32xf32>
    %cst_242 = arith.constant 1.000000e+00 : f32
    %479 = vector.broadcast %cst_242 : f32 to vector<2x32xf32>
    %480 = arith.addf %479, %478 : vector<2x32xf32>
    %481 = arith.divf %479, %480 : vector<2x32xf32>
    %c1_243 = arith.constant 1 : index
    %c10_244 = arith.constant 10 : index
    %c0_245 = arith.constant 0 : index
    %482 = vector.load %arg10[%c1_243, %c10_244, %c0_245] : memref<4x16x32xf32, #tpu.memory_space<vmem>>, vector<1x2x32xf32>
    %483 = vector.shape_cast %482 : vector<1x2x32xf32> to vector<2x32xf32>
    %cst_246 = arith.constant dense<0.000000e+00> : vector<2x32xf32>
    %484 = tpu.matmul %431, %44, %cst_246 {dimension_numbers = #tpu.dot_dimension_numbers<[1], [0], [0], [1], [0, 0, 1, 1], [], []>} : vector<2x32xf32>, vector<32x32xf32>, vector<2x32xf32> -> vector<2x32xf32>
    %485 = arith.addf %483, %484 : vector<2x32xf32>
    %486 = arith.negf %485 : vector<2x32xf32>
    %487 = math.exp %486 : vector<2x32xf32>
    %cst_247 = arith.constant 1.000000e+00 : f32
    %488 = vector.broadcast %cst_247 : f32 to vector<2x32xf32>
    %489 = arith.addf %488, %487 : vector<2x32xf32>
    %490 = arith.divf %488, %489 : vector<2x32xf32>
    %c2_248 = arith.constant 2 : index
    %c10_249 = arith.constant 10 : index
    %c0_250 = arith.constant 0 : index
    %491 = vector.load %arg10[%c2_248, %c10_249, %c0_250] : memref<4x16x32xf32, #tpu.memory_space<vmem>>, vector<1x2x32xf32>
    %492 = vector.shape_cast %491 : vector<1x2x32xf32> to vector<2x32xf32>
    %cst_251 = arith.constant dense<0.000000e+00> : vector<2x32xf32>
    %493 = tpu.matmul %431, %46, %cst_251 {dimension_numbers = #tpu.dot_dimension_numbers<[1], [0], [0], [1], [0, 0, 1, 1], [], []>} : vector<2x32xf32>, vector<32x32xf32>, vector<2x32xf32> -> vector<2x32xf32>
    %494 = arith.addf %492, %493 : vector<2x32xf32>
    %495 = math.tanh %494 : vector<2x32xf32>
    %c3_252 = arith.constant 3 : index
    %c10_253 = arith.constant 10 : index
    %c0_254 = arith.constant 0 : index
    %496 = vector.load %arg10[%c3_252, %c10_253, %c0_254] : memref<4x16x32xf32, #tpu.memory_space<vmem>>, vector<1x2x32xf32>
    %497 = vector.shape_cast %496 : vector<1x2x32xf32> to vector<2x32xf32>
    %cst_255 = arith.constant dense<0.000000e+00> : vector<2x32xf32>
    %498 = tpu.matmul %431, %48, %cst_255 {dimension_numbers = #tpu.dot_dimension_numbers<[1], [0], [0], [1], [0, 0, 1, 1], [], []>} : vector<2x32xf32>, vector<32x32xf32>, vector<2x32xf32> -> vector<2x32xf32>
    %499 = arith.addf %497, %498 : vector<2x32xf32>
    %500 = arith.negf %499 : vector<2x32xf32>
    %501 = math.exp %500 : vector<2x32xf32>
    %cst_256 = arith.constant 1.000000e+00 : f32
    %502 = vector.broadcast %cst_256 : f32 to vector<2x32xf32>
    %503 = arith.addf %502, %501 : vector<2x32xf32>
    %504 = arith.divf %502, %503 : vector<2x32xf32>
    %505 = arith.mulf %490, %429 : vector<2x32xf32>
    %506 = arith.mulf %481, %495 : vector<2x32xf32>
    %507 = arith.addf %505, %506 : vector<2x32xf32>
    %508 = math.tanh %507 : vector<2x32xf32>
    %509 = arith.mulf %504, %508 : vector<2x32xf32>
    %cst_257 = arith.constant dense<0.000000e+00> : vector<2x32xf32>
    %510 = tpu.matmul %509, %50, %cst_257 {dimension_numbers = #tpu.dot_dimension_numbers<[1], [0], [0], [1], [0, 0, 1, 1], [], []>} : vector<2x32xf32>, vector<32x32xf32>, vector<2x32xf32> -> vector<2x32xf32>
    %cst_258 = arith.constant dense<0.000000e+00> : vector<2x32xf32>
    %511 = tpu.matmul %468, %58, %cst_258 {dimension_numbers = #tpu.dot_dimension_numbers<[1], [0], [0], [1], [0, 0, 1, 1], [], []>} : vector<2x32xf32>, vector<32x32xf32>, vector<2x32xf32> -> vector<2x32xf32>
    %512 = arith.addf %510, %511 : vector<2x32xf32>
    %513 = arith.addf %512, %68 : vector<2x32xf32>
    %514 = arith.negf %513 : vector<2x32xf32>
    %515 = math.exp %514 : vector<2x32xf32>
    %cst_259 = arith.constant 1.000000e+00 : f32
    %516 = vector.broadcast %cst_259 : f32 to vector<2x32xf32>
    %517 = arith.addf %516, %515 : vector<2x32xf32>
    %518 = arith.divf %516, %517 : vector<2x32xf32>
    %cst_260 = arith.constant dense<0.000000e+00> : vector<2x32xf32>
    %519 = tpu.matmul %509, %52, %cst_260 {dimension_numbers = #tpu.dot_dimension_numbers<[1], [0], [0], [1], [0, 0, 1, 1], [], []>} : vector<2x32xf32>, vector<32x32xf32>, vector<2x32xf32> -> vector<2x32xf32>
    %cst_261 = arith.constant dense<0.000000e+00> : vector<2x32xf32>
    %520 = tpu.matmul %468, %60, %cst_261 {dimension_numbers = #tpu.dot_dimension_numbers<[1], [0], [0], [1], [0, 0, 1, 1], [], []>} : vector<2x32xf32>, vector<32x32xf32>, vector<2x32xf32> -> vector<2x32xf32>
    %521 = arith.addf %519, %520 : vector<2x32xf32>
    %522 = arith.addf %521, %72 : vector<2x32xf32>
    %523 = arith.negf %522 : vector<2x32xf32>
    %524 = math.exp %523 : vector<2x32xf32>
    %cst_262 = arith.constant 1.000000e+00 : f32
    %525 = vector.broadcast %cst_262 : f32 to vector<2x32xf32>
    %526 = arith.addf %525, %524 : vector<2x32xf32>
    %527 = arith.divf %525, %526 : vector<2x32xf32>
    %cst_263 = arith.constant dense<0.000000e+00> : vector<2x32xf32>
    %528 = tpu.matmul %509, %54, %cst_263 {dimension_numbers = #tpu.dot_dimension_numbers<[1], [0], [0], [1], [0, 0, 1, 1], [], []>} : vector<2x32xf32>, vector<32x32xf32>, vector<2x32xf32> -> vector<2x32xf32>
    %cst_264 = arith.constant dense<0.000000e+00> : vector<2x32xf32>
    %529 = tpu.matmul %468, %62, %cst_264 {dimension_numbers = #tpu.dot_dimension_numbers<[1], [0], [0], [1], [0, 0, 1, 1], [], []>} : vector<2x32xf32>, vector<32x32xf32>, vector<2x32xf32> -> vector<2x32xf32>
    %530 = arith.addf %528, %529 : vector<2x32xf32>
    %531 = arith.addf %530, %76 : vector<2x32xf32>
    %532 = math.tanh %531 : vector<2x32xf32>
    %cst_265 = arith.constant dense<0.000000e+00> : vector<2x32xf32>
    %533 = tpu.matmul %509, %56, %cst_265 {dimension_numbers = #tpu.dot_dimension_numbers<[1], [0], [0], [1], [0, 0, 1, 1], [], []>} : vector<2x32xf32>, vector<32x32xf32>, vector<2x32xf32> -> vector<2x32xf32>
    %cst_266 = arith.constant dense<0.000000e+00> : vector<2x32xf32>
    %534 = tpu.matmul %468, %64, %cst_266 {dimension_numbers = #tpu.dot_dimension_numbers<[1], [0], [0], [1], [0, 0, 1, 1], [], []>} : vector<2x32xf32>, vector<32x32xf32>, vector<2x32xf32> -> vector<2x32xf32>
    %535 = arith.addf %533, %534 : vector<2x32xf32>
    %536 = arith.addf %535, %80 : vector<2x32xf32>
    %537 = arith.negf %536 : vector<2x32xf32>
    %538 = math.exp %537 : vector<2x32xf32>
    %cst_267 = arith.constant 1.000000e+00 : f32
    %539 = vector.broadcast %cst_267 : f32 to vector<2x32xf32>
    %540 = arith.addf %539, %538 : vector<2x32xf32>
    %541 = arith.divf %539, %540 : vector<2x32xf32>
    %542 = arith.mulf %527, %466 : vector<2x32xf32>
    %543 = arith.mulf %518, %532 : vector<2x32xf32>
    %544 = arith.addf %542, %543 : vector<2x32xf32>
    %545 = math.tanh %544 : vector<2x32xf32>
    %546 = arith.mulf %541, %545 : vector<2x32xf32>
    %c5 = arith.constant 5 : index
    %547 = memref.load %arg7[%c5] : memref<8xf32, #tpu.memory_space<smem>>
    %548 = vector.broadcast %547 : f32 to vector<2x32xf32>
    %549 = arith.mulf %548, %546 : vector<2x32xf32>
    %550 = arith.addf %472, %549 : vector<2x32xf32>
    %c0_268 = arith.constant 0 : index
    %c12 = arith.constant 12 : index
    %c0_269 = arith.constant 0 : index
    %551 = vector.load %arg10[%c0_268, %c12, %c0_269] : memref<4x16x32xf32, #tpu.memory_space<vmem>>, vector<1x2x32xf32>
    %552 = vector.shape_cast %551 : vector<1x2x32xf32> to vector<2x32xf32>
    %cst_270 = arith.constant dense<0.000000e+00> : vector<2x32xf32>
    %553 = tpu.matmul %509, %42, %cst_270 {dimension_numbers = #tpu.dot_dimension_numbers<[1], [0], [0], [1], [0, 0, 1, 1], [], []>} : vector<2x32xf32>, vector<32x32xf32>, vector<2x32xf32> -> vector<2x32xf32>
    %554 = arith.addf %552, %553 : vector<2x32xf32>
    %555 = arith.negf %554 : vector<2x32xf32>
    %556 = math.exp %555 : vector<2x32xf32>
    %cst_271 = arith.constant 1.000000e+00 : f32
    %557 = vector.broadcast %cst_271 : f32 to vector<2x32xf32>
    %558 = arith.addf %557, %556 : vector<2x32xf32>
    %559 = arith.divf %557, %558 : vector<2x32xf32>
    %c1_272 = arith.constant 1 : index
    %c12_273 = arith.constant 12 : index
    %c0_274 = arith.constant 0 : index
    %560 = vector.load %arg10[%c1_272, %c12_273, %c0_274] : memref<4x16x32xf32, #tpu.memory_space<vmem>>, vector<1x2x32xf32>
    %561 = vector.shape_cast %560 : vector<1x2x32xf32> to vector<2x32xf32>
    %cst_275 = arith.constant dense<0.000000e+00> : vector<2x32xf32>
    %562 = tpu.matmul %509, %44, %cst_275 {dimension_numbers = #tpu.dot_dimension_numbers<[1], [0], [0], [1], [0, 0, 1, 1], [], []>} : vector<2x32xf32>, vector<32x32xf32>, vector<2x32xf32> -> vector<2x32xf32>
    %563 = arith.addf %561, %562 : vector<2x32xf32>
    %564 = arith.negf %563 : vector<2x32xf32>
    %565 = math.exp %564 : vector<2x32xf32>
    %cst_276 = arith.constant 1.000000e+00 : f32
    %566 = vector.broadcast %cst_276 : f32 to vector<2x32xf32>
    %567 = arith.addf %566, %565 : vector<2x32xf32>
    %568 = arith.divf %566, %567 : vector<2x32xf32>
    %c2_277 = arith.constant 2 : index
    %c12_278 = arith.constant 12 : index
    %c0_279 = arith.constant 0 : index
    %569 = vector.load %arg10[%c2_277, %c12_278, %c0_279] : memref<4x16x32xf32, #tpu.memory_space<vmem>>, vector<1x2x32xf32>
    %570 = vector.shape_cast %569 : vector<1x2x32xf32> to vector<2x32xf32>
    %cst_280 = arith.constant dense<0.000000e+00> : vector<2x32xf32>
    %571 = tpu.matmul %509, %46, %cst_280 {dimension_numbers = #tpu.dot_dimension_numbers<[1], [0], [0], [1], [0, 0, 1, 1], [], []>} : vector<2x32xf32>, vector<32x32xf32>, vector<2x32xf32> -> vector<2x32xf32>
    %572 = arith.addf %570, %571 : vector<2x32xf32>
    %573 = math.tanh %572 : vector<2x32xf32>
    %c3_281 = arith.constant 3 : index
    %c12_282 = arith.constant 12 : index
    %c0_283 = arith.constant 0 : index
    %574 = vector.load %arg10[%c3_281, %c12_282, %c0_283] : memref<4x16x32xf32, #tpu.memory_space<vmem>>, vector<1x2x32xf32>
    %575 = vector.shape_cast %574 : vector<1x2x32xf32> to vector<2x32xf32>
    %cst_284 = arith.constant dense<0.000000e+00> : vector<2x32xf32>
    %576 = tpu.matmul %509, %48, %cst_284 {dimension_numbers = #tpu.dot_dimension_numbers<[1], [0], [0], [1], [0, 0, 1, 1], [], []>} : vector<2x32xf32>, vector<32x32xf32>, vector<2x32xf32> -> vector<2x32xf32>
    %577 = arith.addf %575, %576 : vector<2x32xf32>
    %578 = arith.negf %577 : vector<2x32xf32>
    %579 = math.exp %578 : vector<2x32xf32>
    %cst_285 = arith.constant 1.000000e+00 : f32
    %580 = vector.broadcast %cst_285 : f32 to vector<2x32xf32>
    %581 = arith.addf %580, %579 : vector<2x32xf32>
    %582 = arith.divf %580, %581 : vector<2x32xf32>
    %583 = arith.mulf %568, %507 : vector<2x32xf32>
    %584 = arith.mulf %559, %573 : vector<2x32xf32>
    %585 = arith.addf %583, %584 : vector<2x32xf32>
    %586 = math.tanh %585 : vector<2x32xf32>
    %587 = arith.mulf %582, %586 : vector<2x32xf32>
    %cst_286 = arith.constant dense<0.000000e+00> : vector<2x32xf32>
    %588 = tpu.matmul %587, %50, %cst_286 {dimension_numbers = #tpu.dot_dimension_numbers<[1], [0], [0], [1], [0, 0, 1, 1], [], []>} : vector<2x32xf32>, vector<32x32xf32>, vector<2x32xf32> -> vector<2x32xf32>
    %cst_287 = arith.constant dense<0.000000e+00> : vector<2x32xf32>
    %589 = tpu.matmul %546, %58, %cst_287 {dimension_numbers = #tpu.dot_dimension_numbers<[1], [0], [0], [1], [0, 0, 1, 1], [], []>} : vector<2x32xf32>, vector<32x32xf32>, vector<2x32xf32> -> vector<2x32xf32>
    %590 = arith.addf %588, %589 : vector<2x32xf32>
    %591 = arith.addf %590, %68 : vector<2x32xf32>
    %592 = arith.negf %591 : vector<2x32xf32>
    %593 = math.exp %592 : vector<2x32xf32>
    %cst_288 = arith.constant 1.000000e+00 : f32
    %594 = vector.broadcast %cst_288 : f32 to vector<2x32xf32>
    %595 = arith.addf %594, %593 : vector<2x32xf32>
    %596 = arith.divf %594, %595 : vector<2x32xf32>
    %cst_289 = arith.constant dense<0.000000e+00> : vector<2x32xf32>
    %597 = tpu.matmul %587, %52, %cst_289 {dimension_numbers = #tpu.dot_dimension_numbers<[1], [0], [0], [1], [0, 0, 1, 1], [], []>} : vector<2x32xf32>, vector<32x32xf32>, vector<2x32xf32> -> vector<2x32xf32>
    %cst_290 = arith.constant dense<0.000000e+00> : vector<2x32xf32>
    %598 = tpu.matmul %546, %60, %cst_290 {dimension_numbers = #tpu.dot_dimension_numbers<[1], [0], [0], [1], [0, 0, 1, 1], [], []>} : vector<2x32xf32>, vector<32x32xf32>, vector<2x32xf32> -> vector<2x32xf32>
    %599 = arith.addf %597, %598 : vector<2x32xf32>
    %600 = arith.addf %599, %72 : vector<2x32xf32>
    %601 = arith.negf %600 : vector<2x32xf32>
    %602 = math.exp %601 : vector<2x32xf32>
    %cst_291 = arith.constant 1.000000e+00 : f32
    %603 = vector.broadcast %cst_291 : f32 to vector<2x32xf32>
    %604 = arith.addf %603, %602 : vector<2x32xf32>
    %605 = arith.divf %603, %604 : vector<2x32xf32>
    %cst_292 = arith.constant dense<0.000000e+00> : vector<2x32xf32>
    %606 = tpu.matmul %587, %54, %cst_292 {dimension_numbers = #tpu.dot_dimension_numbers<[1], [0], [0], [1], [0, 0, 1, 1], [], []>} : vector<2x32xf32>, vector<32x32xf32>, vector<2x32xf32> -> vector<2x32xf32>
    %cst_293 = arith.constant dense<0.000000e+00> : vector<2x32xf32>
    %607 = tpu.matmul %546, %62, %cst_293 {dimension_numbers = #tpu.dot_dimension_numbers<[1], [0], [0], [1], [0, 0, 1, 1], [], []>} : vector<2x32xf32>, vector<32x32xf32>, vector<2x32xf32> -> vector<2x32xf32>
    %608 = arith.addf %606, %607 : vector<2x32xf32>
    %609 = arith.addf %608, %76 : vector<2x32xf32>
    %610 = math.tanh %609 : vector<2x32xf32>
    %cst_294 = arith.constant dense<0.000000e+00> : vector<2x32xf32>
    %611 = tpu.matmul %587, %56, %cst_294 {dimension_numbers = #tpu.dot_dimension_numbers<[1], [0], [0], [1], [0, 0, 1, 1], [], []>} : vector<2x32xf32>, vector<32x32xf32>, vector<2x32xf32> -> vector<2x32xf32>
    %cst_295 = arith.constant dense<0.000000e+00> : vector<2x32xf32>
    %612 = tpu.matmul %546, %64, %cst_295 {dimension_numbers = #tpu.dot_dimension_numbers<[1], [0], [0], [1], [0, 0, 1, 1], [], []>} : vector<2x32xf32>, vector<32x32xf32>, vector<2x32xf32> -> vector<2x32xf32>
    %613 = arith.addf %611, %612 : vector<2x32xf32>
    %614 = arith.addf %613, %80 : vector<2x32xf32>
    %615 = arith.negf %614 : vector<2x32xf32>
    %616 = math.exp %615 : vector<2x32xf32>
    %cst_296 = arith.constant 1.000000e+00 : f32
    %617 = vector.broadcast %cst_296 : f32 to vector<2x32xf32>
    %618 = arith.addf %617, %616 : vector<2x32xf32>
    %619 = arith.divf %617, %618 : vector<2x32xf32>
    %620 = arith.mulf %605, %544 : vector<2x32xf32>
    %621 = arith.mulf %596, %610 : vector<2x32xf32>
    %622 = arith.addf %620, %621 : vector<2x32xf32>
    %623 = math.tanh %622 : vector<2x32xf32>
    %624 = arith.mulf %619, %623 : vector<2x32xf32>
    %c6_297 = arith.constant 6 : index
    %625 = memref.load %arg7[%c6_297] : memref<8xf32, #tpu.memory_space<smem>>
    %626 = vector.broadcast %625 : f32 to vector<2x32xf32>
    %627 = arith.mulf %626, %624 : vector<2x32xf32>
    %628 = arith.addf %550, %627 : vector<2x32xf32>
    %c0_298 = arith.constant 0 : index
    %c14 = arith.constant 14 : index
    %c0_299 = arith.constant 0 : index
    %629 = vector.load %arg10[%c0_298, %c14, %c0_299] : memref<4x16x32xf32, #tpu.memory_space<vmem>>, vector<1x2x32xf32>
    %630 = vector.shape_cast %629 : vector<1x2x32xf32> to vector<2x32xf32>
    %cst_300 = arith.constant dense<0.000000e+00> : vector<2x32xf32>
    %631 = tpu.matmul %587, %42, %cst_300 {dimension_numbers = #tpu.dot_dimension_numbers<[1], [0], [0], [1], [0, 0, 1, 1], [], []>} : vector<2x32xf32>, vector<32x32xf32>, vector<2x32xf32> -> vector<2x32xf32>
    %632 = arith.addf %630, %631 : vector<2x32xf32>
    %633 = arith.negf %632 : vector<2x32xf32>
    %634 = math.exp %633 : vector<2x32xf32>
    %cst_301 = arith.constant 1.000000e+00 : f32
    %635 = vector.broadcast %cst_301 : f32 to vector<2x32xf32>
    %636 = arith.addf %635, %634 : vector<2x32xf32>
    %637 = arith.divf %635, %636 : vector<2x32xf32>
    %c1_302 = arith.constant 1 : index
    %c14_303 = arith.constant 14 : index
    %c0_304 = arith.constant 0 : index
    %638 = vector.load %arg10[%c1_302, %c14_303, %c0_304] : memref<4x16x32xf32, #tpu.memory_space<vmem>>, vector<1x2x32xf32>
    %639 = vector.shape_cast %638 : vector<1x2x32xf32> to vector<2x32xf32>
    %cst_305 = arith.constant dense<0.000000e+00> : vector<2x32xf32>
    %640 = tpu.matmul %587, %44, %cst_305 {dimension_numbers = #tpu.dot_dimension_numbers<[1], [0], [0], [1], [0, 0, 1, 1], [], []>} : vector<2x32xf32>, vector<32x32xf32>, vector<2x32xf32> -> vector<2x32xf32>
    %641 = arith.addf %639, %640 : vector<2x32xf32>
    %642 = arith.negf %641 : vector<2x32xf32>
    %643 = math.exp %642 : vector<2x32xf32>
    %cst_306 = arith.constant 1.000000e+00 : f32
    %644 = vector.broadcast %cst_306 : f32 to vector<2x32xf32>
    %645 = arith.addf %644, %643 : vector<2x32xf32>
    %646 = arith.divf %644, %645 : vector<2x32xf32>
    %c2_307 = arith.constant 2 : index
    %c14_308 = arith.constant 14 : index
    %c0_309 = arith.constant 0 : index
    %647 = vector.load %arg10[%c2_307, %c14_308, %c0_309] : memref<4x16x32xf32, #tpu.memory_space<vmem>>, vector<1x2x32xf32>
    %648 = vector.shape_cast %647 : vector<1x2x32xf32> to vector<2x32xf32>
    %cst_310 = arith.constant dense<0.000000e+00> : vector<2x32xf32>
    %649 = tpu.matmul %587, %46, %cst_310 {dimension_numbers = #tpu.dot_dimension_numbers<[1], [0], [0], [1], [0, 0, 1, 1], [], []>} : vector<2x32xf32>, vector<32x32xf32>, vector<2x32xf32> -> vector<2x32xf32>
    %650 = arith.addf %648, %649 : vector<2x32xf32>
    %651 = math.tanh %650 : vector<2x32xf32>
    %c3_311 = arith.constant 3 : index
    %c14_312 = arith.constant 14 : index
    %c0_313 = arith.constant 0 : index
    %652 = vector.load %arg10[%c3_311, %c14_312, %c0_313] : memref<4x16x32xf32, #tpu.memory_space<vmem>>, vector<1x2x32xf32>
    %653 = vector.shape_cast %652 : vector<1x2x32xf32> to vector<2x32xf32>
    %cst_314 = arith.constant dense<0.000000e+00> : vector<2x32xf32>
    %654 = tpu.matmul %587, %48, %cst_314 {dimension_numbers = #tpu.dot_dimension_numbers<[1], [0], [0], [1], [0, 0, 1, 1], [], []>} : vector<2x32xf32>, vector<32x32xf32>, vector<2x32xf32> -> vector<2x32xf32>
    %655 = arith.addf %653, %654 : vector<2x32xf32>
    %656 = arith.negf %655 : vector<2x32xf32>
    %657 = math.exp %656 : vector<2x32xf32>
    %cst_315 = arith.constant 1.000000e+00 : f32
    %658 = vector.broadcast %cst_315 : f32 to vector<2x32xf32>
    %659 = arith.addf %658, %657 : vector<2x32xf32>
    %660 = arith.divf %658, %659 : vector<2x32xf32>
    %661 = arith.mulf %646, %585 : vector<2x32xf32>
    %662 = arith.mulf %637, %651 : vector<2x32xf32>
    %663 = arith.addf %661, %662 : vector<2x32xf32>
    %664 = math.tanh %663 : vector<2x32xf32>
    %665 = arith.mulf %660, %664 : vector<2x32xf32>
    %cst_316 = arith.constant dense<0.000000e+00> : vector<2x32xf32>
    %666 = tpu.matmul %665, %50, %cst_316 {dimension_numbers = #tpu.dot_dimension_numbers<[1], [0], [0], [1], [0, 0, 1, 1], [], []>} : vector<2x32xf32>, vector<32x32xf32>, vector<2x32xf32> -> vector<2x32xf32>
    %cst_317 = arith.constant dense<0.000000e+00> : vector<2x32xf32>
    %667 = tpu.matmul %624, %58, %cst_317 {dimension_numbers = #tpu.dot_dimension_numbers<[1], [0], [0], [1], [0, 0, 1, 1], [], []>} : vector<2x32xf32>, vector<32x32xf32>, vector<2x32xf32> -> vector<2x32xf32>
    %668 = arith.addf %666, %667 : vector<2x32xf32>
    %669 = arith.addf %668, %68 : vector<2x32xf32>
    %670 = arith.negf %669 : vector<2x32xf32>
    %671 = math.exp %670 : vector<2x32xf32>
    %cst_318 = arith.constant 1.000000e+00 : f32
    %672 = vector.broadcast %cst_318 : f32 to vector<2x32xf32>
    %673 = arith.addf %672, %671 : vector<2x32xf32>
    %674 = arith.divf %672, %673 : vector<2x32xf32>
    %cst_319 = arith.constant dense<0.000000e+00> : vector<2x32xf32>
    %675 = tpu.matmul %665, %52, %cst_319 {dimension_numbers = #tpu.dot_dimension_numbers<[1], [0], [0], [1], [0, 0, 1, 1], [], []>} : vector<2x32xf32>, vector<32x32xf32>, vector<2x32xf32> -> vector<2x32xf32>
    %cst_320 = arith.constant dense<0.000000e+00> : vector<2x32xf32>
    %676 = tpu.matmul %624, %60, %cst_320 {dimension_numbers = #tpu.dot_dimension_numbers<[1], [0], [0], [1], [0, 0, 1, 1], [], []>} : vector<2x32xf32>, vector<32x32xf32>, vector<2x32xf32> -> vector<2x32xf32>
    %677 = arith.addf %675, %676 : vector<2x32xf32>
    %678 = arith.addf %677, %72 : vector<2x32xf32>
    %679 = arith.negf %678 : vector<2x32xf32>
    %680 = math.exp %679 : vector<2x32xf32>
    %cst_321 = arith.constant 1.000000e+00 : f32
    %681 = vector.broadcast %cst_321 : f32 to vector<2x32xf32>
    %682 = arith.addf %681, %680 : vector<2x32xf32>
    %683 = arith.divf %681, %682 : vector<2x32xf32>
    %cst_322 = arith.constant dense<0.000000e+00> : vector<2x32xf32>
    %684 = tpu.matmul %665, %54, %cst_322 {dimension_numbers = #tpu.dot_dimension_numbers<[1], [0], [0], [1], [0, 0, 1, 1], [], []>} : vector<2x32xf32>, vector<32x32xf32>, vector<2x32xf32> -> vector<2x32xf32>
    %cst_323 = arith.constant dense<0.000000e+00> : vector<2x32xf32>
    %685 = tpu.matmul %624, %62, %cst_323 {dimension_numbers = #tpu.dot_dimension_numbers<[1], [0], [0], [1], [0, 0, 1, 1], [], []>} : vector<2x32xf32>, vector<32x32xf32>, vector<2x32xf32> -> vector<2x32xf32>
    %686 = arith.addf %684, %685 : vector<2x32xf32>
    %687 = arith.addf %686, %76 : vector<2x32xf32>
    %688 = math.tanh %687 : vector<2x32xf32>
    %cst_324 = arith.constant dense<0.000000e+00> : vector<2x32xf32>
    %689 = tpu.matmul %665, %56, %cst_324 {dimension_numbers = #tpu.dot_dimension_numbers<[1], [0], [0], [1], [0, 0, 1, 1], [], []>} : vector<2x32xf32>, vector<32x32xf32>, vector<2x32xf32> -> vector<2x32xf32>
    %cst_325 = arith.constant dense<0.000000e+00> : vector<2x32xf32>
    %690 = tpu.matmul %624, %64, %cst_325 {dimension_numbers = #tpu.dot_dimension_numbers<[1], [0], [0], [1], [0, 0, 1, 1], [], []>} : vector<2x32xf32>, vector<32x32xf32>, vector<2x32xf32> -> vector<2x32xf32>
    %691 = arith.addf %689, %690 : vector<2x32xf32>
    %692 = arith.addf %691, %80 : vector<2x32xf32>
    %693 = arith.negf %692 : vector<2x32xf32>
    %694 = math.exp %693 : vector<2x32xf32>
    %cst_326 = arith.constant 1.000000e+00 : f32
    %695 = vector.broadcast %cst_326 : f32 to vector<2x32xf32>
    %696 = arith.addf %695, %694 : vector<2x32xf32>
    %697 = arith.divf %695, %696 : vector<2x32xf32>
    %698 = arith.mulf %683, %622 : vector<2x32xf32>
    %699 = arith.mulf %674, %688 : vector<2x32xf32>
    %700 = arith.addf %698, %699 : vector<2x32xf32>
    %701 = math.tanh %700 : vector<2x32xf32>
    %702 = arith.mulf %697, %701 : vector<2x32xf32>
    %c7 = arith.constant 7 : index
    %703 = memref.load %arg7[%c7] : memref<8xf32, #tpu.memory_space<smem>>
    %704 = vector.broadcast %703 : f32 to vector<2x32xf32>
    %705 = arith.mulf %704, %702 : vector<2x32xf32>
    %706 = arith.addf %628, %705 : vector<2x32xf32>
    %c0_327 = arith.constant 0 : index
    %707 = memref.load %arg8[%c0_327] : memref<1xf32, #tpu.memory_space<smem>>
    %708 = vector.broadcast %707 : f32 to vector<2x32xf32>
    %709 = arith.addf %706, %708 : vector<2x32xf32>
    %cst_328 = arith.constant 0.000000e+00 : f32
    %710 = vector.broadcast %cst_328 : f32 to vector<2x32xf32>
    %711 = arith.maximumf %709, %710 : vector<2x32xf32>
    %c0_329 = arith.constant 0 : index
    %c0_330 = arith.constant 0 : index
    %712 = vector.load %arg9[%c0_329, %c0_330] : memref<2x32xf32, #tpu.memory_space<vmem>>, vector<2x32xf32>
    tpu.vector_store %arg9[%c0_329, %c0_330], %711 {strides = array<i32>} : memref<2x32xf32, #tpu.memory_space<vmem>>, vector<2x32xf32>,
    return
  }
}

</mosaic_0001>

<llo_original>
// kernel: lstm_forward.1
$region0: #{lstm_forward.1}
  #allocation0 [shape = 'u32[]', space=smem, size = 0x4, offset = 0x4, fixed_abs, tag = 'smem constant byte address 0x4 - core index']
  #allocation1 [shape = 'u32[144,128]{1,0:T(1,128)}', space=vmem, size = 0x12000, scoped, tag = 'internal scratch']
  #allocation2 [shape = 'f32[4,16,32]{2,1,0:T(8,128)}', space=vmem, size = 0x8000, scoped, tag = 'scratch operand']
  #allocation3 [shape = 'f32[1]{0:T(128)S(6)}', space=smem, size = 0x200, scoped, tag = 'scoped memory for lstm_forward.1']
  %s0 = inlined_call_operand.vmem [shape: f32[16,16], index: 0, kind: input, shape index: {}]
  %s1 = inlined_call_operand.vmem [shape: f32[4,16,32], index: 1, kind: input, shape index: {}]
  %s2 = inlined_call_operand.vmem [shape: f32[4,32,32], index: 2, kind: input, shape index: {}]
  %s3 = inlined_call_operand.vmem [shape: f32[4,1,32], index: 3, kind: input, shape index: {}]
  %s4 = inlined_call_operand.vmem [shape: f32[4,32,32], index: 4, kind: input, shape index: {}]
  %s5 = inlined_call_operand.vmem [shape: f32[4,32,32], index: 5, kind: input, shape index: {}]
  %s6 = inlined_call_operand.vmem [shape: f32[4,1,32], index: 6, kind: input, shape index: {}]
  %s7 = inlined_call_operand.vmem [shape: f32[8], index: 7, kind: input, shape index: {}]
  %s8 = inlined_call_operand.<no memory space> [shape: f32[1], index: 8, kind: input, shape index: {}]
  %s9 = inlined_call_operand.hbm [shape: f32[2,32], index: 9, kind: output, shape index: {}]
  %s10 = sld [smem:[#allocation0]]
  $region50: #{lstm_forward.1} parent=0
    _
  %s12 = ssub.s32 1, %s10
  %s13 = scalar_select 0, %s12, %s10
  %14 = sst [smem:[#allocation3]] %s8
  $region1: #{lstm_forward.1} parent=0
    #allocation4 [shape = 'u8[512]{0}', space=smem, size = 0x200, scoped, tag = 'input window, operand 7, single buffered']
    #allocation5 [shape = 's32[1]{0}', space=sflag, size = 0x4, scoped, tag = 'scoped memory for lstm_forward.1']
    #allocation6 [shape = 's32[1]{0}', space=sflag, size = 0x4, scoped, tag = 'scoped memory for lstm_forward.1']
    #allocation7 [shape = 'u8[1024]{0}', space=vmem, size = 0x400, scoped, tag = 'output window, operand 0, single buffered']
    %15 = vsyncpa [#allocation6], 0
    %16 = vsyncpa [#allocation5], 0
    // Predicated region
    $region2: #{lstm_forward.1} parent=1 // pred_check
      _
    $region3: #{lstm_forward.1} parent=1 // pred_check_branch
      %18 = sbr.rel (0) target = $region5
    $region4: #{lstm_forward.1} parent=1 // pred_region
      _
    $region5: #{lstm_forward.1} parent=1 // pred_fallthru
      _
    // Predicated region
    $region6: #{lstm_forward.1} parent=1 // pred_check
      _
    $region7: #{lstm_forward.1} parent=1 // pred_check_branch
      %20 = sbr.rel (0) target = $region9
    $region8: #{lstm_forward.1} parent=1 // pred_region
      _
    $region9: #{lstm_forward.1} parent=1 // pred_fallthru
      _
    // Predicated region
    $region10: #{lstm_forward.1} parent=1 // pred_check
      _
    $region11: #{lstm_forward.1} parent=1 // pred_check_branch
      %22 = sbr.rel (0) target = $region13
    $region12: #{lstm_forward.1} parent=1 // pred_region
      _
    $region13: #{lstm_forward.1} parent=1 // pred_fallthru
      _
    // Predicated region
    $region14: #{lstm_forward.1} parent=1 // pred_check
      _
    $region15: #{lstm_forward.1} parent=1 // pred_check_branch
      %24 = sbr.rel (0) target = $region17
    $region16: #{lstm_forward.1} parent=1 // pred_region
      _
    $region17: #{lstm_forward.1} parent=1 // pred_fallthru
      _
    // Predicated region
    $region18: #{lstm_forward.1} parent=1 // pred_check
      _
    $region19: #{lstm_forward.1} parent=1 // pred_check_branch
      %26 = sbr.rel (0) target = $region21
    $region20: #{lstm_forward.1} parent=1 // pred_region
      _
    $region21: #{lstm_forward.1} parent=1 // pred_fallthru
      _
    // Predicated region
    $region22: #{lstm_forward.1} parent=1 // pred_check
      _
    $region23: #{lstm_forward.1} parent=1 // pred_check_branch
      %28 = sbr.rel (0) target = $region25
    $region24: #{lstm_forward.1} parent=1 // pred_region
      _
    $region25: #{lstm_forward.1} parent=1 // pred_fallthru
      _
    // Predicated region
    $region26: #{lstm_forward.1} parent=1 // pred_check
      _
    $region27: #{lstm_forward.1} parent=1 // pred_check_branch
      %30 = sbr.rel (0) target = $region29
    $region28: #{lstm_forward.1} parent=1 // pred_region
      _
    $region29: #{lstm_forward.1} parent=1 // pred_fallthru
      _
    // Predicated region
    $region30: #{lstm_forward.1} parent=1 // pred_check
      _
    $region31: #{lstm_forward.1} parent=1 // pred_check_branch
      %32 = sbr.rel (0) target = $region33
    $region32: #{lstm_forward.1} parent=1 // pred_region
      %s34 = ssub.s32 16, 16
      %35 = vsyncadd [#allocation6], %s34
      %s37 = sshll.u32 %s7, 4
      %s38 = int_to_ptr.vmem [resolvable:$true] %s37
      %40 = dma.vmem_to_smem %s38, 16, [#allocation4], [#allocation6]
    $region33: #{lstm_forward.1} parent=1 // pred_fallthru
      _
    // Predicated region
    $region34: #{lstm_forward.1} parent=1 // pred_check
      _
    $region35: #{lstm_forward.1} parent=1 // pred_check_branch
      %42 = sbr.rel (0) target = $region37
    $region36: #{lstm_forward.1} parent=1 // pred_region
      _
    $region37: #{lstm_forward.1} parent=1 // pred_fallthru
      _
    // Predicated region
    $region38: #{lstm_forward.1} parent=1 // pred_check
      _
    $region39: #{lstm_forward.1} parent=1 // pred_check_branch
      %44 = sbr.rel (0) target = $region41
    $region40: #{lstm_forward.1} parent=1 // pred_region
      %45 = dma.done [#allocation6], 16
    $region41: #{lstm_forward.1} parent=1 // pred_fallthru
      _
    %46 = sfence
    %v47 = vld [vmem:[%s0] sm:$0xff]
    %v48 = vld [vmem:[%s0 + $0x8] sm:$0xff]
    %v49 = vld [vmem:[%s1] sm:$0xff]
    %v50 = vld [vmem:[%s1 + $0x8] sm:$0xff]
    %v51 = vld [vmem:[%s3] sm:$0x1]
    %v53 = vlaneseq
    %v54 = vshrl.u32 %v53, 7
    %v55 = vsub.s32 0, %v54
    %v56 = vrot.slane %v51, %v55
    %vm58 = vcmask 130048
    %v60 = vsel %vm58, %v47, 0
    %v63 = vsel %vm58, %v48, 0
    %65 = vmatprep.subr.mxu0 0.0
    %66 = vmatpush1.msra.mxu0 0.0
    %67 = vmatprep.subr.mxu0 0.0
    %68 = vmatpush1.msra.mxu0 0.0
    %69 = vmatprep.subr.mxu0 0.0
    %70 = vmatpush1.msra.mxu0 0.0
    %71 = vmatprep.subr.mxu0 0.0
    %72 = vmatpush1.msra.mxu0 0.0
    %73 = vmatprep.subr.mxu0 0.0
    %74 = vmatpush1.msra.mxu0 0.0
    %75 = vmatprep.subr.mxu0 0.0
    %76 = vmatpush1.msra.mxu0 0.0
    %77 = vmatprep.subr.mxu0 0.0
    %78 = vmatpush1.msra.mxu0 0.0
    %79 = vmatprep.subr.mxu0 0.0
    %80 = vmatpush1.msra.mxu0 0.0
    %81 = vmatprep.subr.mxu0 0.0
    %82 = vmatpush1.msra.mxu0 0.0
    %83 = vmatprep.subr.mxu0 0.0
    %84 = vmatpush1.msra.mxu0 0.0
    %85 = vmatprep.subr.mxu0 0.0
    %86 = vmatpush1.msra.mxu0 0.0
    %87 = vmatprep.subr.mxu0 0.0
    %88 = vmatpush1.msra.mxu0 0.0
    %89 = vmatprep.subr.mxu0 0.0
    %90 = vmatpush1.msra.mxu0 0.0
    %91 = vmatprep.subr.mxu0 0.0
    %92 = vmatpush1.msra.mxu0 0.0
    %93 = vmatprep.subr.mxu0 0.0
    %94 = vmatpush1.msra.mxu0 %v50
    %95 = vmatprep.subr.mxu0 0.0
    %96 = vmatpush1.msra.mxu0 %v49
    %97 = vmatprep.subr.mxu0 0.0
    %98 = vmatpush2.msra.mxu0 0.0
    %99 = vmatprep.subr.mxu0 0.0
    %100 = vmatpush2.msra.mxu0 0.0
    %101 = vmatprep.subr.mxu0 0.0
    %102 = vmatpush2.msra.mxu0 0.0
    %103 = vmatprep.subr.mxu0 0.0
    %104 = vmatpush2.msra.mxu0 0.0
    %105 = vmatprep.subr.mxu0 0.0
    %106 = vmatpush2.msra.mxu0 0.0
    %107 = vmatprep.subr.mxu0 0.0
    %108 = vmatpush2.msra.mxu0 0.0
    %109 = vmatprep.subr.mxu0 0.0
    %110 = vmatpush2.msra.mxu0 0.0
    %111 = vmatprep.subr.mxu0 0.0
    %112 = vmatpush2.msra.mxu0 0.0
    %113 = vmatprep.subr.mxu0 0.0
    %114 = vmatpush2.msra.mxu0 0.0
    %115 = vmatprep.subr.mxu0 0.0
    %116 = vmatpush2.msra.mxu0 0.0
    %117 = vmatprep.subr.mxu0 0.0
    %118 = vmatpush2.msra.mxu0 0.0
    %119 = vmatprep.subr.mxu0 0.0
    %120 = vmatpush2.msra.mxu0 0.0
    %121 = vmatprep.subr.mxu0 0.0
    %122 = vmatpush2.msra.mxu0 0.0
    %123 = vmatprep.subr.mxu0 0.0
    %124 = vmatpush2.msra.mxu0 0.0
    %125 = vmatprep.subr.mxu0 0.0
    %126 = vmatpush2.msra.mxu0 0.0
    %127 = vmatprep.subr.mxu0 0.0
    %128 = vmatpush2.msra.mxu0 0.0
    %129 = vmatprep.mubr.f32.mxu0 0.0
    %130 = vmatmul.mubr.f32.gmra.mxu0 %v60
    %v131 = vpop.f32.mrf.mxu0
    %v132 = vadd.f32 %v56, %v131
    %v133 = vpop.f32.mrf.mxu0
    %134 = vmatprep.mubr.f32.mxu0 0.0
    %135 = vmatmul.mubr.f32.gmra.mxu0 %v63
    %v136 = vpop.f32.mrf.mxu0
    %v137 = vadd.f32 %v56, %v136
    %v138 = vpop.f32.mrf.mxu0
    %139 = vdwg.mxu0
    %vm140 = vcmask 261120
    %141 = vst.msk [vmem:[#allocation2] sm:$0xff] %vm140, %v132
    %142 = vst.msk [vmem:[#allocation2 + $0x8] sm:$0xff] %vm140, %v137
    %s143 = scalar_lea.vmem %s1, 16
    %v144 = vld [vmem:[%s143] sm:$0xff]
    %v145 = vld [vmem:[%s143 + $0x8] sm:$0xff]
    %s146 = scalar_lea.vmem %s3, 1
    %v147 = vld [vmem:[%s146] sm:$0x1]
    %v149 = vlaneseq
    %v150 = vshrl.u32 %v149, 7
    %v151 = vsub.s32 0, %v150
    %v152 = vrot.slane %v147, %v151
    %154 = vmatprep.subr.mxu0 0.0
    %155 = vmatpush1.msra.mxu0 0.0
    %156 = vmatprep.subr.mxu0 0.0
    %157 = vmatpush1.msra.mxu0 0.0
    %158 = vmatprep.subr.mxu0 0.0
    %159 = vmatpush1.msra.mxu0 0.0
    %160 = vmatprep.subr.mxu0 0.0
    %161 = vmatpush1.msra.mxu0 0.0
    %162 = vmatprep.subr.mxu0 0.0
    %163 = vmatpush1.msra.mxu0 0.0
    %164 = vmatprep.subr.mxu0 0.0
    %165 = vmatpush1.msra.mxu0 0.0
    %166 = vmatprep.subr.mxu0 0.0
    %167 = vmatpush1.msra.mxu0 0.0
    %168 = vmatprep.subr.mxu0 0.0
    %169 = vmatpush1.msra.mxu0 0.0
    %170 = vmatprep.subr.mxu0 0.0
    %171 = vmatpush1.msra.mxu0 0.0
    %172 = vmatprep.subr.mxu0 0.0
    %173 = vmatpush1.msra.mxu0 0.0
    %174 = vmatprep.subr.mxu0 0.0
    %175 = vmatpush1.msra.mxu0 0.0
    %176 = vmatprep.subr.mxu0 0.0
    %177 = vmatpush1.msra.mxu0 0.0
    %178 = vmatprep.subr.mxu0 0.0
    %179 = vmatpush1.msra.mxu0 0.0
    %180 = vmatprep.subr.mxu0 0.0
    %181 = vmatpush1.msra.mxu0 0.0
    %182 = vmatprep.subr.mxu0 0.0
    %183 = vmatpush1.msra.mxu0 %v145
    %184 = vmatprep.subr.mxu0 0.0
    %185 = vmatpush1.msra.mxu0 %v144
    %186 = vmatprep.subr.mxu0 0.0
    %187 = vmatpush2.msra.mxu0 0.0
    %188 = vmatprep.subr.mxu0 0.0
    %189 = vmatpush2.msra.mxu0 0.0
    %190 = vmatprep.subr.mxu0 0.0
    %191 = vmatpush2.msra.mxu0 0.0
    %192 = vmatprep.subr.mxu0 0.0
    %193 = vmatpush2.msra.mxu0 0.0
    %194 = vmatprep.subr.mxu0 0.0
    %195 = vmatpush2.msra.mxu0 0.0
    %196 = vmatprep.subr.mxu0 0.0
    %197 = vmatpush2.msra.mxu0 0.0
    %198 = vmatprep.subr.mxu0 0.0
    %199 = vmatpush2.msra.mxu0 0.0
    %200 = vmatprep.subr.mxu0 0.0
    %201 = vmatpush2.msra.mxu0 0.0
    %202 = vmatprep.subr.mxu0 0.0
    %203 = vmatpush2.msra.mxu0 0.0
    %204 = vmatprep.subr.mxu0 0.0
    %205 = vmatpush2.msra.mxu0 0.0
    %206 = vmatprep.subr.mxu0 0.0
    %207 = vmatpush2.msra.mxu0 0.0
    %208 = vmatprep.subr.mxu0 0.0
    %209 = vmatpush2.msra.mxu0 0.0
    %210 = vmatprep.subr.mxu0 0.0
    %211 = vmatpush2.msra.mxu0 0.0
    %212 = vmatprep.subr.mxu0 0.0
    %213 = vmatpush2.msra.mxu0 0.0
    %214 = vmatprep.subr.mxu0 0.0
    %215 = vmatpush2.msra.mxu0 0.0
    %216 = vmatprep.subr.mxu0 0.0
    %217 = vmatpush2.msra.mxu0 0.0
    %218 = vmatprep.mubr.f32.mxu0 0.0
    %219 = vmatmul.mubr.f32.gmra.mxu0 %v60
    %v220 = vpop.f32.mrf.mxu0
    %v221 = vadd.f32 %v152, %v220
    %v222 = vpop.f32.mrf.mxu0
    %223 = vmatprep.mubr.f32.mxu0 0.0
    %224 = vmatmul.mubr.f32.gmra.mxu0 %v63
    %v225 = vpop.f32.mrf.mxu0
    %v226 = vadd.f32 %v152, %v225
    %v227 = vpop.f32.mrf.mxu0
    %228 = vdwg.mxu0
    %s229 = scalar_lea.vmem [#allocation2], 16
    %230 = vst.msk [vmem:[%s229] sm:$0xff] %vm140, %v221
    %231 = vst.msk [vmem:[%s229 + $0x8] sm:$0xff] %vm140, %v226
    %s232 = scalar_lea.vmem %s1, 32
    %v233 = vld [vmem:[%s232] sm:$0xff]
    %v234 = vld [vmem:[%s232 + $0x8] sm:$0xff]
    %s235 = scalar_lea.vmem %s3, 2
    %v236 = vld [vmem:[%s235] sm:$0x1]
    %v238 = vlaneseq
    %v239 = vshrl.u32 %v238, 7
    %v240 = vsub.s32 0, %v239
    %v241 = vrot.slane %v236, %v240
    %243 = vmatprep.subr.mxu0 0.0
    %244 = vmatpush1.msra.mxu0 0.0
    %245 = vmatprep.subr.mxu0 0.0
    %246 = vmatpush1.msra.mxu0 0.0
    %247 = vmatprep.subr.mxu0 0.0
    %248 = vmatpush1.msra.mxu0 0.0
    %249 = vmatprep.subr.mxu0 0.0
    %250 = vmatpush1.msra.mxu0 0.0
    %251 = vmatprep.subr.mxu0 0.0
    %252 = vmatpush1.msra.mxu0 0.0
    %253 = vmatprep.subr.mxu0 0.0
    %254 = vmatpush1.msra.mxu0 0.0
    %255 = vmatprep.subr.mxu0 0.0
    %256 = vmatpush1.msra.mxu0 0.0
    %257 = vmatprep.subr.mxu0 0.0
    %258 = vmatpush1.msra.mxu0 0.0
    %259 = vmatprep.subr.mxu0 0.0
    %260 = vmatpush1.msra.mxu0 0.0
    %261 = vmatprep.subr.mxu0 0.0
    %262 = vmatpush1.msra.mxu0 0.0
    %263 = vmatprep.subr.mxu0 0.0
    %264 = vmatpush1.msra.mxu0 0.0
    %265 = vmatprep.subr.mxu0 0.0
    %266 = vmatpush1.msra.mxu0 0.0
    %267 = vmatprep.subr.mxu0 0.0
    %268 = vmatpush1.msra.mxu0 0.0
    %269 = vmatprep.subr.mxu0 0.0
    %270 = vmatpush1.msra.mxu0 0.0
    %271 = vmatprep.subr.mxu0 0.0
    %272 = vmatpush1.msra.mxu0 %v234
    %273 = vmatprep.subr.mxu0 0.0
    %274 = vmatpush1.msra.mxu0 %v233
    %275 = vmatprep.subr.mxu0 0.0
    %276 = vmatpush2.msra.mxu0 0.0
    %277 = vmatprep.subr.mxu0 0.0
    %278 = vmatpush2.msra.mxu0 0.0
    %279 = vmatprep.subr.mxu0 0.0
    %280 = vmatpush2.msra.mxu0 0.0
    %281 = vmatprep.subr.mxu0 0.0
    %282 = vmatpush2.msra.mxu0 0.0
    %283 = vmatprep.subr.mxu0 0.0
    %284 = vmatpush2.msra.mxu0 0.0
    %285 = vmatprep.subr.mxu0 0.0
    %286 = vmatpush2.msra.mxu0 0.0
    %287 = vmatprep.subr.mxu0 0.0
    %288 = vmatpush2.msra.mxu0 0.0
    %289 = vmatprep.subr.mxu0 0.0
    %290 = vmatpush2.msra.mxu0 0.0
    %291 = vmatprep.subr.mxu0 0.0
    %292 = vmatpush2.msra.mxu0 0.0
    %293 = vmatprep.subr.mxu0 0.0
    %294 = vmatpush2.msra.mxu0 0.0
    %295 = vmatprep.subr.mxu0 0.0
    %296 = vmatpush2.msra.mxu0 0.0
    %297 = vmatprep.subr.mxu0 0.0
    %298 = vmatpush2.msra.mxu0 0.0
    %299 = vmatprep.subr.mxu0 0.0
    %300 = vmatpush2.msra.mxu0 0.0
    %301 = vmatprep.subr.mxu0 0.0
    %302 = vmatpush2.msra.mxu0 0.0
    %303 = vmatprep.subr.mxu0 0.0
    %304 = vmatpush2.msra.mxu0 0.0
    %305 = vmatprep.subr.mxu0 0.0
    %306 = vmatpush2.msra.mxu0 0.0
    %307 = vmatprep.mubr.f32.mxu0 0.0
    %308 = vmatmul.mubr.f32.gmra.mxu0 %v60
    %v309 = vpop.f32.mrf.mxu0
    %v310 = vadd.f32 %v241, %v309
    %v311 = vpop.f32.mrf.mxu0
    %312 = vmatprep.mubr.f32.mxu0 0.0
    %313 = vmatmul.mubr.f32.gmra.mxu0 %v63
    %v314 = vpop.f32.mrf.mxu0
    %v315 = vadd.f32 %v241, %v314
    %v316 = vpop.f32.mrf.mxu0
    %317 = vdwg.mxu0
    %s318 = scalar_lea.vmem [#allocation2], 32
    %319 = vst.msk [vmem:[%s318] sm:$0xff] %vm140, %v310
    %320 = vst.msk [vmem:[%s318 + $0x8] sm:$0xff] %vm140, %v315
    %s321 = scalar_lea.vmem %s1, 48
    %v322 = vld [vmem:[%s321] sm:$0xff]
    %v323 = vld [vmem:[%s321 + $0x8] sm:$0xff]
    %s324 = scalar_lea.vmem %s3, 3
    %v325 = vld [vmem:[%s324] sm:$0x1]
    %v327 = vlaneseq
    %v328 = vshrl.u32 %v327, 7
    %v329 = vsub.s32 0, %v328
    %v330 = vrot.slane %v325, %v329
    %332 = vmatprep.subr.mxu0 0.0
    %333 = vmatpush1.msra.mxu0 0.0
    %334 = vmatprep.subr.mxu0 0.0
    %335 = vmatpush1.msra.mxu0 0.0
    %336 = vmatprep.subr.mxu0 0.0
    %337 = vmatpush1.msra.mxu0 0.0
    %338 = vmatprep.subr.mxu0 0.0
    %339 = vmatpush1.msra.mxu0 0.0
    %340 = vmatprep.subr.mxu0 0.0
    %341 = vmatpush1.msra.mxu0 0.0
    %342 = vmatprep.subr.mxu0 0.0
    %343 = vmatpush1.msra.mxu0 0.0
    %344 = vmatprep.subr.mxu0 0.0
    %345 = vmatpush1.msra.mxu0 0.0
    %346 = vmatprep.subr.mxu0 0.0
    %347 = vmatpush1.msra.mxu0 0.0
    %348 = vmatprep.subr.mxu0 0.0
    %349 = vmatpush1.msra.mxu0 0.0
    %350 = vmatprep.subr.mxu0 0.0
    %351 = vmatpush1.msra.mxu0 0.0
    %352 = vmatprep.subr.mxu0 0.0
    %353 = vmatpush1.msra.mxu0 0.0
    %354 = vmatprep.subr.mxu0 0.0
    %355 = vmatpush1.msra.mxu0 0.0
    %356 = vmatprep.subr.mxu0 0.0
    %357 = vmatpush1.msra.mxu0 0.0
    %358 = vmatprep.subr.mxu0 0.0
    %359 = vmatpush1.msra.mxu0 0.0
    %360 = vmatprep.subr.mxu0 0.0
    %361 = vmatpush1.msra.mxu0 %v323
    %362 = vmatprep.subr.mxu0 0.0
    %363 = vmatpush1.msra.mxu0 %v322
    %364 = vmatprep.subr.mxu0 0.0
    %365 = vmatpush2.msra.mxu0 0.0
    %366 = vmatprep.subr.mxu0 0.0
    %367 = vmatpush2.msra.mxu0 0.0
    %368 = vmatprep.subr.mxu0 0.0
    %369 = vmatpush2.msra.mxu0 0.0
    %370 = vmatprep.subr.mxu0 0.0
    %371 = vmatpush2.msra.mxu0 0.0
    %372 = vmatprep.subr.mxu0 0.0
    %373 = vmatpush2.msra.mxu0 0.0
    %374 = vmatprep.subr.mxu0 0.0
    %375 = vmatpush2.msra.mxu0 0.0
    %376 = vmatprep.subr.mxu0 0.0
    %377 = vmatpush2.msra.mxu0 0.0
    %378 = vmatprep.subr.mxu0 0.0
    %379 = vmatpush2.msra.mxu0 0.0
    %380 = vmatprep.subr.mxu0 0.0
    %381 = vmatpush2.msra.mxu0 0.0
    %382 = vmatprep.subr.mxu0 0.0
    %383 = vmatpush2.msra.mxu0 0.0
    %384 = vmatprep.subr.mxu0 0.0
    %385 = vmatpush2.msra.mxu0 0.0
    %386 = vmatprep.subr.mxu0 0.0
    %387 = vmatpush2.msra.mxu0 0.0
    %388 = vmatprep.subr.mxu0 0.0
    %389 = vmatpush2.msra.mxu0 0.0
    %390 = vmatprep.subr.mxu0 0.0
    %391 = vmatpush2.msra.mxu0 0.0
    %392 = vmatprep.subr.mxu0 0.0
    %393 = vmatpush2.msra.mxu0 0.0
    %394 = vmatprep.subr.mxu0 0.0
    %395 = vmatpush2.msra.mxu0 0.0
    %396 = vmatprep.mubr.f32.mxu0 0.0
    %397 = vmatmul.mubr.f32.gmra.mxu0 %v60
    %v398 = vpop.f32.mrf.mxu0
    %v399 = vadd.f32 %v330, %v398
    %v400 = vpop.f32.mrf.mxu0
    %401 = vmatprep.mubr.f32.mxu0 0.0
    %402 = vmatmul.mubr.f32.gmra.mxu0 %v63
    %v403 = vpop.f32.mrf.mxu0
    %v404 = vadd.f32 %v330, %v403
    %v405 = vpop.f32.mrf.mxu0
    %406 = vdwg.mxu0
    %s407 = scalar_lea.vmem [#allocation2], 48
    %408 = vst.msk [vmem:[%s407] sm:$0xff] %vm140, %v399
    %409 = vst.msk [vmem:[%s407 + $0x8] sm:$0xff] %vm140, %v404
    %v410 = vld [vmem:[%s2] sm:$0xff]
    %v411 = vld [vmem:[%s2 + $0x8] sm:$0xff]
    %v412 = vld [vmem:[%s2 + $0x10] sm:$0xff]
    %v413 = vld [vmem:[%s2 + $0x18] sm:$0xff]
    %s414 = scalar_lea.vmem %s2, 32
    %v415 = vld [vmem:[%s414] sm:$0xff]
    %v416 = vld [vmem:[%s414 + $0x8] sm:$0xff]
    %v417 = vld [vmem:[%s414 + $0x10] sm:$0xff]
    %v418 = vld [vmem:[%s414 + $0x18] sm:$0xff]
    %s419 = scalar_lea.vmem %s2, 64
    %v420 = vld [vmem:[%s419] sm:$0xff]
    %v421 = vld [vmem:[%s419 + $0x8] sm:$0xff]
    %v422 = vld [vmem:[%s419 + $0x10] sm:$0xff]
    %v423 = vld [vmem:[%s419 + $0x18] sm:$0xff]
    %s424 = scalar_lea.vmem %s2, 96
    %v425 = vld [vmem:[%s424] sm:$0xff]
    %v426 = vld [vmem:[%s424 + $0x8] sm:$0xff]
    %v427 = vld [vmem:[%s424 + $0x10] sm:$0xff]
    %v428 = vld [vmem:[%s424 + $0x18] sm:$0xff]
    %v429 = vld [vmem:[%s4] sm:$0xff]
    %v430 = vld [vmem:[%s4 + $0x8] sm:$0xff]
    %v431 = vld [vmem:[%s4 + $0x10] sm:$0xff]
    %v432 = vld [vmem:[%s4 + $0x18] sm:$0xff]
    %s433 = scalar_lea.vmem %s4, 32
    %v434 = vld [vmem:[%s433] sm:$0xff]
    %v435 = vld [vmem:[%s433 + $0x8] sm:$0xff]
    %v436 = vld [vmem:[%s433 + $0x10] sm:$0xff]
    %v437 = vld [vmem:[%s433 + $0x18] sm:$0xff]
    %s438 = scalar_lea.vmem %s4, 64
    %v439 = vld [vmem:[%s438] sm:$0xff]
    %v440 = vld [vmem:[%s438 + $0x8] sm:$0xff]
    %v441 = vld [vmem:[%s438 + $0x10] sm:$0xff]
    %v442 = vld [vmem:[%s438 + $0x18] sm:$0xff]
    %s443 = scalar_lea.vmem %s4, 96
    %v444 = vld [vmem:[%s443] sm:$0xff]
    %v445 = vld [vmem:[%s443 + $0x8] sm:$0xff]
    %v446 = vld [vmem:[%s443 + $0x10] sm:$0xff]
    %v447 = vld [vmem:[%s443 + $0x18] sm:$0xff]
    %v448 = vld [vmem:[%s5] sm:$0xff]
    %v449 = vld [vmem:[%s5 + $0x8] sm:$0xff]
    %v450 = vld [vmem:[%s5 + $0x10] sm:$0xff]
    %v451 = vld [vmem:[%s5 + $0x18] sm:$0xff]
    %s452 = scalar_lea.vmem %s5, 32
    %v453 = vld [vmem:[%s452] sm:$0xff]
    %v454 = vld [vmem:[%s452 + $0x8] sm:$0xff]
    %v455 = vld [vmem:[%s452 + $0x10] sm:$0xff]
    %v456 = vld [vmem:[%s452 + $0x18] sm:$0xff]
    %s457 = scalar_lea.vmem %s5, 64
    %v458 = vld [vmem:[%s457] sm:$0xff]
    %v459 = vld [vmem:[%s457 + $0x8] sm:$0xff]
    %v460 = vld [vmem:[%s457 + $0x10] sm:$0xff]
    %v461 = vld [vmem:[%s457 + $0x18] sm:$0xff]
    %s462 = scalar_lea.vmem %s5, 96
    %v463 = vld [vmem:[%s462] sm:$0xff]
    %v464 = vld [vmem:[%s462 + $0x8] sm:$0xff]
    %v465 = vld [vmem:[%s462 + $0x10] sm:$0xff]
    %v466 = vld [vmem:[%s462 + $0x18] sm:$0xff]
    %v467 = vld [vmem:[%s6] sm:$0x1]
    %v469 = vlaneseq
    %v470 = vshrl.u32 %v469, 7
    %v471 = vsub.s32 0, %v470
    %v472 = vrot.slane %v467, %v471
    %s474 = scalar_lea.vmem %s6, 1
    %v475 = vld [vmem:[%s474] sm:$0x1]
    %v477 = vlaneseq
    %v478 = vshrl.u32 %v477, 7
    %v479 = vsub.s32 0, %v478
    %v480 = vrot.slane %v475, %v479
    %s482 = scalar_lea.vmem %s6, 2
    %v483 = vld [vmem:[%s482] sm:$0x1]
    %v485 = vlaneseq
    %v486 = vshrl.u32 %v485, 7
    %v487 = vsub.s32 0, %v486
    %v488 = vrot.slane %v483, %v487
    %s490 = scalar_lea.vmem %s6, 3
    %v491 = vld [vmem:[%s490] sm:$0x1]
    %v493 = vlaneseq
    %v494 = vshrl.u32 %v493, 7
    %v495 = vsub.s32 0, %v494
    %v496 = vrot.slane %v491, %v495
    %v498 = vld [vmem:[#allocation2] sm:$0x3]
    %v500 = vsel %vm140, 0.0, 0
    %502 = vmatprep.subr.mxu0 0.0
    %503 = vmatpush1.msra.mxu0 0.0
    %504 = vmatprep.subr.mxu0 0.0
    %505 = vmatpush1.msra.mxu0 0.0
    %506 = vmatprep.subr.mxu0 0.0
    %507 = vmatpush1.msra.mxu0 0.0
    %508 = vmatprep.subr.mxu0 0.0
    %509 = vmatpush1.msra.mxu0 0.0
    %510 = vmatprep.subr.mxu0 0.0
    %511 = vmatpush1.msra.mxu0 0.0
    %512 = vmatprep.subr.mxu0 0.0
    %513 = vmatpush1.msra.mxu0 0.0
    %514 = vmatprep.subr.mxu0 0.0
    %515 = vmatpush1.msra.mxu0 0.0
    %516 = vmatprep.subr.mxu0 0.0
    %517 = vmatpush1.msra.mxu0 0.0
    %518 = vmatprep.subr.mxu0 0.0
    %519 = vmatpush1.msra.mxu0 0.0
    %520 = vmatprep.subr.mxu0 0.0
    %521 = vmatpush1.msra.mxu0 0.0
    %522 = vmatprep.subr.mxu0 0.0
    %523 = vmatpush1.msra.mxu0 0.0
    %524 = vmatprep.subr.mxu0 0.0
    %525 = vmatpush1.msra.mxu0 0.0
    %526 = vmatprep.subr.mxu0 0.0
    %527 = vmatpush1.msra.mxu0 %v413
    %528 = vmatprep.subr.mxu0 0.0
    %529 = vmatpush1.msra.mxu0 %v412
    %530 = vmatprep.subr.mxu0 0.0
    %531 = vmatpush1.msra.mxu0 %v411
    %532 = vmatprep.subr.mxu0 0.0
    %533 = vmatpush1.msra.mxu0 %v410
    %534 = vmatprep.subr.mxu0 0.0
    %535 = vmatpush2.msra.mxu0 0.0
    %536 = vmatprep.subr.mxu0 0.0
    %537 = vmatpush2.msra.mxu0 0.0
    %538 = vmatprep.subr.mxu0 0.0
    %539 = vmatpush2.msra.mxu0 0.0
    %540 = vmatprep.subr.mxu0 0.0
    %541 = vmatpush2.msra.mxu0 0.0
    %542 = vmatprep.subr.mxu0 0.0
    %543 = vmatpush2.msra.mxu0 0.0
    %544 = vmatprep.subr.mxu0 0.0
    %545 = vmatpush2.msra.mxu0 0.0
    %546 = vmatprep.subr.mxu0 0.0
    %547 = vmatpush2.msra.mxu0 0.0
    %548 = vmatprep.subr.mxu0 0.0
    %549 = vmatpush2.msra.mxu0 0.0
    %550 = vmatprep.subr.mxu0 0.0
    %551 = vmatpush2.msra.mxu0 0.0
    %552 = vmatprep.subr.mxu0 0.0
    %553 = vmatpush2.msra.mxu0 0.0
    %554 = vmatprep.subr.mxu0 0.0
    %555 = vmatpush2.msra.mxu0 0.0
    %556 = vmatprep.subr.mxu0 0.0
    %557 = vmatpush2.msra.mxu0 0.0
    %558 = vmatprep.subr.mxu0 0.0
    %559 = vmatpush2.msra.mxu0 0.0
    %560 = vmatprep.subr.mxu0 0.0
    %561 = vmatpush2.msra.mxu0 0.0
    %562 = vmatprep.subr.mxu0 0.0
    %563 = vmatpush2.msra.mxu0 0.0
    %564 = vmatprep.subr.mxu0 0.0
    %565 = vmatpush2.msra.mxu0 0.0
    %566 = vmatprep.mubr.f32.mxu0 0.0
    %567 = vmatmul.mubr.f32.gmra.mxu0 %v500
    %v568 = vpop.f32.mrf.mxu0
    %v569 = vadd.f32 0.0, %v568
    %v570 = vpop.f32.mrf.mxu0
    %571 = vdwg.mxu0
    %v572 = vadd.f32 %v498, %v569
    %v573 = vxor.u32 %v572, 2147483648
    %v574 = vmul.f32 %v573, 1.442695
    %v575 = vpow.pop %v574
    %v576 = vadd.f32 %v575, 1.0
    %v577 = vrcp.pop %v576
    %v578 = vmul.f32 1.0, %v577
    %v579 = vld [vmem:[%s229] sm:$0x3]
    %580 = vmatprep.subr.mxu0 0.0
    %581 = vmatpush1.msra.mxu0 0.0
    %582 = vmatprep.subr.mxu0 0.0
    %583 = vmatpush1.msra.mxu0 0.0
    %584 = vmatprep.subr.mxu0 0.0
    %585 = vmatpush1.msra.mxu0 0.0
    %586 = vmatprep.subr.mxu0 0.0
    %587 = vmatpush1.msra.mxu0 0.0
    %588 = vmatprep.subr.mxu0 0.0
    %589 = vmatpush1.msra.mxu0 0.0
    %590 = vmatprep.subr.mxu0 0.0
    %591 = vmatpush1.msra.mxu0 0.0
    %592 = vmatprep.subr.mxu0 0.0
    %593 = vmatpush1.msra.mxu0 0.0
    %594 = vmatprep.subr.mxu0 0.0
    %595 = vmatpush1.msra.mxu0 0.0
    %596 = vmatprep.subr.mxu0 0.0
    %597 = vmatpush1.msra.mxu0 0.0
    %598 = vmatprep.subr.mxu0 0.0
    %599 = vmatpush1.msra.mxu0 0.0
    %600 = vmatprep.subr.mxu0 0.0
    %601 = vmatpush1.msra.mxu0 0.0
    %602 = vmatprep.subr.mxu0 0.0
    %603 = vmatpush1.msra.mxu0 0.0
    %604 = vmatprep.subr.mxu0 0.0
    %605 = vmatpush1.msra.mxu0 %v418
    %606 = vmatprep.subr.mxu0 0.0
    %607 = vmatpush1.msra.mxu0 %v417
    %608 = vmatprep.subr.mxu0 0.0
    %609 = vmatpush1.msra.mxu0 %v416
    %610 = vmatprep.subr.mxu0 0.0
    %611 = vmatpush1.msra.mxu0 %v415
    %612 = vmatprep.subr.mxu0 0.0
    %613 = vmatpush2.msra.mxu0 0.0
    %614 = vmatprep.subr.mxu0 0.0
    %615 = vmatpush2.msra.mxu0 0.0
    %616 = vmatprep.subr.mxu0 0.0
    %617 = vmatpush2.msra.mxu0 0.0
    %618 = vmatprep.subr.mxu0 0.0
    %619 = vmatpush2.msra.mxu0 0.0
    %620 = vmatprep.subr.mxu0 0.0
    %621 = vmatpush2.msra.mxu0 0.0
    %622 = vmatprep.subr.mxu0 0.0
    %623 = vmatpush2.msra.mxu0 0.0
    %624 = vmatprep.subr.mxu0 0.0
    %625 = vmatpush2.msra.mxu0 0.0
    %626 = vmatprep.subr.mxu0 0.0
    %627 = vmatpush2.msra.mxu0 0.0
    %628 = vmatprep.subr.mxu0 0.0
    %629 = vmatpush2.msra.mxu0 0.0
    %630 = vmatprep.subr.mxu0 0.0
    %631 = vmatpush2.msra.mxu0 0.0
    %632 = vmatprep.subr.mxu0 0.0
    %633 = vmatpush2.msra.mxu0 0.0
    %634 = vmatprep.subr.mxu0 0.0
    %635 = vmatpush2.msra.mxu0 0.0
    %636 = vmatprep.subr.mxu0 0.0
    %637 = vmatpush2.msra.mxu0 0.0
    %638 = vmatprep.subr.mxu0 0.0
    %639 = vmatpush2.msra.mxu0 0.0
    %640 = vmatprep.subr.mxu0 0.0
    %641 = vmatpush2.msra.mxu0 0.0
    %642 = vmatprep.subr.mxu0 0.0
    %643 = vmatpush2.msra.mxu0 0.0
    %644 = vmatprep.mubr.f32.mxu0 0.0
    %645 = vmatmul.mubr.f32.gmra.mxu0 %v500
    %v646 = vpop.f32.mrf.mxu0
    %v647 = vadd.f32 0.0, %v646
    %v648 = vpop.f32.mrf.mxu0
    %649 = vdwg.mxu0
    %v650 = vadd.f32 %v579, %v647
    %v651 = vxor.u32 %v650, 2147483648
    %v652 = vmul.f32 %v651, 1.442695
    %v653 = vpow.pop %v652
    %v654 = vadd.f32 %v653, 1.0
    %v655 = vrcp.pop %v654
    %v656 = vmul.f32 1.0, %v655
    %v657 = vld [vmem:[%s318] sm:$0x3]
    %658 = vmatprep.subr.mxu0 0.0
    %659 = vmatpush1.msra.mxu0 0.0
    %660 = vmatprep.subr.mxu0 0.0
    %661 = vmatpush1.msra.mxu0 0.0
    %662 = vmatprep.subr.mxu0 0.0
    %663 = vmatpush1.msra.mxu0 0.0
    %664 = vmatprep.subr.mxu0 0.0
    %665 = vmatpush1.msra.mxu0 0.0
    %666 = vmatprep.subr.mxu0 0.0
    %667 = vmatpush1.msra.mxu0 0.0
    %668 = vmatprep.subr.mxu0 0.0
    %669 = vmatpush1.msra.mxu0 0.0
    %670 = vmatprep.subr.mxu0 0.0
    %671 = vmatpush1.msra.mxu0 0.0
    %672 = vmatprep.subr.mxu0 0.0
    %673 = vmatpush1.msra.mxu0 0.0
    %674 = vmatprep.subr.mxu0 0.0
    %675 = vmatpush1.msra.mxu0 0.0
    %676 = vmatprep.subr.mxu0 0.0
    %677 = vmatpush1.msra.mxu0 0.0
    %678 = vmatprep.subr.mxu0 0.0
    %679 = vmatpush1.msra.mxu0 0.0
    %680 = vmatprep.subr.mxu0 0.0
    %681 = vmatpush1.msra.mxu0 0.0
    %682 = vmatprep.subr.mxu0 0.0
    %683 = vmatpush1.msra.mxu0 %v423
    %684 = vmatprep.subr.mxu0 0.0
    %685 = vmatpush1.msra.mxu0 %v422
    %686 = vmatprep.subr.mxu0 0.0
    %687 = vmatpush1.msra.mxu0 %v421
    %688 = vmatprep.subr.mxu0 0.0
    %689 = vmatpush1.msra.mxu0 %v420
    %690 = vmatprep.subr.mxu0 0.0
    %691 = vmatpush2.msra.mxu0 0.0
    %692 = vmatprep.subr.mxu0 0.0
    %693 = vmatpush2.msra.mxu0 0.0
    %694 = vmatprep.subr.mxu0 0.0
    %695 = vmatpush2.msra.mxu0 0.0
    %696 = vmatprep.subr.mxu0 0.0
    %697 = vmatpush2.msra.mxu0 0.0
    %698 = vmatprep.subr.mxu0 0.0
    %699 = vmatpush2.msra.mxu0 0.0
    %700 = vmatprep.subr.mxu0 0.0
    %701 = vmatpush2.msra.mxu0 0.0
    %702 = vmatprep.subr.mxu0 0.0
    %703 = vmatpush2.msra.mxu0 0.0
    %704 = vmatprep.subr.mxu0 0.0
    %705 = vmatpush2.msra.mxu0 0.0
    %706 = vmatprep.subr.mxu0 0.0
    %707 = vmatpush2.msra.mxu0 0.0
    %708 = vmatprep.subr.mxu0 0.0
    %709 = vmatpush2.msra.mxu0 0.0
    %710 = vmatprep.subr.mxu0 0.0
    %711 = vmatpush2.msra.mxu0 0.0
    %712 = vmatprep.subr.mxu0 0.0
    %713 = vmatpush2.msra.mxu0 0.0
    %714 = vmatprep.subr.mxu0 0.0
    %715 = vmatpush2.msra.mxu0 0.0
    %716 = vmatprep.subr.mxu0 0.0
    %717 = vmatpush2.msra.mxu0 0.0
    %718 = vmatprep.subr.mxu0 0.0
    %719 = vmatpush2.msra.mxu0 0.0
    %720 = vmatprep.subr.mxu0 0.0
    %721 = vmatpush2.msra.mxu0 0.0
    %722 = vmatprep.mubr.f32.mxu0 0.0
    %723 = vmatmul.mubr.f32.gmra.mxu0 %v500
    %v724 = vpop.f32.mrf.mxu0
    %v725 = vadd.f32 0.0, %v724
    %v726 = vpop.f32.mrf.mxu0
    %727 = vdwg.mxu0
    %v728 = vadd.f32 %v657, %v725
    %v729 = vtanh.pop %v728
    %v730 = vld [vmem:[%s407] sm:$0x3]
    %731 = vmatprep.subr.mxu0 0.0
    %732 = vmatpush1.msra.mxu0 0.0
    %733 = vmatprep.subr.mxu0 0.0
    %734 = vmatpush1.msra.mxu0 0.0
    %735 = vmatprep.subr.mxu0 0.0
    %736 = vmatpush1.msra.mxu0 0.0
    %737 = vmatprep.subr.mxu0 0.0
    %738 = vmatpush1.msra.mxu0 0.0
    %739 = vmatprep.subr.mxu0 0.0
    %740 = vmatpush1.msra.mxu0 0.0
    %741 = vmatprep.subr.mxu0 0.0
    %742 = vmatpush1.msra.mxu0 0.0
    %743 = vmatprep.subr.mxu0 0.0
    %744 = vmatpush1.msra.mxu0 0.0
    %745 = vmatprep.subr.mxu0 0.0
    %746 = vmatpush1.msra.mxu0 0.0
    %747 = vmatprep.subr.mxu0 0.0
    %748 = vmatpush1.msra.mxu0 0.0
    %749 = vmatprep.subr.mxu0 0.0
    %750 = vmatpush1.msra.mxu0 0.0
    %751 = vmatprep.subr.mxu0 0.0
    %752 = vmatpush1.msra.mxu0 0.0
    %753 = vmatprep.subr.mxu0 0.0
    %754 = vmatpush1.msra.mxu0 0.0
    %755 = vmatprep.subr.mxu0 0.0
    %756 = vmatpush1.msra.mxu0 %v428
    %757 = vmatprep.subr.mxu0 0.0
    %758 = vmatpush1.msra.mxu0 %v427
    %759 = vmatprep.subr.mxu0 0.0
    %760 = vmatpush1.msra.mxu0 %v426
    %761 = vmatprep.subr.mxu0 0.0
    %762 = vmatpush1.msra.mxu0 %v425
    %763 = vmatprep.subr.mxu0 0.0
    %764 = vmatpush2.msra.mxu0 0.0
    %765 = vmatprep.subr.mxu0 0.0
    %766 = vmatpush2.msra.mxu0 0.0
    %767 = vmatprep.subr.mxu0 0.0
    %768 = vmatpush2.msra.mxu0 0.0
    %769 = vmatprep.subr.mxu0 0.0
    %770 = vmatpush2.msra.mxu0 0.0
    %771 = vmatprep.subr.mxu0 0.0
    %772 = vmatpush2.msra.mxu0 0.0
    %773 = vmatprep.subr.mxu0 0.0
    %774 = vmatpush2.msra.mxu0 0.0
    %775 = vmatprep.subr.mxu0 0.0
    %776 = vmatpush2.msra.mxu0 0.0
    %777 = vmatprep.subr.mxu0 0.0
    %778 = vmatpush2.msra.mxu0 0.0
    %779 = vmatprep.subr.mxu0 0.0
    %780 = vmatpush2.msra.mxu0 0.0
    %781 = vmatprep.subr.mxu0 0.0
    %782 = vmatpush2.msra.mxu0 0.0
    %783 = vmatprep.subr.mxu0 0.0
    %784 = vmatpush2.msra.mxu0 0.0
    %785 = vmatprep.subr.mxu0 0.0
    %786 = vmatpush2.msra.mxu0 0.0
    %787 = vmatprep.subr.mxu0 0.0
    %788 = vmatpush2.msra.mxu0 0.0
    %789 = vmatprep.subr.mxu0 0.0
    %790 = vmatpush2.msra.mxu0 0.0
    %791 = vmatprep.subr.mxu0 0.0
    %792 = vmatpush2.msra.mxu0 0.0
    %793 = vmatprep.subr.mxu0 0.0
    %794 = vmatpush2.msra.mxu0 0.0
    %795 = vmatprep.mubr.f32.mxu0 0.0
    %796 = vmatmul.mubr.f32.gmra.mxu0 %v500
    %v797 = vpop.f32.mrf.mxu0
    %v798 = vadd.f32 0.0, %v797
    %v799 = vpop.f32.mrf.mxu0
    %800 = vdwg.mxu0
    %v801 = vadd.f32 %v730, %v798
    %v802 = vxor.u32 %v801, 2147483648
    %v803 = vmul.f32 %v802, 1.442695
    %v804 = vpow.pop %v803
    %v805 = vadd.f32 %v804, 1.0
    %v806 = vrcp.pop %v805
    %v807 = vmul.f32 1.0, %v806
    %v808 = vmul.f32 %v656, 0.0
    %v809 = vmul.f32 %v578, %v729
    %v810 = vadd.f32 %v808, %v809
    %v811 = vtanh.pop %v810
    %v812 = vmul.f32 %v807, %v811
    %813 = vmatprep.subr.mxu0 0.0
    %814 = vmatpush1.msra.mxu0 0.0
    %815 = vmatprep.subr.mxu0 0.0
    %816 = vmatpush1.msra.mxu0 0.0
    %817 = vmatprep.subr.mxu0 0.0
    %818 = vmatpush1.msra.mxu0 0.0
    %819 = vmatprep.subr.mxu0 0.0
    %820 = vmatpush1.msra.mxu0 0.0
    %821 = vmatprep.subr.mxu0 0.0
    %822 = vmatpush1.msra.mxu0 0.0
    %823 = vmatprep.subr.mxu0 0.0
    %824 = vmatpush1.msra.mxu0 0.0
    %825 = vmatprep.subr.mxu0 0.0
    %826 = vmatpush1.msra.mxu0 0.0
    %827 = vmatprep.subr.mxu0 0.0
    %828 = vmatpush1.msra.mxu0 0.0
    %829 = vmatprep.subr.mxu0 0.0
    %830 = vmatpush1.msra.mxu0 0.0
    %831 = vmatprep.subr.mxu0 0.0
    %832 = vmatpush1.msra.mxu0 0.0
    %833 = vmatprep.subr.mxu0 0.0
    %834 = vmatpush1.msra.mxu0 0.0
    %835 = vmatprep.subr.mxu0 0.0
    %836 = vmatpush1.msra.mxu0 0.0
    %837 = vmatprep.subr.mxu0 0.0
    %838 = vmatpush1.msra.mxu0 %v451
    %839 = vmatprep.subr.mxu0 0.0
    %840 = vmatpush1.msra.mxu0 %v450
    %841 = vmatprep.subr.mxu0 0.0
    %842 = vmatpush1.msra.mxu0 %v449
    %843 = vmatprep.subr.mxu0 0.0
    %844 = vmatpush1.msra.mxu0 %v448
    %845 = vmatprep.subr.mxu0 0.0
    %846 = vmatpush2.msra.mxu0 0.0
    %847 = vmatprep.subr.mxu0 0.0
    %848 = vmatpush2.msra.mxu0 0.0
    %849 = vmatprep.subr.mxu0 0.0
    %850 = vmatpush2.msra.mxu0 0.0
    %851 = vmatprep.subr.mxu0 0.0
    %852 = vmatpush2.msra.mxu0 0.0
    %853 = vmatprep.subr.mxu0 0.0
    %854 = vmatpush2.msra.mxu0 0.0
    %855 = vmatprep.subr.mxu0 0.0
    %856 = vmatpush2.msra.mxu0 0.0
    %857 = vmatprep.subr.mxu0 0.0
    %858 = vmatpush2.msra.mxu0 0.0
    %859 = vmatprep.subr.mxu0 0.0
    %860 = vmatpush2.msra.mxu0 0.0
    %861 = vmatprep.subr.mxu0 0.0
    %862 = vmatpush2.msra.mxu0 0.0
    %863 = vmatprep.subr.mxu0 0.0
    %864 = vmatpush2.msra.mxu0 0.0
    %865 = vmatprep.subr.mxu0 0.0
    %866 = vmatpush2.msra.mxu0 0.0
    %867 = vmatprep.subr.mxu0 0.0
    %868 = vmatpush2.msra.mxu0 0.0
    %869 = vmatprep.subr.mxu0 0.0
    %870 = vmatpush2.msra.mxu0 0.0
    %871 = vmatprep.subr.mxu0 0.0
    %872 = vmatpush2.msra.mxu0 0.0
    %873 = vmatprep.subr.mxu0 0.0
    %874 = vmatpush2.msra.mxu0 0.0
    %875 = vmatprep.subr.mxu0 0.0
    %876 = vmatpush2.msra.mxu0 0.0
    %877 = vmatprep.mubr.f32.mxu0 0.0
    %878 = vmatmul.mubr.f32.gmra.mxu0 %v500
    %v879 = vpop.f32.mrf.mxu0
    %v880 = vadd.f32 0.0, %v879
    %v881 = vpop.f32.mrf.mxu0
    %882 = vdwg.mxu0
    %v884 = vsel %vm140, %v812, 0
    %886 = vmatprep.subr.mxu0 0.0
    %887 = vmatpush1.msra.mxu0 0.0
    %888 = vmatprep.subr.mxu0 0.0
    %889 = vmatpush1.msra.mxu0 0.0
    %890 = vmatprep.subr.mxu0 0.0
    %891 = vmatpush1.msra.mxu0 0.0
    %892 = vmatprep.subr.mxu0 0.0
    %893 = vmatpush1.msra.mxu0 0.0
    %894 = vmatprep.subr.mxu0 0.0
    %895 = vmatpush1.msra.mxu0 0.0
    %896 = vmatprep.subr.mxu0 0.0
    %897 = vmatpush1.msra.mxu0 0.0
    %898 = vmatprep.subr.mxu0 0.0
    %899 = vmatpush1.msra.mxu0 0.0
    %900 = vmatprep.subr.mxu0 0.0
    %901 = vmatpush1.msra.mxu0 0.0
    %902 = vmatprep.subr.mxu0 0.0
    %903 = vmatpush1.msra.mxu0 0.0
    %904 = vmatprep.subr.mxu0 0.0
    %905 = vmatpush1.msra.mxu0 0.0
    %906 = vmatprep.subr.mxu0 0.0
    %907 = vmatpush1.msra.mxu0 0.0
    %908 = vmatprep.subr.mxu0 0.0
    %909 = vmatpush1.msra.mxu0 0.0
    %910 = vmatprep.subr.mxu0 0.0
    %911 = vmatpush1.msra.mxu0 %v432
    %912 = vmatprep.subr.mxu0 0.0
    %913 = vmatpush1.msra.mxu0 %v431
    %914 = vmatprep.subr.mxu0 0.0
    %915 = vmatpush1.msra.mxu0 %v430
    %916 = vmatprep.subr.mxu0 0.0
    %917 = vmatpush1.msra.mxu0 %v429
    %918 = vmatprep.subr.mxu0 0.0
    %919 = vmatpush2.msra.mxu0 0.0
    %920 = vmatprep.subr.mxu0 0.0
    %921 = vmatpush2.msra.mxu0 0.0
    %922 = vmatprep.subr.mxu0 0.0
    %923 = vmatpush2.msra.mxu0 0.0
    %924 = vmatprep.subr.mxu0 0.0
    %925 = vmatpush2.msra.mxu0 0.0
    %926 = vmatprep.subr.mxu0 0.0
    %927 = vmatpush2.msra.mxu0 0.0
    %928 = vmatprep.subr.mxu0 0.0
    %929 = vmatpush2.msra.mxu0 0.0
    %930 = vmatprep.subr.mxu0 0.0
    %931 = vmatpush2.msra.mxu0 0.0
    %932 = vmatprep.subr.mxu0 0.0
    %933 = vmatpush2.msra.mxu0 0.0
    %934 = vmatprep.subr.mxu0 0.0
    %935 = vmatpush2.msra.mxu0 0.0
    %936 = vmatprep.subr.mxu0 0.0
    %937 = vmatpush2.msra.mxu0 0.0
    %938 = vmatprep.subr.mxu0 0.0
    %939 = vmatpush2.msra.mxu0 0.0
    %940 = vmatprep.subr.mxu0 0.0
    %941 = vmatpush2.msra.mxu0 0.0
    %942 = vmatprep.subr.mxu0 0.0
    %943 = vmatpush2.msra.mxu0 0.0
    %944 = vmatprep.subr.mxu0 0.0
    %945 = vmatpush2.msra.mxu0 0.0
    %946 = vmatprep.subr.mxu0 0.0
    %947 = vmatpush2.msra.mxu0 0.0
    %948 = vmatprep.subr.mxu0 0.0
    %949 = vmatpush2.msra.mxu0 0.0
    %950 = vmatprep.mubr.f32.mxu0 0.0
    %951 = vmatmul.mubr.f32.gmra.mxu0 %v884
    %v952 = vpop.f32.mrf.mxu0
    %v953 = vadd.f32 %v880, %v952
    %v954 = vpop.f32.mrf.mxu0
    %955 = vdwg.mxu0
    %v956 = vadd.f32 %v953, %v472
    %v957 = vxor.u32 %v956, 2147483648
    %v958 = vmul.f32 %v957, 1.442695
    %v959 = vpow.pop %v958
    %v960 = vadd.f32 %v959, 1.0
    %v961 = vrcp.pop %v960
    %v962 = vmul.f32 1.0, %v961
    %963 = vmatprep.subr.mxu0 0.0
    %964 = vmatpush1.msra.mxu0 0.0
    %965 = vmatprep.subr.mxu0 0.0
    %966 = vmatpush1.msra.mxu0 0.0
    %967 = vmatprep.subr.mxu0 0.0
    %968 = vmatpush1.msra.mxu0 0.0
    %969 = vmatprep.subr.mxu0 0.0
    %970 = vmatpush1.msra.mxu0 0.0
    %971 = vmatprep.subr.mxu0 0.0
    %972 = vmatpush1.msra.mxu0 0.0
    %973 = vmatprep.subr.mxu0 0.0
    %974 = vmatpush1.msra.mxu0 0.0
    %975 = vmatprep.subr.mxu0 0.0
    %976 = vmatpush1.msra.mxu0 0.0
    %977 = vmatprep.subr.mxu0 0.0
    %978 = vmatpush1.msra.mxu0 0.0
    %979 = vmatprep.subr.mxu0 0.0
    %980 = vmatpush1.msra.mxu0 0.0
    %981 = vmatprep.subr.mxu0 0.0
    %982 = vmatpush1.msra.mxu0 0.0
    %983 = vmatprep.subr.mxu0 0.0
    %984 = vmatpush1.msra.mxu0 0.0
    %985 = vmatprep.subr.mxu0 0.0
    %986 = vmatpush1.msra.mxu0 0.0
    %987 = vmatprep.subr.mxu0 0.0
    %988 = vmatpush1.msra.mxu0 %v456
    %989 = vmatprep.subr.mxu0 0.0
    %990 = vmatpush1.msra.mxu0 %v455
    %991 = vmatprep.subr.mxu0 0.0
    %992 = vmatpush1.msra.mxu0 %v454
    %993 = vmatprep.subr.mxu0 0.0
    %994 = vmatpush1.msra.mxu0 %v453
    %995 = vmatprep.subr.mxu0 0.0
    %996 = vmatpush2.msra.mxu0 0.0
    %997 = vmatprep.subr.mxu0 0.0
    %998 = vmatpush2.msra.mxu0 0.0
    %999 = vmatprep.subr.mxu0 0.0
    %1000 = vmatpush2.msra.mxu0 0.0
    %1001 = vmatprep.subr.mxu0 0.0
    %1002 = vmatpush2.msra.mxu0 0.0
    %1003 = vmatprep.subr.mxu0 0.0
    %1004 = vmatpush2.msra.mxu0 0.0
    %1005 = vmatprep.subr.mxu0 0.0
    %1006 = vmatpush2.msra.mxu0 0.0
    %1007 = vmatprep.subr.mxu0 0.0
    %1008 = vmatpush2.msra.mxu0 0.0
    %1009 = vmatprep.subr.mxu0 0.0
    %1010 = vmatpush2.msra.mxu0 0.0
    %1011 = vmatprep.subr.mxu0 0.0
    %1012 = vmatpush2.msra.mxu0 0.0
    %1013 = vmatprep.subr.mxu0 0.0
    %1014 = vmatpush2.msra.mxu0 0.0
    %1015 = vmatprep.subr.mxu0 0.0
    %1016 = vmatpush2.msra.mxu0 0.0
    %1017 = vmatprep.subr.mxu0 0.0
    %1018 = vmatpush2.msra.mxu0 0.0
    %1019 = vmatprep.subr.mxu0 0.0
    %1020 = vmatpush2.msra.mxu0 0.0
    %1021 = vmatprep.subr.mxu0 0.0
    %1022 = vmatpush2.msra.mxu0 0.0
    %1023 = vmatprep.subr.mxu0 0.0
    %1024 = vmatpush2.msra.mxu0 0.0
    %1025 = vmatprep.subr.mxu0 0.0
    %1026 = vmatpush2.msra.mxu0 0.0
    %1027 = vmatprep.mubr.f32.mxu0 0.0
    %1028 = vmatmul.mubr.f32.gmra.mxu0 %v500
    %v1029 = vpop.f32.mrf.mxu0
    %v1030 = vadd.f32 0.0, %v1029
    %v1031 = vpop.f32.mrf.mxu0
    %1032 = vdwg.mxu0
    %1033 = vmatprep.subr.mxu0 0.0
    %1034 = vmatpush1.msra.mxu0 0.0
    %1035 = vmatprep.subr.mxu0 0.0
    %1036 = vmatpush1.msra.mxu0 0.0
    %1037 = vmatprep.subr.mxu0 0.0
    %1038 = vmatpush1.msra.mxu0 0.0
    %1039 = vmatprep.subr.mxu0 0.0
    %1040 = vmatpush1.msra.mxu0 0.0
    %1041 = vmatprep.subr.mxu0 0.0
    %1042 = vmatpush1.msra.mxu0 0.0
    %1043 = vmatprep.subr.mxu0 0.0
    %1044 = vmatpush1.msra.mxu0 0.0
    %1045 = vmatprep.subr.mxu0 0.0
    %1046 = vmatpush1.msra.mxu0 0.0
    %1047 = vmatprep.subr.mxu0 0.0
    %1048 = vmatpush1.msra.mxu0 0.0
    %1049 = vmatprep.subr.mxu0 0.0
    %1050 = vmatpush1.msra.mxu0 0.0
    %1051 = vmatprep.subr.mxu0 0.0
    %1052 = vmatpush1.msra.mxu0 0.0
    %1053 = vmatprep.subr.mxu0 0.0
    %1054 = vmatpush1.msra.mxu0 0.0
    %1055 = vmatprep.subr.mxu0 0.0
    %1056 = vmatpush1.msra.mxu0 0.0
    %1057 = vmatprep.subr.mxu0 0.0
    %1058 = vmatpush1.msra.mxu0 %v437
    %1059 = vmatprep.subr.mxu0 0.0
    %1060 = vmatpush1.msra.mxu0 %v436
    %1061 = vmatprep.subr.mxu0 0.0
    %1062 = vmatpush1.msra.mxu0 %v435
    %1063 = vmatprep.subr.mxu0 0.0
    %1064 = vmatpush1.msra.mxu0 %v434
    %1065 = vmatprep.subr.mxu0 0.0
    %1066 = vmatpush2.msra.mxu0 0.0
    %1067 = vmatprep.subr.mxu0 0.0
    %1068 = vmatpush2.msra.mxu0 0.0
    %1069 = vmatprep.subr.mxu0 0.0
    %1070 = vmatpush2.msra.mxu0 0.0
    %1071 = vmatprep.subr.mxu0 0.0
    %1072 = vmatpush2.msra.mxu0 0.0
    %1073 = vmatprep.subr.mxu0 0.0
    %1074 = vmatpush2.msra.mxu0 0.0
    %1075 = vmatprep.subr.mxu0 0.0
    %1076 = vmatpush2.msra.mxu0 0.0
    %1077 = vmatprep.subr.mxu0 0.0
    %1078 = vmatpush2.msra.mxu0 0.0
    %1079 = vmatprep.subr.mxu0 0.0
    %1080 = vmatpush2.msra.mxu0 0.0
    %1081 = vmatprep.subr.mxu0 0.0
    %1082 = vmatpush2.msra.mxu0 0.0
    %1083 = vmatprep.subr.mxu0 0.0
    %1084 = vmatpush2.msra.mxu0 0.0
    %1085 = vmatprep.subr.mxu0 0.0
    %1086 = vmatpush2.msra.mxu0 0.0
    %1087 = vmatprep.subr.mxu0 0.0
    %1088 = vmatpush2.msra.mxu0 0.0
    %1089 = vmatprep.subr.mxu0 0.0
    %1090 = vmatpush2.msra.mxu0 0.0
    %1091 = vmatprep.subr.mxu0 0.0
    %1092 = vmatpush2.msra.mxu0 0.0
    %1093 = vmatprep.subr.mxu0 0.0
    %1094 = vmatpush2.msra.mxu0 0.0
    %1095 = vmatprep.subr.mxu0 0.0
    %1096 = vmatpush2.msra.mxu0 0.0
    %1097 = vmatprep.mubr.f32.mxu0 0.0
    %1098 = vmatmul.mubr.f32.gmra.mxu0 %v884
    %v1099 = vpop.f32.mrf.mxu0
    %v1100 = vadd.f32 %v1030, %v1099
    %v1101 = vpop.f32.mrf.mxu0
    %1102 = vdwg.mxu0
    %v1103 = vadd.f32 %v1100, %v480
    %v1104 = vxor.u32 %v1103, 2147483648
    %v1105 = vmul.f32 %v1104, 1.442695
    %v1106 = vpow.pop %v1105
    %v1107 = vadd.f32 %v1106, 1.0
    %v1108 = vrcp.pop %v1107
    %v1109 = vmul.f32 1.0, %v1108
    %1110 = vmatprep.subr.mxu0 0.0
    %1111 = vmatpush1.msra.mxu0 0.0
    %1112 = vmatprep.subr.mxu0 0.0
    %1113 = vmatpush1.msra.mxu0 0.0
    %1114 = vmatprep.subr.mxu0 0.0
    %1115 = vmatpush1.msra.mxu0 0.0
    %1116 = vmatprep.subr.mxu0 0.0
    %1117 = vmatpush1.msra.mxu0 0.0
    %1118 = vmatprep.subr.mxu0 0.0
    %1119 = vmatpush1.msra.mxu0 0.0
    %1120 = vmatprep.subr.mxu0 0.0
    %1121 = vmatpush1.msra.mxu0 0.0
    %1122 = vmatprep.subr.mxu0 0.0
    %1123 = vmatpush1.msra.mxu0 0.0
    %1124 = vmatprep.subr.mxu0 0.0
    %1125 = vmatpush1.msra.mxu0 0.0
    %1126 = vmatprep.subr.mxu0 0.0
    %1127 = vmatpush1.msra.mxu0 0.0
    %1128 = vmatprep.subr.mxu0 0.0
    %1129 = vmatpush1.msra.mxu0 0.0
    %1130 = vmatprep.subr.mxu0 0.0
    %1131 = vmatpush1.msra.mxu0 0.0
    %1132 = vmatprep.subr.mxu0 0.0
    %1133 = vmatpush1.msra.mxu0 0.0
    %1134 = vmatprep.subr.mxu0 0.0
    %1135 = vmatpush1.msra.mxu0 %v461
    %1136 = vmatprep.subr.mxu0 0.0
    %1137 = vmatpush1.msra.mxu0 %v460
    %1138 = vmatprep.subr.mxu0 0.0
    %1139 = vmatpush1.msra.mxu0 %v459
    %1140 = vmatprep.subr.mxu0 0.0
    %1141 = vmatpush1.msra.mxu0 %v458
    %1142 = vmatprep.subr.mxu0 0.0
    %1143 = vmatpush2.msra.mxu0 0.0
    %1144 = vmatprep.subr.mxu0 0.0
    %1145 = vmatpush2.msra.mxu0 0.0
    %1146 = vmatprep.subr.mxu0 0.0
    %1147 = vmatpush2.msra.mxu0 0.0
    %1148 = vmatprep.subr.mxu0 0.0
    %1149 = vmatpush2.msra.mxu0 0.0
    %1150 = vmatprep.subr.mxu0 0.0
    %1151 = vmatpush2.msra.mxu0 0.0
    %1152 = vmatprep.subr.mxu0 0.0
    %1153 = vmatpush2.msra.mxu0 0.0
    %1154 = vmatprep.subr.mxu0 0.0
    %1155 = vmatpush2.msra.mxu0 0.0
    %1156 = vmatprep.subr.mxu0 0.0
    %1157 = vmatpush2.msra.mxu0 0.0
    %1158 = vmatprep.subr.mxu0 0.0
    %1159 = vmatpush2.msra.mxu0 0.0
    %1160 = vmatprep.subr.mxu0 0.0
    %1161 = vmatpush2.msra.mxu0 0.0
    %1162 = vmatprep.subr.mxu0 0.0
    %1163 = vmatpush2.msra.mxu0 0.0
    %1164 = vmatprep.subr.mxu0 0.0
    %1165 = vmatpush2.msra.mxu0 0.0
    %1166 = vmatprep.subr.mxu0 0.0
    %1167 = vmatpush2.msra.mxu0 0.0
    %1168 = vmatprep.subr.mxu0 0.0
    %1169 = vmatpush2.msra.mxu0 0.0
    %1170 = vmatprep.subr.mxu0 0.0
    %1171 = vmatpush2.msra.mxu0 0.0
    %1172 = vmatprep.subr.mxu0 0.0
    %1173 = vmatpush2.msra.mxu0 0.0
    %1174 = vmatprep.mubr.f32.mxu0 0.0
    %1175 = vmatmul.mubr.f32.gmra.mxu0 %v500
    %v1176 = vpop.f32.mrf.mxu0
    %v1177 = vadd.f32 0.0, %v1176
    %v1178 = vpop.f32.mrf.mxu0
    %1179 = vdwg.mxu0
    %1180 = vmatprep.subr.mxu0 0.0
    %1181 = vmatpush1.msra.mxu0 0.0
    %1182 = vmatprep.subr.mxu0 0.0
    %1183 = vmatpush1.msra.mxu0 0.0
    %1184 = vmatprep.subr.mxu0 0.0
    %1185 = vmatpush1.msra.mxu0 0.0
    %1186 = vmatprep.subr.mxu0 0.0
    %1187 = vmatpush1.msra.mxu0 0.0
    %1188 = vmatprep.subr.mxu0 0.0
    %1189 = vmatpush1.msra.mxu0 0.0
    %1190 = vmatprep.subr.mxu0 0.0
    %1191 = vmatpush1.msra.mxu0 0.0
    %1192 = vmatprep.subr.mxu0 0.0
    %1193 = vmatpush1.msra.mxu0 0.0
    %1194 = vmatprep.subr.mxu0 0.0
    %1195 = vmatpush1.msra.mxu0 0.0
    %1196 = vmatprep.subr.mxu0 0.0
    %1197 = vmatpush1.msra.mxu0 0.0
    %1198 = vmatprep.subr.mxu0 0.0
    %1199 = vmatpush1.msra.mxu0 0.0
    %1200 = vmatprep.subr.mxu0 0.0
    %1201 = vmatpush1.msra.mxu0 0.0
    %1202 = vmatprep.subr.mxu0 0.0
    %1203 = vmatpush1.msra.mxu0 0.0
    %1204 = vmatprep.subr.mxu0 0.0
    %1205 = vmatpush1.msra.mxu0 %v442
    %1206 = vmatprep.subr.mxu0 0.0
    %1207 = vmatpush1.msra.mxu0 %v441
    %1208 = vmatprep.subr.mxu0 0.0
    %1209 = vmatpush1.msra.mxu0 %v440
    %1210 = vmatprep.subr.mxu0 0.0
    %1211 = vmatpush1.msra.mxu0 %v439
    %1212 = vmatprep.subr.mxu0 0.0
    %1213 = vmatpush2.msra.mxu0 0.0
    %1214 = vmatprep.subr.mxu0 0.0
    %1215 = vmatpush2.msra.mxu0 0.0
    %1216 = vmatprep.subr.mxu0 0.0
    %1217 = vmatpush2.msra.mxu0 0.0
    %1218 = vmatprep.subr.mxu0 0.0
    %1219 = vmatpush2.msra.mxu0 0.0
    %1220 = vmatprep.subr.mxu0 0.0
    %1221 = vmatpush2.msra.mxu0 0.0
    %1222 = vmatprep.subr.mxu0 0.0
    %1223 = vmatpush2.msra.mxu0 0.0
    %1224 = vmatprep.subr.mxu0 0.0
    %1225 = vmatpush2.msra.mxu0 0.0
    %1226 = vmatprep.subr.mxu0 0.0
    %1227 = vmatpush2.msra.mxu0 0.0
    %1228 = vmatprep.subr.mxu0 0.0
    %1229 = vmatpush2.msra.mxu0 0.0
    %1230 = vmatprep.subr.mxu0 0.0
    %1231 = vmatpush2.msra.mxu0 0.0
    %1232 = vmatprep.subr.mxu0 0.0
    %1233 = vmatpush2.msra.mxu0 0.0
    %1234 = vmatprep.subr.mxu0 0.0
    %1235 = vmatpush2.msra.mxu0 0.0
    %1236 = vmatprep.subr.mxu0 0.0
    %1237 = vmatpush2.msra.mxu0 0.0
    %1238 = vmatprep.subr.mxu0 0.0
    %1239 = vmatpush2.msra.mxu0 0.0
    %1240 = vmatprep.subr.mxu0 0.0
    %1241 = vmatpush2.msra.mxu0 0.0
    %1242 = vmatprep.subr.mxu0 0.0
    %1243 = vmatpush2.msra.mxu0 0.0
    %1244 = vmatprep.mubr.f32.mxu0 0.0
    %1245 = vmatmul.mubr.f32.gmra.mxu0 %v884
    %v1246 = vpop.f32.mrf.mxu0
    %v1247 = vadd.f32 %v1177, %v1246
    %v1248 = vpop.f32.mrf.mxu0
    %1249 = vdwg.mxu0
    %v1250 = vadd.f32 %v1247, %v488
    %v1251 = vtanh.pop %v1250
    %1252 = vmatprep.subr.mxu0 0.0
    %1253 = vmatpush1.msra.mxu0 0.0
    %1254 = vmatprep.subr.mxu0 0.0
    %1255 = vmatpush1.msra.mxu0 0.0
    %1256 = vmatprep.subr.mxu0 0.0
    %1257 = vmatpush1.msra.mxu0 0.0
    %1258 = vmatprep.subr.mxu0 0.0
    %1259 = vmatpush1.msra.mxu0 0.0
    %1260 = vmatprep.subr.mxu0 0.0
    %1261 = vmatpush1.msra.mxu0 0.0
    %1262 = vmatprep.subr.mxu0 0.0
    %1263 = vmatpush1.msra.mxu0 0.0
    %1264 = vmatprep.subr.mxu0 0.0
    %1265 = vmatpush1.msra.mxu0 0.0
    %1266 = vmatprep.subr.mxu0 0.0
    %1267 = vmatpush1.msra.mxu0 0.0
    %1268 = vmatprep.subr.mxu0 0.0
    %1269 = vmatpush1.msra.mxu0 0.0
    %1270 = vmatprep.subr.mxu0 0.0
    %1271 = vmatpush1.msra.mxu0 0.0
    %1272 = vmatprep.subr.mxu0 0.0
    %1273 = vmatpush1.msra.mxu0 0.0
    %1274 = vmatprep.subr.mxu0 0.0
    %1275 = vmatpush1.msra.mxu0 0.0
    %1276 = vmatprep.subr.mxu0 0.0
    %1277 = vmatpush1.msra.mxu0 %v466
    %1278 = vmatprep.subr.mxu0 0.0
    %1279 = vmatpush1.msra.mxu0 %v465
    %1280 = vmatprep.subr.mxu0 0.0
    %1281 = vmatpush1.msra.mxu0 %v464
    %1282 = vmatprep.subr.mxu0 0.0
    %1283 = vmatpush1.msra.mxu0 %v463
    %1284 = vmatprep.subr.mxu0 0.0
    %1285 = vmatpush2.msra.mxu0 0.0
    %1286 = vmatprep.subr.mxu0 0.0
    %1287 = vmatpush2.msra.mxu0 0.0
    %1288 = vmatprep.subr.mxu0 0.0
    %1289 = vmatpush2.msra.mxu0 0.0
    %1290 = vmatprep.subr.mxu0 0.0
    %1291 = vmatpush2.msra.mxu0 0.0
    %1292 = vmatprep.subr.mxu0 0.0
    %1293 = vmatpush2.msra.mxu0 0.0
    %1294 = vmatprep.subr.mxu0 0.0
    %1295 = vmatpush2.msra.mxu0 0.0
    %1296 = vmatprep.subr.mxu0 0.0
    %1297 = vmatpush2.msra.mxu0 0.0
    %1298 = vmatprep.subr.mxu0 0.0
    %1299 = vmatpush2.msra.mxu0 0.0
    %1300 = vmatprep.subr.mxu0 0.0
    %1301 = vmatpush2.msra.mxu0 0.0
    %1302 = vmatprep.subr.mxu0 0.0
    %1303 = vmatpush2.msra.mxu0 0.0
    %1304 = vmatprep.subr.mxu0 0.0
    %1305 = vmatpush2.msra.mxu0 0.0
    %1306 = vmatprep.subr.mxu0 0.0
    %1307 = vmatpush2.msra.mxu0 0.0
    %1308 = vmatprep.subr.mxu0 0.0
    %1309 = vmatpush2.msra.mxu0 0.0
    %1310 = vmatprep.subr.mxu0 0.0
    %1311 = vmatpush2.msra.mxu0 0.0
    %1312 = vmatprep.subr.mxu0 0.0
    %1313 = vmatpush2.msra.mxu0 0.0
    %1314 = vmatprep.subr.mxu0 0.0
    %1315 = vmatpush2.msra.mxu0 0.0
    %1316 = vmatprep.mubr.f32.mxu0 0.0
    %1317 = vmatmul.mubr.f32.gmra.mxu0 %v500
    %v1318 = vpop.f32.mrf.mxu0
    %v1319 = vadd.f32 0.0, %v1318
    %v1320 = vpop.f32.mrf.mxu0
    %1321 = vdwg.mxu0
    %1322 = vmatprep.subr.mxu0 0.0
    %1323 = vmatpush1.msra.mxu0 0.0
    %1324 = vmatprep.subr.mxu0 0.0
    %1325 = vmatpush1.msra.mxu0 0.0
    %1326 = vmatprep.subr.mxu0 0.0
    %1327 = vmatpush1.msra.mxu0 0.0
    %1328 = vmatprep.subr.mxu0 0.0
    %1329 = vmatpush1.msra.mxu0 0.0
    %1330 = vmatprep.subr.mxu0 0.0
    %1331 = vmatpush1.msra.mxu0 0.0
    %1332 = vmatprep.subr.mxu0 0.0
    %1333 = vmatpush1.msra.mxu0 0.0
    %1334 = vmatprep.subr.mxu0 0.0
    %1335 = vmatpush1.msra.mxu0 0.0
    %1336 = vmatprep.subr.mxu0 0.0
    %1337 = vmatpush1.msra.mxu0 0.0
    %1338 = vmatprep.subr.mxu0 0.0
    %1339 = vmatpush1.msra.mxu0 0.0
    %1340 = vmatprep.subr.mxu0 0.0
    %1341 = vmatpush1.msra.mxu0 0.0
    %1342 = vmatprep.subr.mxu0 0.0
    %1343 = vmatpush1.msra.mxu0 0.0
    %1344 = vmatprep.subr.mxu0 0.0
    %1345 = vmatpush1.msra.mxu0 0.0
    %1346 = vmatprep.subr.mxu0 0.0
    %1347 = vmatpush1.msra.mxu0 %v447
    %1348 = vmatprep.subr.mxu0 0.0
    %1349 = vmatpush1.msra.mxu0 %v446
    %1350 = vmatprep.subr.mxu0 0.0
    %1351 = vmatpush1.msra.mxu0 %v445
    %1352 = vmatprep.subr.mxu0 0.0
    %1353 = vmatpush1.msra.mxu0 %v444
    %1354 = vmatprep.subr.mxu0 0.0
    %1355 = vmatpush2.msra.mxu0 0.0
    %1356 = vmatprep.subr.mxu0 0.0
    %1357 = vmatpush2.msra.mxu0 0.0
    %1358 = vmatprep.subr.mxu0 0.0
    %1359 = vmatpush2.msra.mxu0 0.0
    %1360 = vmatprep.subr.mxu0 0.0
    %1361 = vmatpush2.msra.mxu0 0.0
    %1362 = vmatprep.subr.mxu0 0.0
    %1363 = vmatpush2.msra.mxu0 0.0
    %1364 = vmatprep.subr.mxu0 0.0
    %1365 = vmatpush2.msra.mxu0 0.0
    %1366 = vmatprep.subr.mxu0 0.0
    %1367 = vmatpush2.msra.mxu0 0.0
    %1368 = vmatprep.subr.mxu0 0.0
    %1369 = vmatpush2.msra.mxu0 0.0
    %1370 = vmatprep.subr.mxu0 0.0
    %1371 = vmatpush2.msra.mxu0 0.0
    %1372 = vmatprep.subr.mxu0 0.0
    %1373 = vmatpush2.msra.mxu0 0.0
    %1374 = vmatprep.subr.mxu0 0.0
    %1375 = vmatpush2.msra.mxu0 0.0
    %1376 = vmatprep.subr.mxu0 0.0
    %1377 = vmatpush2.msra.mxu0 0.0
    %1378 = vmatprep.subr.mxu0 0.0
    %1379 = vmatpush2.msra.mxu0 0.0
    %1380 = vmatprep.subr.mxu0 0.0
    %1381 = vmatpush2.msra.mxu0 0.0
    %1382 = vmatprep.subr.mxu0 0.0
    %1383 = vmatpush2.msra.mxu0 0.0
    %1384 = vmatprep.subr.mxu0 0.0
    %1385 = vmatpush2.msra.mxu0 0.0
    %1386 = vmatprep.mubr.f32.mxu0 0.0
    %1387 = vmatmul.mubr.f32.gmra.mxu0 %v884
    %v1388 = vpop.f32.mrf.mxu0
    %v1389 = vadd.f32 %v1319, %v1388
    %v1390 = vpop.f32.mrf.mxu0
    %1391 = vdwg.mxu0
    %v1392 = vadd.f32 %v1389, %v496
    %v1393 = vxor.u32 %v1392, 2147483648
    %v1394 = vmul.f32 %v1393, 1.442695
    %v1395 = vpow.pop %v1394
    %v1396 = vadd.f32 %v1395, 1.0
    %v1397 = vrcp.pop %v1396
    %v1398 = vmul.f32 1.0, %v1397
    %v1399 = vmul.f32 %v1109, 0.0
    %v1400 = vmul.f32 %v962, %v1251
    %v1401 = vadd.f32 %v1399, %v1400
    %v1402 = vtanh.pop %v1401
    %v1403 = vmul.f32 %v1398, %v1402
    %s1404 = sld [smem:[#allocation4]]
    %v1405 = vstv %s1404
    %v1406 = vmul.f32 %v1405, %v1403
    %v1407 = vadd.f32 %v1406, 0.0
    %v1408 = vld [vmem:[#allocation2 + $0x2] sm:$0x3]
    %1409 = vmatprep.subr.mxu0 0.0
    %1410 = vmatpush1.msra.mxu0 0.0
    %1411 = vmatprep.subr.mxu0 0.0
    %1412 = vmatpush1.msra.mxu0 0.0
    %1413 = vmatprep.subr.mxu0 0.0
    %1414 = vmatpush1.msra.mxu0 0.0
    %1415 = vmatprep.subr.mxu0 0.0
    %1416 = vmatpush1.msra.mxu0 0.0
    %1417 = vmatprep.subr.mxu0 0.0
    %1418 = vmatpush1.msra.mxu0 0.0
    %1419 = vmatprep.subr.mxu0 0.0
    %1420 = vmatpush1.msra.mxu0 0.0
    %1421 = vmatprep.subr.mxu0 0.0
    %1422 = vmatpush1.msra.mxu0 0.0
    %1423 = vmatprep.subr.mxu0 0.0
    %1424 = vmatpush1.msra.mxu0 0.0
    %1425 = vmatprep.subr.mxu0 0.0
    %1426 = vmatpush1.msra.mxu0 0.0
    %1427 = vmatprep.subr.mxu0 0.0
    %1428 = vmatpush1.msra.mxu0 0.0
    %1429 = vmatprep.subr.mxu0 0.0
    %1430 = vmatpush1.msra.mxu0 0.0
    %1431 = vmatprep.subr.mxu0 0.0
    %1432 = vmatpush1.msra.mxu0 0.0
    %1433 = vmatprep.subr.mxu0 0.0
    %1434 = vmatpush1.msra.mxu0 %v413
    %1435 = vmatprep.subr.mxu0 0.0
    %1436 = vmatpush1.msra.mxu0 %v412
    %1437 = vmatprep.subr.mxu0 0.0
    %1438 = vmatpush1.msra.mxu0 %v411
    %1439 = vmatprep.subr.mxu0 0.0
    %1440 = vmatpush1.msra.mxu0 %v410
    %1441 = vmatprep.subr.mxu0 0.0
    %1442 = vmatpush2.msra.mxu0 0.0
    %1443 = vmatprep.subr.mxu0 0.0
    %1444 = vmatpush2.msra.mxu0 0.0
    %1445 = vmatprep.subr.mxu0 0.0
    %1446 = vmatpush2.msra.mxu0 0.0
    %1447 = vmatprep.subr.mxu0 0.0
    %1448 = vmatpush2.msra.mxu0 0.0
    %1449 = vmatprep.subr.mxu0 0.0
    %1450 = vmatpush2.msra.mxu0 0.0
    %1451 = vmatprep.subr.mxu0 0.0
    %1452 = vmatpush2.msra.mxu0 0.0
    %1453 = vmatprep.subr.mxu0 0.0
    %1454 = vmatpush2.msra.mxu0 0.0
    %1455 = vmatprep.subr.mxu0 0.0
    %1456 = vmatpush2.msra.mxu0 0.0
    %1457 = vmatprep.subr.mxu0 0.0
    %1458 = vmatpush2.msra.mxu0 0.0
    %1459 = vmatprep.subr.mxu0 0.0
    %1460 = vmatpush2.msra.mxu0 0.0
    %1461 = vmatprep.subr.mxu0 0.0
    %1462 = vmatpush2.msra.mxu0 0.0
    %1463 = vmatprep.subr.mxu0 0.0
    %1464 = vmatpush2.msra.mxu0 0.0
    %1465 = vmatprep.subr.mxu0 0.0
    %1466 = vmatpush2.msra.mxu0 0.0
    %1467 = vmatprep.subr.mxu0 0.0
    %1468 = vmatpush2.msra.mxu0 0.0
    %1469 = vmatprep.subr.mxu0 0.0
    %1470 = vmatpush2.msra.mxu0 0.0
    %1471 = vmatprep.subr.mxu0 0.0
    %1472 = vmatpush2.msra.mxu0 0.0
    %1473 = vmatprep.mubr.f32.mxu0 0.0
    %1474 = vmatmul.mubr.f32.gmra.mxu0 %v884
    %v1475 = vpop.f32.mrf.mxu0
    %v1476 = vadd.f32 0.0, %v1475
    %v1477 = vpop.f32.mrf.mxu0
    %1478 = vdwg.mxu0
    %v1479 = vadd.f32 %v1408, %v1476
    %v1480 = vxor.u32 %v1479, 2147483648
    %v1481 = vmul.f32 %v1480, 1.442695
    %v1482 = vpow.pop %v1481
    %v1483 = vadd.f32 %v1482, 1.0
    %v1484 = vrcp.pop %v1483
    %v1485 = vmul.f32 1.0, %v1484
    %v1486 = vld [vmem:[%s229 + $0x2] sm:$0x3]
    %1487 = vmatprep.subr.mxu0 0.0
    %1488 = vmatpush1.msra.mxu0 0.0
    %1489 = vmatprep.subr.mxu0 0.0
    %1490 = vmatpush1.msra.mxu0 0.0
    %1491 = vmatprep.subr.mxu0 0.0
    %1492 = vmatpush1.msra.mxu0 0.0
    %1493 = vmatprep.subr.mxu0 0.0
    %1494 = vmatpush1.msra.mxu0 0.0
    %1495 = vmatprep.subr.mxu0 0.0
    %1496 = vmatpush1.msra.mxu0 0.0
    %1497 = vmatprep.subr.mxu0 0.0
    %1498 = vmatpush1.msra.mxu0 0.0
    %1499 = vmatprep.subr.mxu0 0.0
    %1500 = vmatpush1.msra.mxu0 0.0
    %1501 = vmatprep.subr.mxu0 0.0
    %1502 = vmatpush1.msra.mxu0 0.0
    %1503 = vmatprep.subr.mxu0 0.0
    %1504 = vmatpush1.msra.mxu0 0.0
    %1505 = vmatprep.subr.mxu0 0.0
    %1506 = vmatpush1.msra.mxu0 0.0
    %1507 = vmatprep.subr.mxu0 0.0
    %1508 = vmatpush1.msra.mxu0 0.0
    %1509 = vmatprep.subr.mxu0 0.0
    %1510 = vmatpush1.msra.mxu0 0.0
    %1511 = vmatprep.subr.mxu0 0.0
    %1512 = vmatpush1.msra.mxu0 %v418
    %1513 = vmatprep.subr.mxu0 0.0
    %1514 = vmatpush1.msra.mxu0 %v417
    %1515 = vmatprep.subr.mxu0 0.0
    %1516 = vmatpush1.msra.mxu0 %v416
    %1517 = vmatprep.subr.mxu0 0.0
    %1518 = vmatpush1.msra.mxu0 %v415
    %1519 = vmatprep.subr.mxu0 0.0
    %1520 = vmatpush2.msra.mxu0 0.0
    %1521 = vmatprep.subr.mxu0 0.0
    %1522 = vmatpush2.msra.mxu0 0.0
    %1523 = vmatprep.subr.mxu0 0.0
    %1524 = vmatpush2.msra.mxu0 0.0
    %1525 = vmatprep.subr.mxu0 0.0
    %1526 = vmatpush2.msra.mxu0 0.0
    %1527 = vmatprep.subr.mxu0 0.0
    %1528 = vmatpush2.msra.mxu0 0.0
    %1529 = vmatprep.subr.mxu0 0.0
    %1530 = vmatpush2.msra.mxu0 0.0
    %1531 = vmatprep.subr.mxu0 0.0
    %1532 = vmatpush2.msra.mxu0 0.0
    %1533 = vmatprep.subr.mxu0 0.0
    %1534 = vmatpush2.msra.mxu0 0.0
    %1535 = vmatprep.subr.mxu0 0.0
    %1536 = vmatpush2.msra.mxu0 0.0
    %1537 = vmatprep.subr.mxu0 0.0
    %1538 = vmatpush2.msra.mxu0 0.0
    %1539 = vmatprep.subr.mxu0 0.0
    %1540 = vmatpush2.msra.mxu0 0.0
    %1541 = vmatprep.subr.mxu0 0.0
    %1542 = vmatpush2.msra.mxu0 0.0
    %1543 = vmatprep.subr.mxu0 0.0
    %1544 = vmatpush2.msra.mxu0 0.0
    %1545 = vmatprep.subr.mxu0 0.0
    %1546 = vmatpush2.msra.mxu0 0.0
    %1547 = vmatprep.subr.mxu0 0.0
    %1548 = vmatpush2.msra.mxu0 0.0
    %1549 = vmatprep.subr.mxu0 0.0
    %1550 = vmatpush2.msra.mxu0 0.0
    %1551 = vmatprep.mubr.f32.mxu0 0.0
    %1552 = vmatmul.mubr.f32.gmra.mxu0 %v884
    %v1553 = vpop.f32.mrf.mxu0
    %v1554 = vadd.f32 0.0, %v1553
    %v1555 = vpop.f32.mrf.mxu0
    %1556 = vdwg.mxu0
    %v1557 = vadd.f32 %v1486, %v1554
    %v1558 = vxor.u32 %v1557, 2147483648
    %v1559 = vmul.f32 %v1558, 1.442695
    %v1560 = vpow.pop %v1559
    %v1561 = vadd.f32 %v1560, 1.0
    %v1562 = vrcp.pop %v1561
    %v1563 = vmul.f32 1.0, %v1562
    %v1564 = vld [vmem:[%s318 + $0x2] sm:$0x3]
    %1565 = vmatprep.subr.mxu0 0.0
    %1566 = vmatpush1.msra.mxu0 0.0
    %1567 = vmatprep.subr.mxu0 0.0
    %1568 = vmatpush1.msra.mxu0 0.0
    %1569 = vmatprep.subr.mxu0 0.0
    %1570 = vmatpush1.msra.mxu0 0.0
    %1571 = vmatprep.subr.mxu0 0.0
    %1572 = vmatpush1.msra.mxu0 0.0
    %1573 = vmatprep.subr.mxu0 0.0
    %1574 = vmatpush1.msra.mxu0 0.0
    %1575 = vmatprep.subr.mxu0 0.0
    %1576 = vmatpush1.msra.mxu0 0.0
    %1577 = vmatprep.subr.mxu0 0.0
    %1578 = vmatpush1.msra.mxu0 0.0
    %1579 = vmatprep.subr.mxu0 0.0
    %1580 = vmatpush1.msra.mxu0 0.0
    %1581 = vmatprep.subr.mxu0 0.0
    %1582 = vmatpush1.msra.mxu0 0.0
    %1583 = vmatprep.subr.mxu0 0.0
    %1584 = vmatpush1.msra.mxu0 0.0
    %1585 = vmatprep.subr.mxu0 0.0
    %1586 = vmatpush1.msra.mxu0 0.0
    %1587 = vmatprep.subr.mxu0 0.0
    %1588 = vmatpush1.msra.mxu0 0.0
    %1589 = vmatprep.subr.mxu0 0.0
    %1590 = vmatpush1.msra.mxu0 %v423
    %1591 = vmatprep.subr.mxu0 0.0
    %1592 = vmatpush1.msra.mxu0 %v422
    %1593 = vmatprep.subr.mxu0 0.0
    %1594 = vmatpush1.msra.mxu0 %v421
    %1595 = vmatprep.subr.mxu0 0.0
    %1596 = vmatpush1.msra.mxu0 %v420
    %1597 = vmatprep.subr.mxu0 0.0
    %1598 = vmatpush2.msra.mxu0 0.0
    %1599 = vmatprep.subr.mxu0 0.0
    %1600 = vmatpush2.msra.mxu0 0.0
    %1601 = vmatprep.subr.mxu0 0.0
    %1602 = vmatpush2.msra.mxu0 0.0
    %1603 = vmatprep.subr.mxu0 0.0
    %1604 = vmatpush2.msra.mxu0 0.0
    %1605 = vmatprep.subr.mxu0 0.0
    %1606 = vmatpush2.msra.mxu0 0.0
    %1607 = vmatprep.subr.mxu0 0.0
    %1608 = vmatpush2.msra.mxu0 0.0
    %1609 = vmatprep.subr.mxu0 0.0
    %1610 = vmatpush2.msra.mxu0 0.0
    %1611 = vmatprep.subr.mxu0 0.0
    %1612 = vmatpush2.msra.mxu0 0.0
    %1613 = vmatprep.subr.mxu0 0.0
    %1614 = vmatpush2.msra.mxu0 0.0
    %1615 = vmatprep.subr.mxu0 0.0
    %1616 = vmatpush2.msra.mxu0 0.0
    %1617 = vmatprep.subr.mxu0 0.0
    %1618 = vmatpush2.msra.mxu0 0.0
    %1619 = vmatprep.subr.mxu0 0.0
    %1620 = vmatpush2.msra.mxu0 0.0
    %1621 = vmatprep.subr.mxu0 0.0
    %1622 = vmatpush2.msra.mxu0 0.0
    %1623 = vmatprep.subr.mxu0 0.0
    %1624 = vmatpush2.msra.mxu0 0.0
    %1625 = vmatprep.subr.mxu0 0.0
    %1626 = vmatpush2.msra.mxu0 0.0
    %1627 = vmatprep.subr.mxu0 0.0
    %1628 = vmatpush2.msra.mxu0 0.0
    %1629 = vmatprep.mubr.f32.mxu0 0.0
    %1630 = vmatmul.mubr.f32.gmra.mxu0 %v884
    %v1631 = vpop.f32.mrf.mxu0
    %v1632 = vadd.f32 0.0, %v1631
    %v1633 = vpop.f32.mrf.mxu0
    %1634 = vdwg.mxu0
    %v1635 = vadd.f32 %v1564, %v1632
    %v1636 = vtanh.pop %v1635
    %v1637 = vld [vmem:[%s407 + $0x2] sm:$0x3]
    %1638 = vmatprep.subr.mxu0 0.0
    %1639 = vmatpush1.msra.mxu0 0.0
    %1640 = vmatprep.subr.mxu0 0.0
    %1641 = vmatpush1.msra.mxu0 0.0
    %1642 = vmatprep.subr.mxu0 0.0
    %1643 = vmatpush1.msra.mxu0 0.0
    %1644 = vmatprep.subr.mxu0 0.0
    %1645 = vmatpush1.msra.mxu0 0.0
    %1646 = vmatprep.subr.mxu0 0.0
    %1647 = vmatpush1.msra.mxu0 0.0
    %1648 = vmatprep.subr.mxu0 0.0
    %1649 = vmatpush1.msra.mxu0 0.0
    %1650 = vmatprep.subr.mxu0 0.0
    %1651 = vmatpush1.msra.mxu0 0.0
    %1652 = vmatprep.subr.mxu0 0.0
    %1653 = vmatpush1.msra.mxu0 0.0
    %1654 = vmatprep.subr.mxu0 0.0
    %1655 = vmatpush1.msra.mxu0 0.0
    %1656 = vmatprep.subr.mxu0 0.0
    %1657 = vmatpush1.msra.mxu0 0.0
    %1658 = vmatprep.subr.mxu0 0.0
    %1659 = vmatpush1.msra.mxu0 0.0
    %1660 = vmatprep.subr.mxu0 0.0
    %1661 = vmatpush1.msra.mxu0 0.0
    %1662 = vmatprep.subr.mxu0 0.0
    %1663 = vmatpush1.msra.mxu0 %v428
    %1664 = vmatprep.subr.mxu0 0.0
    %1665 = vmatpush1.msra.mxu0 %v427
    %1666 = vmatprep.subr.mxu0 0.0
    %1667 = vmatpush1.msra.mxu0 %v426
    %1668 = vmatprep.subr.mxu0 0.0
    %1669 = vmatpush1.msra.mxu0 %v425
    %1670 = vmatprep.subr.mxu0 0.0
    %1671 = vmatpush2.msra.mxu0 0.0
    %1672 = vmatprep.subr.mxu0 0.0
    %1673 = vmatpush2.msra.mxu0 0.0
    %1674 = vmatprep.subr.mxu0 0.0
    %1675 = vmatpush2.msra.mxu0 0.0
    %1676 = vmatprep.subr.mxu0 0.0
    %1677 = vmatpush2.msra.mxu0 0.0
    %1678 = vmatprep.subr.mxu0 0.0
    %1679 = vmatpush2.msra.mxu0 0.0
    %1680 = vmatprep.subr.mxu0 0.0
    %1681 = vmatpush2.msra.mxu0 0.0
    %1682 = vmatprep.subr.mxu0 0.0
    %1683 = vmatpush2.msra.mxu0 0.0
    %1684 = vmatprep.subr.mxu0 0.0
    %1685 = vmatpush2.msra.mxu0 0.0
    %1686 = vmatprep.subr.mxu0 0.0
    %1687 = vmatpush2.msra.mxu0 0.0
    %1688 = vmatprep.subr.mxu0 0.0
    %1689 = vmatpush2.msra.mxu0 0.0
    %1690 = vmatprep.subr.mxu0 0.0
    %1691 = vmatpush2.msra.mxu0 0.0
    %1692 = vmatprep.subr.mxu0 0.0
    %1693 = vmatpush2.msra.mxu0 0.0
    %1694 = vmatprep.subr.mxu0 0.0
    %1695 = vmatpush2.msra.mxu0 0.0
    %1696 = vmatprep.subr.mxu0 0.0
    %1697 = vmatpush2.msra.mxu0 0.0
    %1698 = vmatprep.subr.mxu0 0.0
    %1699 = vmatpush2.msra.mxu0 0.0
    %1700 = vmatprep.subr.mxu0 0.0
    %1701 = vmatpush2.msra.mxu0 0.0
    %1702 = vmatprep.mubr.f32.mxu0 0.0
    %1703 = vmatmul.mubr.f32.gmra.mxu0 %v884
    %v1704 = vpop.f32.mrf.mxu0
    %v1705 = vadd.f32 0.0, %v1704
    %v1706 = vpop.f32.mrf.mxu0
    %1707 = vdwg.mxu0
    %v1708 = vadd.f32 %v1637, %v1705
    %v1709 = vxor.u32 %v1708, 2147483648
    %v1710 = vmul.f32 %v1709, 1.442695
    %v1711 = vpow.pop %v1710
    %v1712 = vadd.f32 %v1711, 1.0
    %v1713 = vrcp.pop %v1712
    %v1714 = vmul.f32 1.0, %v1713
    %v1715 = vmul.f32 %v1563, %v810
    %v1716 = vmul.f32 %v1485, %v1636
    %v1717 = vadd.f32 %v1715, %v1716
    %v1718 = vtanh.pop %v1717
    %v1719 = vmul.f32 %v1714, %v1718
    %v1721 = vsel %vm140, %v1403, 0
    %1723 = vmatprep.subr.mxu0 0.0
    %1724 = vmatpush1.msra.mxu0 0.0
    %1725 = vmatprep.subr.mxu0 0.0
    %1726 = vmatpush1.msra.mxu0 0.0
    %1727 = vmatprep.subr.mxu0 0.0
    %1728 = vmatpush1.msra.mxu0 0.0
    %1729 = vmatprep.subr.mxu0 0.0
    %1730 = vmatpush1.msra.mxu0 0.0
    %1731 = vmatprep.subr.mxu0 0.0
    %1732 = vmatpush1.msra.mxu0 0.0
    %1733 = vmatprep.subr.mxu0 0.0
    %1734 = vmatpush1.msra.mxu0 0.0
    %1735 = vmatprep.subr.mxu0 0.0
    %1736 = vmatpush1.msra.mxu0 0.0
    %1737 = vmatprep.subr.mxu0 0.0
    %1738 = vmatpush1.msra.mxu0 0.0
    %1739 = vmatprep.subr.mxu0 0.0
    %1740 = vmatpush1.msra.mxu0 0.0
    %1741 = vmatprep.subr.mxu0 0.0
    %1742 = vmatpush1.msra.mxu0 0.0
    %1743 = vmatprep.subr.mxu0 0.0
    %1744 = vmatpush1.msra.mxu0 0.0
    %1745 = vmatprep.subr.mxu0 0.0
    %1746 = vmatpush1.msra.mxu0 0.0
    %1747 = vmatprep.subr.mxu0 0.0
    %1748 = vmatpush1.msra.mxu0 %v451
    %1749 = vmatprep.subr.mxu0 0.0
    %1750 = vmatpush1.msra.mxu0 %v450
    %1751 = vmatprep.subr.mxu0 0.0
    %1752 = vmatpush1.msra.mxu0 %v449
    %1753 = vmatprep.subr.mxu0 0.0
    %1754 = vmatpush1.msra.mxu0 %v448
    %1755 = vmatprep.subr.mxu0 0.0
    %1756 = vmatpush2.msra.mxu0 0.0
    %1757 = vmatprep.subr.mxu0 0.0
    %1758 = vmatpush2.msra.mxu0 0.0
    %1759 = vmatprep.subr.mxu0 0.0
    %1760 = vmatpush2.msra.mxu0 0.0
    %1761 = vmatprep.subr.mxu0 0.0
    %1762 = vmatpush2.msra.mxu0 0.0
    %1763 = vmatprep.subr.mxu0 0.0
    %1764 = vmatpush2.msra.mxu0 0.0
    %1765 = vmatprep.subr.mxu0 0.0
    %1766 = vmatpush2.msra.mxu0 0.0
    %1767 = vmatprep.subr.mxu0 0.0
    %1768 = vmatpush2.msra.mxu0 0.0
    %1769 = vmatprep.subr.mxu0 0.0
    %1770 = vmatpush2.msra.mxu0 0.0
    %1771 = vmatprep.subr.mxu0 0.0
    %1772 = vmatpush2.msra.mxu0 0.0
    %1773 = vmatprep.subr.mxu0 0.0
    %1774 = vmatpush2.msra.mxu0 0.0
    %1775 = vmatprep.subr.mxu0 0.0
    %1776 = vmatpush2.msra.mxu0 0.0
    %1777 = vmatprep.subr.mxu0 0.0
    %1778 = vmatpush2.msra.mxu0 0.0
    %1779 = vmatprep.subr.mxu0 0.0
    %1780 = vmatpush2.msra.mxu0 0.0
    %1781 = vmatprep.subr.mxu0 0.0
    %1782 = vmatpush2.msra.mxu0 0.0
    %1783 = vmatprep.subr.mxu0 0.0
    %1784 = vmatpush2.msra.mxu0 0.0
    %1785 = vmatprep.subr.mxu0 0.0
    %1786 = vmatpush2.msra.mxu0 0.0
    %1787 = vmatprep.mubr.f32.mxu0 0.0
    %1788 = vmatmul.mubr.f32.gmra.mxu0 %v1721
    %v1789 = vpop.f32.mrf.mxu0
    %v1790 = vadd.f32 0.0, %v1789
    %v1791 = vpop.f32.mrf.mxu0
    %1792 = vdwg.mxu0
    %v1794 = vsel %vm140, %v1719, 0
    %1796 = vmatprep.subr.mxu0 0.0
    %1797 = vmatpush1.msra.mxu0 0.0
    %1798 = vmatprep.subr.mxu0 0.0
    %1799 = vmatpush1.msra.mxu0 0.0
    %1800 = vmatprep.subr.mxu0 0.0
    %1801 = vmatpush1.msra.mxu0 0.0
    %1802 = vmatprep.subr.mxu0 0.0
    %1803 = vmatpush1.msra.mxu0 0.0
    %1804 = vmatprep.subr.mxu0 0.0
    %1805 = vmatpush1.msra.mxu0 0.0
    %1806 = vmatprep.subr.mxu0 0.0
    %1807 = vmatpush1.msra.mxu0 0.0
    %1808 = vmatprep.subr.mxu0 0.0
    %1809 = vmatpush1.msra.mxu0 0.0
    %1810 = vmatprep.subr.mxu0 0.0
    %1811 = vmatpush1.msra.mxu0 0.0
    %1812 = vmatprep.subr.mxu0 0.0
    %1813 = vmatpush1.msra.mxu0 0.0
    %1814 = vmatprep.subr.mxu0 0.0
    %1815 = vmatpush1.msra.mxu0 0.0
    %1816 = vmatprep.subr.mxu0 0.0
    %1817 = vmatpush1.msra.mxu0 0.0
    %1818 = vmatprep.subr.mxu0 0.0
    %1819 = vmatpush1.msra.mxu0 0.0
    %1820 = vmatprep.subr.mxu0 0.0
    %1821 = vmatpush1.msra.mxu0 %v432
    %1822 = vmatprep.subr.mxu0 0.0
    %1823 = vmatpush1.msra.mxu0 %v431
    %1824 = vmatprep.subr.mxu0 0.0
    %1825 = vmatpush1.msra.mxu0 %v430
    %1826 = vmatprep.subr.mxu0 0.0
    %1827 = vmatpush1.msra.mxu0 %v429
    %1828 = vmatprep.subr.mxu0 0.0
    %1829 = vmatpush2.msra.mxu0 0.0
    %1830 = vmatprep.subr.mxu0 0.0
    %1831 = vmatpush2.msra.mxu0 0.0
    %1832 = vmatprep.subr.mxu0 0.0
    %1833 = vmatpush2.msra.mxu0 0.0
    %1834 = vmatprep.subr.mxu0 0.0
    %1835 = vmatpush2.msra.mxu0 0.0
    %1836 = vmatprep.subr.mxu0 0.0
    %1837 = vmatpush2.msra.mxu0 0.0
    %1838 = vmatprep.subr.mxu0 0.0
    %1839 = vmatpush2.msra.mxu0 0.0
    %1840 = vmatprep.subr.mxu0 0.0
    %1841 = vmatpush2.msra.mxu0 0.0
    %1842 = vmatprep.subr.mxu0 0.0
    %1843 = vmatpush2.msra.mxu0 0.0
    %1844 = vmatprep.subr.mxu0 0.0
    %1845 = vmatpush2.msra.mxu0 0.0
    %1846 = vmatprep.subr.mxu0 0.0
    %1847 = vmatpush2.msra.mxu0 0.0
    %1848 = vmatprep.subr.mxu0 0.0
    %1849 = vmatpush2.msra.mxu0 0.0
    %1850 = vmatprep.subr.mxu0 0.0
    %1851 = vmatpush2.msra.mxu0 0.0
    %1852 = vmatprep.subr.mxu0 0.0
    %1853 = vmatpush2.msra.mxu0 0.0
    %1854 = vmatprep.subr.mxu0 0.0
    %1855 = vmatpush2.msra.mxu0 0.0
    %1856 = vmatprep.subr.mxu0 0.0
    %1857 = vmatpush2.msra.mxu0 0.0
    %1858 = vmatprep.subr.mxu0 0.0
    %1859 = vmatpush2.msra.mxu0 0.0
    %1860 = vmatprep.mubr.f32.mxu0 0.0
    %1861 = vmatmul.mubr.f32.gmra.mxu0 %v1794
    %v1862 = vpop.f32.mrf.mxu0
    %v1863 = vadd.f32 %v1790, %v1862
    %v1864 = vpop.f32.mrf.mxu0
    %1865 = vdwg.mxu0
    %v1866 = vadd.f32 %v1863, %v472
    %v1867 = vxor.u32 %v1866, 2147483648
    %v1868 = vmul.f32 %v1867, 1.442695
    %v1869 = vpow.pop %v1868
    %v1870 = vadd.f32 %v1869, 1.0
    %v1871 = vrcp.pop %v1870
    %v1872 = vmul.f32 1.0, %v1871
    %1873 = vmatprep.subr.mxu0 0.0
    %1874 = vmatpush1.msra.mxu0 0.0
    %1875 = vmatprep.subr.mxu0 0.0
    %1876 = vmatpush1.msra.mxu0 0.0
    %1877 = vmatprep.subr.mxu0 0.0
    %1878 = vmatpush1.msra.mxu0 0.0
    %1879 = vmatprep.subr.mxu0 0.0
    %1880 = vmatpush1.msra.mxu0 0.0
    %1881 = vmatprep.subr.mxu0 0.0
    %1882 = vmatpush1.msra.mxu0 0.0
    %1883 = vmatprep.subr.mxu0 0.0
    %1884 = vmatpush1.msra.mxu0 0.0
    %1885 = vmatprep.subr.mxu0 0.0
    %1886 = vmatpush1.msra.mxu0 0.0
    %1887 = vmatprep.subr.mxu0 0.0
    %1888 = vmatpush1.msra.mxu0 0.0
    %1889 = vmatprep.subr.mxu0 0.0
    %1890 = vmatpush1.msra.mxu0 0.0
    %1891 = vmatprep.subr.mxu0 0.0
    %1892 = vmatpush1.msra.mxu0 0.0
    %1893 = vmatprep.subr.mxu0 0.0
    %1894 = vmatpush1.msra.mxu0 0.0
    %1895 = vmatprep.subr.mxu0 0.0
    %1896 = vmatpush1.msra.mxu0 0.0
    %1897 = vmatprep.subr.mxu0 0.0
    %1898 = vmatpush1.msra.mxu0 %v456
    %1899 = vmatprep.subr.mxu0 0.0
    %1900 = vmatpush1.msra.mxu0 %v455
    %1901 = vmatprep.subr.mxu0 0.0
    %1902 = vmatpush1.msra.mxu0 %v454
    %1903 = vmatprep.subr.mxu0 0.0
    %1904 = vmatpush1.msra.mxu0 %v453
    %1905 = vmatprep.subr.mxu0 0.0
    %1906 = vmatpush2.msra.mxu0 0.0
    %1907 = vmatprep.subr.mxu0 0.0
    %1908 = vmatpush2.msra.mxu0 0.0
    %1909 = vmatprep.subr.mxu0 0.0
    %1910 = vmatpush2.msra.mxu0 0.0
    %1911 = vmatprep.subr.mxu0 0.0
    %1912 = vmatpush2.msra.mxu0 0.0
    %1913 = vmatprep.subr.mxu0 0.0
    %1914 = vmatpush2.msra.mxu0 0.0
    %1915 = vmatprep.subr.mxu0 0.0
    %1916 = vmatpush2.msra.mxu0 0.0
    %1917 = vmatprep.subr.mxu0 0.0
    %1918 = vmatpush2.msra.mxu0 0.0
    %1919 = vmatprep.subr.mxu0 0.0
    %1920 = vmatpush2.msra.mxu0 0.0
    %1921 = vmatprep.subr.mxu0 0.0
    %1922 = vmatpush2.msra.mxu0 0.0
    %1923 = vmatprep.subr.mxu0 0.0
    %1924 = vmatpush2.msra.mxu0 0.0
    %1925 = vmatprep.subr.mxu0 0.0
    %1926 = vmatpush2.msra.mxu0 0.0
    %1927 = vmatprep.subr.mxu0 0.0
    %1928 = vmatpush2.msra.mxu0 0.0
    %1929 = vmatprep.subr.mxu0 0.0
    %1930 = vmatpush2.msra.mxu0 0.0
    %1931 = vmatprep.subr.mxu0 0.0
    %1932 = vmatpush2.msra.mxu0 0.0
    %1933 = vmatprep.subr.mxu0 0.0
    %1934 = vmatpush2.msra.mxu0 0.0
    %1935 = vmatprep.subr.mxu0 0.0
    %1936 = vmatpush2.msra.mxu0 0.0
    %1937 = vmatprep.mubr.f32.mxu0 0.0
    %1938 = vmatmul.mubr.f32.gmra.mxu0 %v1721
    %v1939 = vpop.f32.mrf.mxu0
    %v1940 = vadd.f32 0.0, %v1939
    %v1941 = vpop.f32.mrf.mxu0
    %1942 = vdwg.mxu0
    %1943 = vmatprep.subr.mxu0 0.0
    %1944 = vmatpush1.msra.mxu0 0.0
    %1945 = vmatprep.subr.mxu0 0.0
    %1946 = vmatpush1.msra.mxu0 0.0
    %1947 = vmatprep.subr.mxu0 0.0
    %1948 = vmatpush1.msra.mxu0 0.0
    %1949 = vmatprep.subr.mxu0 0.0
    %1950 = vmatpush1.msra.mxu0 0.0
    %1951 = vmatprep.subr.mxu0 0.0
    %1952 = vmatpush1.msra.mxu0 0.0
    %1953 = vmatprep.subr.mxu0 0.0
    %1954 = vmatpush1.msra.mxu0 0.0
    %1955 = vmatprep.subr.mxu0 0.0
    %1956 = vmatpush1.msra.mxu0 0.0
    %1957 = vmatprep.subr.mxu0 0.0
    %1958 = vmatpush1.msra.mxu0 0.0
    %1959 = vmatprep.subr.mxu0 0.0
    %1960 = vmatpush1.msra.mxu0 0.0
    %1961 = vmatprep.subr.mxu0 0.0
    %1962 = vmatpush1.msra.mxu0 0.0
    %1963 = vmatprep.subr.mxu0 0.0
    %1964 = vmatpush1.msra.mxu0 0.0
    %1965 = vmatprep.subr.mxu0 0.0
    %1966 = vmatpush1.msra.mxu0 0.0
    %1967 = vmatprep.subr.mxu0 0.0
    %1968 = vmatpush1.msra.mxu0 %v437
    %1969 = vmatprep.subr.mxu0 0.0
    %1970 = vmatpush1.msra.mxu0 %v436
    %1971 = vmatprep.subr.mxu0 0.0
    %1972 = vmatpush1.msra.mxu0 %v435
    %1973 = vmatprep.subr.mxu0 0.0
    %1974 = vmatpush1.msra.mxu0 %v434
    %1975 = vmatprep.subr.mxu0 0.0
    %1976 = vmatpush2.msra.mxu0 0.0
    %1977 = vmatprep.subr.mxu0 0.0
    %1978 = vmatpush2.msra.mxu0 0.0
    %1979 = vmatprep.subr.mxu0 0.0
    %1980 = vmatpush2.msra.mxu0 0.0
    %1981 = vmatprep.subr.mxu0 0.0
    %1982 = vmatpush2.msra.mxu0 0.0
    %1983 = vmatprep.subr.mxu0 0.0
    %1984 = vmatpush2.msra.mxu0 0.0
    %1985 = vmatprep.subr.mxu0 0.0
    %1986 = vmatpush2.msra.mxu0 0.0
    %1987 = vmatprep.subr.mxu0 0.0
    %1988 = vmatpush2.msra.mxu0 0.0
    %1989 = vmatprep.subr.mxu0 0.0
    %1990 = vmatpush2.msra.mxu0 0.0
    %1991 = vmatprep.subr.mxu0 0.0
    %1992 = vmatpush2.msra.mxu0 0.0
    %1993 = vmatprep.subr.mxu0 0.0
    %1994 = vmatpush2.msra.mxu0 0.0
    %1995 = vmatprep.subr.mxu0 0.0
    %1996 = vmatpush2.msra.mxu0 0.0
    %1997 = vmatprep.subr.mxu0 0.0
    %1998 = vmatpush2.msra.mxu0 0.0
    %1999 = vmatprep.subr.mxu0 0.0
    %2000 = vmatpush2.msra.mxu0 0.0
    %2001 = vmatprep.subr.mxu0 0.0
    %2002 = vmatpush2.msra.mxu0 0.0
    %2003 = vmatprep.subr.mxu0 0.0
    %2004 = vmatpush2.msra.mxu0 0.0
    %2005 = vmatprep.subr.mxu0 0.0
    %2006 = vmatpush2.msra.mxu0 0.0
    %2007 = vmatprep.mubr.f32.mxu0 0.0
    %2008 = vmatmul.mubr.f32.gmra.mxu0 %v1794
    %v2009 = vpop.f32.mrf.mxu0
    %v2010 = vadd.f32 %v1940, %v2009
    %v2011 = vpop.f32.mrf.mxu0
    %2012 = vdwg.mxu0
    %v2013 = vadd.f32 %v2010, %v480
    %v2014 = vxor.u32 %v2013, 2147483648
    %v2015 = vmul.f32 %v2014, 1.442695
    %v2016 = vpow.pop %v2015
    %v2017 = vadd.f32 %v2016, 1.0
    %v2018 = vrcp.pop %v2017
    %v2019 = vmul.f32 1.0, %v2018
    %2020 = vmatprep.subr.mxu0 0.0
    %2021 = vmatpush1.msra.mxu0 0.0
    %2022 = vmatprep.subr.mxu0 0.0
    %2023 = vmatpush1.msra.mxu0 0.0
    %2024 = vmatprep.subr.mxu0 0.0
    %2025 = vmatpush1.msra.mxu0 0.0
    %2026 = vmatprep.subr.mxu0 0.0
    %2027 = vmatpush1.msra.mxu0 0.0
    %2028 = vmatprep.subr.mxu0 0.0
    %2029 = vmatpush1.msra.mxu0 0.0
    %2030 = vmatprep.subr.mxu0 0.0
    %2031 = vmatpush1.msra.mxu0 0.0
    %2032 = vmatprep.subr.mxu0 0.0
    %2033 = vmatpush1.msra.mxu0 0.0
    %2034 = vmatprep.subr.mxu0 0.0
    %2035 = vmatpush1.msra.mxu0 0.0
    %2036 = vmatprep.subr.mxu0 0.0
    %2037 = vmatpush1.msra.mxu0 0.0
    %2038 = vmatprep.subr.mxu0 0.0
    %2039 = vmatpush1.msra.mxu0 0.0
    %2040 = vmatprep.subr.mxu0 0.0
    %2041 = vmatpush1.msra.mxu0 0.0
    %2042 = vmatprep.subr.mxu0 0.0
    %2043 = vmatpush1.msra.mxu0 0.0
    %2044 = vmatprep.subr.mxu0 0.0
    %2045 = vmatpush1.msra.mxu0 %v461
    %2046 = vmatprep.subr.mxu0 0.0
    %2047 = vmatpush1.msra.mxu0 %v460
    %2048 = vmatprep.subr.mxu0 0.0
    %2049 = vmatpush1.msra.mxu0 %v459
    %2050 = vmatprep.subr.mxu0 0.0
    %2051 = vmatpush1.msra.mxu0 %v458
    %2052 = vmatprep.subr.mxu0 0.0
    %2053 = vmatpush2.msra.mxu0 0.0
    %2054 = vmatprep.subr.mxu0 0.0
    %2055 = vmatpush2.msra.mxu0 0.0
    %2056 = vmatprep.subr.mxu0 0.0
    %2057 = vmatpush2.msra.mxu0 0.0
    %2058 = vmatprep.subr.mxu0 0.0
    %2059 = vmatpush2.msra.mxu0 0.0
    %2060 = vmatprep.subr.mxu0 0.0
    %2061 = vmatpush2.msra.mxu0 0.0
    %2062 = vmatprep.subr.mxu0 0.0
    %2063 = vmatpush2.msra.mxu0 0.0
    %2064 = vmatprep.subr.mxu0 0.0
    %2065 = vmatpush2.msra.mxu0 0.0
    %2066 = vmatprep.subr.mxu0 0.0
    %2067 = vmatpush2.msra.mxu0 0.0
    %2068 = vmatprep.subr.mxu0 0.0
    %2069 = vmatpush2.msra.mxu0 0.0
    %2070 = vmatprep.subr.mxu0 0.0
    %2071 = vmatpush2.msra.mxu0 0.0
    %2072 = vmatprep.subr.mxu0 0.0
    %2073 = vmatpush2.msra.mxu0 0.0
    %2074 = vmatprep.subr.mxu0 0.0
    %2075 = vmatpush2.msra.mxu0 0.0
    %2076 = vmatprep.subr.mxu0 0.0
    %2077 = vmatpush2.msra.mxu0 0.0
    %2078 = vmatprep.subr.mxu0 0.0
    %2079 = vmatpush2.msra.mxu0 0.0
    %2080 = vmatprep.subr.mxu0 0.0
    %2081 = vmatpush2.msra.mxu0 0.0
    %2082 = vmatprep.subr.mxu0 0.0
    %2083 = vmatpush2.msra.mxu0 0.0
    %2084 = vmatprep.mubr.f32.mxu0 0.0
    %2085 = vmatmul.mubr.f32.gmra.mxu0 %v1721
    %v2086 = vpop.f32.mrf.mxu0
    %v2087 = vadd.f32 0.0, %v2086
    %v2088 = vpop.f32.mrf.mxu0
    %2089 = vdwg.mxu0
    %2090 = vmatprep.subr.mxu0 0.0
    %2091 = vmatpush1.msra.mxu0 0.0
    %2092 = vmatprep.subr.mxu0 0.0
    %2093 = vmatpush1.msra.mxu0 0.0
    %2094 = vmatprep.subr.mxu0 0.0
    %2095 = vmatpush1.msra.mxu0 0.0
    %2096 = vmatprep.subr.mxu0 0.0
    %2097 = vmatpush1.msra.mxu0 0.0
    %2098 = vmatprep.subr.mxu0 0.0
    %2099 = vmatpush1.msra.mxu0 0.0
    %2100 = vmatprep.subr.mxu0 0.0
    %2101 = vmatpush1.msra.mxu0 0.0
    %2102 = vmatprep.subr.mxu0 0.0
    %2103 = vmatpush1.msra.mxu0 0.0
    %2104 = vmatprep.subr.mxu0 0.0
    %2105 = vmatpush1.msra.mxu0 0.0
    %2106 = vmatprep.subr.mxu0 0.0
    %2107 = vmatpush1.msra.mxu0 0.0
    %2108 = vmatprep.subr.mxu0 0.0
    %2109 = vmatpush1.msra.mxu0 0.0
    %2110 = vmatprep.subr.mxu0 0.0
    %2111 = vmatpush1.msra.mxu0 0.0
    %2112 = vmatprep.subr.mxu0 0.0
    %2113 = vmatpush1.msra.mxu0 0.0
    %2114 = vmatprep.subr.mxu0 0.0
    %2115 = vmatpush1.msra.mxu0 %v442
    %2116 = vmatprep.subr.mxu0 0.0
    %2117 = vmatpush1.msra.mxu0 %v441
    %2118 = vmatprep.subr.mxu0 0.0
    %2119 = vmatpush1.msra.mxu0 %v440
    %2120 = vmatprep.subr.mxu0 0.0
    %2121 = vmatpush1.msra.mxu0 %v439
    %2122 = vmatprep.subr.mxu0 0.0
    %2123 = vmatpush2.msra.mxu0 0.0
    %2124 = vmatprep.subr.mxu0 0.0
    %2125 = vmatpush2.msra.mxu0 0.0
    %2126 = vmatprep.subr.mxu0 0.0
    %2127 = vmatpush2.msra.mxu0 0.0
    %2128 = vmatprep.subr.mxu0 0.0
    %2129 = vmatpush2.msra.mxu0 0.0
    %2130 = vmatprep.subr.mxu0 0.0
    %2131 = vmatpush2.msra.mxu0 0.0
    %2132 = vmatprep.subr.mxu0 0.0
    %2133 = vmatpush2.msra.mxu0 0.0
    %2134 = vmatprep.subr.mxu0 0.0
    %2135 = vmatpush2.msra.mxu0 0.0
    %2136 = vmatprep.subr.mxu0 0.0
    %2137 = vmatpush2.msra.mxu0 0.0
    %2138 = vmatprep.subr.mxu0 0.0
    %2139 = vmatpush2.msra.mxu0 0.0
    %2140 = vmatprep.subr.mxu0 0.0
    %2141 = vmatpush2.msra.mxu0 0.0
    %2142 = vmatprep.subr.mxu0 0.0
    %2143 = vmatpush2.msra.mxu0 0.0
    %2144 = vmatprep.subr.mxu0 0.0
    %2145 = vmatpush2.msra.mxu0 0.0
    %2146 = vmatprep.subr.mxu0 0.0
    %2147 = vmatpush2.msra.mxu0 0.0
    %2148 = vmatprep.subr.mxu0 0.0
    %2149 = vmatpush2.msra.mxu0 0.0
    %2150 = vmatprep.subr.mxu0 0.0
    %2151 = vmatpush2.msra.mxu0 0.0
    %2152 = vmatprep.subr.mxu0 0.0
    %2153 = vmatpush2.msra.mxu0 0.0
    %2154 = vmatprep.mubr.f32.mxu0 0.0
    %2155 = vmatmul.mubr.f32.gmra.mxu0 %v1794
    %v2156 = vpop.f32.mrf.mxu0
    %v2157 = vadd.f32 %v2087, %v2156
    %v2158 = vpop.f32.mrf.mxu0
    %2159 = vdwg.mxu0
    %v2160 = vadd.f32 %v2157, %v488
    %v2161 = vtanh.pop %v2160
    %2162 = vmatprep.subr.mxu0 0.0
    %2163 = vmatpush1.msra.mxu0 0.0
    %2164 = vmatprep.subr.mxu0 0.0
    %2165 = vmatpush1.msra.mxu0 0.0
    %2166 = vmatprep.subr.mxu0 0.0
    %2167 = vmatpush1.msra.mxu0 0.0
    %2168 = vmatprep.subr.mxu0 0.0
    %2169 = vmatpush1.msra.mxu0 0.0
    %2170 = vmatprep.subr.mxu0 0.0
    %2171 = vmatpush1.msra.mxu0 0.0
    %2172 = vmatprep.subr.mxu0 0.0
    %2173 = vmatpush1.msra.mxu0 0.0
    %2174 = vmatprep.subr.mxu0 0.0
    %2175 = vmatpush1.msra.mxu0 0.0
    %2176 = vmatprep.subr.mxu0 0.0
    %2177 = vmatpush1.msra.mxu0 0.0
    %2178 = vmatprep.subr.mxu0 0.0
    %2179 = vmatpush1.msra.mxu0 0.0
    %2180 = vmatprep.subr.mxu0 0.0
    %2181 = vmatpush1.msra.mxu0 0.0
    %2182 = vmatprep.subr.mxu0 0.0
    %2183 = vmatpush1.msra.mxu0 0.0
    %2184 = vmatprep.subr.mxu0 0.0
    %2185 = vmatpush1.msra.mxu0 0.0
    %2186 = vmatprep.subr.mxu0 0.0
    %2187 = vmatpush1.msra.mxu0 %v466
    %2188 = vmatprep.subr.mxu0 0.0
    %2189 = vmatpush1.msra.mxu0 %v465
    %2190 = vmatprep.subr.mxu0 0.0
    %2191 = vmatpush1.msra.mxu0 %v464
    %2192 = vmatprep.subr.mxu0 0.0
    %2193 = vmatpush1.msra.mxu0 %v463
    %2194 = vmatprep.subr.mxu0 0.0
    %2195 = vmatpush2.msra.mxu0 0.0
    %2196 = vmatprep.subr.mxu0 0.0
    %2197 = vmatpush2.msra.mxu0 0.0
    %2198 = vmatprep.subr.mxu0 0.0
    %2199 = vmatpush2.msra.mxu0 0.0
    %2200 = vmatprep.subr.mxu0 0.0
    %2201 = vmatpush2.msra.mxu0 0.0
    %2202 = vmatprep.subr.mxu0 0.0
    %2203 = vmatpush2.msra.mxu0 0.0
    %2204 = vmatprep.subr.mxu0 0.0
    %2205 = vmatpush2.msra.mxu0 0.0
    %2206 = vmatprep.subr.mxu0 0.0
    %2207 = vmatpush2.msra.mxu0 0.0
    %2208 = vmatprep.subr.mxu0 0.0
    %2209 = vmatpush2.msra.mxu0 0.0
    %2210 = vmatprep.subr.mxu0 0.0
    %2211 = vmatpush2.msra.mxu0 0.0
    %2212 = vmatprep.subr.mxu0 0.0
    %2213 = vmatpush2.msra.mxu0 0.0
    %2214 = vmatprep.subr.mxu0 0.0
    %2215 = vmatpush2.msra.mxu0 0.0
    %2216 = vmatprep.subr.mxu0 0.0
    %2217 = vmatpush2.msra.mxu0 0.0
    %2218 = vmatprep.subr.mxu0 0.0
    %2219 = vmatpush2.msra.mxu0 0.0
    %2220 = vmatprep.subr.mxu0 0.0
    %2221 = vmatpush2.msra.mxu0 0.0
    %2222 = vmatprep.subr.mxu0 0.0
    %2223 = vmatpush2.msra.mxu0 0.0
    %2224 = vmatprep.subr.mxu0 0.0
    %2225 = vmatpush2.msra.mxu0 0.0
    %2226 = vmatprep.mubr.f32.mxu0 0.0
    %2227 = vmatmul.mubr.f32.gmra.mxu0 %v1721
    %v2228 = vpop.f32.mrf.mxu0
    %v2229 = vadd.f32 0.0, %v2228
    %v2230 = vpop.f32.mrf.mxu0
    %2231 = vdwg.mxu0
    %2232 = vmatprep.subr.mxu0 0.0
    %2233 = vmatpush1.msra.mxu0 0.0
    %2234 = vmatprep.subr.mxu0 0.0
    %2235 = vmatpush1.msra.mxu0 0.0
    %2236 = vmatprep.subr.mxu0 0.0
    %2237 = vmatpush1.msra.mxu0 0.0
    %2238 = vmatprep.subr.mxu0 0.0
    %2239 = vmatpush1.msra.mxu0 0.0
    %2240 = vmatprep.subr.mxu0 0.0
    %2241 = vmatpush1.msra.mxu0 0.0
    %2242 = vmatprep.subr.mxu0 0.0
    %2243 = vmatpush1.msra.mxu0 0.0
    %2244 = vmatprep.subr.mxu0 0.0
    %2245 = vmatpush1.msra.mxu0 0.0
    %2246 = vmatprep.subr.mxu0 0.0
    %2247 = vmatpush1.msra.mxu0 0.0
    %2248 = vmatprep.subr.mxu0 0.0
    %2249 = vmatpush1.msra.mxu0 0.0
    %2250 = vmatprep.subr.mxu0 0.0
    %2251 = vmatpush1.msra.mxu0 0.0
    %2252 = vmatprep.subr.mxu0 0.0
    %2253 = vmatpush1.msra.mxu0 0.0
    %2254 = vmatprep.subr.mxu0 0.0
    %2255 = vmatpush1.msra.mxu0 0.0
    %2256 = vmatprep.subr.mxu0 0.0
    %2257 = vmatpush1.msra.mxu0 %v447
    %2258 = vmatprep.subr.mxu0 0.0
    %2259 = vmatpush1.msra.mxu0 %v446
    %2260 = vmatprep.subr.mxu0 0.0
    %2261 = vmatpush1.msra.mxu0 %v445
    %2262 = vmatprep.subr.mxu0 0.0
    %2263 = vmatpush1.msra.mxu0 %v444
    %2264 = vmatprep.subr.mxu0 0.0
    %2265 = vmatpush2.msra.mxu0 0.0
    %2266 = vmatprep.subr.mxu0 0.0
    %2267 = vmatpush2.msra.mxu0 0.0
    %2268 = vmatprep.subr.mxu0 0.0
    %2269 = vmatpush2.msra.mxu0 0.0
    %2270 = vmatprep.subr.mxu0 0.0
    %2271 = vmatpush2.msra.mxu0 0.0
    %2272 = vmatprep.subr.mxu0 0.0
    %2273 = vmatpush2.msra.mxu0 0.0
    %2274 = vmatprep.subr.mxu0 0.0
    %2275 = vmatpush2.msra.mxu0 0.0
    %2276 = vmatprep.subr.mxu0 0.0
    %2277 = vmatpush2.msra.mxu0 0.0
    %2278 = vmatprep.subr.mxu0 0.0
    %2279 = vmatpush2.msra.mxu0 0.0
    %2280 = vmatprep.subr.mxu0 0.0
    %2281 = vmatpush2.msra.mxu0 0.0
    %2282 = vmatprep.subr.mxu0 0.0
    %2283 = vmatpush2.msra.mxu0 0.0
    %2284 = vmatprep.subr.mxu0 0.0
    %2285 = vmatpush2.msra.mxu0 0.0
    %2286 = vmatprep.subr.mxu0 0.0
    %2287 = vmatpush2.msra.mxu0 0.0
    %2288 = vmatprep.subr.mxu0 0.0
    %2289 = vmatpush2.msra.mxu0 0.0
    %2290 = vmatprep.subr.mxu0 0.0
    %2291 = vmatpush2.msra.mxu0 0.0
    %2292 = vmatprep.subr.mxu0 0.0
    %2293 = vmatpush2.msra.mxu0 0.0
    %2294 = vmatprep.subr.mxu0 0.0
    %2295 = vmatpush2.msra.mxu0 0.0
    %2296 = vmatprep.mubr.f32.mxu0 0.0
    %2297 = vmatmul.mubr.f32.gmra.mxu0 %v1794
    %v2298 = vpop.f32.mrf.mxu0
    %v2299 = vadd.f32 %v2229, %v2298
    %v2300 = vpop.f32.mrf.mxu0
    %2301 = vdwg.mxu0
    %v2302 = vadd.f32 %v2299, %v496
    %v2303 = vxor.u32 %v2302, 2147483648
    %v2304 = vmul.f32 %v2303, 1.442695
    %v2305 = vpow.pop %v2304
    %v2306 = vadd.f32 %v2305, 1.0
    %v2307 = vrcp.pop %v2306
    %v2308 = vmul.f32 1.0, %v2307
    %v2309 = vmul.f32 %v2019, %v1401
    %v2310 = vmul.f32 %v1872, %v2161
    %v2311 = vadd.f32 %v2309, %v2310
    %v2312 = vtanh.pop %v2311
    %v2313 = vmul.f32 %v2308, %v2312
    %s2314 = sld [smem:[#allocation4 + $0x1]]
    %v2315 = vstv %s2314
    %v2316 = vmul.f32 %v2315, %v2313
    %v2317 = vadd.f32 %v1407, %v2316
    %v2318 = vld [vmem:[#allocation2 + $0x4] sm:$0x3]
    %2319 = vmatprep.subr.mxu0 0.0
    %2320 = vmatpush1.msra.mxu0 0.0
    %2321 = vmatprep.subr.mxu0 0.0
    %2322 = vmatpush1.msra.mxu0 0.0
    %2323 = vmatprep.subr.mxu0 0.0
    %2324 = vmatpush1.msra.mxu0 0.0
    %2325 = vmatprep.subr.mxu0 0.0
    %2326 = vmatpush1.msra.mxu0 0.0
    %2327 = vmatprep.subr.mxu0 0.0
    %2328 = vmatpush1.msra.mxu0 0.0
    %2329 = vmatprep.subr.mxu0 0.0
    %2330 = vmatpush1.msra.mxu0 0.0
    %2331 = vmatprep.subr.mxu0 0.0
    %2332 = vmatpush1.msra.mxu0 0.0
    %2333 = vmatprep.subr.mxu0 0.0
    %2334 = vmatpush1.msra.mxu0 0.0
    %2335 = vmatprep.subr.mxu0 0.0
    %2336 = vmatpush1.msra.mxu0 0.0
    %2337 = vmatprep.subr.mxu0 0.0
    %2338 = vmatpush1.msra.mxu0 0.0
    %2339 = vmatprep.subr.mxu0 0.0
    %2340 = vmatpush1.msra.mxu0 0.0
    %2341 = vmatprep.subr.mxu0 0.0
    %2342 = vmatpush1.msra.mxu0 0.0
    %2343 = vmatprep.subr.mxu0 0.0
    %2344 = vmatpush1.msra.mxu0 %v413
    %2345 = vmatprep.subr.mxu0 0.0
    %2346 = vmatpush1.msra.mxu0 %v412
    %2347 = vmatprep.subr.mxu0 0.0
    %2348 = vmatpush1.msra.mxu0 %v411
    %2349 = vmatprep.subr.mxu0 0.0
    %2350 = vmatpush1.msra.mxu0 %v410
    %2351 = vmatprep.subr.mxu0 0.0
    %2352 = vmatpush2.msra.mxu0 0.0
    %2353 = vmatprep.subr.mxu0 0.0
    %2354 = vmatpush2.msra.mxu0 0.0
    %2355 = vmatprep.subr.mxu0 0.0
    %2356 = vmatpush2.msra.mxu0 0.0
    %2357 = vmatprep.subr.mxu0 0.0
    %2358 = vmatpush2.msra.mxu0 0.0
    %2359 = vmatprep.subr.mxu0 0.0
    %2360 = vmatpush2.msra.mxu0 0.0
    %2361 = vmatprep.subr.mxu0 0.0
    %2362 = vmatpush2.msra.mxu0 0.0
    %2363 = vmatprep.subr.mxu0 0.0
    %2364 = vmatpush2.msra.mxu0 0.0
    %2365 = vmatprep.subr.mxu0 0.0
    %2366 = vmatpush2.msra.mxu0 0.0
    %2367 = vmatprep.subr.mxu0 0.0
    %2368 = vmatpush2.msra.mxu0 0.0
    %2369 = vmatprep.subr.mxu0 0.0
    %2370 = vmatpush2.msra.mxu0 0.0
    %2371 = vmatprep.subr.mxu0 0.0
    %2372 = vmatpush2.msra.mxu0 0.0
    %2373 = vmatprep.subr.mxu0 0.0
    %2374 = vmatpush2.msra.mxu0 0.0
    %2375 = vmatprep.subr.mxu0 0.0
    %2376 = vmatpush2.msra.mxu0 0.0
    %2377 = vmatprep.subr.mxu0 0.0
    %2378 = vmatpush2.msra.mxu0 0.0
    %2379 = vmatprep.subr.mxu0 0.0
    %2380 = vmatpush2.msra.mxu0 0.0
    %2381 = vmatprep.subr.mxu0 0.0
    %2382 = vmatpush2.msra.mxu0 0.0
    %2383 = vmatprep.mubr.f32.mxu0 0.0
    %2384 = vmatmul.mubr.f32.gmra.mxu0 %v1794
    %v2385 = vpop.f32.mrf.mxu0
    %v2386 = vadd.f32 0.0, %v2385
    %v2387 = vpop.f32.mrf.mxu0
    %2388 = vdwg.mxu0
    %v2389 = vadd.f32 %v2318, %v2386
    %v2390 = vxor.u32 %v2389, 2147483648
    %v2391 = vmul.f32 %v2390, 1.442695
    %v2392 = vpow.pop %v2391
    %v2393 = vadd.f32 %v2392, 1.0
    %v2394 = vrcp.pop %v2393
    %v2395 = vmul.f32 1.0, %v2394
    %v2396 = vld [vmem:[%s229 + $0x4] sm:$0x3]
    %2397 = vmatprep.subr.mxu0 0.0
    %2398 = vmatpush1.msra.mxu0 0.0
    %2399 = vmatprep.subr.mxu0 0.0
    %2400 = vmatpush1.msra.mxu0 0.0
    %2401 = vmatprep.subr.mxu0 0.0
    %2402 = vmatpush1.msra.mxu0 0.0
    %2403 = vmatprep.subr.mxu0 0.0
    %2404 = vmatpush1.msra.mxu0 0.0
    %2405 = vmatprep.subr.mxu0 0.0
    %2406 = vmatpush1.msra.mxu0 0.0
    %2407 = vmatprep.subr.mxu0 0.0
    %2408 = vmatpush1.msra.mxu0 0.0
    %2409 = vmatprep.subr.mxu0 0.0
    %2410 = vmatpush1.msra.mxu0 0.0
    %2411 = vmatprep.subr.mxu0 0.0
    %2412 = vmatpush1.msra.mxu0 0.0
    %2413 = vmatprep.subr.mxu0 0.0
    %2414 = vmatpush1.msra.mxu0 0.0
    %2415 = vmatprep.subr.mxu0 0.0
    %2416 = vmatpush1.msra.mxu0 0.0
    %2417 = vmatprep.subr.mxu0 0.0
    %2418 = vmatpush1.msra.mxu0 0.0
    %2419 = vmatprep.subr.mxu0 0.0
    %2420 = vmatpush1.msra.mxu0 0.0
    %2421 = vmatprep.subr.mxu0 0.0
    %2422 = vmatpush1.msra.mxu0 %v418
    %2423 = vmatprep.subr.mxu0 0.0
    %2424 = vmatpush1.msra.mxu0 %v417
    %2425 = vmatprep.subr.mxu0 0.0
    %2426 = vmatpush1.msra.mxu0 %v416
    %2427 = vmatprep.subr.mxu0 0.0
    %2428 = vmatpush1.msra.mxu0 %v415
    %2429 = vmatprep.subr.mxu0 0.0
    %2430 = vmatpush2.msra.mxu0 0.0
    %2431 = vmatprep.subr.mxu0 0.0
    %2432 = vmatpush2.msra.mxu0 0.0
    %2433 = vmatprep.subr.mxu0 0.0
    %2434 = vmatpush2.msra.mxu0 0.0
    %2435 = vmatprep.subr.mxu0 0.0
    %2436 = vmatpush2.msra.mxu0 0.0
    %2437 = vmatprep.subr.mxu0 0.0
    %2438 = vmatpush2.msra.mxu0 0.0
    %2439 = vmatprep.subr.mxu0 0.0
    %2440 = vmatpush2.msra.mxu0 0.0
    %2441 = vmatprep.subr.mxu0 0.0
    %2442 = vmatpush2.msra.mxu0 0.0
    %2443 = vmatprep.subr.mxu0 0.0
    %2444 = vmatpush2.msra.mxu0 0.0
    %2445 = vmatprep.subr.mxu0 0.0
    %2446 = vmatpush2.msra.mxu0 0.0
    %2447 = vmatprep.subr.mxu0 0.0
    %2448 = vmatpush2.msra.mxu0 0.0
    %2449 = vmatprep.subr.mxu0 0.0
    %2450 = vmatpush2.msra.mxu0 0.0
    %2451 = vmatprep.subr.mxu0 0.0
    %2452 = vmatpush2.msra.mxu0 0.0
    %2453 = vmatprep.subr.mxu0 0.0
    %2454 = vmatpush2.msra.mxu0 0.0
    %2455 = vmatprep.subr.mxu0 0.0
    %2456 = vmatpush2.msra.mxu0 0.0
    %2457 = vmatprep.subr.mxu0 0.0
    %2458 = vmatpush2.msra.mxu0 0.0
    %2459 = vmatprep.subr.mxu0 0.0
    %2460 = vmatpush2.msra.mxu0 0.0
    %2461 = vmatprep.mubr.f32.mxu0 0.0
    %2462 = vmatmul.mubr.f32.gmra.mxu0 %v1794
    %v2463 = vpop.f32.mrf.mxu0
    %v2464 = vadd.f32 0.0, %v2463
    %v2465 = vpop.f32.mrf.mxu0
    %2466 = vdwg.mxu0
    %v2467 = vadd.f32 %v2396, %v2464
    %v2468 = vxor.u32 %v2467, 2147483648
    %v2469 = vmul.f32 %v2468, 1.442695
    %v2470 = vpow.pop %v2469
    %v2471 = vadd.f32 %v2470, 1.0
    %v2472 = vrcp.pop %v2471
    %v2473 = vmul.f32 1.0, %v2472
    %v2474 = vld [vmem:[%s318 + $0x4] sm:$0x3]
    %2475 = vmatprep.subr.mxu0 0.0
    %2476 = vmatpush1.msra.mxu0 0.0
    %2477 = vmatprep.subr.mxu0 0.0
    %2478 = vmatpush1.msra.mxu0 0.0
    %2479 = vmatprep.subr.mxu0 0.0
    %2480 = vmatpush1.msra.mxu0 0.0
    %2481 = vmatprep.subr.mxu0 0.0
    %2482 = vmatpush1.msra.mxu0 0.0
    %2483 = vmatprep.subr.mxu0 0.0
    %2484 = vmatpush1.msra.mxu0 0.0
    %2485 = vmatprep.subr.mxu0 0.0
    %2486 = vmatpush1.msra.mxu0 0.0
    %2487 = vmatprep.subr.mxu0 0.0
    %2488 = vmatpush1.msra.mxu0 0.0
    %2489 = vmatprep.subr.mxu0 0.0
    %2490 = vmatpush1.msra.mxu0 0.0
    %2491 = vmatprep.subr.mxu0 0.0
    %2492 = vmatpush1.msra.mxu0 0.0
    %2493 = vmatprep.subr.mxu0 0.0
    %2494 = vmatpush1.msra.mxu0 0.0
    %2495 = vmatprep.subr.mxu0 0.0
    %2496 = vmatpush1.msra.mxu0 0.0
    %2497 = vmatprep.subr.mxu0 0.0
    %2498 = vmatpush1.msra.mxu0 0.0
    %2499 = vmatprep.subr.mxu0 0.0
    %2500 = vmatpush1.msra.mxu0 %v423
    %2501 = vmatprep.subr.mxu0 0.0
    %2502 = vmatpush1.msra.mxu0 %v422
    %2503 = vmatprep.subr.mxu0 0.0
    %2504 = vmatpush1.msra.mxu0 %v421
    %2505 = vmatprep.subr.mxu0 0.0
    %2506 = vmatpush1.msra.mxu0 %v420
    %2507 = vmatprep.subr.mxu0 0.0
    %2508 = vmatpush2.msra.mxu0 0.0
    %2509 = vmatprep.subr.mxu0 0.0
    %2510 = vmatpush2.msra.mxu0 0.0
    %2511 = vmatprep.subr.mxu0 0.0
    %2512 = vmatpush2.msra.mxu0 0.0
    %2513 = vmatprep.subr.mxu0 0.0
    %2514 = vmatpush2.msra.mxu0 0.0
    %2515 = vmatprep.subr.mxu0 0.0
    %2516 = vmatpush2.msra.mxu0 0.0
    %2517 = vmatprep.subr.mxu0 0.0
    %2518 = vmatpush2.msra.mxu0 0.0
    %2519 = vmatprep.subr.mxu0 0.0
    %2520 = vmatpush2.msra.mxu0 0.0
    %2521 = vmatprep.subr.mxu0 0.0
    %2522 = vmatpush2.msra.mxu0 0.0
    %2523 = vmatprep.subr.mxu0 0.0
    %2524 = vmatpush2.msra.mxu0 0.0
    %2525 = vmatprep.subr.mxu0 0.0
    %2526 = vmatpush2.msra.mxu0 0.0
    %2527 = vmatprep.subr.mxu0 0.0
    %2528 = vmatpush2.msra.mxu0 0.0
    %2529 = vmatprep.subr.mxu0 0.0
    %2530 = vmatpush2.msra.mxu0 0.0
    %2531 = vmatprep.subr.mxu0 0.0
    %2532 = vmatpush2.msra.mxu0 0.0
    %2533 = vmatprep.subr.mxu0 0.0
    %2534 = vmatpush2.msra.mxu0 0.0
    %2535 = vmatprep.subr.mxu0 0.0
    %2536 = vmatpush2.msra.mxu0 0.0
    %2537 = vmatprep.subr.mxu0 0.0
    %2538 = vmatpush2.msra.mxu0 0.0
    %2539 = vmatprep.mubr.f32.mxu0 0.0
    %2540 = vmatmul.mubr.f32.gmra.mxu0 %v1794
    %v2541 = vpop.f32.mrf.mxu0
    %v2542 = vadd.f32 0.0, %v2541
    %v2543 = vpop.f32.mrf.mxu0
    %2544 = vdwg.mxu0
    %v2545 = vadd.f32 %v2474, %v2542
    %v2546 = vtanh.pop %v2545
    %v2547 = vld [vmem:[%s407 + $0x4] sm:$0x3]
    %2548 = vmatprep.subr.mxu0 0.0
    %2549 = vmatpush1.msra.mxu0 0.0
    %2550 = vmatprep.subr.mxu0 0.0
    %2551 = vmatpush1.msra.mxu0 0.0
    %2552 = vmatprep.subr.mxu0 0.0
    %2553 = vmatpush1.msra.mxu0 0.0
    %2554 = vmatprep.subr.mxu0 0.0
    %2555 = vmatpush1.msra.mxu0 0.0
    %2556 = vmatprep.subr.mxu0 0.0
    %2557 = vmatpush1.msra.mxu0 0.0
    %2558 = vmatprep.subr.mxu0 0.0
    %2559 = vmatpush1.msra.mxu0 0.0
    %2560 = vmatprep.subr.mxu0 0.0
    %2561 = vmatpush1.msra.mxu0 0.0
    %2562 = vmatprep.subr.mxu0 0.0
    %2563 = vmatpush1.msra.mxu0 0.0
    %2564 = vmatprep.subr.mxu0 0.0
    %2565 = vmatpush1.msra.mxu0 0.0
    %2566 = vmatprep.subr.mxu0 0.0
    %2567 = vmatpush1.msra.mxu0 0.0
    %2568 = vmatprep.subr.mxu0 0.0
    %2569 = vmatpush1.msra.mxu0 0.0
    %2570 = vmatprep.subr.mxu0 0.0
    %2571 = vmatpush1.msra.mxu0 0.0
    %2572 = vmatprep.subr.mxu0 0.0
    %2573 = vmatpush1.msra.mxu0 %v428
    %2574 = vmatprep.subr.mxu0 0.0
    %2575 = vmatpush1.msra.mxu0 %v427
    %2576 = vmatprep.subr.mxu0 0.0
    %2577 = vmatpush1.msra.mxu0 %v426
    %2578 = vmatprep.subr.mxu0 0.0
    %2579 = vmatpush1.msra.mxu0 %v425
    %2580 = vmatprep.subr.mxu0 0.0
    %2581 = vmatpush2.msra.mxu0 0.0
    %2582 = vmatprep.subr.mxu0 0.0
    %2583 = vmatpush2.msra.mxu0 0.0
    %2584 = vmatprep.subr.mxu0 0.0
    %2585 = vmatpush2.msra.mxu0 0.0
    %2586 = vmatprep.subr.mxu0 0.0
    %2587 = vmatpush2.msra.mxu0 0.0
    %2588 = vmatprep.subr.mxu0 0.0
    %2589 = vmatpush2.msra.mxu0 0.0
    %2590 = vmatprep.subr.mxu0 0.0
    %2591 = vmatpush2.msra.mxu0 0.0
    %2592 = vmatprep.subr.mxu0 0.0
    %2593 = vmatpush2.msra.mxu0 0.0
    %2594 = vmatprep.subr.mxu0 0.0
    %2595 = vmatpush2.msra.mxu0 0.0
    %2596 = vmatprep.subr.mxu0 0.0
    %2597 = vmatpush2.msra.mxu0 0.0
    %2598 = vmatprep.subr.mxu0 0.0
    %2599 = vmatpush2.msra.mxu0 0.0
    %2600 = vmatprep.subr.mxu0 0.0
    %2601 = vmatpush2.msra.mxu0 0.0
    %2602 = vmatprep.subr.mxu0 0.0
    %2603 = vmatpush2.msra.mxu0 0.0
    %2604 = vmatprep.subr.mxu0 0.0
    %2605 = vmatpush2.msra.mxu0 0.0
    %2606 = vmatprep.subr.mxu0 0.0
    %2607 = vmatpush2.msra.mxu0 0.0
    %2608 = vmatprep.subr.mxu0 0.0
    %2609 = vmatpush2.msra.mxu0 0.0
    %2610 = vmatprep.subr.mxu0 0.0
    %2611 = vmatpush2.msra.mxu0 0.0
    %2612 = vmatprep.mubr.f32.mxu0 0.0
    %2613 = vmatmul.mubr.f32.gmra.mxu0 %v1794
    %v2614 = vpop.f32.mrf.mxu0
    %v2615 = vadd.f32 0.0, %v2614
    %v2616 = vpop.f32.mrf.mxu0
    %2617 = vdwg.mxu0
    %v2618 = vadd.f32 %v2547, %v2615
    %v2619 = vxor.u32 %v2618, 2147483648
    %v2620 = vmul.f32 %v2619, 1.442695
    %v2621 = vpow.pop %v2620
    %v2622 = vadd.f32 %v2621, 1.0
    %v2623 = vrcp.pop %v2622
    %v2624 = vmul.f32 1.0, %v2623
    %v2625 = vmul.f32 %v2473, %v1717
    %v2626 = vmul.f32 %v2395, %v2546
    %v2627 = vadd.f32 %v2625, %v2626
    %v2628 = vtanh.pop %v2627
    %v2629 = vmul.f32 %v2624, %v2628
    %v2631 = vsel %vm140, %v2313, 0
    %2633 = vmatprep.subr.mxu0 0.0
    %2634 = vmatpush1.msra.mxu0 0.0
    %2635 = vmatprep.subr.mxu0 0.0
    %2636 = vmatpush1.msra.mxu0 0.0
    %2637 = vmatprep.subr.mxu0 0.0
    %2638 = vmatpush1.msra.mxu0 0.0
    %2639 = vmatprep.subr.mxu0 0.0
    %2640 = vmatpush1.msra.mxu0 0.0
    %2641 = vmatprep.subr.mxu0 0.0
    %2642 = vmatpush1.msra.mxu0 0.0
    %2643 = vmatprep.subr.mxu0 0.0
    %2644 = vmatpush1.msra.mxu0 0.0
    %2645 = vmatprep.subr.mxu0 0.0
    %2646 = vmatpush1.msra.mxu0 0.0
    %2647 = vmatprep.subr.mxu0 0.0
    %2648 = vmatpush1.msra.mxu0 0.0
    %2649 = vmatprep.subr.mxu0 0.0
    %2650 = vmatpush1.msra.mxu0 0.0
    %2651 = vmatprep.subr.mxu0 0.0
    %2652 = vmatpush1.msra.mxu0 0.0
    %2653 = vmatprep.subr.mxu0 0.0
    %2654 = vmatpush1.msra.mxu0 0.0
    %2655 = vmatprep.subr.mxu0 0.0
    %2656 = vmatpush1.msra.mxu0 0.0
    %2657 = vmatprep.subr.mxu0 0.0
    %2658 = vmatpush1.msra.mxu0 %v451
    %2659 = vmatprep.subr.mxu0 0.0
    %2660 = vmatpush1.msra.mxu0 %v450
    %2661 = vmatprep.subr.mxu0 0.0
    %2662 = vmatpush1.msra.mxu0 %v449
    %2663 = vmatprep.subr.mxu0 0.0
    %2664 = vmatpush1.msra.mxu0 %v448
    %2665 = vmatprep.subr.mxu0 0.0
    %2666 = vmatpush2.msra.mxu0 0.0
    %2667 = vmatprep.subr.mxu0 0.0
    %2668 = vmatpush2.msra.mxu0 0.0
    %2669 = vmatprep.subr.mxu0 0.0
    %2670 = vmatpush2.msra.mxu0 0.0
    %2671 = vmatprep.subr.mxu0 0.0
    %2672 = vmatpush2.msra.mxu0 0.0
    %2673 = vmatprep.subr.mxu0 0.0
    %2674 = vmatpush2.msra.mxu0 0.0
    %2675 = vmatprep.subr.mxu0 0.0
    %2676 = vmatpush2.msra.mxu0 0.0
    %2677 = vmatprep.subr.mxu0 0.0
    %2678 = vmatpush2.msra.mxu0 0.0
    %2679 = vmatprep.subr.mxu0 0.0
    %2680 = vmatpush2.msra.mxu0 0.0
    %2681 = vmatprep.subr.mxu0 0.0
    %2682 = vmatpush2.msra.mxu0 0.0
    %2683 = vmatprep.subr.mxu0 0.0
    %2684 = vmatpush2.msra.mxu0 0.0
    %2685 = vmatprep.subr.mxu0 0.0
    %2686 = vmatpush2.msra.mxu0 0.0
    %2687 = vmatprep.subr.mxu0 0.0
    %2688 = vmatpush2.msra.mxu0 0.0
    %2689 = vmatprep.subr.mxu0 0.0
    %2690 = vmatpush2.msra.mxu0 0.0
    %2691 = vmatprep.subr.mxu0 0.0
    %2692 = vmatpush2.msra.mxu0 0.0
    %2693 = vmatprep.subr.mxu0 0.0
    %2694 = vmatpush2.msra.mxu0 0.0
    %2695 = vmatprep.subr.mxu0 0.0
    %2696 = vmatpush2.msra.mxu0 0.0
    %2697 = vmatprep.mubr.f32.mxu0 0.0
    %2698 = vmatmul.mubr.f32.gmra.mxu0 %v2631
    %v2699 = vpop.f32.mrf.mxu0
    %v2700 = vadd.f32 0.0, %v2699
    %v2701 = vpop.f32.mrf.mxu0
    %2702 = vdwg.mxu0
    %v2704 = vsel %vm140, %v2629, 0
    %2706 = vmatprep.subr.mxu0 0.0
    %2707 = vmatpush1.msra.mxu0 0.0
    %2708 = vmatprep.subr.mxu0 0.0
    %2709 = vmatpush1.msra.mxu0 0.0
    %2710 = vmatprep.subr.mxu0 0.0
    %2711 = vmatpush1.msra.mxu0 0.0
    %2712 = vmatprep.subr.mxu0 0.0
    %2713 = vmatpush1.msra.mxu0 0.0
    %2714 = vmatprep.subr.mxu0 0.0
    %2715 = vmatpush1.msra.mxu0 0.0
    %2716 = vmatprep.subr.mxu0 0.0
    %2717 = vmatpush1.msra.mxu0 0.0
    %2718 = vmatprep.subr.mxu0 0.0
    %2719 = vmatpush1.msra.mxu0 0.0
    %2720 = vmatprep.subr.mxu0 0.0
    %2721 = vmatpush1.msra.mxu0 0.0
    %2722 = vmatprep.subr.mxu0 0.0
    %2723 = vmatpush1.msra.mxu0 0.0
    %2724 = vmatprep.subr.mxu0 0.0
    %2725 = vmatpush1.msra.mxu0 0.0
    %2726 = vmatprep.subr.mxu0 0.0
    %2727 = vmatpush1.msra.mxu0 0.0
    %2728 = vmatprep.subr.mxu0 0.0
    %2729 = vmatpush1.msra.mxu0 0.0
    %2730 = vmatprep.subr.mxu0 0.0
    %2731 = vmatpush1.msra.mxu0 %v432
    %2732 = vmatprep.subr.mxu0 0.0
    %2733 = vmatpush1.msra.mxu0 %v431
    %2734 = vmatprep.subr.mxu0 0.0
    %2735 = vmatpush1.msra.mxu0 %v430
    %2736 = vmatprep.subr.mxu0 0.0
    %2737 = vmatpush1.msra.mxu0 %v429
    %2738 = vmatprep.subr.mxu0 0.0
    %2739 = vmatpush2.msra.mxu0 0.0
    %2740 = vmatprep.subr.mxu0 0.0
    %2741 = vmatpush2.msra.mxu0 0.0
    %2742 = vmatprep.subr.mxu0 0.0
    %2743 = vmatpush2.msra.mxu0 0.0
    %2744 = vmatprep.subr.mxu0 0.0
    %2745 = vmatpush2.msra.mxu0 0.0
    %2746 = vmatprep.subr.mxu0 0.0
    %2747 = vmatpush2.msra.mxu0 0.0
    %2748 = vmatprep.subr.mxu0 0.0
    %2749 = vmatpush2.msra.mxu0 0.0
    %2750 = vmatprep.subr.mxu0 0.0
    %2751 = vmatpush2.msra.mxu0 0.0
    %2752 = vmatprep.subr.mxu0 0.0
    %2753 = vmatpush2.msra.mxu0 0.0
    %2754 = vmatprep.subr.mxu0 0.0
    %2755 = vmatpush2.msra.mxu0 0.0
    %2756 = vmatprep.subr.mxu0 0.0
    %2757 = vmatpush2.msra.mxu0 0.0
    %2758 = vmatprep.subr.mxu0 0.0
    %2759 = vmatpush2.msra.mxu0 0.0
    %2760 = vmatprep.subr.mxu0 0.0
    %2761 = vmatpush2.msra.mxu0 0.0
    %2762 = vmatprep.subr.mxu0 0.0
    %2763 = vmatpush2.msra.mxu0 0.0
    %2764 = vmatprep.subr.mxu0 0.0
    %2765 = vmatpush2.msra.mxu0 0.0
    %2766 = vmatprep.subr.mxu0 0.0
    %2767 = vmatpush2.msra.mxu0 0.0
    %2768 = vmatprep.subr.mxu0 0.0
    %2769 = vmatpush2.msra.mxu0 0.0
    %2770 = vmatprep.mubr.f32.mxu0 0.0
    %2771 = vmatmul.mubr.f32.gmra.mxu0 %v2704
    %v2772 = vpop.f32.mrf.mxu0
    %v2773 = vadd.f32 %v2700, %v2772
    %v2774 = vpop.f32.mrf.mxu0
    %2775 = vdwg.mxu0
    %v2776 = vadd.f32 %v2773, %v472
    %v2777 = vxor.u32 %v2776, 2147483648
    %v2778 = vmul.f32 %v2777, 1.442695
    %v2779 = vpow.pop %v2778
    %v2780 = vadd.f32 %v2779, 1.0
    %v2781 = vrcp.pop %v2780
    %v2782 = vmul.f32 1.0, %v2781
    %2783 = vmatprep.subr.mxu0 0.0
    %2784 = vmatpush1.msra.mxu0 0.0
    %2785 = vmatprep.subr.mxu0 0.0
    %2786 = vmatpush1.msra.mxu0 0.0
    %2787 = vmatprep.subr.mxu0 0.0
    %2788 = vmatpush1.msra.mxu0 0.0
    %2789 = vmatprep.subr.mxu0 0.0
    %2790 = vmatpush1.msra.mxu0 0.0
    %2791 = vmatprep.subr.mxu0 0.0
    %2792 = vmatpush1.msra.mxu0 0.0
    %2793 = vmatprep.subr.mxu0 0.0
    %2794 = vmatpush1.msra.mxu0 0.0
    %2795 = vmatprep.subr.mxu0 0.0
    %2796 = vmatpush1.msra.mxu0 0.0
    %2797 = vmatprep.subr.mxu0 0.0
    %2798 = vmatpush1.msra.mxu0 0.0
    %2799 = vmatprep.subr.mxu0 0.0
    %2800 = vmatpush1.msra.mxu0 0.0
    %2801 = vmatprep.subr.mxu0 0.0
    %2802 = vmatpush1.msra.mxu0 0.0
    %2803 = vmatprep.subr.mxu0 0.0
    %2804 = vmatpush1.msra.mxu0 0.0
    %2805 = vmatprep.subr.mxu0 0.0
    %2806 = vmatpush1.msra.mxu0 0.0
    %2807 = vmatprep.subr.mxu0 0.0
    %2808 = vmatpush1.msra.mxu0 %v456
    %2809 = vmatprep.subr.mxu0 0.0
    %2810 = vmatpush1.msra.mxu0 %v455
    %2811 = vmatprep.subr.mxu0 0.0
    %2812 = vmatpush1.msra.mxu0 %v454
    %2813 = vmatprep.subr.mxu0 0.0
    %2814 = vmatpush1.msra.mxu0 %v453
    %2815 = vmatprep.subr.mxu0 0.0
    %2816 = vmatpush2.msra.mxu0 0.0
    %2817 = vmatprep.subr.mxu0 0.0
    %2818 = vmatpush2.msra.mxu0 0.0
    %2819 = vmatprep.subr.mxu0 0.0
    %2820 = vmatpush2.msra.mxu0 0.0
    %2821 = vmatprep.subr.mxu0 0.0
    %2822 = vmatpush2.msra.mxu0 0.0
    %2823 = vmatprep.subr.mxu0 0.0
    %2824 = vmatpush2.msra.mxu0 0.0
    %2825 = vmatprep.subr.mxu0 0.0
    %2826 = vmatpush2.msra.mxu0 0.0
    %2827 = vmatprep.subr.mxu0 0.0
    %2828 = vmatpush2.msra.mxu0 0.0
    %2829 = vmatprep.subr.mxu0 0.0
    %2830 = vmatpush2.msra.mxu0 0.0
    %2831 = vmatprep.subr.mxu0 0.0
    %2832 = vmatpush2.msra.mxu0 0.0
    %2833 = vmatprep.subr.mxu0 0.0
    %2834 = vmatpush2.msra.mxu0 0.0
    %2835 = vmatprep.subr.mxu0 0.0
    %2836 = vmatpush2.msra.mxu0 0.0
    %2837 = vmatprep.subr.mxu0 0.0
    %2838 = vmatpush2.msra.mxu0 0.0
    %2839 = vmatprep.subr.mxu0 0.0
    %2840 = vmatpush2.msra.mxu0 0.0
    %2841 = vmatprep.subr.mxu0 0.0
    %2842 = vmatpush2.msra.mxu0 0.0
    %2843 = vmatprep.subr.mxu0 0.0
    %2844 = vmatpush2.msra.mxu0 0.0
    %2845 = vmatprep.subr.mxu0 0.0
    %2846 = vmatpush2.msra.mxu0 0.0
    %2847 = vmatprep.mubr.f32.mxu0 0.0
    %2848 = vmatmul.mubr.f32.gmra.mxu0 %v2631
    %v2849 = vpop.f32.mrf.mxu0
    %v2850 = vadd.f32 0.0, %v2849
    %v2851 = vpop.f32.mrf.mxu0
    %2852 = vdwg.mxu0
    %2853 = vmatprep.subr.mxu0 0.0
    %2854 = vmatpush1.msra.mxu0 0.0
    %2855 = vmatprep.subr.mxu0 0.0
    %2856 = vmatpush1.msra.mxu0 0.0
    %2857 = vmatprep.subr.mxu0 0.0
    %2858 = vmatpush1.msra.mxu0 0.0
    %2859 = vmatprep.subr.mxu0 0.0
    %2860 = vmatpush1.msra.mxu0 0.0
    %2861 = vmatprep.subr.mxu0 0.0
    %2862 = vmatpush1.msra.mxu0 0.0
    %2863 = vmatprep.subr.mxu0 0.0
    %2864 = vmatpush1.msra.mxu0 0.0
    %2865 = vmatprep.subr.mxu0 0.0
    %2866 = vmatpush1.msra.mxu0 0.0
    %2867 = vmatprep.subr.mxu0 0.0
    %2868 = vmatpush1.msra.mxu0 0.0
    %2869 = vmatprep.subr.mxu0 0.0
    %2870 = vmatpush1.msra.mxu0 0.0
    %2871 = vmatprep.subr.mxu0 0.0
    %2872 = vmatpush1.msra.mxu0 0.0
    %2873 = vmatprep.subr.mxu0 0.0
    %2874 = vmatpush1.msra.mxu0 0.0
    %2875 = vmatprep.subr.mxu0 0.0
    %2876 = vmatpush1.msra.mxu0 0.0
    %2877 = vmatprep.subr.mxu0 0.0
    %2878 = vmatpush1.msra.mxu0 %v437
    %2879 = vmatprep.subr.mxu0 0.0
    %2880 = vmatpush1.msra.mxu0 %v436
    %2881 = vmatprep.subr.mxu0 0.0
    %2882 = vmatpush1.msra.mxu0 %v435
    %2883 = vmatprep.subr.mxu0 0.0
    %2884 = vmatpush1.msra.mxu0 %v434
    %2885 = vmatprep.subr.mxu0 0.0
    %2886 = vmatpush2.msra.mxu0 0.0
    %2887 = vmatprep.subr.mxu0 0.0
    %2888 = vmatpush2.msra.mxu0 0.0
    %2889 = vmatprep.subr.mxu0 0.0
    %2890 = vmatpush2.msra.mxu0 0.0
    %2891 = vmatprep.subr.mxu0 0.0
    %2892 = vmatpush2.msra.mxu0 0.0
    %2893 = vmatprep.subr.mxu0 0.0
    %2894 = vmatpush2.msra.mxu0 0.0
    %2895 = vmatprep.subr.mxu0 0.0
    %2896 = vmatpush2.msra.mxu0 0.0
    %2897 = vmatprep.subr.mxu0 0.0
    %2898 = vmatpush2.msra.mxu0 0.0
    %2899 = vmatprep.subr.mxu0 0.0
    %2900 = vmatpush2.msra.mxu0 0.0
    %2901 = vmatprep.subr.mxu0 0.0
    %2902 = vmatpush2.msra.mxu0 0.0
    %2903 = vmatprep.subr.mxu0 0.0
    %2904 = vmatpush2.msra.mxu0 0.0
    %2905 = vmatprep.subr.mxu0 0.0
    %2906 = vmatpush2.msra.mxu0 0.0
    %2907 = vmatprep.subr.mxu0 0.0
    %2908 = vmatpush2.msra.mxu0 0.0
    %2909 = vmatprep.subr.mxu0 0.0
    %2910 = vmatpush2.msra.mxu0 0.0
    %2911 = vmatprep.subr.mxu0 0.0
    %2912 = vmatpush2.msra.mxu0 0.0
    %2913 = vmatprep.subr.mxu0 0.0
    %2914 = vmatpush2.msra.mxu0 0.0
    %2915 = vmatprep.subr.mxu0 0.0
    %2916 = vmatpush2.msra.mxu0 0.0
    %2917 = vmatprep.mubr.f32.mxu0 0.0
    %2918 = vmatmul.mubr.f32.gmra.mxu0 %v2704
    %v2919 = vpop.f32.mrf.mxu0
    %v2920 = vadd.f32 %v2850, %v2919
    %v2921 = vpop.f32.mrf.mxu0
    %2922 = vdwg.mxu0
    %v2923 = vadd.f32 %v2920, %v480
    %v2924 = vxor.u32 %v2923, 2147483648
    %v2925 = vmul.f32 %v2924, 1.442695
    %v2926 = vpow.pop %v2925
    %v2927 = vadd.f32 %v2926, 1.0
    %v2928 = vrcp.pop %v2927
    %v2929 = vmul.f32 1.0, %v2928
    %2930 = vmatprep.subr.mxu0 0.0
    %2931 = vmatpush1.msra.mxu0 0.0
    %2932 = vmatprep.subr.mxu0 0.0
    %2933 = vmatpush1.msra.mxu0 0.0
    %2934 = vmatprep.subr.mxu0 0.0
    %2935 = vmatpush1.msra.mxu0 0.0
    %2936 = vmatprep.subr.mxu0 0.0
    %2937 = vmatpush1.msra.mxu0 0.0
    %2938 = vmatprep.subr.mxu0 0.0
    %2939 = vmatpush1.msra.mxu0 0.0
    %2940 = vmatprep.subr.mxu0 0.0
    %2941 = vmatpush1.msra.mxu0 0.0
    %2942 = vmatprep.subr.mxu0 0.0
    %2943 = vmatpush1.msra.mxu0 0.0
    %2944 = vmatprep.subr.mxu0 0.0
    %2945 = vmatpush1.msra.mxu0 0.0
    %2946 = vmatprep.subr.mxu0 0.0
    %2947 = vmatpush1.msra.mxu0 0.0
    %2948 = vmatprep.subr.mxu0 0.0
    %2949 = vmatpush1.msra.mxu0 0.0
    %2950 = vmatprep.subr.mxu0 0.0
    %2951 = vmatpush1.msra.mxu0 0.0
    %2952 = vmatprep.subr.mxu0 0.0
    %2953 = vmatpush1.msra.mxu0 0.0
    %2954 = vmatprep.subr.mxu0 0.0
    %2955 = vmatpush1.msra.mxu0 %v461
    %2956 = vmatprep.subr.mxu0 0.0
    %2957 = vmatpush1.msra.mxu0 %v460
    %2958 = vmatprep.subr.mxu0 0.0
    %2959 = vmatpush1.msra.mxu0 %v459
    %2960 = vmatprep.subr.mxu0 0.0
    %2961 = vmatpush1.msra.mxu0 %v458
    %2962 = vmatprep.subr.mxu0 0.0
    %2963 = vmatpush2.msra.mxu0 0.0
    %2964 = vmatprep.subr.mxu0 0.0
    %2965 = vmatpush2.msra.mxu0 0.0
    %2966 = vmatprep.subr.mxu0 0.0
    %2967 = vmatpush2.msra.mxu0 0.0
    %2968 = vmatprep.subr.mxu0 0.0
    %2969 = vmatpush2.msra.mxu0 0.0
    %2970 = vmatprep.subr.mxu0 0.0
    %2971 = vmatpush2.msra.mxu0 0.0
    %2972 = vmatprep.subr.mxu0 0.0
    %2973 = vmatpush2.msra.mxu0 0.0
    %2974 = vmatprep.subr.mxu0 0.0
    %2975 = vmatpush2.msra.mxu0 0.0
    %2976 = vmatprep.subr.mxu0 0.0
    %2977 = vmatpush2.msra.mxu0 0.0
    %2978 = vmatprep.subr.mxu0 0.0
    %2979 = vmatpush2.msra.mxu0 0.0
    %2980 = vmatprep.subr.mxu0 0.0
    %2981 = vmatpush2.msra.mxu0 0.0
    %2982 = vmatprep.subr.mxu0 0.0
    %2983 = vmatpush2.msra.mxu0 0.0
    %2984 = vmatprep.subr.mxu0 0.0
    %2985 = vmatpush2.msra.mxu0 0.0
    %2986 = vmatprep.subr.mxu0 0.0
    %2987 = vmatpush2.msra.mxu0 0.0
    %2988 = vmatprep.subr.mxu0 0.0
    %2989 = vmatpush2.msra.mxu0 0.0
    %2990 = vmatprep.subr.mxu0 0.0
    %2991 = vmatpush2.msra.mxu0 0.0
    %2992 = vmatprep.subr.mxu0 0.0
    %2993 = vmatpush2.msra.mxu0 0.0
    %2994 = vmatprep.mubr.f32.mxu0 0.0
    %2995 = vmatmul.mubr.f32.gmra.mxu0 %v2631
    %v2996 = vpop.f32.mrf.mxu0
    %v2997 = vadd.f32 0.0, %v2996
    %v2998 = vpop.f32.mrf.mxu0
    %2999 = vdwg.mxu0
    %3000 = vmatprep.subr.mxu0 0.0
    %3001 = vmatpush1.msra.mxu0 0.0
    %3002 = vmatprep.subr.mxu0 0.0
    %3003 = vmatpush1.msra.mxu0 0.0
    %3004 = vmatprep.subr.mxu0 0.0
    %3005 = vmatpush1.msra.mxu0 0.0
    %3006 = vmatprep.subr.mxu0 0.0
    %3007 = vmatpush1.msra.mxu0 0.0
    %3008 = vmatprep.subr.mxu0 0.0
    %3009 = vmatpush1.msra.mxu0 0.0
    %3010 = vmatprep.subr.mxu0 0.0
    %3011 = vmatpush1.msra.mxu0 0.0
    %3012 = vmatprep.subr.mxu0 0.0
    %3013 = vmatpush1.msra.mxu0 0.0
    %3014 = vmatprep.subr.mxu0 0.0
    %3015 = vmatpush1.msra.mxu0 0.0
    %3016 = vmatprep.subr.mxu0 0.0
    %3017 = vmatpush1.msra.mxu0 0.0
    %3018 = vmatprep.subr.mxu0 0.0
    %3019 = vmatpush1.msra.mxu0 0.0
    %3020 = vmatprep.subr.mxu0 0.0
    %3021 = vmatpush1.msra.mxu0 0.0
    %3022 = vmatprep.subr.mxu0 0.0
    %3023 = vmatpush1.msra.mxu0 0.0
    %3024 = vmatprep.subr.mxu0 0.0
    %3025 = vmatpush1.msra.mxu0 %v442
    %3026 = vmatprep.subr.mxu0 0.0
    %3027 = vmatpush1.msra.mxu0 %v441
    %3028 = vmatprep.subr.mxu0 0.0
    %3029 = vmatpush1.msra.mxu0 %v440
    %3030 = vmatprep.subr.mxu0 0.0
    %3031 = vmatpush1.msra.mxu0 %v439
    %3032 = vmatprep.subr.mxu0 0.0
    %3033 = vmatpush2.msra.mxu0 0.0
    %3034 = vmatprep.subr.mxu0 0.0
    %3035 = vmatpush2.msra.mxu0 0.0
    %3036 = vmatprep.subr.mxu0 0.0
    %3037 = vmatpush2.msra.mxu0 0.0
    %3038 = vmatprep.subr.mxu0 0.0
    %3039 = vmatpush2.msra.mxu0 0.0
    %3040 = vmatprep.subr.mxu0 0.0
    %3041 = vmatpush2.msra.mxu0 0.0
    %3042 = vmatprep.subr.mxu0 0.0
    %3043 = vmatpush2.msra.mxu0 0.0
    %3044 = vmatprep.subr.mxu0 0.0
    %3045 = vmatpush2.msra.mxu0 0.0
    %3046 = vmatprep.subr.mxu0 0.0
    %3047 = vmatpush2.msra.mxu0 0.0
    %3048 = vmatprep.subr.mxu0 0.0
    %3049 = vmatpush2.msra.mxu0 0.0
    %3050 = vmatprep.subr.mxu0 0.0
    %3051 = vmatpush2.msra.mxu0 0.0
    %3052 = vmatprep.subr.mxu0 0.0
    %3053 = vmatpush2.msra.mxu0 0.0
    %3054 = vmatprep.subr.mxu0 0.0
    %3055 = vmatpush2.msra.mxu0 0.0
    %3056 = vmatprep.subr.mxu0 0.0
    %3057 = vmatpush2.msra.mxu0 0.0
    %3058 = vmatprep.subr.mxu0 0.0
    %3059 = vmatpush2.msra.mxu0 0.0
    %3060 = vmatprep.subr.mxu0 0.0
    %3061 = vmatpush2.msra.mxu0 0.0
    %3062 = vmatprep.subr.mxu0 0.0
    %3063 = vmatpush2.msra.mxu0 0.0
    %3064 = vmatprep.mubr.f32.mxu0 0.0
    %3065 = vmatmul.mubr.f32.gmra.mxu0 %v2704
    %v3066 = vpop.f32.mrf.mxu0
    %v3067 = vadd.f32 %v2997, %v3066
    %v3068 = vpop.f32.mrf.mxu0
    %3069 = vdwg.mxu0
    %v3070 = vadd.f32 %v3067, %v488
    %v3071 = vtanh.pop %v3070
    %3072 = vmatprep.subr.mxu0 0.0
    %3073 = vmatpush1.msra.mxu0 0.0
    %3074 = vmatprep.subr.mxu0 0.0
    %3075 = vmatpush1.msra.mxu0 0.0
    %3076 = vmatprep.subr.mxu0 0.0
    %3077 = vmatpush1.msra.mxu0 0.0
    %3078 = vmatprep.subr.mxu0 0.0
    %3079 = vmatpush1.msra.mxu0 0.0
    %3080 = vmatprep.subr.mxu0 0.0
    %3081 = vmatpush1.msra.mxu0 0.0
    %3082 = vmatprep.subr.mxu0 0.0
    %3083 = vmatpush1.msra.mxu0 0.0
    %3084 = vmatprep.subr.mxu0 0.0
    %3085 = vmatpush1.msra.mxu0 0.0
    %3086 = vmatprep.subr.mxu0 0.0
    %3087 = vmatpush1.msra.mxu0 0.0
    %3088 = vmatprep.subr.mxu0 0.0
    %3089 = vmatpush1.msra.mxu0 0.0
    %3090 = vmatprep.subr.mxu0 0.0
    %3091 = vmatpush1.msra.mxu0 0.0
    %3092 = vmatprep.subr.mxu0 0.0
    %3093 = vmatpush1.msra.mxu0 0.0
    %3094 = vmatprep.subr.mxu0 0.0
    %3095 = vmatpush1.msra.mxu0 0.0
    %3096 = vmatprep.subr.mxu0 0.0
    %3097 = vmatpush1.msra.mxu0 %v466
    %3098 = vmatprep.subr.mxu0 0.0
    %3099 = vmatpush1.msra.mxu0 %v465
    %3100 = vmatprep.subr.mxu0 0.0
    %3101 = vmatpush1.msra.mxu0 %v464
    %3102 = vmatprep.subr.mxu0 0.0
    %3103 = vmatpush1.msra.mxu0 %v463
    %3104 = vmatprep.subr.mxu0 0.0
    %3105 = vmatpush2.msra.mxu0 0.0
    %3106 = vmatprep.subr.mxu0 0.0
    %3107 = vmatpush2.msra.mxu0 0.0
    %3108 = vmatprep.subr.mxu0 0.0
    %3109 = vmatpush2.msra.mxu0 0.0
    %3110 = vmatprep.subr.mxu0 0.0
    %3111 = vmatpush2.msra.mxu0 0.0
    %3112 = vmatprep.subr.mxu0 0.0
    %3113 = vmatpush2.msra.mxu0 0.0
    %3114 = vmatprep.subr.mxu0 0.0
    %3115 = vmatpush2.msra.mxu0 0.0
    %3116 = vmatprep.subr.mxu0 0.0
    %3117 = vmatpush2.msra.mxu0 0.0
    %3118 = vmatprep.subr.mxu0 0.0
    %3119 = vmatpush2.msra.mxu0 0.0
    %3120 = vmatprep.subr.mxu0 0.0
    %3121 = vmatpush2.msra.mxu0 0.0
    %3122 = vmatprep.subr.mxu0 0.0
    %3123 = vmatpush2.msra.mxu0 0.0
    %3124 = vmatprep.subr.mxu0 0.0
    %3125 = vmatpush2.msra.mxu0 0.0
    %3126 = vmatprep.subr.mxu0 0.0
    %3127 = vmatpush2.msra.mxu0 0.0
    %3128 = vmatprep.subr.mxu0 0.0
    %3129 = vmatpush2.msra.mxu0 0.0
    %3130 = vmatprep.subr.mxu0 0.0
    %3131 = vmatpush2.msra.mxu0 0.0
    %3132 = vmatprep.subr.mxu0 0.0
    %3133 = vmatpush2.msra.mxu0 0.0
    %3134 = vmatprep.subr.mxu0 0.0
    %3135 = vmatpush2.msra.mxu0 0.0
    %3136 = vmatprep.mubr.f32.mxu0 0.0
    %3137 = vmatmul.mubr.f32.gmra.mxu0 %v2631
    %v3138 = vpop.f32.mrf.mxu0
    %v3139 = vadd.f32 0.0, %v3138
    %v3140 = vpop.f32.mrf.mxu0
    %3141 = vdwg.mxu0
    %3142 = vmatprep.subr.mxu0 0.0
    %3143 = vmatpush1.msra.mxu0 0.0
    %3144 = vmatprep.subr.mxu0 0.0
    %3145 = vmatpush1.msra.mxu0 0.0
    %3146 = vmatprep.subr.mxu0 0.0
    %3147 = vmatpush1.msra.mxu0 0.0
    %3148 = vmatprep.subr.mxu0 0.0
    %3149 = vmatpush1.msra.mxu0 0.0
    %3150 = vmatprep.subr.mxu0 0.0
    %3151 = vmatpush1.msra.mxu0 0.0
    %3152 = vmatprep.subr.mxu0 0.0
    %3153 = vmatpush1.msra.mxu0 0.0
    %3154 = vmatprep.subr.mxu0 0.0
    %3155 = vmatpush1.msra.mxu0 0.0
    %3156 = vmatprep.subr.mxu0 0.0
    %3157 = vmatpush1.msra.mxu0 0.0
    %3158 = vmatprep.subr.mxu0 0.0
    %3159 = vmatpush1.msra.mxu0 0.0
    %3160 = vmatprep.subr.mxu0 0.0
    %3161 = vmatpush1.msra.mxu0 0.0
    %3162 = vmatprep.subr.mxu0 0.0
    %3163 = vmatpush1.msra.mxu0 0.0
    %3164 = vmatprep.subr.mxu0 0.0
    %3165 = vmatpush1.msra.mxu0 0.0
    %3166 = vmatprep.subr.mxu0 0.0
    %3167 = vmatpush1.msra.mxu0 %v447
    %3168 = vmatprep.subr.mxu0 0.0
    %3169 = vmatpush1.msra.mxu0 %v446
    %3170 = vmatprep.subr.mxu0 0.0
    %3171 = vmatpush1.msra.mxu0 %v445
    %3172 = vmatprep.subr.mxu0 0.0
    %3173 = vmatpush1.msra.mxu0 %v444
    %3174 = vmatprep.subr.mxu0 0.0
    %3175 = vmatpush2.msra.mxu0 0.0
    %3176 = vmatprep.subr.mxu0 0.0
    %3177 = vmatpush2.msra.mxu0 0.0
    %3178 = vmatprep.subr.mxu0 0.0
    %3179 = vmatpush2.msra.mxu0 0.0
    %3180 = vmatprep.subr.mxu0 0.0
    %3181 = vmatpush2.msra.mxu0 0.0
    %3182 = vmatprep.subr.mxu0 0.0
    %3183 = vmatpush2.msra.mxu0 0.0
    %3184 = vmatprep.subr.mxu0 0.0
    %3185 = vmatpush2.msra.mxu0 0.0
    %3186 = vmatprep.subr.mxu0 0.0
    %3187 = vmatpush2.msra.mxu0 0.0
    %3188 = vmatprep.subr.mxu0 0.0
    %3189 = vmatpush2.msra.mxu0 0.0
    %3190 = vmatprep.subr.mxu0 0.0
    %3191 = vmatpush2.msra.mxu0 0.0
    %3192 = vmatprep.subr.mxu0 0.0
    %3193 = vmatpush2.msra.mxu0 0.0
    %3194 = vmatprep.subr.mxu0 0.0
    %3195 = vmatpush2.msra.mxu0 0.0
    %3196 = vmatprep.subr.mxu0 0.0
    %3197 = vmatpush2.msra.mxu0 0.0
    %3198 = vmatprep.subr.mxu0 0.0
    %3199 = vmatpush2.msra.mxu0 0.0
    %3200 = vmatprep.subr.mxu0 0.0
    %3201 = vmatpush2.msra.mxu0 0.0
    %3202 = vmatprep.subr.mxu0 0.0
    %3203 = vmatpush2.msra.mxu0 0.0
    %3204 = vmatprep.subr.mxu0 0.0
    %3205 = vmatpush2.msra.mxu0 0.0
    %3206 = vmatprep.mubr.f32.mxu0 0.0
    %3207 = vmatmul.mubr.f32.gmra.mxu0 %v2704
    %v3208 = vpop.f32.mrf.mxu0
    %v3209 = vadd.f32 %v3139, %v3208
    %v3210 = vpop.f32.mrf.mxu0
    %3211 = vdwg.mxu0
    %v3212 = vadd.f32 %v3209, %v496
    %v3213 = vxor.u32 %v3212, 2147483648
    %v3214 = vmul.f32 %v3213, 1.442695
    %v3215 = vpow.pop %v3214
    %v3216 = vadd.f32 %v3215, 1.0
    %v3217 = vrcp.pop %v3216
    %v3218 = vmul.f32 1.0, %v3217
    %v3219 = vmul.f32 %v2929, %v2311
    %v3220 = vmul.f32 %v2782, %v3071
    %v3221 = vadd.f32 %v3219, %v3220
    %v3222 = vtanh.pop %v3221
    %v3223 = vmul.f32 %v3218, %v3222
    %s3224 = sld [smem:[#allocation4 + $0x2]]
    %v3225 = vstv %s3224
    %v3226 = vmul.f32 %v3225, %v3223
    %v3227 = vadd.f32 %v2317, %v3226
    %v3228 = vld [vmem:[#allocation2 + $0x6] sm:$0x3]
    %3229 = vmatprep.subr.mxu0 0.0
    %3230 = vmatpush1.msra.mxu0 0.0
    %3231 = vmatprep.subr.mxu0 0.0
    %3232 = vmatpush1.msra.mxu0 0.0
    %3233 = vmatprep.subr.mxu0 0.0
    %3234 = vmatpush1.msra.mxu0 0.0
    %3235 = vmatprep.subr.mxu0 0.0
    %3236 = vmatpush1.msra.mxu0 0.0
    %3237 = vmatprep.subr.mxu0 0.0
    %3238 = vmatpush1.msra.mxu0 0.0
    %3239 = vmatprep.subr.mxu0 0.0
    %3240 = vmatpush1.msra.mxu0 0.0
    %3241 = vmatprep.subr.mxu0 0.0
    %3242 = vmatpush1.msra.mxu0 0.0
    %3243 = vmatprep.subr.mxu0 0.0
    %3244 = vmatpush1.msra.mxu0 0.0
    %3245 = vmatprep.subr.mxu0 0.0
    %3246 = vmatpush1.msra.mxu0 0.0
    %3247 = vmatprep.subr.mxu0 0.0
    %3248 = vmatpush1.msra.mxu0 0.0
    %3249 = vmatprep.subr.mxu0 0.0
    %3250 = vmatpush1.msra.mxu0 0.0
    %3251 = vmatprep.subr.mxu0 0.0
    %3252 = vmatpush1.msra.mxu0 0.0
    %3253 = vmatprep.subr.mxu0 0.0
    %3254 = vmatpush1.msra.mxu0 %v413
    %3255 = vmatprep.subr.mxu0 0.0
    %3256 = vmatpush1.msra.mxu0 %v412
    %3257 = vmatprep.subr.mxu0 0.0
    %3258 = vmatpush1.msra.mxu0 %v411
    %3259 = vmatprep.subr.mxu0 0.0
    %3260 = vmatpush1.msra.mxu0 %v410
    %3261 = vmatprep.subr.mxu0 0.0
    %3262 = vmatpush2.msra.mxu0 0.0
    %3263 = vmatprep.subr.mxu0 0.0
    %3264 = vmatpush2.msra.mxu0 0.0
    %3265 = vmatprep.subr.mxu0 0.0
    %3266 = vmatpush2.msra.mxu0 0.0
    %3267 = vmatprep.subr.mxu0 0.0
    %3268 = vmatpush2.msra.mxu0 0.0
    %3269 = vmatprep.subr.mxu0 0.0
    %3270 = vmatpush2.msra.mxu0 0.0
    %3271 = vmatprep.subr.mxu0 0.0
    %3272 = vmatpush2.msra.mxu0 0.0
    %3273 = vmatprep.subr.mxu0 0.0
    %3274 = vmatpush2.msra.mxu0 0.0
    %3275 = vmatprep.subr.mxu0 0.0
    %3276 = vmatpush2.msra.mxu0 0.0
    %3277 = vmatprep.subr.mxu0 0.0
    %3278 = vmatpush2.msra.mxu0 0.0
    %3279 = vmatprep.subr.mxu0 0.0
    %3280 = vmatpush2.msra.mxu0 0.0
    %3281 = vmatprep.subr.mxu0 0.0
    %3282 = vmatpush2.msra.mxu0 0.0
    %3283 = vmatprep.subr.mxu0 0.0
    %3284 = vmatpush2.msra.mxu0 0.0
    %3285 = vmatprep.subr.mxu0 0.0
    %3286 = vmatpush2.msra.mxu0 0.0
    %3287 = vmatprep.subr.mxu0 0.0
    %3288 = vmatpush2.msra.mxu0 0.0
    %3289 = vmatprep.subr.mxu0 0.0
    %3290 = vmatpush2.msra.mxu0 0.0
    %3291 = vmatprep.subr.mxu0 0.0
    %3292 = vmatpush2.msra.mxu0 0.0
    %3293 = vmatprep.mubr.f32.mxu0 0.0
    %3294 = vmatmul.mubr.f32.gmra.mxu0 %v2704
    %v3295 = vpop.f32.mrf.mxu0
    %v3296 = vadd.f32 0.0, %v3295
    %v3297 = vpop.f32.mrf.mxu0
    %3298 = vdwg.mxu0
    %v3299 = vadd.f32 %v3228, %v3296
    %v3300 = vxor.u32 %v3299, 2147483648
    %v3301 = vmul.f32 %v3300, 1.442695
    %v3302 = vpow.pop %v3301
    %v3303 = vadd.f32 %v3302, 1.0
    %v3304 = vrcp.pop %v3303
    %v3305 = vmul.f32 1.0, %v3304
    %v3306 = vld [vmem:[%s229 + $0x6] sm:$0x3]
    %3307 = vmatprep.subr.mxu0 0.0
    %3308 = vmatpush1.msra.mxu0 0.0
    %3309 = vmatprep.subr.mxu0 0.0
    %3310 = vmatpush1.msra.mxu0 0.0
    %3311 = vmatprep.subr.mxu0 0.0
    %3312 = vmatpush1.msra.mxu0 0.0
    %3313 = vmatprep.subr.mxu0 0.0
    %3314 = vmatpush1.msra.mxu0 0.0
    %3315 = vmatprep.subr.mxu0 0.0
    %3316 = vmatpush1.msra.mxu0 0.0
    %3317 = vmatprep.subr.mxu0 0.0
    %3318 = vmatpush1.msra.mxu0 0.0
    %3319 = vmatprep.subr.mxu0 0.0
    %3320 = vmatpush1.msra.mxu0 0.0
    %3321 = vmatprep.subr.mxu0 0.0
    %3322 = vmatpush1.msra.mxu0 0.0
    %3323 = vmatprep.subr.mxu0 0.0
    %3324 = vmatpush1.msra.mxu0 0.0
    %3325 = vmatprep.subr.mxu0 0.0
    %3326 = vmatpush1.msra.mxu0 0.0
    %3327 = vmatprep.subr.mxu0 0.0
    %3328 = vmatpush1.msra.mxu0 0.0
    %3329 = vmatprep.subr.mxu0 0.0
    %3330 = vmatpush1.msra.mxu0 0.0
    %3331 = vmatprep.subr.mxu0 0.0
    %3332 = vmatpush1.msra.mxu0 %v418
    %3333 = vmatprep.subr.mxu0 0.0
    %3334 = vmatpush1.msra.mxu0 %v417
    %3335 = vmatprep.subr.mxu0 0.0
    %3336 = vmatpush1.msra.mxu0 %v416
    %3337 = vmatprep.subr.mxu0 0.0
    %3338 = vmatpush1.msra.mxu0 %v415
    %3339 = vmatprep.subr.mxu0 0.0
    %3340 = vmatpush2.msra.mxu0 0.0
    %3341 = vmatprep.subr.mxu0 0.0
    %3342 = vmatpush2.msra.mxu0 0.0
    %3343 = vmatprep.subr.mxu0 0.0
    %3344 = vmatpush2.msra.mxu0 0.0
    %3345 = vmatprep.subr.mxu0 0.0
    %3346 = vmatpush2.msra.mxu0 0.0
    %3347 = vmatprep.subr.mxu0 0.0
    %3348 = vmatpush2.msra.mxu0 0.0
    %3349 = vmatprep.subr.mxu0 0.0
    %3350 = vmatpush2.msra.mxu0 0.0
    %3351 = vmatprep.subr.mxu0 0.0
    %3352 = vmatpush2.msra.mxu0 0.0
    %3353 = vmatprep.subr.mxu0 0.0
    %3354 = vmatpush2.msra.mxu0 0.0
    %3355 = vmatprep.subr.mxu0 0.0
    %3356 = vmatpush2.msra.mxu0 0.0
    %3357 = vmatprep.subr.mxu0 0.0
    %3358 = vmatpush2.msra.mxu0 0.0
    %3359 = vmatprep.subr.mxu0 0.0
    %3360 = vmatpush2.msra.mxu0 0.0
    %3361 = vmatprep.subr.mxu0 0.0
    %3362 = vmatpush2.msra.mxu0 0.0
    %3363 = vmatprep.subr.mxu0 0.0
    %3364 = vmatpush2.msra.mxu0 0.0
    %3365 = vmatprep.subr.mxu0 0.0
    %3366 = vmatpush2.msra.mxu0 0.0
    %3367 = vmatprep.subr.mxu0 0.0
    %3368 = vmatpush2.msra.mxu0 0.0
    %3369 = vmatprep.subr.mxu0 0.0
    %3370 = vmatpush2.msra.mxu0 0.0
    %3371 = vmatprep.mubr.f32.mxu0 0.0
    %3372 = vmatmul.mubr.f32.gmra.mxu0 %v2704
    %v3373 = vpop.f32.mrf.mxu0
    %v3374 = vadd.f32 0.0, %v3373
    %v3375 = vpop.f32.mrf.mxu0
    %3376 = vdwg.mxu0
    %v3377 = vadd.f32 %v3306, %v3374
    %v3378 = vxor.u32 %v3377, 2147483648
    %v3379 = vmul.f32 %v3378, 1.442695
    %v3380 = vpow.pop %v3379
    %v3381 = vadd.f32 %v3380, 1.0
    %v3382 = vrcp.pop %v3381
    %v3383 = vmul.f32 1.0, %v3382
    %v3384 = vld [vmem:[%s318 + $0x6] sm:$0x3]
    %3385 = vmatprep.subr.mxu0 0.0
    %3386 = vmatpush1.msra.mxu0 0.0
    %3387 = vmatprep.subr.mxu0 0.0
    %3388 = vmatpush1.msra.mxu0 0.0
    %3389 = vmatprep.subr.mxu0 0.0
    %3390 = vmatpush1.msra.mxu0 0.0
    %3391 = vmatprep.subr.mxu0 0.0
    %3392 = vmatpush1.msra.mxu0 0.0
    %3393 = vmatprep.subr.mxu0 0.0
    %3394 = vmatpush1.msra.mxu0 0.0
    %3395 = vmatprep.subr.mxu0 0.0
    %3396 = vmatpush1.msra.mxu0 0.0
    %3397 = vmatprep.subr.mxu0 0.0
    %3398 = vmatpush1.msra.mxu0 0.0
    %3399 = vmatprep.subr.mxu0 0.0
    %3400 = vmatpush1.msra.mxu0 0.0
    %3401 = vmatprep.subr.mxu0 0.0
    %3402 = vmatpush1.msra.mxu0 0.0
    %3403 = vmatprep.subr.mxu0 0.0
    %3404 = vmatpush1.msra.mxu0 0.0
    %3405 = vmatprep.subr.mxu0 0.0
    %3406 = vmatpush1.msra.mxu0 0.0
    %3407 = vmatprep.subr.mxu0 0.0
    %3408 = vmatpush1.msra.mxu0 0.0
    %3409 = vmatprep.subr.mxu0 0.0
    %3410 = vmatpush1.msra.mxu0 %v423
    %3411 = vmatprep.subr.mxu0 0.0
    %3412 = vmatpush1.msra.mxu0 %v422
    %3413 = vmatprep.subr.mxu0 0.0
    %3414 = vmatpush1.msra.mxu0 %v421
    %3415 = vmatprep.subr.mxu0 0.0
    %3416 = vmatpush1.msra.mxu0 %v420
    %3417 = vmatprep.subr.mxu0 0.0
    %3418 = vmatpush2.msra.mxu0 0.0
    %3419 = vmatprep.subr.mxu0 0.0
    %3420 = vmatpush2.msra.mxu0 0.0
    %3421 = vmatprep.subr.mxu0 0.0
    %3422 = vmatpush2.msra.mxu0 0.0
    %3423 = vmatprep.subr.mxu0 0.0
    %3424 = vmatpush2.msra.mxu0 0.0
    %3425 = vmatprep.subr.mxu0 0.0
    %3426 = vmatpush2.msra.mxu0 0.0
    %3427 = vmatprep.subr.mxu0 0.0
    %3428 = vmatpush2.msra.mxu0 0.0
    %3429 = vmatprep.subr.mxu0 0.0
    %3430 = vmatpush2.msra.mxu0 0.0
    %3431 = vmatprep.subr.mxu0 0.0
    %3432 = vmatpush2.msra.mxu0 0.0
    %3433 = vmatprep.subr.mxu0 0.0
    %3434 = vmatpush2.msra.mxu0 0.0
    %3435 = vmatprep.subr.mxu0 0.0
    %3436 = vmatpush2.msra.mxu0 0.0
    %3437 = vmatprep.subr.mxu0 0.0
    %3438 = vmatpush2.msra.mxu0 0.0
    %3439 = vmatprep.subr.mxu0 0.0
    %3440 = vmatpush2.msra.mxu0 0.0
    %3441 = vmatprep.subr.mxu0 0.0
    %3442 = vmatpush2.msra.mxu0 0.0
    %3443 = vmatprep.subr.mxu0 0.0
    %3444 = vmatpush2.msra.mxu0 0.0
    %3445 = vmatprep.subr.mxu0 0.0
    %3446 = vmatpush2.msra.mxu0 0.0
    %3447 = vmatprep.subr.mxu0 0.0
    %3448 = vmatpush2.msra.mxu0 0.0
    %3449 = vmatprep.mubr.f32.mxu0 0.0
    %3450 = vmatmul.mubr.f32.gmra.mxu0 %v2704
    %v3451 = vpop.f32.mrf.mxu0
    %v3452 = vadd.f32 0.0, %v3451
    %v3453 = vpop.f32.mrf.mxu0
    %3454 = vdwg.mxu0
    %v3455 = vadd.f32 %v3384, %v3452
    %v3456 = vtanh.pop %v3455
    %v3457 = vld [vmem:[%s407 + $0x6] sm:$0x3]
    %3458 = vmatprep.subr.mxu0 0.0
    %3459 = vmatpush1.msra.mxu0 0.0
    %3460 = vmatprep.subr.mxu0 0.0
    %3461 = vmatpush1.msra.mxu0 0.0
    %3462 = vmatprep.subr.mxu0 0.0
    %3463 = vmatpush1.msra.mxu0 0.0
    %3464 = vmatprep.subr.mxu0 0.0
    %3465 = vmatpush1.msra.mxu0 0.0
    %3466 = vmatprep.subr.mxu0 0.0
    %3467 = vmatpush1.msra.mxu0 0.0
    %3468 = vmatprep.subr.mxu0 0.0
    %3469 = vmatpush1.msra.mxu0 0.0
    %3470 = vmatprep.subr.mxu0 0.0
    %3471 = vmatpush1.msra.mxu0 0.0
    %3472 = vmatprep.subr.mxu0 0.0
    %3473 = vmatpush1.msra.mxu0 0.0
    %3474 = vmatprep.subr.mxu0 0.0
    %3475 = vmatpush1.msra.mxu0 0.0
    %3476 = vmatprep.subr.mxu0 0.0
    %3477 = vmatpush1.msra.mxu0 0.0
    %3478 = vmatprep.subr.mxu0 0.0
    %3479 = vmatpush1.msra.mxu0 0.0
    %3480 = vmatprep.subr.mxu0 0.0
    %3481 = vmatpush1.msra.mxu0 0.0
    %3482 = vmatprep.subr.mxu0 0.0
    %3483 = vmatpush1.msra.mxu0 %v428
    %3484 = vmatprep.subr.mxu0 0.0
    %3485 = vmatpush1.msra.mxu0 %v427
    %3486 = vmatprep.subr.mxu0 0.0
    %3487 = vmatpush1.msra.mxu0 %v426
    %3488 = vmatprep.subr.mxu0 0.0
    %3489 = vmatpush1.msra.mxu0 %v425
    %3490 = vmatprep.subr.mxu0 0.0
    %3491 = vmatpush2.msra.mxu0 0.0
    %3492 = vmatprep.subr.mxu0 0.0
    %3493 = vmatpush2.msra.mxu0 0.0
    %3494 = vmatprep.subr.mxu0 0.0
    %3495 = vmatpush2.msra.mxu0 0.0
    %3496 = vmatprep.subr.mxu0 0.0
    %3497 = vmatpush2.msra.mxu0 0.0
    %3498 = vmatprep.subr.mxu0 0.0
    %3499 = vmatpush2.msra.mxu0 0.0
    %3500 = vmatprep.subr.mxu0 0.0
    %3501 = vmatpush2.msra.mxu0 0.0
    %3502 = vmatprep.subr.mxu0 0.0
    %3503 = vmatpush2.msra.mxu0 0.0
    %3504 = vmatprep.subr.mxu0 0.0
    %3505 = vmatpush2.msra.mxu0 0.0
    %3506 = vmatprep.subr.mxu0 0.0
    %3507 = vmatpush2.msra.mxu0 0.0
    %3508 = vmatprep.subr.mxu0 0.0
    %3509 = vmatpush2.msra.mxu0 0.0
    %3510 = vmatprep.subr.mxu0 0.0
    %3511 = vmatpush2.msra.mxu0 0.0
    %3512 = vmatprep.subr.mxu0 0.0
    %3513 = vmatpush2.msra.mxu0 0.0
    %3514 = vmatprep.subr.mxu0 0.0
    %3515 = vmatpush2.msra.mxu0 0.0
    %3516 = vmatprep.subr.mxu0 0.0
    %3517 = vmatpush2.msra.mxu0 0.0
    %3518 = vmatprep.subr.mxu0 0.0
    %3519 = vmatpush2.msra.mxu0 0.0
    %3520 = vmatprep.subr.mxu0 0.0
    %3521 = vmatpush2.msra.mxu0 0.0
    %3522 = vmatprep.mubr.f32.mxu0 0.0
    %3523 = vmatmul.mubr.f32.gmra.mxu0 %v2704
    %v3524 = vpop.f32.mrf.mxu0
    %v3525 = vadd.f32 0.0, %v3524
    %v3526 = vpop.f32.mrf.mxu0
    %3527 = vdwg.mxu0
    %v3528 = vadd.f32 %v3457, %v3525
    %v3529 = vxor.u32 %v3528, 2147483648
    %v3530 = vmul.f32 %v3529, 1.442695
    %v3531 = vpow.pop %v3530
    %v3532 = vadd.f32 %v3531, 1.0
    %v3533 = vrcp.pop %v3532
    %v3534 = vmul.f32 1.0, %v3533
    %v3535 = vmul.f32 %v3383, %v2627
    %v3536 = vmul.f32 %v3305, %v3456
    %v3537 = vadd.f32 %v3535, %v3536
    %v3538 = vtanh.pop %v3537
    %v3539 = vmul.f32 %v3534, %v3538
    %v3541 = vsel %vm140, %v3223, 0
    %3543 = vmatprep.subr.mxu0 0.0
    %3544 = vmatpush1.msra.mxu0 0.0
    %3545 = vmatprep.subr.mxu0 0.0
    %3546 = vmatpush1.msra.mxu0 0.0
    %3547 = vmatprep.subr.mxu0 0.0
    %3548 = vmatpush1.msra.mxu0 0.0
    %3549 = vmatprep.subr.mxu0 0.0
    %3550 = vmatpush1.msra.mxu0 0.0
    %3551 = vmatprep.subr.mxu0 0.0
    %3552 = vmatpush1.msra.mxu0 0.0
    %3553 = vmatprep.subr.mxu0 0.0
    %3554 = vmatpush1.msra.mxu0 0.0
    %3555 = vmatprep.subr.mxu0 0.0
    %3556 = vmatpush1.msra.mxu0 0.0
    %3557 = vmatprep.subr.mxu0 0.0
    %3558 = vmatpush1.msra.mxu0 0.0
    %3559 = vmatprep.subr.mxu0 0.0
    %3560 = vmatpush1.msra.mxu0 0.0
    %3561 = vmatprep.subr.mxu0 0.0
    %3562 = vmatpush1.msra.mxu0 0.0
    %3563 = vmatprep.subr.mxu0 0.0
    %3564 = vmatpush1.msra.mxu0 0.0
    %3565 = vmatprep.subr.mxu0 0.0
    %3566 = vmatpush1.msra.mxu0 0.0
    %3567 = vmatprep.subr.mxu0 0.0
    %3568 = vmatpush1.msra.mxu0 %v451
    %3569 = vmatprep.subr.mxu0 0.0
    %3570 = vmatpush1.msra.mxu0 %v450
    %3571 = vmatprep.subr.mxu0 0.0
    %3572 = vmatpush1.msra.mxu0 %v449
    %3573 = vmatprep.subr.mxu0 0.0
    %3574 = vmatpush1.msra.mxu0 %v448
    %3575 = vmatprep.subr.mxu0 0.0
    %3576 = vmatpush2.msra.mxu0 0.0
    %3577 = vmatprep.subr.mxu0 0.0
    %3578 = vmatpush2.msra.mxu0 0.0
    %3579 = vmatprep.subr.mxu0 0.0
    %3580 = vmatpush2.msra.mxu0 0.0
    %3581 = vmatprep.subr.mxu0 0.0
    %3582 = vmatpush2.msra.mxu0 0.0
    %3583 = vmatprep.subr.mxu0 0.0
    %3584 = vmatpush2.msra.mxu0 0.0
    %3585 = vmatprep.subr.mxu0 0.0
    %3586 = vmatpush2.msra.mxu0 0.0
    %3587 = vmatprep.subr.mxu0 0.0
    %3588 = vmatpush2.msra.mxu0 0.0
    %3589 = vmatprep.subr.mxu0 0.0
    %3590 = vmatpush2.msra.mxu0 0.0
    %3591 = vmatprep.subr.mxu0 0.0
    %3592 = vmatpush2.msra.mxu0 0.0
    %3593 = vmatprep.subr.mxu0 0.0
    %3594 = vmatpush2.msra.mxu0 0.0
    %3595 = vmatprep.subr.mxu0 0.0
    %3596 = vmatpush2.msra.mxu0 0.0
    %3597 = vmatprep.subr.mxu0 0.0
    %3598 = vmatpush2.msra.mxu0 0.0
    %3599 = vmatprep.subr.mxu0 0.0
    %3600 = vmatpush2.msra.mxu0 0.0
    %3601 = vmatprep.subr.mxu0 0.0
    %3602 = vmatpush2.msra.mxu0 0.0
    %3603 = vmatprep.subr.mxu0 0.0
    %3604 = vmatpush2.msra.mxu0 0.0
    %3605 = vmatprep.subr.mxu0 0.0
    %3606 = vmatpush2.msra.mxu0 0.0
    %3607 = vmatprep.mubr.f32.mxu0 0.0
    %3608 = vmatmul.mubr.f32.gmra.mxu0 %v3541
    %v3609 = vpop.f32.mrf.mxu0
    %v3610 = vadd.f32 0.0, %v3609
    %v3611 = vpop.f32.mrf.mxu0
    %3612 = vdwg.mxu0
    %v3614 = vsel %vm140, %v3539, 0
    %3616 = vmatprep.subr.mxu0 0.0
    %3617 = vmatpush1.msra.mxu0 0.0
    %3618 = vmatprep.subr.mxu0 0.0
    %3619 = vmatpush1.msra.mxu0 0.0
    %3620 = vmatprep.subr.mxu0 0.0
    %3621 = vmatpush1.msra.mxu0 0.0
    %3622 = vmatprep.subr.mxu0 0.0
    %3623 = vmatpush1.msra.mxu0 0.0
    %3624 = vmatprep.subr.mxu0 0.0
    %3625 = vmatpush1.msra.mxu0 0.0
    %3626 = vmatprep.subr.mxu0 0.0
    %3627 = vmatpush1.msra.mxu0 0.0
    %3628 = vmatprep.subr.mxu0 0.0
    %3629 = vmatpush1.msra.mxu0 0.0
    %3630 = vmatprep.subr.mxu0 0.0
    %3631 = vmatpush1.msra.mxu0 0.0
    %3632 = vmatprep.subr.mxu0 0.0
    %3633 = vmatpush1.msra.mxu0 0.0
    %3634 = vmatprep.subr.mxu0 0.0
    %3635 = vmatpush1.msra.mxu0 0.0
    %3636 = vmatprep.subr.mxu0 0.0
    %3637 = vmatpush1.msra.mxu0 0.0
    %3638 = vmatprep.subr.mxu0 0.0
    %3639 = vmatpush1.msra.mxu0 0.0
    %3640 = vmatprep.subr.mxu0 0.0
    %3641 = vmatpush1.msra.mxu0 %v432
    %3642 = vmatprep.subr.mxu0 0.0
    %3643 = vmatpush1.msra.mxu0 %v431
    %3644 = vmatprep.subr.mxu0 0.0
    %3645 = vmatpush1.msra.mxu0 %v430
    %3646 = vmatprep.subr.mxu0 0.0
    %3647 = vmatpush1.msra.mxu0 %v429
    %3648 = vmatprep.subr.mxu0 0.0
    %3649 = vmatpush2.msra.mxu0 0.0
    %3650 = vmatprep.subr.mxu0 0.0
    %3651 = vmatpush2.msra.mxu0 0.0
    %3652 = vmatprep.subr.mxu0 0.0
    %3653 = vmatpush2.msra.mxu0 0.0
    %3654 = vmatprep.subr.mxu0 0.0
    %3655 = vmatpush2.msra.mxu0 0.0
    %3656 = vmatprep.subr.mxu0 0.0
    %3657 = vmatpush2.msra.mxu0 0.0
    %3658 = vmatprep.subr.mxu0 0.0
    %3659 = vmatpush2.msra.mxu0 0.0
    %3660 = vmatprep.subr.mxu0 0.0
    %3661 = vmatpush2.msra.mxu0 0.0
    %3662 = vmatprep.subr.mxu0 0.0
    %3663 = vmatpush2.msra.mxu0 0.0
    %3664 = vmatprep.subr.mxu0 0.0
    %3665 = vmatpush2.msra.mxu0 0.0
    %3666 = vmatprep.subr.mxu0 0.0
    %3667 = vmatpush2.msra.mxu0 0.0
    %3668 = vmatprep.subr.mxu0 0.0
    %3669 = vmatpush2.msra.mxu0 0.0
    %3670 = vmatprep.subr.mxu0 0.0
    %3671 = vmatpush2.msra.mxu0 0.0
    %3672 = vmatprep.subr.mxu0 0.0
    %3673 = vmatpush2.msra.mxu0 0.0
    %3674 = vmatprep.subr.mxu0 0.0
    %3675 = vmatpush2.msra.mxu0 0.0
    %3676 = vmatprep.subr.mxu0 0.0
    %3677 = vmatpush2.msra.mxu0 0.0
    %3678 = vmatprep.subr.mxu0 0.0
    %3679 = vmatpush2.msra.mxu0 0.0
    %3680 = vmatprep.mubr.f32.mxu0 0.0
    %3681 = vmatmul.mubr.f32.gmra.mxu0 %v3614
    %v3682 = vpop.f32.mrf.mxu0
    %v3683 = vadd.f32 %v3610, %v3682
    %v3684 = vpop.f32.mrf.mxu0
    %3685 = vdwg.mxu0
    %v3686 = vadd.f32 %v3683, %v472
    %v3687 = vxor.u32 %v3686, 2147483648
    %v3688 = vmul.f32 %v3687, 1.442695
    %v3689 = vpow.pop %v3688
    %v3690 = vadd.f32 %v3689, 1.0
    %v3691 = vrcp.pop %v3690
    %v3692 = vmul.f32 1.0, %v3691
    %3693 = vmatprep.subr.mxu0 0.0
    %3694 = vmatpush1.msra.mxu0 0.0
    %3695 = vmatprep.subr.mxu0 0.0
    %3696 = vmatpush1.msra.mxu0 0.0
    %3697 = vmatprep.subr.mxu0 0.0
    %3698 = vmatpush1.msra.mxu0 0.0
    %3699 = vmatprep.subr.mxu0 0.0
    %3700 = vmatpush1.msra.mxu0 0.0
    %3701 = vmatprep.subr.mxu0 0.0
    %3702 = vmatpush1.msra.mxu0 0.0
    %3703 = vmatprep.subr.mxu0 0.0
    %3704 = vmatpush1.msra.mxu0 0.0
    %3705 = vmatprep.subr.mxu0 0.0
    %3706 = vmatpush1.msra.mxu0 0.0
    %3707 = vmatprep.subr.mxu0 0.0
    %3708 = vmatpush1.msra.mxu0 0.0
    %3709 = vmatprep.subr.mxu0 0.0
    %3710 = vmatpush1.msra.mxu0 0.0
    %3711 = vmatprep.subr.mxu0 0.0
    %3712 = vmatpush1.msra.mxu0 0.0
    %3713 = vmatprep.subr.mxu0 0.0
    %3714 = vmatpush1.msra.mxu0 0.0
    %3715 = vmatprep.subr.mxu0 0.0
    %3716 = vmatpush1.msra.mxu0 0.0
    %3717 = vmatprep.subr.mxu0 0.0
    %3718 = vmatpush1.msra.mxu0 %v456
    %3719 = vmatprep.subr.mxu0 0.0
    %3720 = vmatpush1.msra.mxu0 %v455
    %3721 = vmatprep.subr.mxu0 0.0
    %3722 = vmatpush1.msra.mxu0 %v454
    %3723 = vmatprep.subr.mxu0 0.0
    %3724 = vmatpush1.msra.mxu0 %v453
    %3725 = vmatprep.subr.mxu0 0.0
    %3726 = vmatpush2.msra.mxu0 0.0
    %3727 = vmatprep.subr.mxu0 0.0
    %3728 = vmatpush2.msra.mxu0 0.0
    %3729 = vmatprep.subr.mxu0 0.0
    %3730 = vmatpush2.msra.mxu0 0.0
    %3731 = vmatprep.subr.mxu0 0.0
    %3732 = vmatpush2.msra.mxu0 0.0
    %3733 = vmatprep.subr.mxu0 0.0
    %3734 = vmatpush2.msra.mxu0 0.0
    %3735 = vmatprep.subr.mxu0 0.0
    %3736 = vmatpush2.msra.mxu0 0.0
    %3737 = vmatprep.subr.mxu0 0.0
    %3738 = vmatpush2.msra.mxu0 0.0
    %3739 = vmatprep.subr.mxu0 0.0
    %3740 = vmatpush2.msra.mxu0 0.0
    %3741 = vmatprep.subr.mxu0 0.0
    %3742 = vmatpush2.msra.mxu0 0.0
    %3743 = vmatprep.subr.mxu0 0.0
    %3744 = vmatpush2.msra.mxu0 0.0
    %3745 = vmatprep.subr.mxu0 0.0
    %3746 = vmatpush2.msra.mxu0 0.0
    %3747 = vmatprep.subr.mxu0 0.0
    %3748 = vmatpush2.msra.mxu0 0.0
    %3749 = vmatprep.subr.mxu0 0.0
    %3750 = vmatpush2.msra.mxu0 0.0
    %3751 = vmatprep.subr.mxu0 0.0
    %3752 = vmatpush2.msra.mxu0 0.0
    %3753 = vmatprep.subr.mxu0 0.0
    %3754 = vmatpush2.msra.mxu0 0.0
    %3755 = vmatprep.subr.mxu0 0.0
    %3756 = vmatpush2.msra.mxu0 0.0
    %3757 = vmatprep.mubr.f32.mxu0 0.0
    %3758 = vmatmul.mubr.f32.gmra.mxu0 %v3541
    %v3759 = vpop.f32.mrf.mxu0
    %v3760 = vadd.f32 0.0, %v3759
    %v3761 = vpop.f32.mrf.mxu0
    %3762 = vdwg.mxu0
    %3763 = vmatprep.subr.mxu0 0.0
    %3764 = vmatpush1.msra.mxu0 0.0
    %3765 = vmatprep.subr.mxu0 0.0
    %3766 = vmatpush1.msra.mxu0 0.0
    %3767 = vmatprep.subr.mxu0 0.0
    %3768 = vmatpush1.msra.mxu0 0.0
    %3769 = vmatprep.subr.mxu0 0.0
    %3770 = vmatpush1.msra.mxu0 0.0
    %3771 = vmatprep.subr.mxu0 0.0
    %3772 = vmatpush1.msra.mxu0 0.0
    %3773 = vmatprep.subr.mxu0 0.0
    %3774 = vmatpush1.msra.mxu0 0.0
    %3775 = vmatprep.subr.mxu0 0.0
    %3776 = vmatpush1.msra.mxu0 0.0
    %3777 = vmatprep.subr.mxu0 0.0
    %3778 = vmatpush1.msra.mxu0 0.0
    %3779 = vmatprep.subr.mxu0 0.0
    %3780 = vmatpush1.msra.mxu0 0.0
    %3781 = vmatprep.subr.mxu0 0.0
    %3782 = vmatpush1.msra.mxu0 0.0
    %3783 = vmatprep.subr.mxu0 0.0
    %3784 = vmatpush1.msra.mxu0 0.0
    %3785 = vmatprep.subr.mxu0 0.0
    %3786 = vmatpush1.msra.mxu0 0.0
    %3787 = vmatprep.subr.mxu0 0.0
    %3788 = vmatpush1.msra.mxu0 %v437
    %3789 = vmatprep.subr.mxu0 0.0
    %3790 = vmatpush1.msra.mxu0 %v436
    %3791 = vmatprep.subr.mxu0 0.0
    %3792 = vmatpush1.msra.mxu0 %v435
    %3793 = vmatprep.subr.mxu0 0.0
    %3794 = vmatpush1.msra.mxu0 %v434
    %3795 = vmatprep.subr.mxu0 0.0
    %3796 = vmatpush2.msra.mxu0 0.0
    %3797 = vmatprep.subr.mxu0 0.0
    %3798 = vmatpush2.msra.mxu0 0.0
    %3799 = vmatprep.subr.mxu0 0.0
    %3800 = vmatpush2.msra.mxu0 0.0
    %3801 = vmatprep.subr.mxu0 0.0
    %3802 = vmatpush2.msra.mxu0 0.0
    %3803 = vmatprep.subr.mxu0 0.0
    %3804 = vmatpush2.msra.mxu0 0.0
    %3805 = vmatprep.subr.mxu0 0.0
    %3806 = vmatpush2.msra.mxu0 0.0
    %3807 = vmatprep.subr.mxu0 0.0
    %3808 = vmatpush2.msra.mxu0 0.0
    %3809 = vmatprep.subr.mxu0 0.0
    %3810 = vmatpush2.msra.mxu0 0.0
    %3811 = vmatprep.subr.mxu0 0.0
    %3812 = vmatpush2.msra.mxu0 0.0
    %3813 = vmatprep.subr.mxu0 0.0
    %3814 = vmatpush2.msra.mxu0 0.0
    %3815 = vmatprep.subr.mxu0 0.0
    %3816 = vmatpush2.msra.mxu0 0.0
    %3817 = vmatprep.subr.mxu0 0.0
    %3818 = vmatpush2.msra.mxu0 0.0
    %3819 = vmatprep.subr.mxu0 0.0
    %3820 = vmatpush2.msra.mxu0 0.0
    %3821 = vmatprep.subr.mxu0 0.0
    %3822 = vmatpush2.msra.mxu0 0.0
    %3823 = vmatprep.subr.mxu0 0.0
    %3824 = vmatpush2.msra.mxu0 0.0
    %3825 = vmatprep.subr.mxu0 0.0
    %3826 = vmatpush2.msra.mxu0 0.0
    %3827 = vmatprep.mubr.f32.mxu0 0.0
    %3828 = vmatmul.mubr.f32.gmra.mxu0 %v3614
    %v3829 = vpop.f32.mrf.mxu0
    %v3830 = vadd.f32 %v3760, %v3829
    %v3831 = vpop.f32.mrf.mxu0
    %3832 = vdwg.mxu0
    %v3833 = vadd.f32 %v3830, %v480
    %v3834 = vxor.u32 %v3833, 2147483648
    %v3835 = vmul.f32 %v3834, 1.442695
    %v3836 = vpow.pop %v3835
    %v3837 = vadd.f32 %v3836, 1.0
    %v3838 = vrcp.pop %v3837
    %v3839 = vmul.f32 1.0, %v3838
    %3840 = vmatprep.subr.mxu0 0.0
    %3841 = vmatpush1.msra.mxu0 0.0
    %3842 = vmatprep.subr.mxu0 0.0
    %3843 = vmatpush1.msra.mxu0 0.0
    %3844 = vmatprep.subr.mxu0 0.0
    %3845 = vmatpush1.msra.mxu0 0.0
    %3846 = vmatprep.subr.mxu0 0.0
    %3847 = vmatpush1.msra.mxu0 0.0
    %3848 = vmatprep.subr.mxu0 0.0
    %3849 = vmatpush1.msra.mxu0 0.0
    %3850 = vmatprep.subr.mxu0 0.0
    %3851 = vmatpush1.msra.mxu0 0.0
    %3852 = vmatprep.subr.mxu0 0.0
    %3853 = vmatpush1.msra.mxu0 0.0
    %3854 = vmatprep.subr.mxu0 0.0
    %3855 = vmatpush1.msra.mxu0 0.0
    %3856 = vmatprep.subr.mxu0 0.0
    %3857 = vmatpush1.msra.mxu0 0.0
    %3858 = vmatprep.subr.mxu0 0.0
    %3859 = vmatpush1.msra.mxu0 0.0
    %3860 = vmatprep.subr.mxu0 0.0
    %3861 = vmatpush1.msra.mxu0 0.0
    %3862 = vmatprep.subr.mxu0 0.0
    %3863 = vmatpush1.msra.mxu0 0.0
    %3864 = vmatprep.subr.mxu0 0.0
    %3865 = vmatpush1.msra.mxu0 %v461
    %3866 = vmatprep.subr.mxu0 0.0
    %3867 = vmatpush1.msra.mxu0 %v460
    %3868 = vmatprep.subr.mxu0 0.0
    %3869 = vmatpush1.msra.mxu0 %v459
    %3870 = vmatprep.subr.mxu0 0.0
    %3871 = vmatpush1.msra.mxu0 %v458
    %3872 = vmatprep.subr.mxu0 0.0
    %3873 = vmatpush2.msra.mxu0 0.0
    %3874 = vmatprep.subr.mxu0 0.0
    %3875 = vmatpush2.msra.mxu0 0.0
    %3876 = vmatprep.subr.mxu0 0.0
    %3877 = vmatpush2.msra.mxu0 0.0
    %3878 = vmatprep.subr.mxu0 0.0
    %3879 = vmatpush2.msra.mxu0 0.0
    %3880 = vmatprep.subr.mxu0 0.0
    %3881 = vmatpush2.msra.mxu0 0.0
    %3882 = vmatprep.subr.mxu0 0.0
    %3883 = vmatpush2.msra.mxu0 0.0
    %3884 = vmatprep.subr.mxu0 0.0
    %3885 = vmatpush2.msra.mxu0 0.0
    %3886 = vmatprep.subr.mxu0 0.0
    %3887 = vmatpush2.msra.mxu0 0.0
    %3888 = vmatprep.subr.mxu0 0.0
    %3889 = vmatpush2.msra.mxu0 0.0
    %3890 = vmatprep.subr.mxu0 0.0
    %3891 = vmatpush2.msra.mxu0 0.0
    %3892 = vmatprep.subr.mxu0 0.0
    %3893 = vmatpush2.msra.mxu0 0.0
    %3894 = vmatprep.subr.mxu0 0.0
    %3895 = vmatpush2.msra.mxu0 0.0
    %3896 = vmatprep.subr.mxu0 0.0
    %3897 = vmatpush2.msra.mxu0 0.0
    %3898 = vmatprep.subr.mxu0 0.0
    %3899 = vmatpush2.msra.mxu0 0.0
    %3900 = vmatprep.subr.mxu0 0.0
    %3901 = vmatpush2.msra.mxu0 0.0
    %3902 = vmatprep.subr.mxu0 0.0
    %3903 = vmatpush2.msra.mxu0 0.0
    %3904 = vmatprep.mubr.f32.mxu0 0.0
    %3905 = vmatmul.mubr.f32.gmra.mxu0 %v3541
    %v3906 = vpop.f32.mrf.mxu0
    %v3907 = vadd.f32 0.0, %v3906
    %v3908 = vpop.f32.mrf.mxu0
    %3909 = vdwg.mxu0
    %3910 = vmatprep.subr.mxu0 0.0
    %3911 = vmatpush1.msra.mxu0 0.0
    %3912 = vmatprep.subr.mxu0 0.0
    %3913 = vmatpush1.msra.mxu0 0.0
    %3914 = vmatprep.subr.mxu0 0.0
    %3915 = vmatpush1.msra.mxu0 0.0
    %3916 = vmatprep.subr.mxu0 0.0
    %3917 = vmatpush1.msra.mxu0 0.0
    %3918 = vmatprep.subr.mxu0 0.0
    %3919 = vmatpush1.msra.mxu0 0.0
    %3920 = vmatprep.subr.mxu0 0.0
    %3921 = vmatpush1.msra.mxu0 0.0
    %3922 = vmatprep.subr.mxu0 0.0
    %3923 = vmatpush1.msra.mxu0 0.0
    %3924 = vmatprep.subr.mxu0 0.0
    %3925 = vmatpush1.msra.mxu0 0.0
    %3926 = vmatprep.subr.mxu0 0.0
    %3927 = vmatpush1.msra.mxu0 0.0
    %3928 = vmatprep.subr.mxu0 0.0
    %3929 = vmatpush1.msra.mxu0 0.0
    %3930 = vmatprep.subr.mxu0 0.0
    %3931 = vmatpush1.msra.mxu0 0.0
    %3932 = vmatprep.subr.mxu0 0.0
    %3933 = vmatpush1.msra.mxu0 0.0
    %3934 = vmatprep.subr.mxu0 0.0
    %3935 = vmatpush1.msra.mxu0 %v442
    %3936 = vmatprep.subr.mxu0 0.0
    %3937 = vmatpush1.msra.mxu0 %v441
    %3938 = vmatprep.subr.mxu0 0.0
    %3939 = vmatpush1.msra.mxu0 %v440
    %3940 = vmatprep.subr.mxu0 0.0
    %3941 = vmatpush1.msra.mxu0 %v439
    %3942 = vmatprep.subr.mxu0 0.0
    %3943 = vmatpush2.msra.mxu0 0.0
    %3944 = vmatprep.subr.mxu0 0.0
    %3945 = vmatpush2.msra.mxu0 0.0
    %3946 = vmatprep.subr.mxu0 0.0
    %3947 = vmatpush2.msra.mxu0 0.0
    %3948 = vmatprep.subr.mxu0 0.0
    %3949 = vmatpush2.msra.mxu0 0.0
    %3950 = vmatprep.subr.mxu0 0.0
    %3951 = vmatpush2.msra.mxu0 0.0
    %3952 = vmatprep.subr.mxu0 0.0
    %3953 = vmatpush2.msra.mxu0 0.0
    %3954 = vmatprep.subr.mxu0 0.0
    %3955 = vmatpush2.msra.mxu0 0.0
    %3956 = vmatprep.subr.mxu0 0.0
    %3957 = vmatpush2.msra.mxu0 0.0
    %3958 = vmatprep.subr.mxu0 0.0
    %3959 = vmatpush2.msra.mxu0 0.0
    %3960 = vmatprep.subr.mxu0 0.0
    %3961 = vmatpush2.msra.mxu0 0.0
    %3962 = vmatprep.subr.mxu0 0.0
    %3963 = vmatpush2.msra.mxu0 0.0
    %3964 = vmatprep.subr.mxu0 0.0
    %3965 = vmatpush2.msra.mxu0 0.0
    %3966 = vmatprep.subr.mxu0 0.0
    %3967 = vmatpush2.msra.mxu0 0.0
    %3968 = vmatprep.subr.mxu0 0.0
    %3969 = vmatpush2.msra.mxu0 0.0
    %3970 = vmatprep.subr.mxu0 0.0
    %3971 = vmatpush2.msra.mxu0 0.0
    %3972 = vmatprep.subr.mxu0 0.0
    %3973 = vmatpush2.msra.mxu0 0.0
    %3974 = vmatprep.mubr.f32.mxu0 0.0
    %3975 = vmatmul.mubr.f32.gmra.mxu0 %v3614
    %v3976 = vpop.f32.mrf.mxu0
    %v3977 = vadd.f32 %v3907, %v3976
    %v3978 = vpop.f32.mrf.mxu0
    %3979 = vdwg.mxu0
    %v3980 = vadd.f32 %v3977, %v488
    %v3981 = vtanh.pop %v3980
    %3982 = vmatprep.subr.mxu0 0.0
    %3983 = vmatpush1.msra.mxu0 0.0
    %3984 = vmatprep.subr.mxu0 0.0
    %3985 = vmatpush1.msra.mxu0 0.0
    %3986 = vmatprep.subr.mxu0 0.0
    %3987 = vmatpush1.msra.mxu0 0.0
    %3988 = vmatprep.subr.mxu0 0.0
    %3989 = vmatpush1.msra.mxu0 0.0
    %3990 = vmatprep.subr.mxu0 0.0
    %3991 = vmatpush1.msra.mxu0 0.0
    %3992 = vmatprep.subr.mxu0 0.0
    %3993 = vmatpush1.msra.mxu0 0.0
    %3994 = vmatprep.subr.mxu0 0.0
    %3995 = vmatpush1.msra.mxu0 0.0
    %3996 = vmatprep.subr.mxu0 0.0
    %3997 = vmatpush1.msra.mxu0 0.0
    %3998 = vmatprep.subr.mxu0 0.0
    %3999 = vmatpush1.msra.mxu0 0.0
    %4000 = vmatprep.subr.mxu0 0.0
    %4001 = vmatpush1.msra.mxu0 0.0
    %4002 = vmatprep.subr.mxu0 0.0
    %4003 = vmatpush1.msra.mxu0 0.0
    %4004 = vmatprep.subr.mxu0 0.0
    %4005 = vmatpush1.msra.mxu0 0.0
    %4006 = vmatprep.subr.mxu0 0.0
    %4007 = vmatpush1.msra.mxu0 %v466
    %4008 = vmatprep.subr.mxu0 0.0
    %4009 = vmatpush1.msra.mxu0 %v465
    %4010 = vmatprep.subr.mxu0 0.0
    %4011 = vmatpush1.msra.mxu0 %v464
    %4012 = vmatprep.subr.mxu0 0.0
    %4013 = vmatpush1.msra.mxu0 %v463
    %4014 = vmatprep.subr.mxu0 0.0
    %4015 = vmatpush2.msra.mxu0 0.0
    %4016 = vmatprep.subr.mxu0 0.0
    %4017 = vmatpush2.msra.mxu0 0.0
    %4018 = vmatprep.subr.mxu0 0.0
    %4019 = vmatpush2.msra.mxu0 0.0
    %4020 = vmatprep.subr.mxu0 0.0
    %4021 = vmatpush2.msra.mxu0 0.0
    %4022 = vmatprep.subr.mxu0 0.0
    %4023 = vmatpush2.msra.mxu0 0.0
    %4024 = vmatprep.subr.mxu0 0.0
    %4025 = vmatpush2.msra.mxu0 0.0
    %4026 = vmatprep.subr.mxu0 0.0
    %4027 = vmatpush2.msra.mxu0 0.0
    %4028 = vmatprep.subr.mxu0 0.0
    %4029 = vmatpush2.msra.mxu0 0.0
    %4030 = vmatprep.subr.mxu0 0.0
    %4031 = vmatpush2.msra.mxu0 0.0
    %4032 = vmatprep.subr.mxu0 0.0
    %4033 = vmatpush2.msra.mxu0 0.0
    %4034 = vmatprep.subr.mxu0 0.0
    %4035 = vmatpush2.msra.mxu0 0.0
    %4036 = vmatprep.subr.mxu0 0.0
    %4037 = vmatpush2.msra.mxu0 0.0
    %4038 = vmatprep.subr.mxu0 0.0
    %4039 = vmatpush2.msra.mxu0 0.0
    %4040 = vmatprep.subr.mxu0 0.0
    %4041 = vmatpush2.msra.mxu0 0.0
    %4042 = vmatprep.subr.mxu0 0.0
    %4043 = vmatpush2.msra.mxu0 0.0
    %4044 = vmatprep.subr.mxu0 0.0
    %4045 = vmatpush2.msra.mxu0 0.0
    %4046 = vmatprep.mubr.f32.mxu0 0.0
    %4047 = vmatmul.mubr.f32.gmra.mxu0 %v3541
    %v4048 = vpop.f32.mrf.mxu0
    %v4049 = vadd.f32 0.0, %v4048
    %v4050 = vpop.f32.mrf.mxu0
    %4051 = vdwg.mxu0
    %4052 = vmatprep.subr.mxu0 0.0
    %4053 = vmatpush1.msra.mxu0 0.0
    %4054 = vmatprep.subr.mxu0 0.0
    %4055 = vmatpush1.msra.mxu0 0.0
    %4056 = vmatprep.subr.mxu0 0.0
    %4057 = vmatpush1.msra.mxu0 0.0
    %4058 = vmatprep.subr.mxu0 0.0
    %4059 = vmatpush1.msra.mxu0 0.0
    %4060 = vmatprep.subr.mxu0 0.0
    %4061 = vmatpush1.msra.mxu0 0.0
    %4062 = vmatprep.subr.mxu0 0.0
    %4063 = vmatpush1.msra.mxu0 0.0
    %4064 = vmatprep.subr.mxu0 0.0
    %4065 = vmatpush1.msra.mxu0 0.0
    %4066 = vmatprep.subr.mxu0 0.0
    %4067 = vmatpush1.msra.mxu0 0.0
    %4068 = vmatprep.subr.mxu0 0.0
    %4069 = vmatpush1.msra.mxu0 0.0
    %4070 = vmatprep.subr.mxu0 0.0
    %4071 = vmatpush1.msra.mxu0 0.0
    %4072 = vmatprep.subr.mxu0 0.0
    %4073 = vmatpush1.msra.mxu0 0.0
    %4074 = vmatprep.subr.mxu0 0.0
    %4075 = vmatpush1.msra.mxu0 0.0
    %4076 = vmatprep.subr.mxu0 0.0
    %4077 = vmatpush1.msra.mxu0 %v447
    %4078 = vmatprep.subr.mxu0 0.0
    %4079 = vmatpush1.msra.mxu0 %v446
    %4080 = vmatprep.subr.mxu0 0.0
    %4081 = vmatpush1.msra.mxu0 %v445
    %4082 = vmatprep.subr.mxu0 0.0
    %4083 = vmatpush1.msra.mxu0 %v444
    %4084 = vmatprep.subr.mxu0 0.0
    %4085 = vmatpush2.msra.mxu0 0.0
    %4086 = vmatprep.subr.mxu0 0.0
    %4087 = vmatpush2.msra.mxu0 0.0
    %4088 = vmatprep.subr.mxu0 0.0
    %4089 = vmatpush2.msra.mxu0 0.0
    %4090 = vmatprep.subr.mxu0 0.0
    %4091 = vmatpush2.msra.mxu0 0.0
    %4092 = vmatprep.subr.mxu0 0.0
    %4093 = vmatpush2.msra.mxu0 0.0
    %4094 = vmatprep.subr.mxu0 0.0
    %4095 = vmatpush2.msra.mxu0 0.0
    %4096 = vmatprep.subr.mxu0 0.0
    %4097 = vmatpush2.msra.mxu0 0.0
    %4098 = vmatprep.subr.mxu0 0.0
    %4099 = vmatpush2.msra.mxu0 0.0
    %4100 = vmatprep.subr.mxu0 0.0
    %4101 = vmatpush2.msra.mxu0 0.0
    %4102 = vmatprep.subr.mxu0 0.0
    %4103 = vmatpush2.msra.mxu0 0.0
    %4104 = vmatprep.subr.mxu0 0.0
    %4105 = vmatpush2.msra.mxu0 0.0
    %4106 = vmatprep.subr.mxu0 0.0
    %4107 = vmatpush2.msra.mxu0 0.0
    %4108 = vmatprep.subr.mxu0 0.0
    %4109 = vmatpush2.msra.mxu0 0.0
    %4110 = vmatprep.subr.mxu0 0.0
    %4111 = vmatpush2.msra.mxu0 0.0
    %4112 = vmatprep.subr.mxu0 0.0
    %4113 = vmatpush2.msra.mxu0 0.0
    %4114 = vmatprep.subr.mxu0 0.0
    %4115 = vmatpush2.msra.mxu0 0.0
    %4116 = vmatprep.mubr.f32.mxu0 0.0
    %4117 = vmatmul.mubr.f32.gmra.mxu0 %v3614
    %v4118 = vpop.f32.mrf.mxu0
    %v4119 = vadd.f32 %v4049, %v4118
    %v4120 = vpop.f32.mrf.mxu0
    %4121 = vdwg.mxu0
    %v4122 = vadd.f32 %v4119, %v496
    %v4123 = vxor.u32 %v4122, 2147483648
    %v4124 = vmul.f32 %v4123, 1.442695
    %v4125 = vpow.pop %v4124
    %v4126 = vadd.f32 %v4125, 1.0
    %v4127 = vrcp.pop %v4126
    %v4128 = vmul.f32 1.0, %v4127
    %v4129 = vmul.f32 %v3839, %v3221
    %v4130 = vmul.f32 %v3692, %v3981
    %v4131 = vadd.f32 %v4129, %v4130
    %v4132 = vtanh.pop %v4131
    %v4133 = vmul.f32 %v4128, %v4132
    %s4134 = sld [smem:[#allocation4 + $0x3]]
    %v4135 = vstv %s4134
    %v4136 = vmul.f32 %v4135, %v4133
    %v4137 = vadd.f32 %v3227, %v4136
    %v4138 = vld [vmem:[#allocation2 + $0x8] sm:$0x3]
    %4139 = vmatprep.subr.mxu0 0.0
    %4140 = vmatpush1.msra.mxu0 0.0
    %4141 = vmatprep.subr.mxu0 0.0
    %4142 = vmatpush1.msra.mxu0 0.0
    %4143 = vmatprep.subr.mxu0 0.0
    %4144 = vmatpush1.msra.mxu0 0.0
    %4145 = vmatprep.subr.mxu0 0.0
    %4146 = vmatpush1.msra.mxu0 0.0
    %4147 = vmatprep.subr.mxu0 0.0
    %4148 = vmatpush1.msra.mxu0 0.0
    %4149 = vmatprep.subr.mxu0 0.0
    %4150 = vmatpush1.msra.mxu0 0.0
    %4151 = vmatprep.subr.mxu0 0.0
    %4152 = vmatpush1.msra.mxu0 0.0
    %4153 = vmatprep.subr.mxu0 0.0
    %4154 = vmatpush1.msra.mxu0 0.0
    %4155 = vmatprep.subr.mxu0 0.0
    %4156 = vmatpush1.msra.mxu0 0.0
    %4157 = vmatprep.subr.mxu0 0.0
    %4158 = vmatpush1.msra.mxu0 0.0
    %4159 = vmatprep.subr.mxu0 0.0
    %4160 = vmatpush1.msra.mxu0 0.0
    %4161 = vmatprep.subr.mxu0 0.0
    %4162 = vmatpush1.msra.mxu0 0.0
    %4163 = vmatprep.subr.mxu0 0.0
    %4164 = vmatpush1.msra.mxu0 %v413
    %4165 = vmatprep.subr.mxu0 0.0
    %4166 = vmatpush1.msra.mxu0 %v412
    %4167 = vmatprep.subr.mxu0 0.0
    %4168 = vmatpush1.msra.mxu0 %v411
    %4169 = vmatprep.subr.mxu0 0.0
    %4170 = vmatpush1.msra.mxu0 %v410
    %4171 = vmatprep.subr.mxu0 0.0
    %4172 = vmatpush2.msra.mxu0 0.0
    %4173 = vmatprep.subr.mxu0 0.0
    %4174 = vmatpush2.msra.mxu0 0.0
    %4175 = vmatprep.subr.mxu0 0.0
    %4176 = vmatpush2.msra.mxu0 0.0
    %4177 = vmatprep.subr.mxu0 0.0
    %4178 = vmatpush2.msra.mxu0 0.0
    %4179 = vmatprep.subr.mxu0 0.0
    %4180 = vmatpush2.msra.mxu0 0.0
    %4181 = vmatprep.subr.mxu0 0.0
    %4182 = vmatpush2.msra.mxu0 0.0
    %4183 = vmatprep.subr.mxu0 0.0
    %4184 = vmatpush2.msra.mxu0 0.0
    %4185 = vmatprep.subr.mxu0 0.0
    %4186 = vmatpush2.msra.mxu0 0.0
    %4187 = vmatprep.subr.mxu0 0.0
    %4188 = vmatpush2.msra.mxu0 0.0
    %4189 = vmatprep.subr.mxu0 0.0
    %4190 = vmatpush2.msra.mxu0 0.0
    %4191 = vmatprep.subr.mxu0 0.0
    %4192 = vmatpush2.msra.mxu0 0.0
    %4193 = vmatprep.subr.mxu0 0.0
    %4194 = vmatpush2.msra.mxu0 0.0
    %4195 = vmatprep.subr.mxu0 0.0
    %4196 = vmatpush2.msra.mxu0 0.0
    %4197 = vmatprep.subr.mxu0 0.0
    %4198 = vmatpush2.msra.mxu0 0.0
    %4199 = vmatprep.subr.mxu0 0.0
    %4200 = vmatpush2.msra.mxu0 0.0
    %4201 = vmatprep.subr.mxu0 0.0
    %4202 = vmatpush2.msra.mxu0 0.0
    %4203 = vmatprep.mubr.f32.mxu0 0.0
    %4204 = vmatmul.mubr.f32.gmra.mxu0 %v3614
    %v4205 = vpop.f32.mrf.mxu0
    %v4206 = vadd.f32 0.0, %v4205
    %v4207 = vpop.f32.mrf.mxu0
    %4208 = vdwg.mxu0
    %v4209 = vadd.f32 %v4138, %v4206
    %v4210 = vxor.u32 %v4209, 2147483648
    %v4211 = vmul.f32 %v4210, 1.442695
    %v4212 = vpow.pop %v4211
    %v4213 = vadd.f32 %v4212, 1.0
    %v4214 = vrcp.pop %v4213
    %v4215 = vmul.f32 1.0, %v4214
    %v4216 = vld [vmem:[%s229 + $0x8] sm:$0x3]
    %4217 = vmatprep.subr.mxu0 0.0
    %4218 = vmatpush1.msra.mxu0 0.0
    %4219 = vmatprep.subr.mxu0 0.0
    %4220 = vmatpush1.msra.mxu0 0.0
    %4221 = vmatprep.subr.mxu0 0.0
    %4222 = vmatpush1.msra.mxu0 0.0
    %4223 = vmatprep.subr.mxu0 0.0
    %4224 = vmatpush1.msra.mxu0 0.0
    %4225 = vmatprep.subr.mxu0 0.0
    %4226 = vmatpush1.msra.mxu0 0.0
    %4227 = vmatprep.subr.mxu0 0.0
    %4228 = vmatpush1.msra.mxu0 0.0
    %4229 = vmatprep.subr.mxu0 0.0
    %4230 = vmatpush1.msra.mxu0 0.0
    %4231 = vmatprep.subr.mxu0 0.0
    %4232 = vmatpush1.msra.mxu0 0.0
    %4233 = vmatprep.subr.mxu0 0.0
    %4234 = vmatpush1.msra.mxu0 0.0
    %4235 = vmatprep.subr.mxu0 0.0
    %4236 = vmatpush1.msra.mxu0 0.0
    %4237 = vmatprep.subr.mxu0 0.0
    %4238 = vmatpush1.msra.mxu0 0.0
    %4239 = vmatprep.subr.mxu0 0.0
    %4240 = vmatpush1.msra.mxu0 0.0
    %4241 = vmatprep.subr.mxu0 0.0
    %4242 = vmatpush1.msra.mxu0 %v418
    %4243 = vmatprep.subr.mxu0 0.0
    %4244 = vmatpush1.msra.mxu0 %v417
    %4245 = vmatprep.subr.mxu0 0.0
    %4246 = vmatpush1.msra.mxu0 %v416
    %4247 = vmatprep.subr.mxu0 0.0
    %4248 = vmatpush1.msra.mxu0 %v415
    %4249 = vmatprep.subr.mxu0 0.0
    %4250 = vmatpush2.msra.mxu0 0.0
    %4251 = vmatprep.subr.mxu0 0.0
    %4252 = vmatpush2.msra.mxu0 0.0
    %4253 = vmatprep.subr.mxu0 0.0
    %4254 = vmatpush2.msra.mxu0 0.0
    %4255 = vmatprep.subr.mxu0 0.0
    %4256 = vmatpush2.msra.mxu0 0.0
    %4257 = vmatprep.subr.mxu0 0.0
    %4258 = vmatpush2.msra.mxu0 0.0
    %4259 = vmatprep.subr.mxu0 0.0
    %4260 = vmatpush2.msra.mxu0 0.0
    %4261 = vmatprep.subr.mxu0 0.0
    %4262 = vmatpush2.msra.mxu0 0.0
    %4263 = vmatprep.subr.mxu0 0.0
    %4264 = vmatpush2.msra.mxu0 0.0
    %4265 = vmatprep.subr.mxu0 0.0
    %4266 = vmatpush2.msra.mxu0 0.0
    %4267 = vmatprep.subr.mxu0 0.0
    %4268 = vmatpush2.msra.mxu0 0.0
    %4269 = vmatprep.subr.mxu0 0.0
    %4270 = vmatpush2.msra.mxu0 0.0
    %4271 = vmatprep.subr.mxu0 0.0
    %4272 = vmatpush2.msra.mxu0 0.0
    %4273 = vmatprep.subr.mxu0 0.0
    %4274 = vmatpush2.msra.mxu0 0.0
    %4275 = vmatprep.subr.mxu0 0.0
    %4276 = vmatpush2.msra.mxu0 0.0
    %4277 = vmatprep.subr.mxu0 0.0
    %4278 = vmatpush2.msra.mxu0 0.0
    %4279 = vmatprep.subr.mxu0 0.0
    %4280 = vmatpush2.msra.mxu0 0.0
    %4281 = vmatprep.mubr.f32.mxu0 0.0
    %4282 = vmatmul.mubr.f32.gmra.mxu0 %v3614
    %v4283 = vpop.f32.mrf.mxu0
    %v4284 = vadd.f32 0.0, %v4283
    %v4285 = vpop.f32.mrf.mxu0
    %4286 = vdwg.mxu0
    %v4287 = vadd.f32 %v4216, %v4284
    %v4288 = vxor.u32 %v4287, 2147483648
    %v4289 = vmul.f32 %v4288, 1.442695
    %v4290 = vpow.pop %v4289
    %v4291 = vadd.f32 %v4290, 1.0
    %v4292 = vrcp.pop %v4291
    %v4293 = vmul.f32 1.0, %v4292
    %v4294 = vld [vmem:[%s318 + $0x8] sm:$0x3]
    %4295 = vmatprep.subr.mxu0 0.0
    %4296 = vmatpush1.msra.mxu0 0.0
    %4297 = vmatprep.subr.mxu0 0.0
    %4298 = vmatpush1.msra.mxu0 0.0
    %4299 = vmatprep.subr.mxu0 0.0
    %4300 = vmatpush1.msra.mxu0 0.0
    %4301 = vmatprep.subr.mxu0 0.0
    %4302 = vmatpush1.msra.mxu0 0.0
    %4303 = vmatprep.subr.mxu0 0.0
    %4304 = vmatpush1.msra.mxu0 0.0
    %4305 = vmatprep.subr.mxu0 0.0
    %4306 = vmatpush1.msra.mxu0 0.0
    %4307 = vmatprep.subr.mxu0 0.0
    %4308 = vmatpush1.msra.mxu0 0.0
    %4309 = vmatprep.subr.mxu0 0.0
    %4310 = vmatpush1.msra.mxu0 0.0
    %4311 = vmatprep.subr.mxu0 0.0
    %4312 = vmatpush1.msra.mxu0 0.0
    %4313 = vmatprep.subr.mxu0 0.0
    %4314 = vmatpush1.msra.mxu0 0.0
    %4315 = vmatprep.subr.mxu0 0.0
    %4316 = vmatpush1.msra.mxu0 0.0
    %4317 = vmatprep.subr.mxu0 0.0
    %4318 = vmatpush1.msra.mxu0 0.0
    %4319 = vmatprep.subr.mxu0 0.0
    %4320 = vmatpush1.msra.mxu0 %v423
    %4321 = vmatprep.subr.mxu0 0.0
    %4322 = vmatpush1.msra.mxu0 %v422
    %4323 = vmatprep.subr.mxu0 0.0
    %4324 = vmatpush1.msra.mxu0 %v421
    %4325 = vmatprep.subr.mxu0 0.0
    %4326 = vmatpush1.msra.mxu0 %v420
    %4327 = vmatprep.subr.mxu0 0.0
    %4328 = vmatpush2.msra.mxu0 0.0
    %4329 = vmatprep.subr.mxu0 0.0
    %4330 = vmatpush2.msra.mxu0 0.0
    %4331 = vmatprep.subr.mxu0 0.0
    %4332 = vmatpush2.msra.mxu0 0.0
    %4333 = vmatprep.subr.mxu0 0.0
    %4334 = vmatpush2.msra.mxu0 0.0
    %4335 = vmatprep.subr.mxu0 0.0
    %4336 = vmatpush2.msra.mxu0 0.0
    %4337 = vmatprep.subr.mxu0 0.0
    %4338 = vmatpush2.msra.mxu0 0.0
    %4339 = vmatprep.subr.mxu0 0.0
    %4340 = vmatpush2.msra.mxu0 0.0
    %4341 = vmatprep.subr.mxu0 0.0
    %4342 = vmatpush2.msra.mxu0 0.0
    %4343 = vmatprep.subr.mxu0 0.0
    %4344 = vmatpush2.msra.mxu0 0.0
    %4345 = vmatprep.subr.mxu0 0.0
    %4346 = vmatpush2.msra.mxu0 0.0
    %4347 = vmatprep.subr.mxu0 0.0
    %4348 = vmatpush2.msra.mxu0 0.0
    %4349 = vmatprep.subr.mxu0 0.0
    %4350 = vmatpush2.msra.mxu0 0.0
    %4351 = vmatprep.subr.mxu0 0.0
    %4352 = vmatpush2.msra.mxu0 0.0
    %4353 = vmatprep.subr.mxu0 0.0
    %4354 = vmatpush2.msra.mxu0 0.0
    %4355 = vmatprep.subr.mxu0 0.0
    %4356 = vmatpush2.msra.mxu0 0.0
    %4357 = vmatprep.subr.mxu0 0.0
    %4358 = vmatpush2.msra.mxu0 0.0
    %4359 = vmatprep.mubr.f32.mxu0 0.0
    %4360 = vmatmul.mubr.f32.gmra.mxu0 %v3614
    %v4361 = vpop.f32.mrf.mxu0
    %v4362 = vadd.f32 0.0, %v4361
    %v4363 = vpop.f32.mrf.mxu0
    %4364 = vdwg.mxu0
    %v4365 = vadd.f32 %v4294, %v4362
    %v4366 = vtanh.pop %v4365
    %v4367 = vld [vmem:[%s407 + $0x8] sm:$0x3]
    %4368 = vmatprep.subr.mxu0 0.0
    %4369 = vmatpush1.msra.mxu0 0.0
    %4370 = vmatprep.subr.mxu0 0.0
    %4371 = vmatpush1.msra.mxu0 0.0
    %4372 = vmatprep.subr.mxu0 0.0
    %4373 = vmatpush1.msra.mxu0 0.0
    %4374 = vmatprep.subr.mxu0 0.0
    %4375 = vmatpush1.msra.mxu0 0.0
    %4376 = vmatprep.subr.mxu0 0.0
    %4377 = vmatpush1.msra.mxu0 0.0
    %4378 = vmatprep.subr.mxu0 0.0
    %4379 = vmatpush1.msra.mxu0 0.0
    %4380 = vmatprep.subr.mxu0 0.0
    %4381 = vmatpush1.msra.mxu0 0.0
    %4382 = vmatprep.subr.mxu0 0.0
    %4383 = vmatpush1.msra.mxu0 0.0
    %4384 = vmatprep.subr.mxu0 0.0
    %4385 = vmatpush1.msra.mxu0 0.0
    %4386 = vmatprep.subr.mxu0 0.0
    %4387 = vmatpush1.msra.mxu0 0.0
    %4388 = vmatprep.subr.mxu0 0.0
    %4389 = vmatpush1.msra.mxu0 0.0
    %4390 = vmatprep.subr.mxu0 0.0
    %4391 = vmatpush1.msra.mxu0 0.0
    %4392 = vmatprep.subr.mxu0 0.0
    %4393 = vmatpush1.msra.mxu0 %v428
    %4394 = vmatprep.subr.mxu0 0.0
    %4395 = vmatpush1.msra.mxu0 %v427
    %4396 = vmatprep.subr.mxu0 0.0
    %4397 = vmatpush1.msra.mxu0 %v426
    %4398 = vmatprep.subr.mxu0 0.0
    %4399 = vmatpush1.msra.mxu0 %v425
    %4400 = vmatprep.subr.mxu0 0.0
    %4401 = vmatpush2.msra.mxu0 0.0
    %4402 = vmatprep.subr.mxu0 0.0
    %4403 = vmatpush2.msra.mxu0 0.0
    %4404 = vmatprep.subr.mxu0 0.0
    %4405 = vmatpush2.msra.mxu0 0.0
    %4406 = vmatprep.subr.mxu0 0.0
    %4407 = vmatpush2.msra.mxu0 0.0
    %4408 = vmatprep.subr.mxu0 0.0
    %4409 = vmatpush2.msra.mxu0 0.0
    %4410 = vmatprep.subr.mxu0 0.0
    %4411 = vmatpush2.msra.mxu0 0.0
    %4412 = vmatprep.subr.mxu0 0.0
    %4413 = vmatpush2.msra.mxu0 0.0
    %4414 = vmatprep.subr.mxu0 0.0
    %4415 = vmatpush2.msra.mxu0 0.0
    %4416 = vmatprep.subr.mxu0 0.0
    %4417 = vmatpush2.msra.mxu0 0.0
    %4418 = vmatprep.subr.mxu0 0.0
    %4419 = vmatpush2.msra.mxu0 0.0
    %4420 = vmatprep.subr.mxu0 0.0
    %4421 = vmatpush2.msra.mxu0 0.0
    %4422 = vmatprep.subr.mxu0 0.0
    %4423 = vmatpush2.msra.mxu0 0.0
    %4424 = vmatprep.subr.mxu0 0.0
    %4425 = vmatpush2.msra.mxu0 0.0
    %4426 = vmatprep.subr.mxu0 0.0
    %4427 = vmatpush2.msra.mxu0 0.0
    %4428 = vmatprep.subr.mxu0 0.0
    %4429 = vmatpush2.msra.mxu0 0.0
    %4430 = vmatprep.subr.mxu0 0.0
    %4431 = vmatpush2.msra.mxu0 0.0
    %4432 = vmatprep.mubr.f32.mxu0 0.0
    %4433 = vmatmul.mubr.f32.gmra.mxu0 %v3614
    %v4434 = vpop.f32.mrf.mxu0
    %v4435 = vadd.f32 0.0, %v4434
    %v4436 = vpop.f32.mrf.mxu0
    %4437 = vdwg.mxu0
    %v4438 = vadd.f32 %v4367, %v4435
    %v4439 = vxor.u32 %v4438, 2147483648
    %v4440 = vmul.f32 %v4439, 1.442695
    %v4441 = vpow.pop %v4440
    %v4442 = vadd.f32 %v4441, 1.0
    %v4443 = vrcp.pop %v4442
    %v4444 = vmul.f32 1.0, %v4443
    %v4445 = vmul.f32 %v4293, %v3537
    %v4446 = vmul.f32 %v4215, %v4366
    %v4447 = vadd.f32 %v4445, %v4446
    %v4448 = vtanh.pop %v4447
    %v4449 = vmul.f32 %v4444, %v4448
    %v4451 = vsel %vm140, %v4133, 0
    %4453 = vmatprep.subr.mxu0 0.0
    %4454 = vmatpush1.msra.mxu0 0.0
    %4455 = vmatprep.subr.mxu0 0.0
    %4456 = vmatpush1.msra.mxu0 0.0
    %4457 = vmatprep.subr.mxu0 0.0
    %4458 = vmatpush1.msra.mxu0 0.0
    %4459 = vmatprep.subr.mxu0 0.0
    %4460 = vmatpush1.msra.mxu0 0.0
    %4461 = vmatprep.subr.mxu0 0.0
    %4462 = vmatpush1.msra.mxu0 0.0
    %4463 = vmatprep.subr.mxu0 0.0
    %4464 = vmatpush1.msra.mxu0 0.0
    %4465 = vmatprep.subr.mxu0 0.0
    %4466 = vmatpush1.msra.mxu0 0.0
    %4467 = vmatprep.subr.mxu0 0.0
    %4468 = vmatpush1.msra.mxu0 0.0
    %4469 = vmatprep.subr.mxu0 0.0
    %4470 = vmatpush1.msra.mxu0 0.0
    %4471 = vmatprep.subr.mxu0 0.0
    %4472 = vmatpush1.msra.mxu0 0.0
    %4473 = vmatprep.subr.mxu0 0.0
    %4474 = vmatpush1.msra.mxu0 0.0
    %4475 = vmatprep.subr.mxu0 0.0
    %4476 = vmatpush1.msra.mxu0 0.0
    %4477 = vmatprep.subr.mxu0 0.0
    %4478 = vmatpush1.msra.mxu0 %v451
    %4479 = vmatprep.subr.mxu0 0.0
    %4480 = vmatpush1.msra.mxu0 %v450
    %4481 = vmatprep.subr.mxu0 0.0
    %4482 = vmatpush1.msra.mxu0 %v449
    %4483 = vmatprep.subr.mxu0 0.0
    %4484 = vmatpush1.msra.mxu0 %v448
    %4485 = vmatprep.subr.mxu0 0.0
    %4486 = vmatpush2.msra.mxu0 0.0
    %4487 = vmatprep.subr.mxu0 0.0
    %4488 = vmatpush2.msra.mxu0 0.0
    %4489 = vmatprep.subr.mxu0 0.0
    %4490 = vmatpush2.msra.mxu0 0.0
    %4491 = vmatprep.subr.mxu0 0.0
    %4492 = vmatpush2.msra.mxu0 0.0
    %4493 = vmatprep.subr.mxu0 0.0
    %4494 = vmatpush2.msra.mxu0 0.0
    %4495 = vmatprep.subr.mxu0 0.0
    %4496 = vmatpush2.msra.mxu0 0.0
    %4497 = vmatprep.subr.mxu0 0.0
    %4498 = vmatpush2.msra.mxu0 0.0
    %4499 = vmatprep.subr.mxu0 0.0
    %4500 = vmatpush2.msra.mxu0 0.0
    %4501 = vmatprep.subr.mxu0 0.0
    %4502 = vmatpush2.msra.mxu0 0.0
    %4503 = vmatprep.subr.mxu0 0.0
    %4504 = vmatpush2.msra.mxu0 0.0
    %4505 = vmatprep.subr.mxu0 0.0
    %4506 = vmatpush2.msra.mxu0 0.0
    %4507 = vmatprep.subr.mxu0 0.0
    %4508 = vmatpush2.msra.mxu0 0.0
    %4509 = vmatprep.subr.mxu0 0.0
    %4510 = vmatpush2.msra.mxu0 0.0
    %4511 = vmatprep.subr.mxu0 0.0
    %4512 = vmatpush2.msra.mxu0 0.0
    %4513 = vmatprep.subr.mxu0 0.0
    %4514 = vmatpush2.msra.mxu0 0.0
    %4515 = vmatprep.subr.mxu0 0.0
    %4516 = vmatpush2.msra.mxu0 0.0
    %4517 = vmatprep.mubr.f32.mxu0 0.0
    %4518 = vmatmul.mubr.f32.gmra.mxu0 %v4451
    %v4519 = vpop.f32.mrf.mxu0
    %v4520 = vadd.f32 0.0, %v4519
    %v4521 = vpop.f32.mrf.mxu0
    %4522 = vdwg.mxu0
    %v4524 = vsel %vm140, %v4449, 0
    %4526 = vmatprep.subr.mxu0 0.0
    %4527 = vmatpush1.msra.mxu0 0.0
    %4528 = vmatprep.subr.mxu0 0.0
    %4529 = vmatpush1.msra.mxu0 0.0
    %4530 = vmatprep.subr.mxu0 0.0
    %4531 = vmatpush1.msra.mxu0 0.0
    %4532 = vmatprep.subr.mxu0 0.0
    %4533 = vmatpush1.msra.mxu0 0.0
    %4534 = vmatprep.subr.mxu0 0.0
    %4535 = vmatpush1.msra.mxu0 0.0
    %4536 = vmatprep.subr.mxu0 0.0
    %4537 = vmatpush1.msra.mxu0 0.0
    %4538 = vmatprep.subr.mxu0 0.0
    %4539 = vmatpush1.msra.mxu0 0.0
    %4540 = vmatprep.subr.mxu0 0.0
    %4541 = vmatpush1.msra.mxu0 0.0
    %4542 = vmatprep.subr.mxu0 0.0
    %4543 = vmatpush1.msra.mxu0 0.0
    %4544 = vmatprep.subr.mxu0 0.0
    %4545 = vmatpush1.msra.mxu0 0.0
    %4546 = vmatprep.subr.mxu0 0.0
    %4547 = vmatpush1.msra.mxu0 0.0
    %4548 = vmatprep.subr.mxu0 0.0
    %4549 = vmatpush1.msra.mxu0 0.0
    %4550 = vmatprep.subr.mxu0 0.0
    %4551 = vmatpush1.msra.mxu0 %v432
    %4552 = vmatprep.subr.mxu0 0.0
    %4553 = vmatpush1.msra.mxu0 %v431
    %4554 = vmatprep.subr.mxu0 0.0
    %4555 = vmatpush1.msra.mxu0 %v430
    %4556 = vmatprep.subr.mxu0 0.0
    %4557 = vmatpush1.msra.mxu0 %v429
    %4558 = vmatprep.subr.mxu0 0.0
    %4559 = vmatpush2.msra.mxu0 0.0
    %4560 = vmatprep.subr.mxu0 0.0
    %4561 = vmatpush2.msra.mxu0 0.0
    %4562 = vmatprep.subr.mxu0 0.0
    %4563 = vmatpush2.msra.mxu0 0.0
    %4564 = vmatprep.subr.mxu0 0.0
    %4565 = vmatpush2.msra.mxu0 0.0
    %4566 = vmatprep.subr.mxu0 0.0
    %4567 = vmatpush2.msra.mxu0 0.0
    %4568 = vmatprep.subr.mxu0 0.0
    %4569 = vmatpush2.msra.mxu0 0.0
    %4570 = vmatprep.subr.mxu0 0.0
    %4571 = vmatpush2.msra.mxu0 0.0
    %4572 = vmatprep.subr.mxu0 0.0
    %4573 = vmatpush2.msra.mxu0 0.0
    %4574 = vmatprep.subr.mxu0 0.0
    %4575 = vmatpush2.msra.mxu0 0.0
    %4576 = vmatprep.subr.mxu0 0.0
    %4577 = vmatpush2.msra.mxu0 0.0
    %4578 = vmatprep.subr.mxu0 0.0
    %4579 = vmatpush2.msra.mxu0 0.0
    %4580 = vmatprep.subr.mxu0 0.0
    %4581 = vmatpush2.msra.mxu0 0.0
    %4582 = vmatprep.subr.mxu0 0.0
    %4583 = vmatpush2.msra.mxu0 0.0
    %4584 = vmatprep.subr.mxu0 0.0
    %4585 = vmatpush2.msra.mxu0 0.0
    %4586 = vmatprep.subr.mxu0 0.0
    %4587 = vmatpush2.msra.mxu0 0.0
    %4588 = vmatprep.subr.mxu0 0.0
    %4589 = vmatpush2.msra.mxu0 0.0
    %4590 = vmatprep.mubr.f32.mxu0 0.0
    %4591 = vmatmul.mubr.f32.gmra.mxu0 %v4524
    %v4592 = vpop.f32.mrf.mxu0
    %v4593 = vadd.f32 %v4520, %v4592
    %v4594 = vpop.f32.mrf.mxu0
    %4595 = vdwg.mxu0
    %v4596 = vadd.f32 %v4593, %v472
    %v4597 = vxor.u32 %v4596, 2147483648
    %v4598 = vmul.f32 %v4597, 1.442695
    %v4599 = vpow.pop %v4598
    %v4600 = vadd.f32 %v4599, 1.0
    %v4601 = vrcp.pop %v4600
    %v4602 = vmul.f32 1.0, %v4601
    %4603 = vmatprep.subr.mxu0 0.0
    %4604 = vmatpush1.msra.mxu0 0.0
    %4605 = vmatprep.subr.mxu0 0.0
    %4606 = vmatpush1.msra.mxu0 0.0
    %4607 = vmatprep.subr.mxu0 0.0
    %4608 = vmatpush1.msra.mxu0 0.0
    %4609 = vmatprep.subr.mxu0 0.0
    %4610 = vmatpush1.msra.mxu0 0.0
    %4611 = vmatprep.subr.mxu0 0.0
    %4612 = vmatpush1.msra.mxu0 0.0
    %4613 = vmatprep.subr.mxu0 0.0
    %4614 = vmatpush1.msra.mxu0 0.0
    %4615 = vmatprep.subr.mxu0 0.0
    %4616 = vmatpush1.msra.mxu0 0.0
    %4617 = vmatprep.subr.mxu0 0.0
    %4618 = vmatpush1.msra.mxu0 0.0
    %4619 = vmatprep.subr.mxu0 0.0
    %4620 = vmatpush1.msra.mxu0 0.0
    %4621 = vmatprep.subr.mxu0 0.0
    %4622 = vmatpush1.msra.mxu0 0.0
    %4623 = vmatprep.subr.mxu0 0.0
    %4624 = vmatpush1.msra.mxu0 0.0
    %4625 = vmatprep.subr.mxu0 0.0
    %4626 = vmatpush1.msra.mxu0 0.0
    %4627 = vmatprep.subr.mxu0 0.0
    %4628 = vmatpush1.msra.mxu0 %v456
    %4629 = vmatprep.subr.mxu0 0.0
    %4630 = vmatpush1.msra.mxu0 %v455
    %4631 = vmatprep.subr.mxu0 0.0
    %4632 = vmatpush1.msra.mxu0 %v454
    %4633 = vmatprep.subr.mxu0 0.0
    %4634 = vmatpush1.msra.mxu0 %v453
    %4635 = vmatprep.subr.mxu0 0.0
    %4636 = vmatpush2.msra.mxu0 0.0
    %4637 = vmatprep.subr.mxu0 0.0
    %4638 = vmatpush2.msra.mxu0 0.0
    %4639 = vmatprep.subr.mxu0 0.0
    %4640 = vmatpush2.msra.mxu0 0.0
    %4641 = vmatprep.subr.mxu0 0.0
    %4642 = vmatpush2.msra.mxu0 0.0
    %4643 = vmatprep.subr.mxu0 0.0
    %4644 = vmatpush2.msra.mxu0 0.0
    %4645 = vmatprep.subr.mxu0 0.0
    %4646 = vmatpush2.msra.mxu0 0.0
    %4647 = vmatprep.subr.mxu0 0.0
    %4648 = vmatpush2.msra.mxu0 0.0
    %4649 = vmatprep.subr.mxu0 0.0
    %4650 = vmatpush2.msra.mxu0 0.0
    %4651 = vmatprep.subr.mxu0 0.0
    %4652 = vmatpush2.msra.mxu0 0.0
    %4653 = vmatprep.subr.mxu0 0.0
    %4654 = vmatpush2.msra.mxu0 0.0
    %4655 = vmatprep.subr.mxu0 0.0
    %4656 = vmatpush2.msra.mxu0 0.0
    %4657 = vmatprep.subr.mxu0 0.0
    %4658 = vmatpush2.msra.mxu0 0.0
    %4659 = vmatprep.subr.mxu0 0.0
    %4660 = vmatpush2.msra.mxu0 0.0
    %4661 = vmatprep.subr.mxu0 0.0
    %4662 = vmatpush2.msra.mxu0 0.0
    %4663 = vmatprep.subr.mxu0 0.0
    %4664 = vmatpush2.msra.mxu0 0.0
    %4665 = vmatprep.subr.mxu0 0.0
    %4666 = vmatpush2.msra.mxu0 0.0
    %4667 = vmatprep.mubr.f32.mxu0 0.0
    %4668 = vmatmul.mubr.f32.gmra.mxu0 %v4451
    %v4669 = vpop.f32.mrf.mxu0
    %v4670 = vadd.f32 0.0, %v4669
    %v4671 = vpop.f32.mrf.mxu0
    %4672 = vdwg.mxu0
    %4673 = vmatprep.subr.mxu0 0.0
    %4674 = vmatpush1.msra.mxu0 0.0
    %4675 = vmatprep.subr.mxu0 0.0
    %4676 = vmatpush1.msra.mxu0 0.0
    %4677 = vmatprep.subr.mxu0 0.0
    %4678 = vmatpush1.msra.mxu0 0.0
    %4679 = vmatprep.subr.mxu0 0.0
    %4680 = vmatpush1.msra.mxu0 0.0
    %4681 = vmatprep.subr.mxu0 0.0
    %4682 = vmatpush1.msra.mxu0 0.0
    %4683 = vmatprep.subr.mxu0 0.0
    %4684 = vmatpush1.msra.mxu0 0.0
    %4685 = vmatprep.subr.mxu0 0.0
    %4686 = vmatpush1.msra.mxu0 0.0
    %4687 = vmatprep.subr.mxu0 0.0
    %4688 = vmatpush1.msra.mxu0 0.0
    %4689 = vmatprep.subr.mxu0 0.0
    %4690 = vmatpush1.msra.mxu0 0.0
    %4691 = vmatprep.subr.mxu0 0.0
    %4692 = vmatpush1.msra.mxu0 0.0
    %4693 = vmatprep.subr.mxu0 0.0
    %4694 = vmatpush1.msra.mxu0 0.0
    %4695 = vmatprep.subr.mxu0 0.0
    %4696 = vmatpush1.msra.mxu0 0.0
    %4697 = vmatprep.subr.mxu0 0.0
    %4698 = vmatpush1.msra.mxu0 %v437
    %4699 = vmatprep.subr.mxu0 0.0
    %4700 = vmatpush1.msra.mxu0 %v436
    %4701 = vmatprep.subr.mxu0 0.0
    %4702 = vmatpush1.msra.mxu0 %v435
    %4703 = vmatprep.subr.mxu0 0.0
    %4704 = vmatpush1.msra.mxu0 %v434
    %4705 = vmatprep.subr.mxu0 0.0
    %4706 = vmatpush2.msra.mxu0 0.0
    %4707 = vmatprep.subr.mxu0 0.0
    %4708 = vmatpush2.msra.mxu0 0.0
    %4709 = vmatprep.subr.mxu0 0.0
    %4710 = vmatpush2.msra.mxu0 0.0
    %4711 = vmatprep.subr.mxu0 0.0
    %4712 = vmatpush2.msra.mxu0 0.0
    %4713 = vmatprep.subr.mxu0 0.0
    %4714 = vmatpush2.msra.mxu0 0.0
    %4715 = vmatprep.subr.mxu0 0.0
    %4716 = vmatpush2.msra.mxu0 0.0
    %4717 = vmatprep.subr.mxu0 0.0
    %4718 = vmatpush2.msra.mxu0 0.0
    %4719 = vmatprep.subr.mxu0 0.0
    %4720 = vmatpush2.msra.mxu0 0.0
    %4721 = vmatprep.subr.mxu0 0.0
    %4722 = vmatpush2.msra.mxu0 0.0
    %4723 = vmatprep.subr.mxu0 0.0
    %4724 = vmatpush2.msra.mxu0 0.0
    %4725 = vmatprep.subr.mxu0 0.0
    %4726 = vmatpush2.msra.mxu0 0.0
    %4727 = vmatprep.subr.mxu0 0.0
    %4728 = vmatpush2.msra.mxu0 0.0
    %4729 = vmatprep.subr.mxu0 0.0
    %4730 = vmatpush2.msra.mxu0 0.0
    %4731 = vmatprep.subr.mxu0 0.0
    %4732 = vmatpush2.msra.mxu0 0.0
    %4733 = vmatprep.subr.mxu0 0.0
    %4734 = vmatpush2.msra.mxu0 0.0
    %4735 = vmatprep.subr.mxu0 0.0
    %4736 = vmatpush2.msra.mxu0 0.0
    %4737 = vmatprep.mubr.f32.mxu0 0.0
    %4738 = vmatmul.mubr.f32.gmra.mxu0 %v4524
    %v4739 = vpop.f32.mrf.mxu0
    %v4740 = vadd.f32 %v4670, %v4739
    %v4741 = vpop.f32.mrf.mxu0
    %4742 = vdwg.mxu0
    %v4743 = vadd.f32 %v4740, %v480
    %v4744 = vxor.u32 %v4743, 2147483648
    %v4745 = vmul.f32 %v4744, 1.442695
    %v4746 = vpow.pop %v4745
    %v4747 = vadd.f32 %v4746, 1.0
    %v4748 = vrcp.pop %v4747
    %v4749 = vmul.f32 1.0, %v4748
    %4750 = vmatprep.subr.mxu0 0.0
    %4751 = vmatpush1.msra.mxu0 0.0
    %4752 = vmatprep.subr.mxu0 0.0
    %4753 = vmatpush1.msra.mxu0 0.0
    %4754 = vmatprep.subr.mxu0 0.0
    %4755 = vmatpush1.msra.mxu0 0.0
    %4756 = vmatprep.subr.mxu0 0.0
    %4757 = vmatpush1.msra.mxu0 0.0
    %4758 = vmatprep.subr.mxu0 0.0
    %4759 = vmatpush1.msra.mxu0 0.0
    %4760 = vmatprep.subr.mxu0 0.0
    %4761 = vmatpush1.msra.mxu0 0.0
    %4762 = vmatprep.subr.mxu0 0.0
    %4763 = vmatpush1.msra.mxu0 0.0
    %4764 = vmatprep.subr.mxu0 0.0
    %4765 = vmatpush1.msra.mxu0 0.0
    %4766 = vmatprep.subr.mxu0 0.0
    %4767 = vmatpush1.msra.mxu0 0.0
    %4768 = vmatprep.subr.mxu0 0.0
    %4769 = vmatpush1.msra.mxu0 0.0
    %4770 = vmatprep.subr.mxu0 0.0
    %4771 = vmatpush1.msra.mxu0 0.0
    %4772 = vmatprep.subr.mxu0 0.0
    %4773 = vmatpush1.msra.mxu0 0.0
    %4774 = vmatprep.subr.mxu0 0.0
    %4775 = vmatpush1.msra.mxu0 %v461
    %4776 = vmatprep.subr.mxu0 0.0
    %4777 = vmatpush1.msra.mxu0 %v460
    %4778 = vmatprep.subr.mxu0 0.0
    %4779 = vmatpush1.msra.mxu0 %v459
    %4780 = vmatprep.subr.mxu0 0.0
    %4781 = vmatpush1.msra.mxu0 %v458
    %4782 = vmatprep.subr.mxu0 0.0
    %4783 = vmatpush2.msra.mxu0 0.0
    %4784 = vmatprep.subr.mxu0 0.0
    %4785 = vmatpush2.msra.mxu0 0.0
    %4786 = vmatprep.subr.mxu0 0.0
    %4787 = vmatpush2.msra.mxu0 0.0
    %4788 = vmatprep.subr.mxu0 0.0
    %4789 = vmatpush2.msra.mxu0 0.0
    %4790 = vmatprep.subr.mxu0 0.0
    %4791 = vmatpush2.msra.mxu0 0.0
    %4792 = vmatprep.subr.mxu0 0.0
    %4793 = vmatpush2.msra.mxu0 0.0
    %4794 = vmatprep.subr.mxu0 0.0
    %4795 = vmatpush2.msra.mxu0 0.0
    %4796 = vmatprep.subr.mxu0 0.0
    %4797 = vmatpush2.msra.mxu0 0.0
    %4798 = vmatprep.subr.mxu0 0.0
    %4799 = vmatpush2.msra.mxu0 0.0
    %4800 = vmatprep.subr.mxu0 0.0
    %4801 = vmatpush2.msra.mxu0 0.0
    %4802 = vmatprep.subr.mxu0 0.0
    %4803 = vmatpush2.msra.mxu0 0.0
    %4804 = vmatprep.subr.mxu0 0.0
    %4805 = vmatpush2.msra.mxu0 0.0
    %4806 = vmatprep.subr.mxu0 0.0
    %4807 = vmatpush2.msra.mxu0 0.0
    %4808 = vmatprep.subr.mxu0 0.0
    %4809 = vmatpush2.msra.mxu0 0.0
    %4810 = vmatprep.subr.mxu0 0.0
    %4811 = vmatpush2.msra.mxu0 0.0
    %4812 = vmatprep.subr.mxu0 0.0
    %4813 = vmatpush2.msra.mxu0 0.0
    %4814 = vmatprep.mubr.f32.mxu0 0.0
    %4815 = vmatmul.mubr.f32.gmra.mxu0 %v4451
    %v4816 = vpop.f32.mrf.mxu0
    %v4817 = vadd.f32 0.0, %v4816
    %v4818 = vpop.f32.mrf.mxu0
    %4819 = vdwg.mxu0
    %4820 = vmatprep.subr.mxu0 0.0
    %4821 = vmatpush1.msra.mxu0 0.0
    %4822 = vmatprep.subr.mxu0 0.0
    %4823 = vmatpush1.msra.mxu0 0.0
    %4824 = vmatprep.subr.mxu0 0.0
    %4825 = vmatpush1.msra.mxu0 0.0
    %4826 = vmatprep.subr.mxu0 0.0
    %4827 = vmatpush1.msra.mxu0 0.0
    %4828 = vmatprep.subr.mxu0 0.0
    %4829 = vmatpush1.msra.mxu0 0.0
    %4830 = vmatprep.subr.mxu0 0.0
    %4831 = vmatpush1.msra.mxu0 0.0
    %4832 = vmatprep.subr.mxu0 0.0
    %4833 = vmatpush1.msra.mxu0 0.0
    %4834 = vmatprep.subr.mxu0 0.0
    %4835 = vmatpush1.msra.mxu0 0.0
    %4836 = vmatprep.subr.mxu0 0.0
    %4837 = vmatpush1.msra.mxu0 0.0
    %4838 = vmatprep.subr.mxu0 0.0
    %4839 = vmatpush1.msra.mxu0 0.0
    %4840 = vmatprep.subr.mxu0 0.0
    %4841 = vmatpush1.msra.mxu0 0.0
    %4842 = vmatprep.subr.mxu0 0.0
    %4843 = vmatpush1.msra.mxu0 0.0
    %4844 = vmatprep.subr.mxu0 0.0
    %4845 = vmatpush1.msra.mxu0 %v442
    %4846 = vmatprep.subr.mxu0 0.0
    %4847 = vmatpush1.msra.mxu0 %v441
    %4848 = vmatprep.subr.mxu0 0.0
    %4849 = vmatpush1.msra.mxu0 %v440
    %4850 = vmatprep.subr.mxu0 0.0
    %4851 = vmatpush1.msra.mxu0 %v439
    %4852 = vmatprep.subr.mxu0 0.0
    %4853 = vmatpush2.msra.mxu0 0.0
    %4854 = vmatprep.subr.mxu0 0.0
    %4855 = vmatpush2.msra.mxu0 0.0
    %4856 = vmatprep.subr.mxu0 0.0
    %4857 = vmatpush2.msra.mxu0 0.0
    %4858 = vmatprep.subr.mxu0 0.0
    %4859 = vmatpush2.msra.mxu0 0.0
    %4860 = vmatprep.subr.mxu0 0.0
    %4861 = vmatpush2.msra.mxu0 0.0
    %4862 = vmatprep.subr.mxu0 0.0
    %4863 = vmatpush2.msra.mxu0 0.0
    %4864 = vmatprep.subr.mxu0 0.0
    %4865 = vmatpush2.msra.mxu0 0.0
    %4866 = vmatprep.subr.mxu0 0.0
    %4867 = vmatpush2.msra.mxu0 0.0
    %4868 = vmatprep.subr.mxu0 0.0
    %4869 = vmatpush2.msra.mxu0 0.0
    %4870 = vmatprep.subr.mxu0 0.0
    %4871 = vmatpush2.msra.mxu0 0.0
    %4872 = vmatprep.subr.mxu0 0.0
    %4873 = vmatpush2.msra.mxu0 0.0
    %4874 = vmatprep.subr.mxu0 0.0
    %4875 = vmatpush2.msra.mxu0 0.0
    %4876 = vmatprep.subr.mxu0 0.0
    %4877 = vmatpush2.msra.mxu0 0.0
    %4878 = vmatprep.subr.mxu0 0.0
    %4879 = vmatpush2.msra.mxu0 0.0
    %4880 = vmatprep.subr.mxu0 0.0
    %4881 = vmatpush2.msra.mxu0 0.0
    %4882 = vmatprep.subr.mxu0 0.0
    %4883 = vmatpush2.msra.mxu0 0.0
    %4884 = vmatprep.mubr.f32.mxu0 0.0
    %4885 = vmatmul.mubr.f32.gmra.mxu0 %v4524
    %v4886 = vpop.f32.mrf.mxu0
    %v4887 = vadd.f32 %v4817, %v4886
    %v4888 = vpop.f32.mrf.mxu0
    %4889 = vdwg.mxu0
    %v4890 = vadd.f32 %v4887, %v488
    %v4891 = vtanh.pop %v4890
    %4892 = vmatprep.subr.mxu0 0.0
    %4893 = vmatpush1.msra.mxu0 0.0
    %4894 = vmatprep.subr.mxu0 0.0
    %4895 = vmatpush1.msra.mxu0 0.0
    %4896 = vmatprep.subr.mxu0 0.0
    %4897 = vmatpush1.msra.mxu0 0.0
    %4898 = vmatprep.subr.mxu0 0.0
    %4899 = vmatpush1.msra.mxu0 0.0
    %4900 = vmatprep.subr.mxu0 0.0
    %4901 = vmatpush1.msra.mxu0 0.0
    %4902 = vmatprep.subr.mxu0 0.0
    %4903 = vmatpush1.msra.mxu0 0.0
    %4904 = vmatprep.subr.mxu0 0.0
    %4905 = vmatpush1.msra.mxu0 0.0
    %4906 = vmatprep.subr.mxu0 0.0
    %4907 = vmatpush1.msra.mxu0 0.0
    %4908 = vmatprep.subr.mxu0 0.0
    %4909 = vmatpush1.msra.mxu0 0.0
    %4910 = vmatprep.subr.mxu0 0.0
    %4911 = vmatpush1.msra.mxu0 0.0
    %4912 = vmatprep.subr.mxu0 0.0
    %4913 = vmatpush1.msra.mxu0 0.0
    %4914 = vmatprep.subr.mxu0 0.0
    %4915 = vmatpush1.msra.mxu0 0.0
    %4916 = vmatprep.subr.mxu0 0.0
    %4917 = vmatpush1.msra.mxu0 %v466
    %4918 = vmatprep.subr.mxu0 0.0
    %4919 = vmatpush1.msra.mxu0 %v465
    %4920 = vmatprep.subr.mxu0 0.0
    %4921 = vmatpush1.msra.mxu0 %v464
    %4922 = vmatprep.subr.mxu0 0.0
    %4923 = vmatpush1.msra.mxu0 %v463
    %4924 = vmatprep.subr.mxu0 0.0
    %4925 = vmatpush2.msra.mxu0 0.0
    %4926 = vmatprep.subr.mxu0 0.0
    %4927 = vmatpush2.msra.mxu0 0.0
    %4928 = vmatprep.subr.mxu0 0.0
    %4929 = vmatpush2.msra.mxu0 0.0
    %4930 = vmatprep.subr.mxu0 0.0
    %4931 = vmatpush2.msra.mxu0 0.0
    %4932 = vmatprep.subr.mxu0 0.0
    %4933 = vmatpush2.msra.mxu0 0.0
    %4934 = vmatprep.subr.mxu0 0.0
    %4935 = vmatpush2.msra.mxu0 0.0
    %4936 = vmatprep.subr.mxu0 0.0
    %4937 = vmatpush2.msra.mxu0 0.0
    %4938 = vmatprep.subr.mxu0 0.0
    %4939 = vmatpush2.msra.mxu0 0.0
    %4940 = vmatprep.subr.mxu0 0.0
    %4941 = vmatpush2.msra.mxu0 0.0
    %4942 = vmatprep.subr.mxu0 0.0
    %4943 = vmatpush2.msra.mxu0 0.0
    %4944 = vmatprep.subr.mxu0 0.0
    %4945 = vmatpush2.msra.mxu0 0.0
    %4946 = vmatprep.subr.mxu0 0.0
    %4947 = vmatpush2.msra.mxu0 0.0
    %4948 = vmatprep.subr.mxu0 0.0
    %4949 = vmatpush2.msra.mxu0 0.0
    %4950 = vmatprep.subr.mxu0 0.0
    %4951 = vmatpush2.msra.mxu0 0.0
    %4952 = vmatprep.subr.mxu0 0.0
    %4953 = vmatpush2.msra.mxu0 0.0
    %4954 = vmatprep.subr.mxu0 0.0
    %4955 = vmatpush2.msra.mxu0 0.0
    %4956 = vmatprep.mubr.f32.mxu0 0.0
    %4957 = vmatmul.mubr.f32.gmra.mxu0 %v4451
    %v4958 = vpop.f32.mrf.mxu0
    %v4959 = vadd.f32 0.0, %v4958
    %v4960 = vpop.f32.mrf.mxu0
    %4961 = vdwg.mxu0
    %4962 = vmatprep.subr.mxu0 0.0
    %4963 = vmatpush1.msra.mxu0 0.0
    %4964 = vmatprep.subr.mxu0 0.0
    %4965 = vmatpush1.msra.mxu0 0.0
    %4966 = vmatprep.subr.mxu0 0.0
    %4967 = vmatpush1.msra.mxu0 0.0
    %4968 = vmatprep.subr.mxu0 0.0
    %4969 = vmatpush1.msra.mxu0 0.0
    %4970 = vmatprep.subr.mxu0 0.0
    %4971 = vmatpush1.msra.mxu0 0.0
    %4972 = vmatprep.subr.mxu0 0.0
    %4973 = vmatpush1.msra.mxu0 0.0
    %4974 = vmatprep.subr.mxu0 0.0
    %4975 = vmatpush1.msra.mxu0 0.0
    %4976 = vmatprep.subr.mxu0 0.0
    %4977 = vmatpush1.msra.mxu0 0.0
    %4978 = vmatprep.subr.mxu0 0.0
    %4979 = vmatpush1.msra.mxu0 0.0
    %4980 = vmatprep.subr.mxu0 0.0
    %4981 = vmatpush1.msra.mxu0 0.0
    %4982 = vmatprep.subr.mxu0 0.0
    %4983 = vmatpush1.msra.mxu0 0.0
    %4984 = vmatprep.subr.mxu0 0.0
    %4985 = vmatpush1.msra.mxu0 0.0
    %4986 = vmatprep.subr.mxu0 0.0
    %4987 = vmatpush1.msra.mxu0 %v447
    %4988 = vmatprep.subr.mxu0 0.0
    %4989 = vmatpush1.msra.mxu0 %v446
    %4990 = vmatprep.subr.mxu0 0.0
    %4991 = vmatpush1.msra.mxu0 %v445
    %4992 = vmatprep.subr.mxu0 0.0
    %4993 = vmatpush1.msra.mxu0 %v444
    %4994 = vmatprep.subr.mxu0 0.0
    %4995 = vmatpush2.msra.mxu0 0.0
    %4996 = vmatprep.subr.mxu0 0.0
    %4997 = vmatpush2.msra.mxu0 0.0
    %4998 = vmatprep.subr.mxu0 0.0
    %4999 = vmatpush2.msra.mxu0 0.0
    %5000 = vmatprep.subr.mxu0 0.0
    %5001 = vmatpush2.msra.mxu0 0.0
    %5002 = vmatprep.subr.mxu0 0.0
    %5003 = vmatpush2.msra.mxu0 0.0
    %5004 = vmatprep.subr.mxu0 0.0
    %5005 = vmatpush2.msra.mxu0 0.0
    %5006 = vmatprep.subr.mxu0 0.0
    %5007 = vmatpush2.msra.mxu0 0.0
    %5008 = vmatprep.subr.mxu0 0.0
    %5009 = vmatpush2.msra.mxu0 0.0
    %5010 = vmatprep.subr.mxu0 0.0
    %5011 = vmatpush2.msra.mxu0 0.0
    %5012 = vmatprep.subr.mxu0 0.0
    %5013 = vmatpush2.msra.mxu0 0.0
    %5014 = vmatprep.subr.mxu0 0.0
    %5015 = vmatpush2.msra.mxu0 0.0
    %5016 = vmatprep.subr.mxu0 0.0
    %5017 = vmatpush2.msra.mxu0 0.0
    %5018 = vmatprep.subr.mxu0 0.0
    %5019 = vmatpush2.msra.mxu0 0.0
    %5020 = vmatprep.subr.mxu0 0.0
    %5021 = vmatpush2.msra.mxu0 0.0
    %5022 = vmatprep.subr.mxu0 0.0
    %5023 = vmatpush2.msra.mxu0 0.0
    %5024 = vmatprep.subr.mxu0 0.0
    %5025 = vmatpush2.msra.mxu0 0.0
    %5026 = vmatprep.mubr.f32.mxu0 0.0
    %5027 = vmatmul.mubr.f32.gmra.mxu0 %v4524
    %v5028 = vpop.f32.mrf.mxu0
    %v5029 = vadd.f32 %v4959, %v5028
    %v5030 = vpop.f32.mrf.mxu0
    %5031 = vdwg.mxu0
    %v5032 = vadd.f32 %v5029, %v496
    %v5033 = vxor.u32 %v5032, 2147483648
    %v5034 = vmul.f32 %v5033, 1.442695
    %v5035 = vpow.pop %v5034
    %v5036 = vadd.f32 %v5035, 1.0
    %v5037 = vrcp.pop %v5036
    %v5038 = vmul.f32 1.0, %v5037
    %v5039 = vmul.f32 %v4749, %v4131
    %v5040 = vmul.f32 %v4602, %v4891
    %v5041 = vadd.f32 %v5039, %v5040
    %v5042 = vtanh.pop %v5041
    %v5043 = vmul.f32 %v5038, %v5042
    %s5044 = sld [smem:[#allocation4 + $0x4]]
    %v5045 = vstv %s5044
    %v5046 = vmul.f32 %v5045, %v5043
    %v5047 = vadd.f32 %v4137, %v5046
    %v5048 = vld [vmem:[#allocation2 + $0xa] sm:$0x3]
    %5049 = vmatprep.subr.mxu0 0.0
    %5050 = vmatpush1.msra.mxu0 0.0
    %5051 = vmatprep.subr.mxu0 0.0
    %5052 = vmatpush1.msra.mxu0 0.0
    %5053 = vmatprep.subr.mxu0 0.0
    %5054 = vmatpush1.msra.mxu0 0.0
    %5055 = vmatprep.subr.mxu0 0.0
    %5056 = vmatpush1.msra.mxu0 0.0
    %5057 = vmatprep.subr.mxu0 0.0
    %5058 = vmatpush1.msra.mxu0 0.0
    %5059 = vmatprep.subr.mxu0 0.0
    %5060 = vmatpush1.msra.mxu0 0.0
    %5061 = vmatprep.subr.mxu0 0.0
    %5062 = vmatpush1.msra.mxu0 0.0
    %5063 = vmatprep.subr.mxu0 0.0
    %5064 = vmatpush1.msra.mxu0 0.0
    %5065 = vmatprep.subr.mxu0 0.0
    %5066 = vmatpush1.msra.mxu0 0.0
    %5067 = vmatprep.subr.mxu0 0.0
    %5068 = vmatpush1.msra.mxu0 0.0
    %5069 = vmatprep.subr.mxu0 0.0
    %5070 = vmatpush1.msra.mxu0 0.0
    %5071 = vmatprep.subr.mxu0 0.0
    %5072 = vmatpush1.msra.mxu0 0.0
    %5073 = vmatprep.subr.mxu0 0.0
    %5074 = vmatpush1.msra.mxu0 %v413
    %5075 = vmatprep.subr.mxu0 0.0
    %5076 = vmatpush1.msra.mxu0 %v412
    %5077 = vmatprep.subr.mxu0 0.0
    %5078 = vmatpush1.msra.mxu0 %v411
    %5079 = vmatprep.subr.mxu0 0.0
    %5080 = vmatpush1.msra.mxu0 %v410
    %5081 = vmatprep.subr.mxu0 0.0
    %5082 = vmatpush2.msra.mxu0 0.0
    %5083 = vmatprep.subr.mxu0 0.0
    %5084 = vmatpush2.msra.mxu0 0.0
    %5085 = vmatprep.subr.mxu0 0.0
    %5086 = vmatpush2.msra.mxu0 0.0
    %5087 = vmatprep.subr.mxu0 0.0
    %5088 = vmatpush2.msra.mxu0 0.0
    %5089 = vmatprep.subr.mxu0 0.0
    %5090 = vmatpush2.msra.mxu0 0.0
    %5091 = vmatprep.subr.mxu0 0.0
    %5092 = vmatpush2.msra.mxu0 0.0
    %5093 = vmatprep.subr.mxu0 0.0
    %5094 = vmatpush2.msra.mxu0 0.0
    %5095 = vmatprep.subr.mxu0 0.0
    %5096 = vmatpush2.msra.mxu0 0.0
    %5097 = vmatprep.subr.mxu0 0.0
    %5098 = vmatpush2.msra.mxu0 0.0
    %5099 = vmatprep.subr.mxu0 0.0
    %5100 = vmatpush2.msra.mxu0 0.0
    %5101 = vmatprep.subr.mxu0 0.0
    %5102 = vmatpush2.msra.mxu0 0.0
    %5103 = vmatprep.subr.mxu0 0.0
    %5104 = vmatpush2.msra.mxu0 0.0
    %5105 = vmatprep.subr.mxu0 0.0
    %5106 = vmatpush2.msra.mxu0 0.0
    %5107 = vmatprep.subr.mxu0 0.0
    %5108 = vmatpush2.msra.mxu0 0.0
    %5109 = vmatprep.subr.mxu0 0.0
    %5110 = vmatpush2.msra.mxu0 0.0
    %5111 = vmatprep.subr.mxu0 0.0
    %5112 = vmatpush2.msra.mxu0 0.0
    %5113 = vmatprep.mubr.f32.mxu0 0.0
    %5114 = vmatmul.mubr.f32.gmra.mxu0 %v4524
    %v5115 = vpop.f32.mrf.mxu0
    %v5116 = vadd.f32 0.0, %v5115
    %v5117 = vpop.f32.mrf.mxu0
    %5118 = vdwg.mxu0
    %v5119 = vadd.f32 %v5048, %v5116
    %v5120 = vxor.u32 %v5119, 2147483648
    %v5121 = vmul.f32 %v5120, 1.442695
    %v5122 = vpow.pop %v5121
    %v5123 = vadd.f32 %v5122, 1.0
    %v5124 = vrcp.pop %v5123
    %v5125 = vmul.f32 1.0, %v5124
    %v5126 = vld [vmem:[%s229 + $0xa] sm:$0x3]
    %5127 = vmatprep.subr.mxu0 0.0
    %5128 = vmatpush1.msra.mxu0 0.0
    %5129 = vmatprep.subr.mxu0 0.0
    %5130 = vmatpush1.msra.mxu0 0.0
    %5131 = vmatprep.subr.mxu0 0.0
    %5132 = vmatpush1.msra.mxu0 0.0
    %5133 = vmatprep.subr.mxu0 0.0
    %5134 = vmatpush1.msra.mxu0 0.0
    %5135 = vmatprep.subr.mxu0 0.0
    %5136 = vmatpush1.msra.mxu0 0.0
    %5137 = vmatprep.subr.mxu0 0.0
    %5138 = vmatpush1.msra.mxu0 0.0
    %5139 = vmatprep.subr.mxu0 0.0
    %5140 = vmatpush1.msra.mxu0 0.0
    %5141 = vmatprep.subr.mxu0 0.0
    %5142 = vmatpush1.msra.mxu0 0.0
    %5143 = vmatprep.subr.mxu0 0.0
    %5144 = vmatpush1.msra.mxu0 0.0
    %5145 = vmatprep.subr.mxu0 0.0
    %5146 = vmatpush1.msra.mxu0 0.0
    %5147 = vmatprep.subr.mxu0 0.0
    %5148 = vmatpush1.msra.mxu0 0.0
    %5149 = vmatprep.subr.mxu0 0.0
    %5150 = vmatpush1.msra.mxu0 0.0
    %5151 = vmatprep.subr.mxu0 0.0
    %5152 = vmatpush1.msra.mxu0 %v418
    %5153 = vmatprep.subr.mxu0 0.0
    %5154 = vmatpush1.msra.mxu0 %v417
    %5155 = vmatprep.subr.mxu0 0.0
    %5156 = vmatpush1.msra.mxu0 %v416
    %5157 = vmatprep.subr.mxu0 0.0
    %5158 = vmatpush1.msra.mxu0 %v415
    %5159 = vmatprep.subr.mxu0 0.0
    %5160 = vmatpush2.msra.mxu0 0.0
    %5161 = vmatprep.subr.mxu0 0.0
    %5162 = vmatpush2.msra.mxu0 0.0
    %5163 = vmatprep.subr.mxu0 0.0
    %5164 = vmatpush2.msra.mxu0 0.0
    %5165 = vmatprep.subr.mxu0 0.0
    %5166 = vmatpush2.msra.mxu0 0.0
    %5167 = vmatprep.subr.mxu0 0.0
    %5168 = vmatpush2.msra.mxu0 0.0
    %5169 = vmatprep.subr.mxu0 0.0
    %5170 = vmatpush2.msra.mxu0 0.0
    %5171 = vmatprep.subr.mxu0 0.0
    %5172 = vmatpush2.msra.mxu0 0.0
    %5173 = vmatprep.subr.mxu0 0.0
    %5174 = vmatpush2.msra.mxu0 0.0
    %5175 = vmatprep.subr.mxu0 0.0
    %5176 = vmatpush2.msra.mxu0 0.0
    %5177 = vmatprep.subr.mxu0 0.0
    %5178 = vmatpush2.msra.mxu0 0.0
    %5179 = vmatprep.subr.mxu0 0.0
    %5180 = vmatpush2.msra.mxu0 0.0
    %5181 = vmatprep.subr.mxu0 0.0
    %5182 = vmatpush2.msra.mxu0 0.0
    %5183 = vmatprep.subr.mxu0 0.0
    %5184 = vmatpush2.msra.mxu0 0.0
    %5185 = vmatprep.subr.mxu0 0.0
    %5186 = vmatpush2.msra.mxu0 0.0
    %5187 = vmatprep.subr.mxu0 0.0
    %5188 = vmatpush2.msra.mxu0 0.0
    %5189 = vmatprep.subr.mxu0 0.0
    %5190 = vmatpush2.msra.mxu0 0.0
    %5191 = vmatprep.mubr.f32.mxu0 0.0
    %5192 = vmatmul.mubr.f32.gmra.mxu0 %v4524
    %v5193 = vpop.f32.mrf.mxu0
    %v5194 = vadd.f32 0.0, %v5193
    %v5195 = vpop.f32.mrf.mxu0
    %5196 = vdwg.mxu0
    %v5197 = vadd.f32 %v5126, %v5194
    %v5198 = vxor.u32 %v5197, 2147483648
    %v5199 = vmul.f32 %v5198, 1.442695
    %v5200 = vpow.pop %v5199
    %v5201 = vadd.f32 %v5200, 1.0
    %v5202 = vrcp.pop %v5201
    %v5203 = vmul.f32 1.0, %v5202
    %v5204 = vld [vmem:[%s318 + $0xa] sm:$0x3]
    %5205 = vmatprep.subr.mxu0 0.0
    %5206 = vmatpush1.msra.mxu0 0.0
    %5207 = vmatprep.subr.mxu0 0.0
    %5208 = vmatpush1.msra.mxu0 0.0
    %5209 = vmatprep.subr.mxu0 0.0
    %5210 = vmatpush1.msra.mxu0 0.0
    %5211 = vmatprep.subr.mxu0 0.0
    %5212 = vmatpush1.msra.mxu0 0.0
    %5213 = vmatprep.subr.mxu0 0.0
    %5214 = vmatpush1.msra.mxu0 0.0
    %5215 = vmatprep.subr.mxu0 0.0
    %5216 = vmatpush1.msra.mxu0 0.0
    %5217 = vmatprep.subr.mxu0 0.0
    %5218 = vmatpush1.msra.mxu0 0.0
    %5219 = vmatprep.subr.mxu0 0.0
    %5220 = vmatpush1.msra.mxu0 0.0
    %5221 = vmatprep.subr.mxu0 0.0
    %5222 = vmatpush1.msra.mxu0 0.0
    %5223 = vmatprep.subr.mxu0 0.0
    %5224 = vmatpush1.msra.mxu0 0.0
    %5225 = vmatprep.subr.mxu0 0.0
    %5226 = vmatpush1.msra.mxu0 0.0
    %5227 = vmatprep.subr.mxu0 0.0
    %5228 = vmatpush1.msra.mxu0 0.0
    %5229 = vmatprep.subr.mxu0 0.0
    %5230 = vmatpush1.msra.mxu0 %v423
    %5231 = vmatprep.subr.mxu0 0.0
    %5232 = vmatpush1.msra.mxu0 %v422
    %5233 = vmatprep.subr.mxu0 0.0
    %5234 = vmatpush1.msra.mxu0 %v421
    %5235 = vmatprep.subr.mxu0 0.0
    %5236 = vmatpush1.msra.mxu0 %v420
    %5237 = vmatprep.subr.mxu0 0.0
    %5238 = vmatpush2.msra.mxu0 0.0
    %5239 = vmatprep.subr.mxu0 0.0
    %5240 = vmatpush2.msra.mxu0 0.0
    %5241 = vmatprep.subr.mxu0 0.0
    %5242 = vmatpush2.msra.mxu0 0.0
    %5243 = vmatprep.subr.mxu0 0.0
    %5244 = vmatpush2.msra.mxu0 0.0
    %5245 = vmatprep.subr.mxu0 0.0
    %5246 = vmatpush2.msra.mxu0 0.0
    %5247 = vmatprep.subr.mxu0 0.0
    %5248 = vmatpush2.msra.mxu0 0.0
    %5249 = vmatprep.subr.mxu0 0.0
    %5250 = vmatpush2.msra.mxu0 0.0
    %5251 = vmatprep.subr.mxu0 0.0
    %5252 = vmatpush2.msra.mxu0 0.0
    %5253 = vmatprep.subr.mxu0 0.0
    %5254 = vmatpush2.msra.mxu0 0.0
    %5255 = vmatprep.subr.mxu0 0.0
    %5256 = vmatpush2.msra.mxu0 0.0
    %5257 = vmatprep.subr.mxu0 0.0
    %5258 = vmatpush2.msra.mxu0 0.0
    %5259 = vmatprep.subr.mxu0 0.0
    %5260 = vmatpush2.msra.mxu0 0.0
    %5261 = vmatprep.subr.mxu0 0.0
    %5262 = vmatpush2.msra.mxu0 0.0
    %5263 = vmatprep.subr.mxu0 0.0
    %5264 = vmatpush2.msra.mxu0 0.0
    %5265 = vmatprep.subr.mxu0 0.0
    %5266 = vmatpush2.msra.mxu0 0.0
    %5267 = vmatprep.subr.mxu0 0.0
    %5268 = vmatpush2.msra.mxu0 0.0
    %5269 = vmatprep.mubr.f32.mxu0 0.0
    %5270 = vmatmul.mubr.f32.gmra.mxu0 %v4524
    %v5271 = vpop.f32.mrf.mxu0
    %v5272 = vadd.f32 0.0, %v5271
    %v5273 = vpop.f32.mrf.mxu0
    %5274 = vdwg.mxu0
    %v5275 = vadd.f32 %v5204, %v5272
    %v5276 = vtanh.pop %v5275
    %v5277 = vld [vmem:[%s407 + $0xa] sm:$0x3]
    %5278 = vmatprep.subr.mxu0 0.0
    %5279 = vmatpush1.msra.mxu0 0.0
    %5280 = vmatprep.subr.mxu0 0.0
    %5281 = vmatpush1.msra.mxu0 0.0
    %5282 = vmatprep.subr.mxu0 0.0
    %5283 = vmatpush1.msra.mxu0 0.0
    %5284 = vmatprep.subr.mxu0 0.0
    %5285 = vmatpush1.msra.mxu0 0.0
    %5286 = vmatprep.subr.mxu0 0.0
    %5287 = vmatpush1.msra.mxu0 0.0
    %5288 = vmatprep.subr.mxu0 0.0
    %5289 = vmatpush1.msra.mxu0 0.0
    %5290 = vmatprep.subr.mxu0 0.0
    %5291 = vmatpush1.msra.mxu0 0.0
    %5292 = vmatprep.subr.mxu0 0.0
    %5293 = vmatpush1.msra.mxu0 0.0
    %5294 = vmatprep.subr.mxu0 0.0
    %5295 = vmatpush1.msra.mxu0 0.0
    %5296 = vmatprep.subr.mxu0 0.0
    %5297 = vmatpush1.msra.mxu0 0.0
    %5298 = vmatprep.subr.mxu0 0.0
    %5299 = vmatpush1.msra.mxu0 0.0
    %5300 = vmatprep.subr.mxu0 0.0
    %5301 = vmatpush1.msra.mxu0 0.0
    %5302 = vmatprep.subr.mxu0 0.0
    %5303 = vmatpush1.msra.mxu0 %v428
    %5304 = vmatprep.subr.mxu0 0.0
    %5305 = vmatpush1.msra.mxu0 %v427
    %5306 = vmatprep.subr.mxu0 0.0
    %5307 = vmatpush1.msra.mxu0 %v426
    %5308 = vmatprep.subr.mxu0 0.0
    %5309 = vmatpush1.msra.mxu0 %v425
    %5310 = vmatprep.subr.mxu0 0.0
    %5311 = vmatpush2.msra.mxu0 0.0
    %5312 = vmatprep.subr.mxu0 0.0
    %5313 = vmatpush2.msra.mxu0 0.0
    %5314 = vmatprep.subr.mxu0 0.0
    %5315 = vmatpush2.msra.mxu0 0.0
    %5316 = vmatprep.subr.mxu0 0.0
    %5317 = vmatpush2.msra.mxu0 0.0
    %5318 = vmatprep.subr.mxu0 0.0
    %5319 = vmatpush2.msra.mxu0 0.0
    %5320 = vmatprep.subr.mxu0 0.0
    %5321 = vmatpush2.msra.mxu0 0.0
    %5322 = vmatprep.subr.mxu0 0.0
    %5323 = vmatpush2.msra.mxu0 0.0
    %5324 = vmatprep.subr.mxu0 0.0
    %5325 = vmatpush2.msra.mxu0 0.0
    %5326 = vmatprep.subr.mxu0 0.0
    %5327 = vmatpush2.msra.mxu0 0.0
    %5328 = vmatprep.subr.mxu0 0.0
    %5329 = vmatpush2.msra.mxu0 0.0
    %5330 = vmatprep.subr.mxu0 0.0
    %5331 = vmatpush2.msra.mxu0 0.0
    %5332 = vmatprep.subr.mxu0 0.0
    %5333 = vmatpush2.msra.mxu0 0.0
    %5334 = vmatprep.subr.mxu0 0.0
    %5335 = vmatpush2.msra.mxu0 0.0
    %5336 = vmatprep.subr.mxu0 0.0
    %5337 = vmatpush2.msra.mxu0 0.0
    %5338 = vmatprep.subr.mxu0 0.0
    %5339 = vmatpush2.msra.mxu0 0.0
    %5340 = vmatprep.subr.mxu0 0.0
    %5341 = vmatpush2.msra.mxu0 0.0
    %5342 = vmatprep.mubr.f32.mxu0 0.0
    %5343 = vmatmul.mubr.f32.gmra.mxu0 %v4524
    %v5344 = vpop.f32.mrf.mxu0
    %v5345 = vadd.f32 0.0, %v5344
    %v5346 = vpop.f32.mrf.mxu0
    %5347 = vdwg.mxu0
    %v5348 = vadd.f32 %v5277, %v5345
    %v5349 = vxor.u32 %v5348, 2147483648
    %v5350 = vmul.f32 %v5349, 1.442695
    %v5351 = vpow.pop %v5350
    %v5352 = vadd.f32 %v5351, 1.0
    %v5353 = vrcp.pop %v5352
    %v5354 = vmul.f32 1.0, %v5353
    %v5355 = vmul.f32 %v5203, %v4447
    %v5356 = vmul.f32 %v5125, %v5276
    %v5357 = vadd.f32 %v5355, %v5356
    %v5358 = vtanh.pop %v5357
    %v5359 = vmul.f32 %v5354, %v5358
    %v5361 = vsel %vm140, %v5043, 0
    %5363 = vmatprep.subr.mxu0 0.0
    %5364 = vmatpush1.msra.mxu0 0.0
    %5365 = vmatprep.subr.mxu0 0.0
    %5366 = vmatpush1.msra.mxu0 0.0
    %5367 = vmatprep.subr.mxu0 0.0
    %5368 = vmatpush1.msra.mxu0 0.0
    %5369 = vmatprep.subr.mxu0 0.0
    %5370 = vmatpush1.msra.mxu0 0.0
    %5371 = vmatprep.subr.mxu0 0.0
    %5372 = vmatpush1.msra.mxu0 0.0
    %5373 = vmatprep.subr.mxu0 0.0
    %5374 = vmatpush1.msra.mxu0 0.0
    %5375 = vmatprep.subr.mxu0 0.0
    %5376 = vmatpush1.msra.mxu0 0.0
    %5377 = vmatprep.subr.mxu0 0.0
    %5378 = vmatpush1.msra.mxu0 0.0
    %5379 = vmatprep.subr.mxu0 0.0
    %5380 = vmatpush1.msra.mxu0 0.0
    %5381 = vmatprep.subr.mxu0 0.0
    %5382 = vmatpush1.msra.mxu0 0.0
    %5383 = vmatprep.subr.mxu0 0.0
    %5384 = vmatpush1.msra.mxu0 0.0
    %5385 = vmatprep.subr.mxu0 0.0
    %5386 = vmatpush1.msra.mxu0 0.0
    %5387 = vmatprep.subr.mxu0 0.0
    %5388 = vmatpush1.msra.mxu0 %v451
    %5389 = vmatprep.subr.mxu0 0.0
    %5390 = vmatpush1.msra.mxu0 %v450
    %5391 = vmatprep.subr.mxu0 0.0
    %5392 = vmatpush1.msra.mxu0 %v449
    %5393 = vmatprep.subr.mxu0 0.0
    %5394 = vmatpush1.msra.mxu0 %v448
    %5395 = vmatprep.subr.mxu0 0.0
    %5396 = vmatpush2.msra.mxu0 0.0
    %5397 = vmatprep.subr.mxu0 0.0
    %5398 = vmatpush2.msra.mxu0 0.0
    %5399 = vmatprep.subr.mxu0 0.0
    %5400 = vmatpush2.msra.mxu0 0.0
    %5401 = vmatprep.subr.mxu0 0.0
    %5402 = vmatpush2.msra.mxu0 0.0
    %5403 = vmatprep.subr.mxu0 0.0
    %5404 = vmatpush2.msra.mxu0 0.0
    %5405 = vmatprep.subr.mxu0 0.0
    %5406 = vmatpush2.msra.mxu0 0.0
    %5407 = vmatprep.subr.mxu0 0.0
    %5408 = vmatpush2.msra.mxu0 0.0
    %5409 = vmatprep.subr.mxu0 0.0
    %5410 = vmatpush2.msra.mxu0 0.0
    %5411 = vmatprep.subr.mxu0 0.0
    %5412 = vmatpush2.msra.mxu0 0.0
    %5413 = vmatprep.subr.mxu0 0.0
    %5414 = vmatpush2.msra.mxu0 0.0
    %5415 = vmatprep.subr.mxu0 0.0
    %5416 = vmatpush2.msra.mxu0 0.0
    %5417 = vmatprep.subr.mxu0 0.0
    %5418 = vmatpush2.msra.mxu0 0.0
    %5419 = vmatprep.subr.mxu0 0.0
    %5420 = vmatpush2.msra.mxu0 0.0
    %5421 = vmatprep.subr.mxu0 0.0
    %5422 = vmatpush2.msra.mxu0 0.0
    %5423 = vmatprep.subr.mxu0 0.0
    %5424 = vmatpush2.msra.mxu0 0.0
    %5425 = vmatprep.subr.mxu0 0.0
    %5426 = vmatpush2.msra.mxu0 0.0
    %5427 = vmatprep.mubr.f32.mxu0 0.0
    %5428 = vmatmul.mubr.f32.gmra.mxu0 %v5361
    %v5429 = vpop.f32.mrf.mxu0
    %v5430 = vadd.f32 0.0, %v5429
    %v5431 = vpop.f32.mrf.mxu0
    %5432 = vdwg.mxu0
    %v5434 = vsel %vm140, %v5359, 0
    %5436 = vmatprep.subr.mxu0 0.0
    %5437 = vmatpush1.msra.mxu0 0.0
    %5438 = vmatprep.subr.mxu0 0.0
    %5439 = vmatpush1.msra.mxu0 0.0
    %5440 = vmatprep.subr.mxu0 0.0
    %5441 = vmatpush1.msra.mxu0 0.0
    %5442 = vmatprep.subr.mxu0 0.0
    %5443 = vmatpush1.msra.mxu0 0.0
    %5444 = vmatprep.subr.mxu0 0.0
    %5445 = vmatpush1.msra.mxu0 0.0
    %5446 = vmatprep.subr.mxu0 0.0
    %5447 = vmatpush1.msra.mxu0 0.0
    %5448 = vmatprep.subr.mxu0 0.0
    %5449 = vmatpush1.msra.mxu0 0.0
    %5450 = vmatprep.subr.mxu0 0.0
    %5451 = vmatpush1.msra.mxu0 0.0
    %5452 = vmatprep.subr.mxu0 0.0
    %5453 = vmatpush1.msra.mxu0 0.0
    %5454 = vmatprep.subr.mxu0 0.0
    %5455 = vmatpush1.msra.mxu0 0.0
    %5456 = vmatprep.subr.mxu0 0.0
    %5457 = vmatpush1.msra.mxu0 0.0
    %5458 = vmatprep.subr.mxu0 0.0
    %5459 = vmatpush1.msra.mxu0 0.0
    %5460 = vmatprep.subr.mxu0 0.0
    %5461 = vmatpush1.msra.mxu0 %v432
    %5462 = vmatprep.subr.mxu0 0.0
    %5463 = vmatpush1.msra.mxu0 %v431
    %5464 = vmatprep.subr.mxu0 0.0
    %5465 = vmatpush1.msra.mxu0 %v430
    %5466 = vmatprep.subr.mxu0 0.0
    %5467 = vmatpush1.msra.mxu0 %v429
    %5468 = vmatprep.subr.mxu0 0.0
    %5469 = vmatpush2.msra.mxu0 0.0
    %5470 = vmatprep.subr.mxu0 0.0
    %5471 = vmatpush2.msra.mxu0 0.0
    %5472 = vmatprep.subr.mxu0 0.0
    %5473 = vmatpush2.msra.mxu0 0.0
    %5474 = vmatprep.subr.mxu0 0.0
    %5475 = vmatpush2.msra.mxu0 0.0
    %5476 = vmatprep.subr.mxu0 0.0
    %5477 = vmatpush2.msra.mxu0 0.0
    %5478 = vmatprep.subr.mxu0 0.0
    %5479 = vmatpush2.msra.mxu0 0.0
    %5480 = vmatprep.subr.mxu0 0.0
    %5481 = vmatpush2.msra.mxu0 0.0
    %5482 = vmatprep.subr.mxu0 0.0
    %5483 = vmatpush2.msra.mxu0 0.0
    %5484 = vmatprep.subr.mxu0 0.0
    %5485 = vmatpush2.msra.mxu0 0.0
    %5486 = vmatprep.subr.mxu0 0.0
    %5487 = vmatpush2.msra.mxu0 0.0
    %5488 = vmatprep.subr.mxu0 0.0
    %5489 = vmatpush2.msra.mxu0 0.0
    %5490 = vmatprep.subr.mxu0 0.0
    %5491 = vmatpush2.msra.mxu0 0.0
    %5492 = vmatprep.subr.mxu0 0.0
    %5493 = vmatpush2.msra.mxu0 0.0
    %5494 = vmatprep.subr.mxu0 0.0
    %5495 = vmatpush2.msra.mxu0 0.0
    %5496 = vmatprep.subr.mxu0 0.0
    %5497 = vmatpush2.msra.mxu0 0.0
    %5498 = vmatprep.subr.mxu0 0.0
    %5499 = vmatpush2.msra.mxu0 0.0
    %5500 = vmatprep.mubr.f32.mxu0 0.0
    %5501 = vmatmul.mubr.f32.gmra.mxu0 %v5434
    %v5502 = vpop.f32.mrf.mxu0
    %v5503 = vadd.f32 %v5430, %v5502
    %v5504 = vpop.f32.mrf.mxu0
    %5505 = vdwg.mxu0
    %v5506 = vadd.f32 %v5503, %v472
    %v5507 = vxor.u32 %v5506, 2147483648
    %v5508 = vmul.f32 %v5507, 1.442695
    %v5509 = vpow.pop %v5508
    %v5510 = vadd.f32 %v5509, 1.0
    %v5511 = vrcp.pop %v5510
    %v5512 = vmul.f32 1.0, %v5511
    %5513 = vmatprep.subr.mxu0 0.0
    %5514 = vmatpush1.msra.mxu0 0.0
    %5515 = vmatprep.subr.mxu0 0.0
    %5516 = vmatpush1.msra.mxu0 0.0
    %5517 = vmatprep.subr.mxu0 0.0
    %5518 = vmatpush1.msra.mxu0 0.0
    %5519 = vmatprep.subr.mxu0 0.0
    %5520 = vmatpush1.msra.mxu0 0.0
    %5521 = vmatprep.subr.mxu0 0.0
    %5522 = vmatpush1.msra.mxu0 0.0
    %5523 = vmatprep.subr.mxu0 0.0
    %5524 = vmatpush1.msra.mxu0 0.0
    %5525 = vmatprep.subr.mxu0 0.0
    %5526 = vmatpush1.msra.mxu0 0.0
    %5527 = vmatprep.subr.mxu0 0.0
    %5528 = vmatpush1.msra.mxu0 0.0
    %5529 = vmatprep.subr.mxu0 0.0
    %5530 = vmatpush1.msra.mxu0 0.0
    %5531 = vmatprep.subr.mxu0 0.0
    %5532 = vmatpush1.msra.mxu0 0.0
    %5533 = vmatprep.subr.mxu0 0.0
    %5534 = vmatpush1.msra.mxu0 0.0
    %5535 = vmatprep.subr.mxu0 0.0
    %5536 = vmatpush1.msra.mxu0 0.0
    %5537 = vmatprep.subr.mxu0 0.0
    %5538 = vmatpush1.msra.mxu0 %v456
    %5539 = vmatprep.subr.mxu0 0.0
    %5540 = vmatpush1.msra.mxu0 %v455
    %5541 = vmatprep.subr.mxu0 0.0
    %5542 = vmatpush1.msra.mxu0 %v454
    %5543 = vmatprep.subr.mxu0 0.0
    %5544 = vmatpush1.msra.mxu0 %v453
    %5545 = vmatprep.subr.mxu0 0.0
    %5546 = vmatpush2.msra.mxu0 0.0
    %5547 = vmatprep.subr.mxu0 0.0
    %5548 = vmatpush2.msra.mxu0 0.0
    %5549 = vmatprep.subr.mxu0 0.0
    %5550 = vmatpush2.msra.mxu0 0.0
    %5551 = vmatprep.subr.mxu0 0.0
    %5552 = vmatpush2.msra.mxu0 0.0
    %5553 = vmatprep.subr.mxu0 0.0
    %5554 = vmatpush2.msra.mxu0 0.0
    %5555 = vmatprep.subr.mxu0 0.0
    %5556 = vmatpush2.msra.mxu0 0.0
    %5557 = vmatprep.subr.mxu0 0.0
    %5558 = vmatpush2.msra.mxu0 0.0
    %5559 = vmatprep.subr.mxu0 0.0
    %5560 = vmatpush2.msra.mxu0 0.0
    %5561 = vmatprep.subr.mxu0 0.0
    %5562 = vmatpush2.msra.mxu0 0.0
    %5563 = vmatprep.subr.mxu0 0.0
    %5564 = vmatpush2.msra.mxu0 0.0
    %5565 = vmatprep.subr.mxu0 0.0
    %5566 = vmatpush2.msra.mxu0 0.0
    %5567 = vmatprep.subr.mxu0 0.0
    %5568 = vmatpush2.msra.mxu0 0.0
    %5569 = vmatprep.subr.mxu0 0.0
    %5570 = vmatpush2.msra.mxu0 0.0
    %5571 = vmatprep.subr.mxu0 0.0
    %5572 = vmatpush2.msra.mxu0 0.0
    %5573 = vmatprep.subr.mxu0 0.0
    %5574 = vmatpush2.msra.mxu0 0.0
    %5575 = vmatprep.subr.mxu0 0.0
    %5576 = vmatpush2.msra.mxu0 0.0
    %5577 = vmatprep.mubr.f32.mxu0 0.0
    %5578 = vmatmul.mubr.f32.gmra.mxu0 %v5361
    %v5579 = vpop.f32.mrf.mxu0
    %v5580 = vadd.f32 0.0, %v5579
    %v5581 = vpop.f32.mrf.mxu0
    %5582 = vdwg.mxu0
    %5583 = vmatprep.subr.mxu0 0.0
    %5584 = vmatpush1.msra.mxu0 0.0
    %5585 = vmatprep.subr.mxu0 0.0
    %5586 = vmatpush1.msra.mxu0 0.0
    %5587 = vmatprep.subr.mxu0 0.0
    %5588 = vmatpush1.msra.mxu0 0.0
    %5589 = vmatprep.subr.mxu0 0.0
    %5590 = vmatpush1.msra.mxu0 0.0
    %5591 = vmatprep.subr.mxu0 0.0
    %5592 = vmatpush1.msra.mxu0 0.0
    %5593 = vmatprep.subr.mxu0 0.0
    %5594 = vmatpush1.msra.mxu0 0.0
    %5595 = vmatprep.subr.mxu0 0.0
    %5596 = vmatpush1.msra.mxu0 0.0
    %5597 = vmatprep.subr.mxu0 0.0
    %5598 = vmatpush1.msra.mxu0 0.0
    %5599 = vmatprep.subr.mxu0 0.0
    %5600 = vmatpush1.msra.mxu0 0.0
    %5601 = vmatprep.subr.mxu0 0.0
    %5602 = vmatpush1.msra.mxu0 0.0
    %5603 = vmatprep.subr.mxu0 0.0
    %5604 = vmatpush1.msra.mxu0 0.0
    %5605 = vmatprep.subr.mxu0 0.0
    %5606 = vmatpush1.msra.mxu0 0.0
    %5607 = vmatprep.subr.mxu0 0.0
    %5608 = vmatpush1.msra.mxu0 %v437
    %5609 = vmatprep.subr.mxu0 0.0
    %5610 = vmatpush1.msra.mxu0 %v436
    %5611 = vmatprep.subr.mxu0 0.0
    %5612 = vmatpush1.msra.mxu0 %v435
    %5613 = vmatprep.subr.mxu0 0.0
    %5614 = vmatpush1.msra.mxu0 %v434
    %5615 = vmatprep.subr.mxu0 0.0
    %5616 = vmatpush2.msra.mxu0 0.0
    %5617 = vmatprep.subr.mxu0 0.0
    %5618 = vmatpush2.msra.mxu0 0.0
    %5619 = vmatprep.subr.mxu0 0.0
    %5620 = vmatpush2.msra.mxu0 0.0
    %5621 = vmatprep.subr.mxu0 0.0
    %5622 = vmatpush2.msra.mxu0 0.0
    %5623 = vmatprep.subr.mxu0 0.0
    %5624 = vmatpush2.msra.mxu0 0.0
    %5625 = vmatprep.subr.mxu0 0.0
    %5626 = vmatpush2.msra.mxu0 0.0
    %5627 = vmatprep.subr.mxu0 0.0
    %5628 = vmatpush2.msra.mxu0 0.0
    %5629 = vmatprep.subr.mxu0 0.0
    %5630 = vmatpush2.msra.mxu0 0.0
    %5631 = vmatprep.subr.mxu0 0.0
    %5632 = vmatpush2.msra.mxu0 0.0
    %5633 = vmatprep.subr.mxu0 0.0
    %5634 = vmatpush2.msra.mxu0 0.0
    %5635 = vmatprep.subr.mxu0 0.0
    %5636 = vmatpush2.msra.mxu0 0.0
    %5637 = vmatprep.subr.mxu0 0.0
    %5638 = vmatpush2.msra.mxu0 0.0
    %5639 = vmatprep.subr.mxu0 0.0
    %5640 = vmatpush2.msra.mxu0 0.0
    %5641 = vmatprep.subr.mxu0 0.0
    %5642 = vmatpush2.msra.mxu0 0.0
    %5643 = vmatprep.subr.mxu0 0.0
    %5644 = vmatpush2.msra.mxu0 0.0
    %5645 = vmatprep.subr.mxu0 0.0
    %5646 = vmatpush2.msra.mxu0 0.0
    %5647 = vmatprep.mubr.f32.mxu0 0.0
    %5648 = vmatmul.mubr.f32.gmra.mxu0 %v5434
    %v5649 = vpop.f32.mrf.mxu0
    %v5650 = vadd.f32 %v5580, %v5649
    %v5651 = vpop.f32.mrf.mxu0
    %5652 = vdwg.mxu0
    %v5653 = vadd.f32 %v5650, %v480
    %v5654 = vxor.u32 %v5653, 2147483648
    %v5655 = vmul.f32 %v5654, 1.442695
    %v5656 = vpow.pop %v5655
    %v5657 = vadd.f32 %v5656, 1.0
    %v5658 = vrcp.pop %v5657
    %v5659 = vmul.f32 1.0, %v5658
    %5660 = vmatprep.subr.mxu0 0.0
    %5661 = vmatpush1.msra.mxu0 0.0
    %5662 = vmatprep.subr.mxu0 0.0
    %5663 = vmatpush1.msra.mxu0 0.0
    %5664 = vmatprep.subr.mxu0 0.0
    %5665 = vmatpush1.msra.mxu0 0.0
    %5666 = vmatprep.subr.mxu0 0.0
    %5667 = vmatpush1.msra.mxu0 0.0
    %5668 = vmatprep.subr.mxu0 0.0
    %5669 = vmatpush1.msra.mxu0 0.0
    %5670 = vmatprep.subr.mxu0 0.0
    %5671 = vmatpush1.msra.mxu0 0.0
    %5672 = vmatprep.subr.mxu0 0.0
    %5673 = vmatpush1.msra.mxu0 0.0
    %5674 = vmatprep.subr.mxu0 0.0
    %5675 = vmatpush1.msra.mxu0 0.0
    %5676 = vmatprep.subr.mxu0 0.0
    %5677 = vmatpush1.msra.mxu0 0.0
    %5678 = vmatprep.subr.mxu0 0.0
    %5679 = vmatpush1.msra.mxu0 0.0
    %5680 = vmatprep.subr.mxu0 0.0
    %5681 = vmatpush1.msra.mxu0 0.0
    %5682 = vmatprep.subr.mxu0 0.0
    %5683 = vmatpush1.msra.mxu0 0.0
    %5684 = vmatprep.subr.mxu0 0.0
    %5685 = vmatpush1.msra.mxu0 %v461
    %5686 = vmatprep.subr.mxu0 0.0
    %5687 = vmatpush1.msra.mxu0 %v460
    %5688 = vmatprep.subr.mxu0 0.0
    %5689 = vmatpush1.msra.mxu0 %v459
    %5690 = vmatprep.subr.mxu0 0.0
    %5691 = vmatpush1.msra.mxu0 %v458
    %5692 = vmatprep.subr.mxu0 0.0
    %5693 = vmatpush2.msra.mxu0 0.0
    %5694 = vmatprep.subr.mxu0 0.0
    %5695 = vmatpush2.msra.mxu0 0.0
    %5696 = vmatprep.subr.mxu0 0.0
    %5697 = vmatpush2.msra.mxu0 0.0
    %5698 = vmatprep.subr.mxu0 0.0
    %5699 = vmatpush2.msra.mxu0 0.0
    %5700 = vmatprep.subr.mxu0 0.0
    %5701 = vmatpush2.msra.mxu0 0.0
    %5702 = vmatprep.subr.mxu0 0.0
    %5703 = vmatpush2.msra.mxu0 0.0
    %5704 = vmatprep.subr.mxu0 0.0
    %5705 = vmatpush2.msra.mxu0 0.0
    %5706 = vmatprep.subr.mxu0 0.0
    %5707 = vmatpush2.msra.mxu0 0.0
    %5708 = vmatprep.subr.mxu0 0.0
    %5709 = vmatpush2.msra.mxu0 0.0
    %5710 = vmatprep.subr.mxu0 0.0
    %5711 = vmatpush2.msra.mxu0 0.0
    %5712 = vmatprep.subr.mxu0 0.0
    %5713 = vmatpush2.msra.mxu0 0.0
    %5714 = vmatprep.subr.mxu0 0.0
    %5715 = vmatpush2.msra.mxu0 0.0
    %5716 = vmatprep.subr.mxu0 0.0
    %5717 = vmatpush2.msra.mxu0 0.0
    %5718 = vmatprep.subr.mxu0 0.0
    %5719 = vmatpush2.msra.mxu0 0.0
    %5720 = vmatprep.subr.mxu0 0.0
    %5721 = vmatpush2.msra.mxu0 0.0
    %5722 = vmatprep.subr.mxu0 0.0
    %5723 = vmatpush2.msra.mxu0 0.0
    %5724 = vmatprep.mubr.f32.mxu0 0.0
    %5725 = vmatmul.mubr.f32.gmra.mxu0 %v5361
    %v5726 = vpop.f32.mrf.mxu0
    %v5727 = vadd.f32 0.0, %v5726
    %v5728 = vpop.f32.mrf.mxu0
    %5729 = vdwg.mxu0
    %5730 = vmatprep.subr.mxu0 0.0
    %5731 = vmatpush1.msra.mxu0 0.0
    %5732 = vmatprep.subr.mxu0 0.0
    %5733 = vmatpush1.msra.mxu0 0.0
    %5734 = vmatprep.subr.mxu0 0.0
    %5735 = vmatpush1.msra.mxu0 0.0
    %5736 = vmatprep.subr.mxu0 0.0
    %5737 = vmatpush1.msra.mxu0 0.0
    %5738 = vmatprep.subr.mxu0 0.0
    %5739 = vmatpush1.msra.mxu0 0.0
    %5740 = vmatprep.subr.mxu0 0.0
    %5741 = vmatpush1.msra.mxu0 0.0
    %5742 = vmatprep.subr.mxu0 0.0
    %5743 = vmatpush1.msra.mxu0 0.0
    %5744 = vmatprep.subr.mxu0 0.0
    %5745 = vmatpush1.msra.mxu0 0.0
    %5746 = vmatprep.subr.mxu0 0.0
    %5747 = vmatpush1.msra.mxu0 0.0
    %5748 = vmatprep.subr.mxu0 0.0
    %5749 = vmatpush1.msra.mxu0 0.0
    %5750 = vmatprep.subr.mxu0 0.0
    %5751 = vmatpush1.msra.mxu0 0.0
    %5752 = vmatprep.subr.mxu0 0.0
    %5753 = vmatpush1.msra.mxu0 0.0
    %5754 = vmatprep.subr.mxu0 0.0
    %5755 = vmatpush1.msra.mxu0 %v442
    %5756 = vmatprep.subr.mxu0 0.0
    %5757 = vmatpush1.msra.mxu0 %v441
    %5758 = vmatprep.subr.mxu0 0.0
    %5759 = vmatpush1.msra.mxu0 %v440
    %5760 = vmatprep.subr.mxu0 0.0
    %5761 = vmatpush1.msra.mxu0 %v439
    %5762 = vmatprep.subr.mxu0 0.0
    %5763 = vmatpush2.msra.mxu0 0.0
    %5764 = vmatprep.subr.mxu0 0.0
    %5765 = vmatpush2.msra.mxu0 0.0
    %5766 = vmatprep.subr.mxu0 0.0
    %5767 = vmatpush2.msra.mxu0 0.0
    %5768 = vmatprep.subr.mxu0 0.0
    %5769 = vmatpush2.msra.mxu0 0.0
    %5770 = vmatprep.subr.mxu0 0.0
    %5771 = vmatpush2.msra.mxu0 0.0
    %5772 = vmatprep.subr.mxu0 0.0
    %5773 = vmatpush2.msra.mxu0 0.0
    %5774 = vmatprep.subr.mxu0 0.0
    %5775 = vmatpush2.msra.mxu0 0.0
    %5776 = vmatprep.subr.mxu0 0.0
    %5777 = vmatpush2.msra.mxu0 0.0
    %5778 = vmatprep.subr.mxu0 0.0
    %5779 = vmatpush2.msra.mxu0 0.0
    %5780 = vmatprep.subr.mxu0 0.0
    %5781 = vmatpush2.msra.mxu0 0.0
    %5782 = vmatprep.subr.mxu0 0.0
    %5783 = vmatpush2.msra.mxu0 0.0
    %5784 = vmatprep.subr.mxu0 0.0
    %5785 = vmatpush2.msra.mxu0 0.0
    %5786 = vmatprep.subr.mxu0 0.0
    %5787 = vmatpush2.msra.mxu0 0.0
    %5788 = vmatprep.subr.mxu0 0.0
    %5789 = vmatpush2.msra.mxu0 0.0
    %5790 = vmatprep.subr.mxu0 0.0
    %5791 = vmatpush2.msra.mxu0 0.0
    %5792 = vmatprep.subr.mxu0 0.0
    %5793 = vmatpush2.msra.mxu0 0.0
    %5794 = vmatprep.mubr.f32.mxu0 0.0
    %5795 = vmatmul.mubr.f32.gmra.mxu0 %v5434
    %v5796 = vpop.f32.mrf.mxu0
    %v5797 = vadd.f32 %v5727, %v5796
    %v5798 = vpop.f32.mrf.mxu0
    %5799 = vdwg.mxu0
    %v5800 = vadd.f32 %v5797, %v488
    %v5801 = vtanh.pop %v5800
    %5802 = vmatprep.subr.mxu0 0.0
    %5803 = vmatpush1.msra.mxu0 0.0
    %5804 = vmatprep.subr.mxu0 0.0
    %5805 = vmatpush1.msra.mxu0 0.0
    %5806 = vmatprep.subr.mxu0 0.0
    %5807 = vmatpush1.msra.mxu0 0.0
    %5808 = vmatprep.subr.mxu0 0.0
    %5809 = vmatpush1.msra.mxu0 0.0
    %5810 = vmatprep.subr.mxu0 0.0
    %5811 = vmatpush1.msra.mxu0 0.0
    %5812 = vmatprep.subr.mxu0 0.0
    %5813 = vmatpush1.msra.mxu0 0.0
    %5814 = vmatprep.subr.mxu0 0.0
    %5815 = vmatpush1.msra.mxu0 0.0
    %5816 = vmatprep.subr.mxu0 0.0
    %5817 = vmatpush1.msra.mxu0 0.0
    %5818 = vmatprep.subr.mxu0 0.0
    %5819 = vmatpush1.msra.mxu0 0.0
    %5820 = vmatprep.subr.mxu0 0.0
    %5821 = vmatpush1.msra.mxu0 0.0
    %5822 = vmatprep.subr.mxu0 0.0
    %5823 = vmatpush1.msra.mxu0 0.0
    %5824 = vmatprep.subr.mxu0 0.0
    %5825 = vmatpush1.msra.mxu0 0.0
    %5826 = vmatprep.subr.mxu0 0.0
    %5827 = vmatpush1.msra.mxu0 %v466
    %5828 = vmatprep.subr.mxu0 0.0
    %5829 = vmatpush1.msra.mxu0 %v465
    %5830 = vmatprep.subr.mxu0 0.0
    %5831 = vmatpush1.msra.mxu0 %v464
    %5832 = vmatprep.subr.mxu0 0.0
    %5833 = vmatpush1.msra.mxu0 %v463
    %5834 = vmatprep.subr.mxu0 0.0
    %5835 = vmatpush2.msra.mxu0 0.0
    %5836 = vmatprep.subr.mxu0 0.0
    %5837 = vmatpush2.msra.mxu0 0.0
    %5838 = vmatprep.subr.mxu0 0.0
    %5839 = vmatpush2.msra.mxu0 0.0
    %5840 = vmatprep.subr.mxu0 0.0
    %5841 = vmatpush2.msra.mxu0 0.0
    %5842 = vmatprep.subr.mxu0 0.0
    %5843 = vmatpush2.msra.mxu0 0.0
    %5844 = vmatprep.subr.mxu0 0.0
    %5845 = vmatpush2.msra.mxu0 0.0
    %5846 = vmatprep.subr.mxu0 0.0
    %5847 = vmatpush2.msra.mxu0 0.0
    %5848 = vmatprep.subr.mxu0 0.0
    %5849 = vmatpush2.msra.mxu0 0.0
    %5850 = vmatprep.subr.mxu0 0.0
    %5851 = vmatpush2.msra.mxu0 0.0
    %5852 = vmatprep.subr.mxu0 0.0
    %5853 = vmatpush2.msra.mxu0 0.0
    %5854 = vmatprep.subr.mxu0 0.0
    %5855 = vmatpush2.msra.mxu0 0.0
    %5856 = vmatprep.subr.mxu0 0.0
    %5857 = vmatpush2.msra.mxu0 0.0
    %5858 = vmatprep.subr.mxu0 0.0
    %5859 = vmatpush2.msra.mxu0 0.0
    %5860 = vmatprep.subr.mxu0 0.0
    %5861 = vmatpush2.msra.mxu0 0.0
    %5862 = vmatprep.subr.mxu0 0.0
    %5863 = vmatpush2.msra.mxu0 0.0
    %5864 = vmatprep.subr.mxu0 0.0
    %5865 = vmatpush2.msra.mxu0 0.0
    %5866 = vmatprep.mubr.f32.mxu0 0.0
    %5867 = vmatmul.mubr.f32.gmra.mxu0 %v5361
    %v5868 = vpop.f32.mrf.mxu0
    %v5869 = vadd.f32 0.0, %v5868
    %v5870 = vpop.f32.mrf.mxu0
    %5871 = vdwg.mxu0
    %5872 = vmatprep.subr.mxu0 0.0
    %5873 = vmatpush1.msra.mxu0 0.0
    %5874 = vmatprep.subr.mxu0 0.0
    %5875 = vmatpush1.msra.mxu0 0.0
    %5876 = vmatprep.subr.mxu0 0.0
    %5877 = vmatpush1.msra.mxu0 0.0
    %5878 = vmatprep.subr.mxu0 0.0
    %5879 = vmatpush1.msra.mxu0 0.0
    %5880 = vmatprep.subr.mxu0 0.0
    %5881 = vmatpush1.msra.mxu0 0.0
    %5882 = vmatprep.subr.mxu0 0.0
    %5883 = vmatpush1.msra.mxu0 0.0
    %5884 = vmatprep.subr.mxu0 0.0
    %5885 = vmatpush1.msra.mxu0 0.0
    %5886 = vmatprep.subr.mxu0 0.0
    %5887 = vmatpush1.msra.mxu0 0.0
    %5888 = vmatprep.subr.mxu0 0.0
    %5889 = vmatpush1.msra.mxu0 0.0
    %5890 = vmatprep.subr.mxu0 0.0
    %5891 = vmatpush1.msra.mxu0 0.0
    %5892 = vmatprep.subr.mxu0 0.0
    %5893 = vmatpush1.msra.mxu0 0.0
    %5894 = vmatprep.subr.mxu0 0.0
    %5895 = vmatpush1.msra.mxu0 0.0
    %5896 = vmatprep.subr.mxu0 0.0
    %5897 = vmatpush1.msra.mxu0 %v447
    %5898 = vmatprep.subr.mxu0 0.0
    %5899 = vmatpush1.msra.mxu0 %v446
    %5900 = vmatprep.subr.mxu0 0.0
    %5901 = vmatpush1.msra.mxu0 %v445
    %5902 = vmatprep.subr.mxu0 0.0
    %5903 = vmatpush1.msra.mxu0 %v444
    %5904 = vmatprep.subr.mxu0 0.0
    %5905 = vmatpush2.msra.mxu0 0.0
    %5906 = vmatprep.subr.mxu0 0.0
    %5907 = vmatpush2.msra.mxu0 0.0
    %5908 = vmatprep.subr.mxu0 0.0
    %5909 = vmatpush2.msra.mxu0 0.0
    %5910 = vmatprep.subr.mxu0 0.0
    %5911 = vmatpush2.msra.mxu0 0.0
    %5912 = vmatprep.subr.mxu0 0.0
    %5913 = vmatpush2.msra.mxu0 0.0
    %5914 = vmatprep.subr.mxu0 0.0
    %5915 = vmatpush2.msra.mxu0 0.0
    %5916 = vmatprep.subr.mxu0 0.0
    %5917 = vmatpush2.msra.mxu0 0.0
    %5918 = vmatprep.subr.mxu0 0.0
    %5919 = vmatpush2.msra.mxu0 0.0
    %5920 = vmatprep.subr.mxu0 0.0
    %5921 = vmatpush2.msra.mxu0 0.0
    %5922 = vmatprep.subr.mxu0 0.0
    %5923 = vmatpush2.msra.mxu0 0.0
    %5924 = vmatprep.subr.mxu0 0.0
    %5925 = vmatpush2.msra.mxu0 0.0
    %5926 = vmatprep.subr.mxu0 0.0
    %5927 = vmatpush2.msra.mxu0 0.0
    %5928 = vmatprep.subr.mxu0 0.0
    %5929 = vmatpush2.msra.mxu0 0.0
    %5930 = vmatprep.subr.mxu0 0.0
    %5931 = vmatpush2.msra.mxu0 0.0
    %5932 = vmatprep.subr.mxu0 0.0
    %5933 = vmatpush2.msra.mxu0 0.0
    %5934 = vmatprep.subr.mxu0 0.0
    %5935 = vmatpush2.msra.mxu0 0.0
    %5936 = vmatprep.mubr.f32.mxu0 0.0
    %5937 = vmatmul.mubr.f32.gmra.mxu0 %v5434
    %v5938 = vpop.f32.mrf.mxu0
    %v5939 = vadd.f32 %v5869, %v5938
    %v5940 = vpop.f32.mrf.mxu0
    %5941 = vdwg.mxu0
    %v5942 = vadd.f32 %v5939, %v496
    %v5943 = vxor.u32 %v5942, 2147483648
    %v5944 = vmul.f32 %v5943, 1.442695
    %v5945 = vpow.pop %v5944
    %v5946 = vadd.f32 %v5945, 1.0
    %v5947 = vrcp.pop %v5946
    %v5948 = vmul.f32 1.0, %v5947
    %v5949 = vmul.f32 %v5659, %v5041
    %v5950 = vmul.f32 %v5512, %v5801
    %v5951 = vadd.f32 %v5949, %v5950
    %v5952 = vtanh.pop %v5951
    %v5953 = vmul.f32 %v5948, %v5952
    %s5954 = sld [smem:[#allocation4 + $0x5]]
    %v5955 = vstv %s5954
    %v5956 = vmul.f32 %v5955, %v5953
    %v5957 = vadd.f32 %v5047, %v5956
    %v5958 = vld [vmem:[#allocation2 + $0xc] sm:$0x3]
    %5959 = vmatprep.subr.mxu0 0.0
    %5960 = vmatpush1.msra.mxu0 0.0
    %5961 = vmatprep.subr.mxu0 0.0
    %5962 = vmatpush1.msra.mxu0 0.0
    %5963 = vmatprep.subr.mxu0 0.0
    %5964 = vmatpush1.msra.mxu0 0.0
    %5965 = vmatprep.subr.mxu0 0.0
    %5966 = vmatpush1.msra.mxu0 0.0
    %5967 = vmatprep.subr.mxu0 0.0
    %5968 = vmatpush1.msra.mxu0 0.0
    %5969 = vmatprep.subr.mxu0 0.0
    %5970 = vmatpush1.msra.mxu0 0.0
    %5971 = vmatprep.subr.mxu0 0.0
    %5972 = vmatpush1.msra.mxu0 0.0
    %5973 = vmatprep.subr.mxu0 0.0
    %5974 = vmatpush1.msra.mxu0 0.0
    %5975 = vmatprep.subr.mxu0 0.0
    %5976 = vmatpush1.msra.mxu0 0.0
    %5977 = vmatprep.subr.mxu0 0.0
    %5978 = vmatpush1.msra.mxu0 0.0
    %5979 = vmatprep.subr.mxu0 0.0
    %5980 = vmatpush1.msra.mxu0 0.0
    %5981 = vmatprep.subr.mxu0 0.0
    %5982 = vmatpush1.msra.mxu0 0.0
    %5983 = vmatprep.subr.mxu0 0.0
    %5984 = vmatpush1.msra.mxu0 %v413
    %5985 = vmatprep.subr.mxu0 0.0
    %5986 = vmatpush1.msra.mxu0 %v412
    %5987 = vmatprep.subr.mxu0 0.0
    %5988 = vmatpush1.msra.mxu0 %v411
    %5989 = vmatprep.subr.mxu0 0.0
    %5990 = vmatpush1.msra.mxu0 %v410
    %5991 = vmatprep.subr.mxu0 0.0
    %5992 = vmatpush2.msra.mxu0 0.0
    %5993 = vmatprep.subr.mxu0 0.0
    %5994 = vmatpush2.msra.mxu0 0.0
    %5995 = vmatprep.subr.mxu0 0.0
    %5996 = vmatpush2.msra.mxu0 0.0
    %5997 = vmatprep.subr.mxu0 0.0
    %5998 = vmatpush2.msra.mxu0 0.0
    %5999 = vmatprep.subr.mxu0 0.0
    %6000 = vmatpush2.msra.mxu0 0.0
    %6001 = vmatprep.subr.mxu0 0.0
    %6002 = vmatpush2.msra.mxu0 0.0
    %6003 = vmatprep.subr.mxu0 0.0
    %6004 = vmatpush2.msra.mxu0 0.0
    %6005 = vmatprep.subr.mxu0 0.0
    %6006 = vmatpush2.msra.mxu0 0.0
    %6007 = vmatprep.subr.mxu0 0.0
    %6008 = vmatpush2.msra.mxu0 0.0
    %6009 = vmatprep.subr.mxu0 0.0
    %6010 = vmatpush2.msra.mxu0 0.0
    %6011 = vmatprep.subr.mxu0 0.0
    %6012 = vmatpush2.msra.mxu0 0.0
    %6013 = vmatprep.subr.mxu0 0.0
    %6014 = vmatpush2.msra.mxu0 0.0
    %6015 = vmatprep.subr.mxu0 0.0
    %6016 = vmatpush2.msra.mxu0 0.0
    %6017 = vmatprep.subr.mxu0 0.0
    %6018 = vmatpush2.msra.mxu0 0.0
    %6019 = vmatprep.subr.mxu0 0.0
    %6020 = vmatpush2.msra.mxu0 0.0
    %6021 = vmatprep.subr.mxu0 0.0
    %6022 = vmatpush2.msra.mxu0 0.0
    %6023 = vmatprep.mubr.f32.mxu0 0.0
    %6024 = vmatmul.mubr.f32.gmra.mxu0 %v5434
    %v6025 = vpop.f32.mrf.mxu0
    %v6026 = vadd.f32 0.0, %v6025
    %v6027 = vpop.f32.mrf.mxu0
    %6028 = vdwg.mxu0
    %v6029 = vadd.f32 %v5958, %v6026
    %v6030 = vxor.u32 %v6029, 2147483648
    %v6031 = vmul.f32 %v6030, 1.442695
    %v6032 = vpow.pop %v6031
    %v6033 = vadd.f32 %v6032, 1.0
    %v6034 = vrcp.pop %v6033
    %v6035 = vmul.f32 1.0, %v6034
    %v6036 = vld [vmem:[%s229 + $0xc] sm:$0x3]
    %6037 = vmatprep.subr.mxu0 0.0
    %6038 = vmatpush1.msra.mxu0 0.0
    %6039 = vmatprep.subr.mxu0 0.0
    %6040 = vmatpush1.msra.mxu0 0.0
    %6041 = vmatprep.subr.mxu0 0.0
    %6042 = vmatpush1.msra.mxu0 0.0
    %6043 = vmatprep.subr.mxu0 0.0
    %6044 = vmatpush1.msra.mxu0 0.0
    %6045 = vmatprep.subr.mxu0 0.0
    %6046 = vmatpush1.msra.mxu0 0.0
    %6047 = vmatprep.subr.mxu0 0.0
    %6048 = vmatpush1.msra.mxu0 0.0
    %6049 = vmatprep.subr.mxu0 0.0
    %6050 = vmatpush1.msra.mxu0 0.0
    %6051 = vmatprep.subr.mxu0 0.0
    %6052 = vmatpush1.msra.mxu0 0.0
    %6053 = vmatprep.subr.mxu0 0.0
    %6054 = vmatpush1.msra.mxu0 0.0
    %6055 = vmatprep.subr.mxu0 0.0
    %6056 = vmatpush1.msra.mxu0 0.0
    %6057 = vmatprep.subr.mxu0 0.0
    %6058 = vmatpush1.msra.mxu0 0.0
    %6059 = vmatprep.subr.mxu0 0.0
    %6060 = vmatpush1.msra.mxu0 0.0
    %6061 = vmatprep.subr.mxu0 0.0
    %6062 = vmatpush1.msra.mxu0 %v418
    %6063 = vmatprep.subr.mxu0 0.0
    %6064 = vmatpush1.msra.mxu0 %v417
    %6065 = vmatprep.subr.mxu0 0.0
    %6066 = vmatpush1.msra.mxu0 %v416
    %6067 = vmatprep.subr.mxu0 0.0
    %6068 = vmatpush1.msra.mxu0 %v415
    %6069 = vmatprep.subr.mxu0 0.0
    %6070 = vmatpush2.msra.mxu0 0.0
    %6071 = vmatprep.subr.mxu0 0.0
    %6072 = vmatpush2.msra.mxu0 0.0
    %6073 = vmatprep.subr.mxu0 0.0
    %6074 = vmatpush2.msra.mxu0 0.0
    %6075 = vmatprep.subr.mxu0 0.0
    %6076 = vmatpush2.msra.mxu0 0.0
    %6077 = vmatprep.subr.mxu0 0.0
    %6078 = vmatpush2.msra.mxu0 0.0
    %6079 = vmatprep.subr.mxu0 0.0
    %6080 = vmatpush2.msra.mxu0 0.0
    %6081 = vmatprep.subr.mxu0 0.0
    %6082 = vmatpush2.msra.mxu0 0.0
    %6083 = vmatprep.subr.mxu0 0.0
    %6084 = vmatpush2.msra.mxu0 0.0
    %6085 = vmatprep.subr.mxu0 0.0
    %6086 = vmatpush2.msra.mxu0 0.0
    %6087 = vmatprep.subr.mxu0 0.0
    %6088 = vmatpush2.msra.mxu0 0.0
    %6089 = vmatprep.subr.mxu0 0.0
    %6090 = vmatpush2.msra.mxu0 0.0
    %6091 = vmatprep.subr.mxu0 0.0
    %6092 = vmatpush2.msra.mxu0 0.0
    %6093 = vmatprep.subr.mxu0 0.0
    %6094 = vmatpush2.msra.mxu0 0.0
    %6095 = vmatprep.subr.mxu0 0.0
    %6096 = vmatpush2.msra.mxu0 0.0
    %6097 = vmatprep.subr.mxu0 0.0
    %6098 = vmatpush2.msra.mxu0 0.0
    %6099 = vmatprep.subr.mxu0 0.0
    %6100 = vmatpush2.msra.mxu0 0.0
    %6101 = vmatprep.mubr.f32.mxu0 0.0
    %6102 = vmatmul.mubr.f32.gmra.mxu0 %v5434
    %v6103 = vpop.f32.mrf.mxu0
    %v6104 = vadd.f32 0.0, %v6103
    %v6105 = vpop.f32.mrf.mxu0
    %6106 = vdwg.mxu0
    %v6107 = vadd.f32 %v6036, %v6104
    %v6108 = vxor.u32 %v6107, 2147483648
    %v6109 = vmul.f32 %v6108, 1.442695
    %v6110 = vpow.pop %v6109
    %v6111 = vadd.f32 %v6110, 1.0
    %v6112 = vrcp.pop %v6111
    %v6113 = vmul.f32 1.0, %v6112
    %v6114 = vld [vmem:[%s318 + $0xc] sm:$0x3]
    %6115 = vmatprep.subr.mxu0 0.0
    %6116 = vmatpush1.msra.mxu0 0.0
    %6117 = vmatprep.subr.mxu0 0.0
    %6118 = vmatpush1.msra.mxu0 0.0
    %6119 = vmatprep.subr.mxu0 0.0
    %6120 = vmatpush1.msra.mxu0 0.0
    %6121 = vmatprep.subr.mxu0 0.0
    %6122 = vmatpush1.msra.mxu0 0.0
    %6123 = vmatprep.subr.mxu0 0.0
    %6124 = vmatpush1.msra.mxu0 0.0
    %6125 = vmatprep.subr.mxu0 0.0
    %6126 = vmatpush1.msra.mxu0 0.0
    %6127 = vmatprep.subr.mxu0 0.0
    %6128 = vmatpush1.msra.mxu0 0.0
    %6129 = vmatprep.subr.mxu0 0.0
    %6130 = vmatpush1.msra.mxu0 0.0
    %6131 = vmatprep.subr.mxu0 0.0
    %6132 = vmatpush1.msra.mxu0 0.0
    %6133 = vmatprep.subr.mxu0 0.0
    %6134 = vmatpush1.msra.mxu0 0.0
    %6135 = vmatprep.subr.mxu0 0.0
    %6136 = vmatpush1.msra.mxu0 0.0
    %6137 = vmatprep.subr.mxu0 0.0
    %6138 = vmatpush1.msra.mxu0 0.0
    %6139 = vmatprep.subr.mxu0 0.0
    %6140 = vmatpush1.msra.mxu0 %v423
    %6141 = vmatprep.subr.mxu0 0.0
    %6142 = vmatpush1.msra.mxu0 %v422
    %6143 = vmatprep.subr.mxu0 0.0
    %6144 = vmatpush1.msra.mxu0 %v421
    %6145 = vmatprep.subr.mxu0 0.0
    %6146 = vmatpush1.msra.mxu0 %v420
    %6147 = vmatprep.subr.mxu0 0.0
    %6148 = vmatpush2.msra.mxu0 0.0
    %6149 = vmatprep.subr.mxu0 0.0
    %6150 = vmatpush2.msra.mxu0 0.0
    %6151 = vmatprep.subr.mxu0 0.0
    %6152 = vmatpush2.msra.mxu0 0.0
    %6153 = vmatprep.subr.mxu0 0.0
    %6154 = vmatpush2.msra.mxu0 0.0
    %6155 = vmatprep.subr.mxu0 0.0
    %6156 = vmatpush2.msra.mxu0 0.0
    %6157 = vmatprep.subr.mxu0 0.0
    %6158 = vmatpush2.msra.mxu0 0.0
    %6159 = vmatprep.subr.mxu0 0.0
    %6160 = vmatpush2.msra.mxu0 0.0
    %6161 = vmatprep.subr.mxu0 0.0
    %6162 = vmatpush2.msra.mxu0 0.0
    %6163 = vmatprep.subr.mxu0 0.0
    %6164 = vmatpush2.msra.mxu0 0.0
    %6165 = vmatprep.subr.mxu0 0.0
    %6166 = vmatpush2.msra.mxu0 0.0
    %6167 = vmatprep.subr.mxu0 0.0
    %6168 = vmatpush2.msra.mxu0 0.0
    %6169 = vmatprep.subr.mxu0 0.0
    %6170 = vmatpush2.msra.mxu0 0.0
    %6171 = vmatprep.subr.mxu0 0.0
    %6172 = vmatpush2.msra.mxu0 0.0
    %6173 = vmatprep.subr.mxu0 0.0
    %6174 = vmatpush2.msra.mxu0 0.0
    %6175 = vmatprep.subr.mxu0 0.0
    %6176 = vmatpush2.msra.mxu0 0.0
    %6177 = vmatprep.subr.mxu0 0.0
    %6178 = vmatpush2.msra.mxu0 0.0
    %6179 = vmatprep.mubr.f32.mxu0 0.0
    %6180 = vmatmul.mubr.f32.gmra.mxu0 %v5434
    %v6181 = vpop.f32.mrf.mxu0
    %v6182 = vadd.f32 0.0, %v6181
    %v6183 = vpop.f32.mrf.mxu0
    %6184 = vdwg.mxu0
    %v6185 = vadd.f32 %v6114, %v6182
    %v6186 = vtanh.pop %v6185
    %v6187 = vld [vmem:[%s407 + $0xc] sm:$0x3]
    %6188 = vmatprep.subr.mxu0 0.0
    %6189 = vmatpush1.msra.mxu0 0.0
    %6190 = vmatprep.subr.mxu0 0.0
    %6191 = vmatpush1.msra.mxu0 0.0
    %6192 = vmatprep.subr.mxu0 0.0
    %6193 = vmatpush1.msra.mxu0 0.0
    %6194 = vmatprep.subr.mxu0 0.0
    %6195 = vmatpush1.msra.mxu0 0.0
    %6196 = vmatprep.subr.mxu0 0.0
    %6197 = vmatpush1.msra.mxu0 0.0
    %6198 = vmatprep.subr.mxu0 0.0
    %6199 = vmatpush1.msra.mxu0 0.0
    %6200 = vmatprep.subr.mxu0 0.0
    %6201 = vmatpush1.msra.mxu0 0.0
    %6202 = vmatprep.subr.mxu0 0.0
    %6203 = vmatpush1.msra.mxu0 0.0
    %6204 = vmatprep.subr.mxu0 0.0
    %6205 = vmatpush1.msra.mxu0 0.0
    %6206 = vmatprep.subr.mxu0 0.0
    %6207 = vmatpush1.msra.mxu0 0.0
    %6208 = vmatprep.subr.mxu0 0.0
    %6209 = vmatpush1.msra.mxu0 0.0
    %6210 = vmatprep.subr.mxu0 0.0
    %6211 = vmatpush1.msra.mxu0 0.0
    %6212 = vmatprep.subr.mxu0 0.0
    %6213 = vmatpush1.msra.mxu0 %v428
    %6214 = vmatprep.subr.mxu0 0.0
    %6215 = vmatpush1.msra.mxu0 %v427
    %6216 = vmatprep.subr.mxu0 0.0
    %6217 = vmatpush1.msra.mxu0 %v426
    %6218 = vmatprep.subr.mxu0 0.0
    %6219 = vmatpush1.msra.mxu0 %v425
    %6220 = vmatprep.subr.mxu0 0.0
    %6221 = vmatpush2.msra.mxu0 0.0
    %6222 = vmatprep.subr.mxu0 0.0
    %6223 = vmatpush2.msra.mxu0 0.0
    %6224 = vmatprep.subr.mxu0 0.0
    %6225 = vmatpush2.msra.mxu0 0.0
    %6226 = vmatprep.subr.mxu0 0.0
    %6227 = vmatpush2.msra.mxu0 0.0
    %6228 = vmatprep.subr.mxu0 0.0
    %6229 = vmatpush2.msra.mxu0 0.0
    %6230 = vmatprep.subr.mxu0 0.0
    %6231 = vmatpush2.msra.mxu0 0.0
    %6232 = vmatprep.subr.mxu0 0.0
    %6233 = vmatpush2.msra.mxu0 0.0
    %6234 = vmatprep.subr.mxu0 0.0
    %6235 = vmatpush2.msra.mxu0 0.0
    %6236 = vmatprep.subr.mxu0 0.0
    %6237 = vmatpush2.msra.mxu0 0.0
    %6238 = vmatprep.subr.mxu0 0.0
    %6239 = vmatpush2.msra.mxu0 0.0
    %6240 = vmatprep.subr.mxu0 0.0
    %6241 = vmatpush2.msra.mxu0 0.0
    %6242 = vmatprep.subr.mxu0 0.0
    %6243 = vmatpush2.msra.mxu0 0.0
    %6244 = vmatprep.subr.mxu0 0.0
    %6245 = vmatpush2.msra.mxu0 0.0
    %6246 = vmatprep.subr.mxu0 0.0
    %6247 = vmatpush2.msra.mxu0 0.0
    %6248 = vmatprep.subr.mxu0 0.0
    %6249 = vmatpush2.msra.mxu0 0.0
    %6250 = vmatprep.subr.mxu0 0.0
    %6251 = vmatpush2.msra.mxu0 0.0
    %6252 = vmatprep.mubr.f32.mxu0 0.0
    %6253 = vmatmul.mubr.f32.gmra.mxu0 %v5434
    %v6254 = vpop.f32.mrf.mxu0
    %v6255 = vadd.f32 0.0, %v6254
    %v6256 = vpop.f32.mrf.mxu0
    %6257 = vdwg.mxu0
    %v6258 = vadd.f32 %v6187, %v6255
    %v6259 = vxor.u32 %v6258, 2147483648
    %v6260 = vmul.f32 %v6259, 1.442695
    %v6261 = vpow.pop %v6260
    %v6262 = vadd.f32 %v6261, 1.0
    %v6263 = vrcp.pop %v6262
    %v6264 = vmul.f32 1.0, %v6263
    %v6265 = vmul.f32 %v6113, %v5357
    %v6266 = vmul.f32 %v6035, %v6186
    %v6267 = vadd.f32 %v6265, %v6266
    %v6268 = vtanh.pop %v6267
    %v6269 = vmul.f32 %v6264, %v6268
    %v6271 = vsel %vm140, %v5953, 0
    %6273 = vmatprep.subr.mxu0 0.0
    %6274 = vmatpush1.msra.mxu0 0.0
    %6275 = vmatprep.subr.mxu0 0.0
    %6276 = vmatpush1.msra.mxu0 0.0
    %6277 = vmatprep.subr.mxu0 0.0
    %6278 = vmatpush1.msra.mxu0 0.0
    %6279 = vmatprep.subr.mxu0 0.0
    %6280 = vmatpush1.msra.mxu0 0.0
    %6281 = vmatprep.subr.mxu0 0.0
    %6282 = vmatpush1.msra.mxu0 0.0
    %6283 = vmatprep.subr.mxu0 0.0
    %6284 = vmatpush1.msra.mxu0 0.0
    %6285 = vmatprep.subr.mxu0 0.0
    %6286 = vmatpush1.msra.mxu0 0.0
    %6287 = vmatprep.subr.mxu0 0.0
    %6288 = vmatpush1.msra.mxu0 0.0
    %6289 = vmatprep.subr.mxu0 0.0
    %6290 = vmatpush1.msra.mxu0 0.0
    %6291 = vmatprep.subr.mxu0 0.0
    %6292 = vmatpush1.msra.mxu0 0.0
    %6293 = vmatprep.subr.mxu0 0.0
    %6294 = vmatpush1.msra.mxu0 0.0
    %6295 = vmatprep.subr.mxu0 0.0
    %6296 = vmatpush1.msra.mxu0 0.0
    %6297 = vmatprep.subr.mxu0 0.0
    %6298 = vmatpush1.msra.mxu0 %v451
    %6299 = vmatprep.subr.mxu0 0.0
    %6300 = vmatpush1.msra.mxu0 %v450
    %6301 = vmatprep.subr.mxu0 0.0
    %6302 = vmatpush1.msra.mxu0 %v449
    %6303 = vmatprep.subr.mxu0 0.0
    %6304 = vmatpush1.msra.mxu0 %v448
    %6305 = vmatprep.subr.mxu0 0.0
    %6306 = vmatpush2.msra.mxu0 0.0
    %6307 = vmatprep.subr.mxu0 0.0
    %6308 = vmatpush2.msra.mxu0 0.0
    %6309 = vmatprep.subr.mxu0 0.0
    %6310 = vmatpush2.msra.mxu0 0.0
    %6311 = vmatprep.subr.mxu0 0.0
    %6312 = vmatpush2.msra.mxu0 0.0
    %6313 = vmatprep.subr.mxu0 0.0
    %6314 = vmatpush2.msra.mxu0 0.0
    %6315 = vmatprep.subr.mxu0 0.0
    %6316 = vmatpush2.msra.mxu0 0.0
    %6317 = vmatprep.subr.mxu0 0.0
    %6318 = vmatpush2.msra.mxu0 0.0
    %6319 = vmatprep.subr.mxu0 0.0
    %6320 = vmatpush2.msra.mxu0 0.0
    %6321 = vmatprep.subr.mxu0 0.0
    %6322 = vmatpush2.msra.mxu0 0.0
    %6323 = vmatprep.subr.mxu0 0.0
    %6324 = vmatpush2.msra.mxu0 0.0
    %6325 = vmatprep.subr.mxu0 0.0
    %6326 = vmatpush2.msra.mxu0 0.0
    %6327 = vmatprep.subr.mxu0 0.0
    %6328 = vmatpush2.msra.mxu0 0.0
    %6329 = vmatprep.subr.mxu0 0.0
    %6330 = vmatpush2.msra.mxu0 0.0
    %6331 = vmatprep.subr.mxu0 0.0
    %6332 = vmatpush2.msra.mxu0 0.0
    %6333 = vmatprep.subr.mxu0 0.0
    %6334 = vmatpush2.msra.mxu0 0.0
    %6335 = vmatprep.subr.mxu0 0.0
    %6336 = vmatpush2.msra.mxu0 0.0
    %6337 = vmatprep.mubr.f32.mxu0 0.0
    %6338 = vmatmul.mubr.f32.gmra.mxu0 %v6271
    %v6339 = vpop.f32.mrf.mxu0
    %v6340 = vadd.f32 0.0, %v6339
    %v6341 = vpop.f32.mrf.mxu0
    %6342 = vdwg.mxu0
    %v6344 = vsel %vm140, %v6269, 0
    %6346 = vmatprep.subr.mxu0 0.0
    %6347 = vmatpush1.msra.mxu0 0.0
    %6348 = vmatprep.subr.mxu0 0.0
    %6349 = vmatpush1.msra.mxu0 0.0
    %6350 = vmatprep.subr.mxu0 0.0
    %6351 = vmatpush1.msra.mxu0 0.0
    %6352 = vmatprep.subr.mxu0 0.0
    %6353 = vmatpush1.msra.mxu0 0.0
    %6354 = vmatprep.subr.mxu0 0.0
    %6355 = vmatpush1.msra.mxu0 0.0
    %6356 = vmatprep.subr.mxu0 0.0
    %6357 = vmatpush1.msra.mxu0 0.0
    %6358 = vmatprep.subr.mxu0 0.0
    %6359 = vmatpush1.msra.mxu0 0.0
    %6360 = vmatprep.subr.mxu0 0.0
    %6361 = vmatpush1.msra.mxu0 0.0
    %6362 = vmatprep.subr.mxu0 0.0
    %6363 = vmatpush1.msra.mxu0 0.0
    %6364 = vmatprep.subr.mxu0 0.0
    %6365 = vmatpush1.msra.mxu0 0.0
    %6366 = vmatprep.subr.mxu0 0.0
    %6367 = vmatpush1.msra.mxu0 0.0
    %6368 = vmatprep.subr.mxu0 0.0
    %6369 = vmatpush1.msra.mxu0 0.0
    %6370 = vmatprep.subr.mxu0 0.0
    %6371 = vmatpush1.msra.mxu0 %v432
    %6372 = vmatprep.subr.mxu0 0.0
    %6373 = vmatpush1.msra.mxu0 %v431
    %6374 = vmatprep.subr.mxu0 0.0
    %6375 = vmatpush1.msra.mxu0 %v430
    %6376 = vmatprep.subr.mxu0 0.0
    %6377 = vmatpush1.msra.mxu0 %v429
    %6378 = vmatprep.subr.mxu0 0.0
    %6379 = vmatpush2.msra.mxu0 0.0
    %6380 = vmatprep.subr.mxu0 0.0
    %6381 = vmatpush2.msra.mxu0 0.0
    %6382 = vmatprep.subr.mxu0 0.0
    %6383 = vmatpush2.msra.mxu0 0.0
    %6384 = vmatprep.subr.mxu0 0.0
    %6385 = vmatpush2.msra.mxu0 0.0
    %6386 = vmatprep.subr.mxu0 0.0
    %6387 = vmatpush2.msra.mxu0 0.0
    %6388 = vmatprep.subr.mxu0 0.0
    %6389 = vmatpush2.msra.mxu0 0.0
    %6390 = vmatprep.subr.mxu0 0.0
    %6391 = vmatpush2.msra.mxu0 0.0
    %6392 = vmatprep.subr.mxu0 0.0
    %6393 = vmatpush2.msra.mxu0 0.0
    %6394 = vmatprep.subr.mxu0 0.0
    %6395 = vmatpush2.msra.mxu0 0.0
    %6396 = vmatprep.subr.mxu0 0.0
    %6397 = vmatpush2.msra.mxu0 0.0
    %6398 = vmatprep.subr.mxu0 0.0
    %6399 = vmatpush2.msra.mxu0 0.0
    %6400 = vmatprep.subr.mxu0 0.0
    %6401 = vmatpush2.msra.mxu0 0.0
    %6402 = vmatprep.subr.mxu0 0.0
    %6403 = vmatpush2.msra.mxu0 0.0
    %6404 = vmatprep.subr.mxu0 0.0
    %6405 = vmatpush2.msra.mxu0 0.0
    %6406 = vmatprep.subr.mxu0 0.0
    %6407 = vmatpush2.msra.mxu0 0.0
    %6408 = vmatprep.subr.mxu0 0.0
    %6409 = vmatpush2.msra.mxu0 0.0
    %6410 = vmatprep.mubr.f32.mxu0 0.0
    %6411 = vmatmul.mubr.f32.gmra.mxu0 %v6344
    %v6412 = vpop.f32.mrf.mxu0
    %v6413 = vadd.f32 %v6340, %v6412
    %v6414 = vpop.f32.mrf.mxu0
    %6415 = vdwg.mxu0
    %v6416 = vadd.f32 %v6413, %v472
    %v6417 = vxor.u32 %v6416, 2147483648
    %v6418 = vmul.f32 %v6417, 1.442695
    %v6419 = vpow.pop %v6418
    %v6420 = vadd.f32 %v6419, 1.0
    %v6421 = vrcp.pop %v6420
    %v6422 = vmul.f32 1.0, %v6421
    %6423 = vmatprep.subr.mxu0 0.0
    %6424 = vmatpush1.msra.mxu0 0.0
    %6425 = vmatprep.subr.mxu0 0.0
    %6426 = vmatpush1.msra.mxu0 0.0
    %6427 = vmatprep.subr.mxu0 0.0
    %6428 = vmatpush1.msra.mxu0 0.0
    %6429 = vmatprep.subr.mxu0 0.0
    %6430 = vmatpush1.msra.mxu0 0.0
    %6431 = vmatprep.subr.mxu0 0.0
    %6432 = vmatpush1.msra.mxu0 0.0
    %6433 = vmatprep.subr.mxu0 0.0
    %6434 = vmatpush1.msra.mxu0 0.0
    %6435 = vmatprep.subr.mxu0 0.0
    %6436 = vmatpush1.msra.mxu0 0.0
    %6437 = vmatprep.subr.mxu0 0.0
    %6438 = vmatpush1.msra.mxu0 0.0
    %6439 = vmatprep.subr.mxu0 0.0
    %6440 = vmatpush1.msra.mxu0 0.0
    %6441 = vmatprep.subr.mxu0 0.0
    %6442 = vmatpush1.msra.mxu0 0.0
    %6443 = vmatprep.subr.mxu0 0.0
    %6444 = vmatpush1.msra.mxu0 0.0
    %6445 = vmatprep.subr.mxu0 0.0
    %6446 = vmatpush1.msra.mxu0 0.0
    %6447 = vmatprep.subr.mxu0 0.0
    %6448 = vmatpush1.msra.mxu0 %v456
    %6449 = vmatprep.subr.mxu0 0.0
    %6450 = vmatpush1.msra.mxu0 %v455
    %6451 = vmatprep.subr.mxu0 0.0
    %6452 = vmatpush1.msra.mxu0 %v454
    %6453 = vmatprep.subr.mxu0 0.0
    %6454 = vmatpush1.msra.mxu0 %v453
    %6455 = vmatprep.subr.mxu0 0.0
    %6456 = vmatpush2.msra.mxu0 0.0
    %6457 = vmatprep.subr.mxu0 0.0
    %6458 = vmatpush2.msra.mxu0 0.0
    %6459 = vmatprep.subr.mxu0 0.0
    %6460 = vmatpush2.msra.mxu0 0.0
    %6461 = vmatprep.subr.mxu0 0.0
    %6462 = vmatpush2.msra.mxu0 0.0
    %6463 = vmatprep.subr.mxu0 0.0
    %6464 = vmatpush2.msra.mxu0 0.0
    %6465 = vmatprep.subr.mxu0 0.0
    %6466 = vmatpush2.msra.mxu0 0.0
    %6467 = vmatprep.subr.mxu0 0.0
    %6468 = vmatpush2.msra.mxu0 0.0
    %6469 = vmatprep.subr.mxu0 0.0
    %6470 = vmatpush2.msra.mxu0 0.0
    %6471 = vmatprep.subr.mxu0 0.0
    %6472 = vmatpush2.msra.mxu0 0.0
    %6473 = vmatprep.subr.mxu0 0.0
    %6474 = vmatpush2.msra.mxu0 0.0
    %6475 = vmatprep.subr.mxu0 0.0
    %6476 = vmatpush2.msra.mxu0 0.0
    %6477 = vmatprep.subr.mxu0 0.0
    %6478 = vmatpush2.msra.mxu0 0.0
    %6479 = vmatprep.subr.mxu0 0.0
    %6480 = vmatpush2.msra.mxu0 0.0
    %6481 = vmatprep.subr.mxu0 0.0
    %6482 = vmatpush2.msra.mxu0 0.0
    %6483 = vmatprep.subr.mxu0 0.0
    %6484 = vmatpush2.msra.mxu0 0.0
    %6485 = vmatprep.subr.mxu0 0.0
    %6486 = vmatpush2.msra.mxu0 0.0
    %6487 = vmatprep.mubr.f32.mxu0 0.0
    %6488 = vmatmul.mubr.f32.gmra.mxu0 %v6271
    %v6489 = vpop.f32.mrf.mxu0
    %v6490 = vadd.f32 0.0, %v6489
    %v6491 = vpop.f32.mrf.mxu0
    %6492 = vdwg.mxu0
    %6493 = vmatprep.subr.mxu0 0.0
    %6494 = vmatpush1.msra.mxu0 0.0
    %6495 = vmatprep.subr.mxu0 0.0
    %6496 = vmatpush1.msra.mxu0 0.0
    %6497 = vmatprep.subr.mxu0 0.0
    %6498 = vmatpush1.msra.mxu0 0.0
    %6499 = vmatprep.subr.mxu0 0.0
    %6500 = vmatpush1.msra.mxu0 0.0
    %6501 = vmatprep.subr.mxu0 0.0
    %6502 = vmatpush1.msra.mxu0 0.0
    %6503 = vmatprep.subr.mxu0 0.0
    %6504 = vmatpush1.msra.mxu0 0.0
    %6505 = vmatprep.subr.mxu0 0.0
    %6506 = vmatpush1.msra.mxu0 0.0
    %6507 = vmatprep.subr.mxu0 0.0
    %6508 = vmatpush1.msra.mxu0 0.0
    %6509 = vmatprep.subr.mxu0 0.0
    %6510 = vmatpush1.msra.mxu0 0.0
    %6511 = vmatprep.subr.mxu0 0.0
    %6512 = vmatpush1.msra.mxu0 0.0
    %6513 = vmatprep.subr.mxu0 0.0
    %6514 = vmatpush1.msra.mxu0 0.0
    %6515 = vmatprep.subr.mxu0 0.0
    %6516 = vmatpush1.msra.mxu0 0.0
    %6517 = vmatprep.subr.mxu0 0.0
    %6518 = vmatpush1.msra.mxu0 %v437
    %6519 = vmatprep.subr.mxu0 0.0
    %6520 = vmatpush1.msra.mxu0 %v436
    %6521 = vmatprep.subr.mxu0 0.0
    %6522 = vmatpush1.msra.mxu0 %v435
    %6523 = vmatprep.subr.mxu0 0.0
    %6524 = vmatpush1.msra.mxu0 %v434
    %6525 = vmatprep.subr.mxu0 0.0
    %6526 = vmatpush2.msra.mxu0 0.0
    %6527 = vmatprep.subr.mxu0 0.0
    %6528 = vmatpush2.msra.mxu0 0.0
    %6529 = vmatprep.subr.mxu0 0.0
    %6530 = vmatpush2.msra.mxu0 0.0
    %6531 = vmatprep.subr.mxu0 0.0
    %6532 = vmatpush2.msra.mxu0 0.0
    %6533 = vmatprep.subr.mxu0 0.0
    %6534 = vmatpush2.msra.mxu0 0.0
    %6535 = vmatprep.subr.mxu0 0.0
    %6536 = vmatpush2.msra.mxu0 0.0
    %6537 = vmatprep.subr.mxu0 0.0
    %6538 = vmatpush2.msra.mxu0 0.0
    %6539 = vmatprep.subr.mxu0 0.0
    %6540 = vmatpush2.msra.mxu0 0.0
    %6541 = vmatprep.subr.mxu0 0.0
    %6542 = vmatpush2.msra.mxu0 0.0
    %6543 = vmatprep.subr.mxu0 0.0
    %6544 = vmatpush2.msra.mxu0 0.0
    %6545 = vmatprep.subr.mxu0 0.0
    %6546 = vmatpush2.msra.mxu0 0.0
    %6547 = vmatprep.subr.mxu0 0.0
    %6548 = vmatpush2.msra.mxu0 0.0
    %6549 = vmatprep.subr.mxu0 0.0
    %6550 = vmatpush2.msra.mxu0 0.0
    %6551 = vmatprep.subr.mxu0 0.0
    %6552 = vmatpush2.msra.mxu0 0.0
    %6553 = vmatprep.subr.mxu0 0.0
    %6554 = vmatpush2.msra.mxu0 0.0
    %6555 = vmatprep.subr.mxu0 0.0
    %6556 = vmatpush2.msra.mxu0 0.0
    %6557 = vmatprep.mubr.f32.mxu0 0.0
    %6558 = vmatmul.mubr.f32.gmra.mxu0 %v6344
    %v6559 = vpop.f32.mrf.mxu0
    %v6560 = vadd.f32 %v6490, %v6559
    %v6561 = vpop.f32.mrf.mxu0
    %6562 = vdwg.mxu0
    %v6563 = vadd.f32 %v6560, %v480
    %v6564 = vxor.u32 %v6563, 2147483648
    %v6565 = vmul.f32 %v6564, 1.442695
    %v6566 = vpow.pop %v6565
    %v6567 = vadd.f32 %v6566, 1.0
    %v6568 = vrcp.pop %v6567
    %v6569 = vmul.f32 1.0, %v6568
    %6570 = vmatprep.subr.mxu0 0.0
    %6571 = vmatpush1.msra.mxu0 0.0
    %6572 = vmatprep.subr.mxu0 0.0
    %6573 = vmatpush1.msra.mxu0 0.0
    %6574 = vmatprep.subr.mxu0 0.0
    %6575 = vmatpush1.msra.mxu0 0.0
    %6576 = vmatprep.subr.mxu0 0.0
    %6577 = vmatpush1.msra.mxu0 0.0
    %6578 = vmatprep.subr.mxu0 0.0
    %6579 = vmatpush1.msra.mxu0 0.0
    %6580 = vmatprep.subr.mxu0 0.0
    %6581 = vmatpush1.msra.mxu0 0.0
    %6582 = vmatprep.subr.mxu0 0.0
    %6583 = vmatpush1.msra.mxu0 0.0
    %6584 = vmatprep.subr.mxu0 0.0
    %6585 = vmatpush1.msra.mxu0 0.0
    %6586 = vmatprep.subr.mxu0 0.0
    %6587 = vmatpush1.msra.mxu0 0.0
    %6588 = vmatprep.subr.mxu0 0.0
    %6589 = vmatpush1.msra.mxu0 0.0
    %6590 = vmatprep.subr.mxu0 0.0
    %6591 = vmatpush1.msra.mxu0 0.0
    %6592 = vmatprep.subr.mxu0 0.0
    %6593 = vmatpush1.msra.mxu0 0.0
    %6594 = vmatprep.subr.mxu0 0.0
    %6595 = vmatpush1.msra.mxu0 %v461
    %6596 = vmatprep.subr.mxu0 0.0
    %6597 = vmatpush1.msra.mxu0 %v460
    %6598 = vmatprep.subr.mxu0 0.0
    %6599 = vmatpush1.msra.mxu0 %v459
    %6600 = vmatprep.subr.mxu0 0.0
    %6601 = vmatpush1.msra.mxu0 %v458
    %6602 = vmatprep.subr.mxu0 0.0
    %6603 = vmatpush2.msra.mxu0 0.0
    %6604 = vmatprep.subr.mxu0 0.0
    %6605 = vmatpush2.msra.mxu0 0.0
    %6606 = vmatprep.subr.mxu0 0.0
    %6607 = vmatpush2.msra.mxu0 0.0
    %6608 = vmatprep.subr.mxu0 0.0
    %6609 = vmatpush2.msra.mxu0 0.0
    %6610 = vmatprep.subr.mxu0 0.0
    %6611 = vmatpush2.msra.mxu0 0.0
    %6612 = vmatprep.subr.mxu0 0.0
    %6613 = vmatpush2.msra.mxu0 0.0
    %6614 = vmatprep.subr.mxu0 0.0
    %6615 = vmatpush2.msra.mxu0 0.0
    %6616 = vmatprep.subr.mxu0 0.0
    %6617 = vmatpush2.msra.mxu0 0.0
    %6618 = vmatprep.subr.mxu0 0.0
    %6619 = vmatpush2.msra.mxu0 0.0
    %6620 = vmatprep.subr.mxu0 0.0
    %6621 = vmatpush2.msra.mxu0 0.0
    %6622 = vmatprep.subr.mxu0 0.0
    %6623 = vmatpush2.msra.mxu0 0.0
    %6624 = vmatprep.subr.mxu0 0.0
    %6625 = vmatpush2.msra.mxu0 0.0
    %6626 = vmatprep.subr.mxu0 0.0
    %6627 = vmatpush2.msra.mxu0 0.0
    %6628 = vmatprep.subr.mxu0 0.0
    %6629 = vmatpush2.msra.mxu0 0.0
    %6630 = vmatprep.subr.mxu0 0.0
    %6631 = vmatpush2.msra.mxu0 0.0
    %6632 = vmatprep.subr.mxu0 0.0
    %6633 = vmatpush2.msra.mxu0 0.0
    %6634 = vmatprep.mubr.f32.mxu0 0.0
    %6635 = vmatmul.mubr.f32.gmra.mxu0 %v6271
    %v6636 = vpop.f32.mrf.mxu0
    %v6637 = vadd.f32 0.0, %v6636
    %v6638 = vpop.f32.mrf.mxu0
    %6639 = vdwg.mxu0
    %6640 = vmatprep.subr.mxu0 0.0
    %6641 = vmatpush1.msra.mxu0 0.0
    %6642 = vmatprep.subr.mxu0 0.0
    %6643 = vmatpush1.msra.mxu0 0.0
    %6644 = vmatprep.subr.mxu0 0.0
    %6645 = vmatpush1.msra.mxu0 0.0
    %6646 = vmatprep.subr.mxu0 0.0
    %6647 = vmatpush1.msra.mxu0 0.0
    %6648 = vmatprep.subr.mxu0 0.0
    %6649 = vmatpush1.msra.mxu0 0.0
    %6650 = vmatprep.subr.mxu0 0.0
    %6651 = vmatpush1.msra.mxu0 0.0
    %6652 = vmatprep.subr.mxu0 0.0
    %6653 = vmatpush1.msra.mxu0 0.0
    %6654 = vmatprep.subr.mxu0 0.0
    %6655 = vmatpush1.msra.mxu0 0.0
    %6656 = vmatprep.subr.mxu0 0.0
    %6657 = vmatpush1.msra.mxu0 0.0
    %6658 = vmatprep.subr.mxu0 0.0
    %6659 = vmatpush1.msra.mxu0 0.0
    %6660 = vmatprep.subr.mxu0 0.0
    %6661 = vmatpush1.msra.mxu0 0.0
    %6662 = vmatprep.subr.mxu0 0.0
    %6663 = vmatpush1.msra.mxu0 0.0
    %6664 = vmatprep.subr.mxu0 0.0
    %6665 = vmatpush1.msra.mxu0 %v442
    %6666 = vmatprep.subr.mxu0 0.0
    %6667 = vmatpush1.msra.mxu0 %v441
    %6668 = vmatprep.subr.mxu0 0.0
    %6669 = vmatpush1.msra.mxu0 %v440
    %6670 = vmatprep.subr.mxu0 0.0
    %6671 = vmatpush1.msra.mxu0 %v439
    %6672 = vmatprep.subr.mxu0 0.0
    %6673 = vmatpush2.msra.mxu0 0.0
    %6674 = vmatprep.subr.mxu0 0.0
    %6675 = vmatpush2.msra.mxu0 0.0
    %6676 = vmatprep.subr.mxu0 0.0
    %6677 = vmatpush2.msra.mxu0 0.0
    %6678 = vmatprep.subr.mxu0 0.0
    %6679 = vmatpush2.msra.mxu0 0.0
    %6680 = vmatprep.subr.mxu0 0.0
    %6681 = vmatpush2.msra.mxu0 0.0
    %6682 = vmatprep.subr.mxu0 0.0
    %6683 = vmatpush2.msra.mxu0 0.0
    %6684 = vmatprep.subr.mxu0 0.0
    %6685 = vmatpush2.msra.mxu0 0.0
    %6686 = vmatprep.subr.mxu0 0.0
    %6687 = vmatpush2.msra.mxu0 0.0
    %6688 = vmatprep.subr.mxu0 0.0
    %6689 = vmatpush2.msra.mxu0 0.0
    %6690 = vmatprep.subr.mxu0 0.0
    %6691 = vmatpush2.msra.mxu0 0.0
    %6692 = vmatprep.subr.mxu0 0.0
    %6693 = vmatpush2.msra.mxu0 0.0
    %6694 = vmatprep.subr.mxu0 0.0
    %6695 = vmatpush2.msra.mxu0 0.0
    %6696 = vmatprep.subr.mxu0 0.0
    %6697 = vmatpush2.msra.mxu0 0.0
    %6698 = vmatprep.subr.mxu0 0.0
    %6699 = vmatpush2.msra.mxu0 0.0
    %6700 = vmatprep.subr.mxu0 0.0
    %6701 = vmatpush2.msra.mxu0 0.0
    %6702 = vmatprep.subr.mxu0 0.0
    %6703 = vmatpush2.msra.mxu0 0.0
    %6704 = vmatprep.mubr.f32.mxu0 0.0
    %6705 = vmatmul.mubr.f32.gmra.mxu0 %v6344
    %v6706 = vpop.f32.mrf.mxu0
    %v6707 = vadd.f32 %v6637, %v6706
    %v6708 = vpop.f32.mrf.mxu0
    %6709 = vdwg.mxu0
    %v6710 = vadd.f32 %v6707, %v488
    %v6711 = vtanh.pop %v6710
    %6712 = vmatprep.subr.mxu0 0.0
    %6713 = vmatpush1.msra.mxu0 0.0
    %6714 = vmatprep.subr.mxu0 0.0
    %6715 = vmatpush1.msra.mxu0 0.0
    %6716 = vmatprep.subr.mxu0 0.0
    %6717 = vmatpush1.msra.mxu0 0.0
    %6718 = vmatprep.subr.mxu0 0.0
    %6719 = vmatpush1.msra.mxu0 0.0
    %6720 = vmatprep.subr.mxu0 0.0
    %6721 = vmatpush1.msra.mxu0 0.0
    %6722 = vmatprep.subr.mxu0 0.0
    %6723 = vmatpush1.msra.mxu0 0.0
    %6724 = vmatprep.subr.mxu0 0.0
    %6725 = vmatpush1.msra.mxu0 0.0
    %6726 = vmatprep.subr.mxu0 0.0
    %6727 = vmatpush1.msra.mxu0 0.0
    %6728 = vmatprep.subr.mxu0 0.0
    %6729 = vmatpush1.msra.mxu0 0.0
    %6730 = vmatprep.subr.mxu0 0.0
    %6731 = vmatpush1.msra.mxu0 0.0
    %6732 = vmatprep.subr.mxu0 0.0
    %6733 = vmatpush1.msra.mxu0 0.0
    %6734 = vmatprep.subr.mxu0 0.0
    %6735 = vmatpush1.msra.mxu0 0.0
    %6736 = vmatprep.subr.mxu0 0.0
    %6737 = vmatpush1.msra.mxu0 %v466
    %6738 = vmatprep.subr.mxu0 0.0
    %6739 = vmatpush1.msra.mxu0 %v465
    %6740 = vmatprep.subr.mxu0 0.0
    %6741 = vmatpush1.msra.mxu0 %v464
    %6742 = vmatprep.subr.mxu0 0.0
    %6743 = vmatpush1.msra.mxu0 %v463
    %6744 = vmatprep.subr.mxu0 0.0
    %6745 = vmatpush2.msra.mxu0 0.0
    %6746 = vmatprep.subr.mxu0 0.0
    %6747 = vmatpush2.msra.mxu0 0.0
    %6748 = vmatprep.subr.mxu0 0.0
    %6749 = vmatpush2.msra.mxu0 0.0
    %6750 = vmatprep.subr.mxu0 0.0
    %6751 = vmatpush2.msra.mxu0 0.0
    %6752 = vmatprep.subr.mxu0 0.0
    %6753 = vmatpush2.msra.mxu0 0.0
    %6754 = vmatprep.subr.mxu0 0.0
    %6755 = vmatpush2.msra.mxu0 0.0
    %6756 = vmatprep.subr.mxu0 0.0
    %6757 = vmatpush2.msra.mxu0 0.0
    %6758 = vmatprep.subr.mxu0 0.0
    %6759 = vmatpush2.msra.mxu0 0.0
    %6760 = vmatprep.subr.mxu0 0.0
    %6761 = vmatpush2.msra.mxu0 0.0
    %6762 = vmatprep.subr.mxu0 0.0
    %6763 = vmatpush2.msra.mxu0 0.0
    %6764 = vmatprep.subr.mxu0 0.0
    %6765 = vmatpush2.msra.mxu0 0.0
    %6766 = vmatprep.subr.mxu0 0.0
    %6767 = vmatpush2.msra.mxu0 0.0
    %6768 = vmatprep.subr.mxu0 0.0
    %6769 = vmatpush2.msra.mxu0 0.0
    %6770 = vmatprep.subr.mxu0 0.0
    %6771 = vmatpush2.msra.mxu0 0.0
    %6772 = vmatprep.subr.mxu0 0.0
    %6773 = vmatpush2.msra.mxu0 0.0
    %6774 = vmatprep.subr.mxu0 0.0
    %6775 = vmatpush2.msra.mxu0 0.0
    %6776 = vmatprep.mubr.f32.mxu0 0.0
    %6777 = vmatmul.mubr.f32.gmra.mxu0 %v6271
    %v6778 = vpop.f32.mrf.mxu0
    %v6779 = vadd.f32 0.0, %v6778
    %v6780 = vpop.f32.mrf.mxu0
    %6781 = vdwg.mxu0
    %6782 = vmatprep.subr.mxu0 0.0
    %6783 = vmatpush1.msra.mxu0 0.0
    %6784 = vmatprep.subr.mxu0 0.0
    %6785 = vmatpush1.msra.mxu0 0.0
    %6786 = vmatprep.subr.mxu0 0.0
    %6787 = vmatpush1.msra.mxu0 0.0
    %6788 = vmatprep.subr.mxu0 0.0
    %6789 = vmatpush1.msra.mxu0 0.0
    %6790 = vmatprep.subr.mxu0 0.0
    %6791 = vmatpush1.msra.mxu0 0.0
    %6792 = vmatprep.subr.mxu0 0.0
    %6793 = vmatpush1.msra.mxu0 0.0
    %6794 = vmatprep.subr.mxu0 0.0
    %6795 = vmatpush1.msra.mxu0 0.0
    %6796 = vmatprep.subr.mxu0 0.0
    %6797 = vmatpush1.msra.mxu0 0.0
    %6798 = vmatprep.subr.mxu0 0.0
    %6799 = vmatpush1.msra.mxu0 0.0
    %6800 = vmatprep.subr.mxu0 0.0
    %6801 = vmatpush1.msra.mxu0 0.0
    %6802 = vmatprep.subr.mxu0 0.0
    %6803 = vmatpush1.msra.mxu0 0.0
    %6804 = vmatprep.subr.mxu0 0.0
    %6805 = vmatpush1.msra.mxu0 0.0
    %6806 = vmatprep.subr.mxu0 0.0
    %6807 = vmatpush1.msra.mxu0 %v447
    %6808 = vmatprep.subr.mxu0 0.0
    %6809 = vmatpush1.msra.mxu0 %v446
    %6810 = vmatprep.subr.mxu0 0.0
    %6811 = vmatpush1.msra.mxu0 %v445
    %6812 = vmatprep.subr.mxu0 0.0
    %6813 = vmatpush1.msra.mxu0 %v444
    %6814 = vmatprep.subr.mxu0 0.0
    %6815 = vmatpush2.msra.mxu0 0.0
    %6816 = vmatprep.subr.mxu0 0.0
    %6817 = vmatpush2.msra.mxu0 0.0
    %6818 = vmatprep.subr.mxu0 0.0
    %6819 = vmatpush2.msra.mxu0 0.0
    %6820 = vmatprep.subr.mxu0 0.0
    %6821 = vmatpush2.msra.mxu0 0.0
    %6822 = vmatprep.subr.mxu0 0.0
    %6823 = vmatpush2.msra.mxu0 0.0
    %6824 = vmatprep.subr.mxu0 0.0
    %6825 = vmatpush2.msra.mxu0 0.0
    %6826 = vmatprep.subr.mxu0 0.0
    %6827 = vmatpush2.msra.mxu0 0.0
    %6828 = vmatprep.subr.mxu0 0.0
    %6829 = vmatpush2.msra.mxu0 0.0
    %6830 = vmatprep.subr.mxu0 0.0
    %6831 = vmatpush2.msra.mxu0 0.0
    %6832 = vmatprep.subr.mxu0 0.0
    %6833 = vmatpush2.msra.mxu0 0.0
    %6834 = vmatprep.subr.mxu0 0.0
    %6835 = vmatpush2.msra.mxu0 0.0
    %6836 = vmatprep.subr.mxu0 0.0
    %6837 = vmatpush2.msra.mxu0 0.0
    %6838 = vmatprep.subr.mxu0 0.0
    %6839 = vmatpush2.msra.mxu0 0.0
    %6840 = vmatprep.subr.mxu0 0.0
    %6841 = vmatpush2.msra.mxu0 0.0
    %6842 = vmatprep.subr.mxu0 0.0
    %6843 = vmatpush2.msra.mxu0 0.0
    %6844 = vmatprep.subr.mxu0 0.0
    %6845 = vmatpush2.msra.mxu0 0.0
    %6846 = vmatprep.mubr.f32.mxu0 0.0
    %6847 = vmatmul.mubr.f32.gmra.mxu0 %v6344
    %v6848 = vpop.f32.mrf.mxu0
    %v6849 = vadd.f32 %v6779, %v6848
    %v6850 = vpop.f32.mrf.mxu0
    %6851 = vdwg.mxu0
    %v6852 = vadd.f32 %v6849, %v496
    %v6853 = vxor.u32 %v6852, 2147483648
    %v6854 = vmul.f32 %v6853, 1.442695
    %v6855 = vpow.pop %v6854
    %v6856 = vadd.f32 %v6855, 1.0
    %v6857 = vrcp.pop %v6856
    %v6858 = vmul.f32 1.0, %v6857
    %v6859 = vmul.f32 %v6569, %v5951
    %v6860 = vmul.f32 %v6422, %v6711
    %v6861 = vadd.f32 %v6859, %v6860
    %v6862 = vtanh.pop %v6861
    %v6863 = vmul.f32 %v6858, %v6862
    %s6864 = sld [smem:[#allocation4 + $0x6]]
    %v6865 = vstv %s6864
    %v6866 = vmul.f32 %v6865, %v6863
    %v6867 = vadd.f32 %v5957, %v6866
    %v6868 = vld [vmem:[#allocation2 + $0xe] sm:$0x3]
    %6869 = vmatprep.subr.mxu0 0.0
    %6870 = vmatpush1.msra.mxu0 0.0
    %6871 = vmatprep.subr.mxu0 0.0
    %6872 = vmatpush1.msra.mxu0 0.0
    %6873 = vmatprep.subr.mxu0 0.0
    %6874 = vmatpush1.msra.mxu0 0.0
    %6875 = vmatprep.subr.mxu0 0.0
    %6876 = vmatpush1.msra.mxu0 0.0
    %6877 = vmatprep.subr.mxu0 0.0
    %6878 = vmatpush1.msra.mxu0 0.0
    %6879 = vmatprep.subr.mxu0 0.0
    %6880 = vmatpush1.msra.mxu0 0.0
    %6881 = vmatprep.subr.mxu0 0.0
    %6882 = vmatpush1.msra.mxu0 0.0
    %6883 = vmatprep.subr.mxu0 0.0
    %6884 = vmatpush1.msra.mxu0 0.0
    %6885 = vmatprep.subr.mxu0 0.0
    %6886 = vmatpush1.msra.mxu0 0.0
    %6887 = vmatprep.subr.mxu0 0.0
    %6888 = vmatpush1.msra.mxu0 0.0
    %6889 = vmatprep.subr.mxu0 0.0
    %6890 = vmatpush1.msra.mxu0 0.0
    %6891 = vmatprep.subr.mxu0 0.0
    %6892 = vmatpush1.msra.mxu0 0.0
    %6893 = vmatprep.subr.mxu0 0.0
    %6894 = vmatpush1.msra.mxu0 %v413
    %6895 = vmatprep.subr.mxu0 0.0
    %6896 = vmatpush1.msra.mxu0 %v412
    %6897 = vmatprep.subr.mxu0 0.0
    %6898 = vmatpush1.msra.mxu0 %v411
    %6899 = vmatprep.subr.mxu0 0.0
    %6900 = vmatpush1.msra.mxu0 %v410
    %6901 = vmatprep.subr.mxu0 0.0
    %6902 = vmatpush2.msra.mxu0 0.0
    %6903 = vmatprep.subr.mxu0 0.0
    %6904 = vmatpush2.msra.mxu0 0.0
    %6905 = vmatprep.subr.mxu0 0.0
    %6906 = vmatpush2.msra.mxu0 0.0
    %6907 = vmatprep.subr.mxu0 0.0
    %6908 = vmatpush2.msra.mxu0 0.0
    %6909 = vmatprep.subr.mxu0 0.0
    %6910 = vmatpush2.msra.mxu0 0.0
    %6911 = vmatprep.subr.mxu0 0.0
    %6912 = vmatpush2.msra.mxu0 0.0
    %6913 = vmatprep.subr.mxu0 0.0
    %6914 = vmatpush2.msra.mxu0 0.0
    %6915 = vmatprep.subr.mxu0 0.0
    %6916 = vmatpush2.msra.mxu0 0.0
    %6917 = vmatprep.subr.mxu0 0.0
    %6918 = vmatpush2.msra.mxu0 0.0
    %6919 = vmatprep.subr.mxu0 0.0
    %6920 = vmatpush2.msra.mxu0 0.0
    %6921 = vmatprep.subr.mxu0 0.0
    %6922 = vmatpush2.msra.mxu0 0.0
    %6923 = vmatprep.subr.mxu0 0.0
    %6924 = vmatpush2.msra.mxu0 0.0
    %6925 = vmatprep.subr.mxu0 0.0
    %6926 = vmatpush2.msra.mxu0 0.0
    %6927 = vmatprep.subr.mxu0 0.0
    %6928 = vmatpush2.msra.mxu0 0.0
    %6929 = vmatprep.subr.mxu0 0.0
    %6930 = vmatpush2.msra.mxu0 0.0
    %6931 = vmatprep.subr.mxu0 0.0
    %6932 = vmatpush2.msra.mxu0 0.0
    %6933 = vmatprep.mubr.f32.mxu0 0.0
    %6934 = vmatmul.mubr.f32.gmra.mxu0 %v6344
    %v6935 = vpop.f32.mrf.mxu0
    %v6936 = vadd.f32 0.0, %v6935
    %v6937 = vpop.f32.mrf.mxu0
    %6938 = vdwg.mxu0
    %v6939 = vadd.f32 %v6868, %v6936
    %v6940 = vxor.u32 %v6939, 2147483648
    %v6941 = vmul.f32 %v6940, 1.442695
    %v6942 = vpow.pop %v6941
    %v6943 = vadd.f32 %v6942, 1.0
    %v6944 = vrcp.pop %v6943
    %v6945 = vmul.f32 1.0, %v6944
    %v6946 = vld [vmem:[%s229 + $0xe] sm:$0x3]
    %6947 = vmatprep.subr.mxu0 0.0
    %6948 = vmatpush1.msra.mxu0 0.0
    %6949 = vmatprep.subr.mxu0 0.0
    %6950 = vmatpush1.msra.mxu0 0.0
    %6951 = vmatprep.subr.mxu0 0.0
    %6952 = vmatpush1.msra.mxu0 0.0
    %6953 = vmatprep.subr.mxu0 0.0
    %6954 = vmatpush1.msra.mxu0 0.0
    %6955 = vmatprep.subr.mxu0 0.0
    %6956 = vmatpush1.msra.mxu0 0.0
    %6957 = vmatprep.subr.mxu0 0.0
    %6958 = vmatpush1.msra.mxu0 0.0
    %6959 = vmatprep.subr.mxu0 0.0
    %6960 = vmatpush1.msra.mxu0 0.0
    %6961 = vmatprep.subr.mxu0 0.0
    %6962 = vmatpush1.msra.mxu0 0.0
    %6963 = vmatprep.subr.mxu0 0.0
    %6964 = vmatpush1.msra.mxu0 0.0
    %6965 = vmatprep.subr.mxu0 0.0
    %6966 = vmatpush1.msra.mxu0 0.0
    %6967 = vmatprep.subr.mxu0 0.0
    %6968 = vmatpush1.msra.mxu0 0.0
    %6969 = vmatprep.subr.mxu0 0.0
    %6970 = vmatpush1.msra.mxu0 0.0
    %6971 = vmatprep.subr.mxu0 0.0
    %6972 = vmatpush1.msra.mxu0 %v418
    %6973 = vmatprep.subr.mxu0 0.0
    %6974 = vmatpush1.msra.mxu0 %v417
    %6975 = vmatprep.subr.mxu0 0.0
    %6976 = vmatpush1.msra.mxu0 %v416
    %6977 = vmatprep.subr.mxu0 0.0
    %6978 = vmatpush1.msra.mxu0 %v415
    %6979 = vmatprep.subr.mxu0 0.0
    %6980 = vmatpush2.msra.mxu0 0.0
    %6981 = vmatprep.subr.mxu0 0.0
    %6982 = vmatpush2.msra.mxu0 0.0
    %6983 = vmatprep.subr.mxu0 0.0
    %6984 = vmatpush2.msra.mxu0 0.0
    %6985 = vmatprep.subr.mxu0 0.0
    %6986 = vmatpush2.msra.mxu0 0.0
    %6987 = vmatprep.subr.mxu0 0.0
    %6988 = vmatpush2.msra.mxu0 0.0
    %6989 = vmatprep.subr.mxu0 0.0
    %6990 = vmatpush2.msra.mxu0 0.0
    %6991 = vmatprep.subr.mxu0 0.0
    %6992 = vmatpush2.msra.mxu0 0.0
    %6993 = vmatprep.subr.mxu0 0.0
    %6994 = vmatpush2.msra.mxu0 0.0
    %6995 = vmatprep.subr.mxu0 0.0
    %6996 = vmatpush2.msra.mxu0 0.0
    %6997 = vmatprep.subr.mxu0 0.0
    %6998 = vmatpush2.msra.mxu0 0.0
    %6999 = vmatprep.subr.mxu0 0.0
    %7000 = vmatpush2.msra.mxu0 0.0
    %7001 = vmatprep.subr.mxu0 0.0
    %7002 = vmatpush2.msra.mxu0 0.0
    %7003 = vmatprep.subr.mxu0 0.0
    %7004 = vmatpush2.msra.mxu0 0.0
    %7005 = vmatprep.subr.mxu0 0.0
    %7006 = vmatpush2.msra.mxu0 0.0
    %7007 = vmatprep.subr.mxu0 0.0
    %7008 = vmatpush2.msra.mxu0 0.0
    %7009 = vmatprep.subr.mxu0 0.0
    %7010 = vmatpush2.msra.mxu0 0.0
    %7011 = vmatprep.mubr.f32.mxu0 0.0
    %7012 = vmatmul.mubr.f32.gmra.mxu0 %v6344
    %v7013 = vpop.f32.mrf.mxu0
    %v7014 = vadd.f32 0.0, %v7013
    %v7015 = vpop.f32.mrf.mxu0
    %7016 = vdwg.mxu0
    %v7017 = vadd.f32 %v6946, %v7014
    %v7018 = vxor.u32 %v7017, 2147483648
    %v7019 = vmul.f32 %v7018, 1.442695
    %v7020 = vpow.pop %v7019
    %v7021 = vadd.f32 %v7020, 1.0
    %v7022 = vrcp.pop %v7021
    %v7023 = vmul.f32 1.0, %v7022
    %v7024 = vld [vmem:[%s318 + $0xe] sm:$0x3]
    %7025 = vmatprep.subr.mxu0 0.0
    %7026 = vmatpush1.msra.mxu0 0.0
    %7027 = vmatprep.subr.mxu0 0.0
    %7028 = vmatpush1.msra.mxu0 0.0
    %7029 = vmatprep.subr.mxu0 0.0
    %7030 = vmatpush1.msra.mxu0 0.0
    %7031 = vmatprep.subr.mxu0 0.0
    %7032 = vmatpush1.msra.mxu0 0.0
    %7033 = vmatprep.subr.mxu0 0.0
    %7034 = vmatpush1.msra.mxu0 0.0
    %7035 = vmatprep.subr.mxu0 0.0
    %7036 = vmatpush1.msra.mxu0 0.0
    %7037 = vmatprep.subr.mxu0 0.0
    %7038 = vmatpush1.msra.mxu0 0.0
    %7039 = vmatprep.subr.mxu0 0.0
    %7040 = vmatpush1.msra.mxu0 0.0
    %7041 = vmatprep.subr.mxu0 0.0
    %7042 = vmatpush1.msra.mxu0 0.0
    %7043 = vmatprep.subr.mxu0 0.0
    %7044 = vmatpush1.msra.mxu0 0.0
    %7045 = vmatprep.subr.mxu0 0.0
    %7046 = vmatpush1.msra.mxu0 0.0
    %7047 = vmatprep.subr.mxu0 0.0
    %7048 = vmatpush1.msra.mxu0 0.0
    %7049 = vmatprep.subr.mxu0 0.0
    %7050 = vmatpush1.msra.mxu0 %v423
    %7051 = vmatprep.subr.mxu0 0.0
    %7052 = vmatpush1.msra.mxu0 %v422
    %7053 = vmatprep.subr.mxu0 0.0
    %7054 = vmatpush1.msra.mxu0 %v421
    %7055 = vmatprep.subr.mxu0 0.0
    %7056 = vmatpush1.msra.mxu0 %v420
    %7057 = vmatprep.subr.mxu0 0.0
    %7058 = vmatpush2.msra.mxu0 0.0
    %7059 = vmatprep.subr.mxu0 0.0
    %7060 = vmatpush2.msra.mxu0 0.0
    %7061 = vmatprep.subr.mxu0 0.0
    %7062 = vmatpush2.msra.mxu0 0.0
    %7063 = vmatprep.subr.mxu0 0.0
    %7064 = vmatpush2.msra.mxu0 0.0
    %7065 = vmatprep.subr.mxu0 0.0
    %7066 = vmatpush2.msra.mxu0 0.0
    %7067 = vmatprep.subr.mxu0 0.0
    %7068 = vmatpush2.msra.mxu0 0.0
    %7069 = vmatprep.subr.mxu0 0.0
    %7070 = vmatpush2.msra.mxu0 0.0
    %7071 = vmatprep.subr.mxu0 0.0
    %7072 = vmatpush2.msra.mxu0 0.0
    %7073 = vmatprep.subr.mxu0 0.0
    %7074 = vmatpush2.msra.mxu0 0.0
    %7075 = vmatprep.subr.mxu0 0.0
    %7076 = vmatpush2.msra.mxu0 0.0
    %7077 = vmatprep.subr.mxu0 0.0
    %7078 = vmatpush2.msra.mxu0 0.0
    %7079 = vmatprep.subr.mxu0 0.0
    %7080 = vmatpush2.msra.mxu0 0.0
    %7081 = vmatprep.subr.mxu0 0.0
    %7082 = vmatpush2.msra.mxu0 0.0
    %7083 = vmatprep.subr.mxu0 0.0
    %7084 = vmatpush2.msra.mxu0 0.0
    %7085 = vmatprep.subr.mxu0 0.0
    %7086 = vmatpush2.msra.mxu0 0.0
    %7087 = vmatprep.subr.mxu0 0.0
    %7088 = vmatpush2.msra.mxu0 0.0
    %7089 = vmatprep.mubr.f32.mxu0 0.0
    %7090 = vmatmul.mubr.f32.gmra.mxu0 %v6344
    %v7091 = vpop.f32.mrf.mxu0
    %v7092 = vadd.f32 0.0, %v7091
    %v7093 = vpop.f32.mrf.mxu0
    %7094 = vdwg.mxu0
    %v7095 = vadd.f32 %v7024, %v7092
    %v7096 = vtanh.pop %v7095
    %v7097 = vld [vmem:[%s407 + $0xe] sm:$0x3]
    %7098 = vmatprep.subr.mxu0 0.0
    %7099 = vmatpush1.msra.mxu0 0.0
    %7100 = vmatprep.subr.mxu0 0.0
    %7101 = vmatpush1.msra.mxu0 0.0
    %7102 = vmatprep.subr.mxu0 0.0
    %7103 = vmatpush1.msra.mxu0 0.0
    %7104 = vmatprep.subr.mxu0 0.0
    %7105 = vmatpush1.msra.mxu0 0.0
    %7106 = vmatprep.subr.mxu0 0.0
    %7107 = vmatpush1.msra.mxu0 0.0
    %7108 = vmatprep.subr.mxu0 0.0
    %7109 = vmatpush1.msra.mxu0 0.0
    %7110 = vmatprep.subr.mxu0 0.0
    %7111 = vmatpush1.msra.mxu0 0.0
    %7112 = vmatprep.subr.mxu0 0.0
    %7113 = vmatpush1.msra.mxu0 0.0
    %7114 = vmatprep.subr.mxu0 0.0
    %7115 = vmatpush1.msra.mxu0 0.0
    %7116 = vmatprep.subr.mxu0 0.0
    %7117 = vmatpush1.msra.mxu0 0.0
    %7118 = vmatprep.subr.mxu0 0.0
    %7119 = vmatpush1.msra.mxu0 0.0
    %7120 = vmatprep.subr.mxu0 0.0
    %7121 = vmatpush1.msra.mxu0 0.0
    %7122 = vmatprep.subr.mxu0 0.0
    %7123 = vmatpush1.msra.mxu0 %v428
    %7124 = vmatprep.subr.mxu0 0.0
    %7125 = vmatpush1.msra.mxu0 %v427
    %7126 = vmatprep.subr.mxu0 0.0
    %7127 = vmatpush1.msra.mxu0 %v426
    %7128 = vmatprep.subr.mxu0 0.0
    %7129 = vmatpush1.msra.mxu0 %v425
    %7130 = vmatprep.subr.mxu0 0.0
    %7131 = vmatpush2.msra.mxu0 0.0
    %7132 = vmatprep.subr.mxu0 0.0
    %7133 = vmatpush2.msra.mxu0 0.0
    %7134 = vmatprep.subr.mxu0 0.0
    %7135 = vmatpush2.msra.mxu0 0.0
    %7136 = vmatprep.subr.mxu0 0.0
    %7137 = vmatpush2.msra.mxu0 0.0
    %7138 = vmatprep.subr.mxu0 0.0
    %7139 = vmatpush2.msra.mxu0 0.0
    %7140 = vmatprep.subr.mxu0 0.0
    %7141 = vmatpush2.msra.mxu0 0.0
    %7142 = vmatprep.subr.mxu0 0.0
    %7143 = vmatpush2.msra.mxu0 0.0
    %7144 = vmatprep.subr.mxu0 0.0
    %7145 = vmatpush2.msra.mxu0 0.0
    %7146 = vmatprep.subr.mxu0 0.0
    %7147 = vmatpush2.msra.mxu0 0.0
    %7148 = vmatprep.subr.mxu0 0.0
    %7149 = vmatpush2.msra.mxu0 0.0
    %7150 = vmatprep.subr.mxu0 0.0
    %7151 = vmatpush2.msra.mxu0 0.0
    %7152 = vmatprep.subr.mxu0 0.0
    %7153 = vmatpush2.msra.mxu0 0.0
    %7154 = vmatprep.subr.mxu0 0.0
    %7155 = vmatpush2.msra.mxu0 0.0
    %7156 = vmatprep.subr.mxu0 0.0
    %7157 = vmatpush2.msra.mxu0 0.0
    %7158 = vmatprep.subr.mxu0 0.0
    %7159 = vmatpush2.msra.mxu0 0.0
    %7160 = vmatprep.subr.mxu0 0.0
    %7161 = vmatpush2.msra.mxu0 0.0
    %7162 = vmatprep.mubr.f32.mxu0 0.0
    %7163 = vmatmul.mubr.f32.gmra.mxu0 %v6344
    %v7164 = vpop.f32.mrf.mxu0
    %v7165 = vadd.f32 0.0, %v7164
    %v7166 = vpop.f32.mrf.mxu0
    %7167 = vdwg.mxu0
    %v7168 = vadd.f32 %v7097, %v7165
    %v7169 = vxor.u32 %v7168, 2147483648
    %v7170 = vmul.f32 %v7169, 1.442695
    %v7171 = vpow.pop %v7170
    %v7172 = vadd.f32 %v7171, 1.0
    %v7173 = vrcp.pop %v7172
    %v7174 = vmul.f32 1.0, %v7173
    %v7175 = vmul.f32 %v7023, %v6267
    %v7176 = vmul.f32 %v6945, %v7096
    %v7177 = vadd.f32 %v7175, %v7176
    %v7178 = vtanh.pop %v7177
    %v7179 = vmul.f32 %v7174, %v7178
    %v7181 = vsel %vm140, %v6863, 0
    %7183 = vmatprep.subr.mxu0 0.0
    %7184 = vmatpush1.msra.mxu0 0.0
    %7185 = vmatprep.subr.mxu0 0.0
    %7186 = vmatpush1.msra.mxu0 0.0
    %7187 = vmatprep.subr.mxu0 0.0
    %7188 = vmatpush1.msra.mxu0 0.0
    %7189 = vmatprep.subr.mxu0 0.0
    %7190 = vmatpush1.msra.mxu0 0.0
    %7191 = vmatprep.subr.mxu0 0.0
    %7192 = vmatpush1.msra.mxu0 0.0
    %7193 = vmatprep.subr.mxu0 0.0
    %7194 = vmatpush1.msra.mxu0 0.0
    %7195 = vmatprep.subr.mxu0 0.0
    %7196 = vmatpush1.msra.mxu0 0.0
    %7197 = vmatprep.subr.mxu0 0.0
    %7198 = vmatpush1.msra.mxu0 0.0
    %7199 = vmatprep.subr.mxu0 0.0
    %7200 = vmatpush1.msra.mxu0 0.0
    %7201 = vmatprep.subr.mxu0 0.0
    %7202 = vmatpush1.msra.mxu0 0.0
    %7203 = vmatprep.subr.mxu0 0.0
    %7204 = vmatpush1.msra.mxu0 0.0
    %7205 = vmatprep.subr.mxu0 0.0
    %7206 = vmatpush1.msra.mxu0 0.0
    %7207 = vmatprep.subr.mxu0 0.0
    %7208 = vmatpush1.msra.mxu0 %v451
    %7209 = vmatprep.subr.mxu0 0.0
    %7210 = vmatpush1.msra.mxu0 %v450
    %7211 = vmatprep.subr.mxu0 0.0
    %7212 = vmatpush1.msra.mxu0 %v449
    %7213 = vmatprep.subr.mxu0 0.0
    %7214 = vmatpush1.msra.mxu0 %v448
    %7215 = vmatprep.subr.mxu0 0.0
    %7216 = vmatpush2.msra.mxu0 0.0
    %7217 = vmatprep.subr.mxu0 0.0
    %7218 = vmatpush2.msra.mxu0 0.0
    %7219 = vmatprep.subr.mxu0 0.0
    %7220 = vmatpush2.msra.mxu0 0.0
    %7221 = vmatprep.subr.mxu0 0.0
    %7222 = vmatpush2.msra.mxu0 0.0
    %7223 = vmatprep.subr.mxu0 0.0
    %7224 = vmatpush2.msra.mxu0 0.0
    %7225 = vmatprep.subr.mxu0 0.0
    %7226 = vmatpush2.msra.mxu0 0.0
    %7227 = vmatprep.subr.mxu0 0.0
    %7228 = vmatpush2.msra.mxu0 0.0
    %7229 = vmatprep.subr.mxu0 0.0
    %7230 = vmatpush2.msra.mxu0 0.0
    %7231 = vmatprep.subr.mxu0 0.0
    %7232 = vmatpush2.msra.mxu0 0.0
    %7233 = vmatprep.subr.mxu0 0.0
    %7234 = vmatpush2.msra.mxu0 0.0
    %7235 = vmatprep.subr.mxu0 0.0
    %7236 = vmatpush2.msra.mxu0 0.0
    %7237 = vmatprep.subr.mxu0 0.0
    %7238 = vmatpush2.msra.mxu0 0.0
    %7239 = vmatprep.subr.mxu0 0.0
    %7240 = vmatpush2.msra.mxu0 0.0
    %7241 = vmatprep.subr.mxu0 0.0
    %7242 = vmatpush2.msra.mxu0 0.0
    %7243 = vmatprep.subr.mxu0 0.0
    %7244 = vmatpush2.msra.mxu0 0.0
    %7245 = vmatprep.subr.mxu0 0.0
    %7246 = vmatpush2.msra.mxu0 0.0
    %7247 = vmatprep.mubr.f32.mxu0 0.0
    %7248 = vmatmul.mubr.f32.gmra.mxu0 %v7181
    %v7249 = vpop.f32.mrf.mxu0
    %v7250 = vadd.f32 0.0, %v7249
    %v7251 = vpop.f32.mrf.mxu0
    %7252 = vdwg.mxu0
    %v7254 = vsel %vm140, %v7179, 0
    %7256 = vmatprep.subr.mxu0 0.0
    %7257 = vmatpush1.msra.mxu0 0.0
    %7258 = vmatprep.subr.mxu0 0.0
    %7259 = vmatpush1.msra.mxu0 0.0
    %7260 = vmatprep.subr.mxu0 0.0
    %7261 = vmatpush1.msra.mxu0 0.0
    %7262 = vmatprep.subr.mxu0 0.0
    %7263 = vmatpush1.msra.mxu0 0.0
    %7264 = vmatprep.subr.mxu0 0.0
    %7265 = vmatpush1.msra.mxu0 0.0
    %7266 = vmatprep.subr.mxu0 0.0
    %7267 = vmatpush1.msra.mxu0 0.0
    %7268 = vmatprep.subr.mxu0 0.0
    %7269 = vmatpush1.msra.mxu0 0.0
    %7270 = vmatprep.subr.mxu0 0.0
    %7271 = vmatpush1.msra.mxu0 0.0
    %7272 = vmatprep.subr.mxu0 0.0
    %7273 = vmatpush1.msra.mxu0 0.0
    %7274 = vmatprep.subr.mxu0 0.0
    %7275 = vmatpush1.msra.mxu0 0.0
    %7276 = vmatprep.subr.mxu0 0.0
    %7277 = vmatpush1.msra.mxu0 0.0
    %7278 = vmatprep.subr.mxu0 0.0
    %7279 = vmatpush1.msra.mxu0 0.0
    %7280 = vmatprep.subr.mxu0 0.0
    %7281 = vmatpush1.msra.mxu0 %v432
    %7282 = vmatprep.subr.mxu0 0.0
    %7283 = vmatpush1.msra.mxu0 %v431
    %7284 = vmatprep.subr.mxu0 0.0
    %7285 = vmatpush1.msra.mxu0 %v430
    %7286 = vmatprep.subr.mxu0 0.0
    %7287 = vmatpush1.msra.mxu0 %v429
    %7288 = vmatprep.subr.mxu0 0.0
    %7289 = vmatpush2.msra.mxu0 0.0
    %7290 = vmatprep.subr.mxu0 0.0
    %7291 = vmatpush2.msra.mxu0 0.0
    %7292 = vmatprep.subr.mxu0 0.0
    %7293 = vmatpush2.msra.mxu0 0.0
    %7294 = vmatprep.subr.mxu0 0.0
    %7295 = vmatpush2.msra.mxu0 0.0
    %7296 = vmatprep.subr.mxu0 0.0
    %7297 = vmatpush2.msra.mxu0 0.0
    %7298 = vmatprep.subr.mxu0 0.0
    %7299 = vmatpush2.msra.mxu0 0.0
    %7300 = vmatprep.subr.mxu0 0.0
    %7301 = vmatpush2.msra.mxu0 0.0
    %7302 = vmatprep.subr.mxu0 0.0
    %7303 = vmatpush2.msra.mxu0 0.0
    %7304 = vmatprep.subr.mxu0 0.0
    %7305 = vmatpush2.msra.mxu0 0.0
    %7306 = vmatprep.subr.mxu0 0.0
    %7307 = vmatpush2.msra.mxu0 0.0
    %7308 = vmatprep.subr.mxu0 0.0
    %7309 = vmatpush2.msra.mxu0 0.0
    %7310 = vmatprep.subr.mxu0 0.0
    %7311 = vmatpush2.msra.mxu0 0.0
    %7312 = vmatprep.subr.mxu0 0.0
    %7313 = vmatpush2.msra.mxu0 0.0
    %7314 = vmatprep.subr.mxu0 0.0
    %7315 = vmatpush2.msra.mxu0 0.0
    %7316 = vmatprep.subr.mxu0 0.0
    %7317 = vmatpush2.msra.mxu0 0.0
    %7318 = vmatprep.subr.mxu0 0.0
    %7319 = vmatpush2.msra.mxu0 0.0
    %7320 = vmatprep.mubr.f32.mxu0 0.0
    %7321 = vmatmul.mubr.f32.gmra.mxu0 %v7254
    %v7322 = vpop.f32.mrf.mxu0
    %v7323 = vadd.f32 %v7250, %v7322
    %v7324 = vpop.f32.mrf.mxu0
    %7325 = vdwg.mxu0
    %v7326 = vadd.f32 %v7323, %v472
    %v7327 = vxor.u32 %v7326, 2147483648
    %v7328 = vmul.f32 %v7327, 1.442695
    %v7329 = vpow.pop %v7328
    %v7330 = vadd.f32 %v7329, 1.0
    %v7331 = vrcp.pop %v7330
    %v7332 = vmul.f32 1.0, %v7331
    %7333 = vmatprep.subr.mxu0 0.0
    %7334 = vmatpush1.msra.mxu0 0.0
    %7335 = vmatprep.subr.mxu0 0.0
    %7336 = vmatpush1.msra.mxu0 0.0
    %7337 = vmatprep.subr.mxu0 0.0
    %7338 = vmatpush1.msra.mxu0 0.0
    %7339 = vmatprep.subr.mxu0 0.0
    %7340 = vmatpush1.msra.mxu0 0.0
    %7341 = vmatprep.subr.mxu0 0.0
    %7342 = vmatpush1.msra.mxu0 0.0
    %7343 = vmatprep.subr.mxu0 0.0
    %7344 = vmatpush1.msra.mxu0 0.0
    %7345 = vmatprep.subr.mxu0 0.0
    %7346 = vmatpush1.msra.mxu0 0.0
    %7347 = vmatprep.subr.mxu0 0.0
    %7348 = vmatpush1.msra.mxu0 0.0
    %7349 = vmatprep.subr.mxu0 0.0
    %7350 = vmatpush1.msra.mxu0 0.0
    %7351 = vmatprep.subr.mxu0 0.0
    %7352 = vmatpush1.msra.mxu0 0.0
    %7353 = vmatprep.subr.mxu0 0.0
    %7354 = vmatpush1.msra.mxu0 0.0
    %7355 = vmatprep.subr.mxu0 0.0
    %7356 = vmatpush1.msra.mxu0 0.0
    %7357 = vmatprep.subr.mxu0 0.0
    %7358 = vmatpush1.msra.mxu0 %v456
    %7359 = vmatprep.subr.mxu0 0.0
    %7360 = vmatpush1.msra.mxu0 %v455
    %7361 = vmatprep.subr.mxu0 0.0
    %7362 = vmatpush1.msra.mxu0 %v454
    %7363 = vmatprep.subr.mxu0 0.0
    %7364 = vmatpush1.msra.mxu0 %v453
    %7365 = vmatprep.subr.mxu0 0.0
    %7366 = vmatpush2.msra.mxu0 0.0
    %7367 = vmatprep.subr.mxu0 0.0
    %7368 = vmatpush2.msra.mxu0 0.0
    %7369 = vmatprep.subr.mxu0 0.0
    %7370 = vmatpush2.msra.mxu0 0.0
    %7371 = vmatprep.subr.mxu0 0.0
    %7372 = vmatpush2.msra.mxu0 0.0
    %7373 = vmatprep.subr.mxu0 0.0
    %7374 = vmatpush2.msra.mxu0 0.0
    %7375 = vmatprep.subr.mxu0 0.0
    %7376 = vmatpush2.msra.mxu0 0.0
    %7377 = vmatprep.subr.mxu0 0.0
    %7378 = vmatpush2.msra.mxu0 0.0
    %7379 = vmatprep.subr.mxu0 0.0
    %7380 = vmatpush2.msra.mxu0 0.0
    %7381 = vmatprep.subr.mxu0 0.0
    %7382 = vmatpush2.msra.mxu0 0.0
    %7383 = vmatprep.subr.mxu0 0.0
    %7384 = vmatpush2.msra.mxu0 0.0
    %7385 = vmatprep.subr.mxu0 0.0
    %7386 = vmatpush2.msra.mxu0 0.0
    %7387 = vmatprep.subr.mxu0 0.0
    %7388 = vmatpush2.msra.mxu0 0.0
    %7389 = vmatprep.subr.mxu0 0.0
    %7390 = vmatpush2.msra.mxu0 0.0
    %7391 = vmatprep.subr.mxu0 0.0
    %7392 = vmatpush2.msra.mxu0 0.0
    %7393 = vmatprep.subr.mxu0 0.0
    %7394 = vmatpush2.msra.mxu0 0.0
    %7395 = vmatprep.subr.mxu0 0.0
    %7396 = vmatpush2.msra.mxu0 0.0
    %7397 = vmatprep.mubr.f32.mxu0 0.0
    %7398 = vmatmul.mubr.f32.gmra.mxu0 %v7181
    %v7399 = vpop.f32.mrf.mxu0
    %v7400 = vadd.f32 0.0, %v7399
    %v7401 = vpop.f32.mrf.mxu0
    %7402 = vdwg.mxu0
    %7403 = vmatprep.subr.mxu0 0.0
    %7404 = vmatpush1.msra.mxu0 0.0
    %7405 = vmatprep.subr.mxu0 0.0
    %7406 = vmatpush1.msra.mxu0 0.0
    %7407 = vmatprep.subr.mxu0 0.0
    %7408 = vmatpush1.msra.mxu0 0.0
    %7409 = vmatprep.subr.mxu0 0.0
    %7410 = vmatpush1.msra.mxu0 0.0
    %7411 = vmatprep.subr.mxu0 0.0
    %7412 = vmatpush1.msra.mxu0 0.0
    %7413 = vmatprep.subr.mxu0 0.0
    %7414 = vmatpush1.msra.mxu0 0.0
    %7415 = vmatprep.subr.mxu0 0.0
    %7416 = vmatpush1.msra.mxu0 0.0
    %7417 = vmatprep.subr.mxu0 0.0
    %7418 = vmatpush1.msra.mxu0 0.0
    %7419 = vmatprep.subr.mxu0 0.0
    %7420 = vmatpush1.msra.mxu0 0.0
    %7421 = vmatprep.subr.mxu0 0.0
    %7422 = vmatpush1.msra.mxu0 0.0
    %7423 = vmatprep.subr.mxu0 0.0
    %7424 = vmatpush1.msra.mxu0 0.0
    %7425 = vmatprep.subr.mxu0 0.0
    %7426 = vmatpush1.msra.mxu0 0.0
    %7427 = vmatprep.subr.mxu0 0.0
    %7428 = vmatpush1.msra.mxu0 %v437
    %7429 = vmatprep.subr.mxu0 0.0
    %7430 = vmatpush1.msra.mxu0 %v436
    %7431 = vmatprep.subr.mxu0 0.0
    %7432 = vmatpush1.msra.mxu0 %v435
    %7433 = vmatprep.subr.mxu0 0.0
    %7434 = vmatpush1.msra.mxu0 %v434
    %7435 = vmatprep.subr.mxu0 0.0
    %7436 = vmatpush2.msra.mxu0 0.0
    %7437 = vmatprep.subr.mxu0 0.0
    %7438 = vmatpush2.msra.mxu0 0.0
    %7439 = vmatprep.subr.mxu0 0.0
    %7440 = vmatpush2.msra.mxu0 0.0
    %7441 = vmatprep.subr.mxu0 0.0
    %7442 = vmatpush2.msra.mxu0 0.0
    %7443 = vmatprep.subr.mxu0 0.0
    %7444 = vmatpush2.msra.mxu0 0.0
    %7445 = vmatprep.subr.mxu0 0.0
    %7446 = vmatpush2.msra.mxu0 0.0
    %7447 = vmatprep.subr.mxu0 0.0
    %7448 = vmatpush2.msra.mxu0 0.0
    %7449 = vmatprep.subr.mxu0 0.0
    %7450 = vmatpush2.msra.mxu0 0.0
    %7451 = vmatprep.subr.mxu0 0.0
    %7452 = vmatpush2.msra.mxu0 0.0
    %7453 = vmatprep.subr.mxu0 0.0
    %7454 = vmatpush2.msra.mxu0 0.0
    %7455 = vmatprep.subr.mxu0 0.0
    %7456 = vmatpush2.msra.mxu0 0.0
    %7457 = vmatprep.subr.mxu0 0.0
    %7458 = vmatpush2.msra.mxu0 0.0
    %7459 = vmatprep.subr.mxu0 0.0
    %7460 = vmatpush2.msra.mxu0 0.0
    %7461 = vmatprep.subr.mxu0 0.0
    %7462 = vmatpush2.msra.mxu0 0.0
    %7463 = vmatprep.subr.mxu0 0.0
    %7464 = vmatpush2.msra.mxu0 0.0
    %7465 = vmatprep.subr.mxu0 0.0
    %7466 = vmatpush2.msra.mxu0 0.0
    %7467 = vmatprep.mubr.f32.mxu0 0.0
    %7468 = vmatmul.mubr.f32.gmra.mxu0 %v7254
    %v7469 = vpop.f32.mrf.mxu0
    %v7470 = vadd.f32 %v7400, %v7469
    %v7471 = vpop.f32.mrf.mxu0
    %7472 = vdwg.mxu0
    %v7473 = vadd.f32 %v7470, %v480
    %v7474 = vxor.u32 %v7473, 2147483648
    %v7475 = vmul.f32 %v7474, 1.442695
    %v7476 = vpow.pop %v7475
    %v7477 = vadd.f32 %v7476, 1.0
    %v7478 = vrcp.pop %v7477
    %v7479 = vmul.f32 1.0, %v7478
    %7480 = vmatprep.subr.mxu0 0.0
    %7481 = vmatpush1.msra.mxu0 0.0
    %7482 = vmatprep.subr.mxu0 0.0
    %7483 = vmatpush1.msra.mxu0 0.0
    %7484 = vmatprep.subr.mxu0 0.0
    %7485 = vmatpush1.msra.mxu0 0.0
    %7486 = vmatprep.subr.mxu0 0.0
    %7487 = vmatpush1.msra.mxu0 0.0
    %7488 = vmatprep.subr.mxu0 0.0
    %7489 = vmatpush1.msra.mxu0 0.0
    %7490 = vmatprep.subr.mxu0 0.0
    %7491 = vmatpush1.msra.mxu0 0.0
    %7492 = vmatprep.subr.mxu0 0.0
    %7493 = vmatpush1.msra.mxu0 0.0
    %7494 = vmatprep.subr.mxu0 0.0
    %7495 = vmatpush1.msra.mxu0 0.0
    %7496 = vmatprep.subr.mxu0 0.0
    %7497 = vmatpush1.msra.mxu0 0.0
    %7498 = vmatprep.subr.mxu0 0.0
    %7499 = vmatpush1.msra.mxu0 0.0
    %7500 = vmatprep.subr.mxu0 0.0
    %7501 = vmatpush1.msra.mxu0 0.0
    %7502 = vmatprep.subr.mxu0 0.0
    %7503 = vmatpush1.msra.mxu0 0.0
    %7504 = vmatprep.subr.mxu0 0.0
    %7505 = vmatpush1.msra.mxu0 %v461
    %7506 = vmatprep.subr.mxu0 0.0
    %7507 = vmatpush1.msra.mxu0 %v460
    %7508 = vmatprep.subr.mxu0 0.0
    %7509 = vmatpush1.msra.mxu0 %v459
    %7510 = vmatprep.subr.mxu0 0.0
    %7511 = vmatpush1.msra.mxu0 %v458
    %7512 = vmatprep.subr.mxu0 0.0
    %7513 = vmatpush2.msra.mxu0 0.0
    %7514 = vmatprep.subr.mxu0 0.0
    %7515 = vmatpush2.msra.mxu0 0.0
    %7516 = vmatprep.subr.mxu0 0.0
    %7517 = vmatpush2.msra.mxu0 0.0
    %7518 = vmatprep.subr.mxu0 0.0
    %7519 = vmatpush2.msra.mxu0 0.0
    %7520 = vmatprep.subr.mxu0 0.0
    %7521 = vmatpush2.msra.mxu0 0.0
    %7522 = vmatprep.subr.mxu0 0.0
    %7523 = vmatpush2.msra.mxu0 0.0
    %7524 = vmatprep.subr.mxu0 0.0
    %7525 = vmatpush2.msra.mxu0 0.0
    %7526 = vmatprep.subr.mxu0 0.0
    %7527 = vmatpush2.msra.mxu0 0.0
    %7528 = vmatprep.subr.mxu0 0.0
    %7529 = vmatpush2.msra.mxu0 0.0
    %7530 = vmatprep.subr.mxu0 0.0
    %7531 = vmatpush2.msra.mxu0 0.0
    %7532 = vmatprep.subr.mxu0 0.0
    %7533 = vmatpush2.msra.mxu0 0.0
    %7534 = vmatprep.subr.mxu0 0.0
    %7535 = vmatpush2.msra.mxu0 0.0
    %7536 = vmatprep.subr.mxu0 0.0
    %7537 = vmatpush2.msra.mxu0 0.0
    %7538 = vmatprep.subr.mxu0 0.0
    %7539 = vmatpush2.msra.mxu0 0.0
    %7540 = vmatprep.subr.mxu0 0.0
    %7541 = vmatpush2.msra.mxu0 0.0
    %7542 = vmatprep.subr.mxu0 0.0
    %7543 = vmatpush2.msra.mxu0 0.0
    %7544 = vmatprep.mubr.f32.mxu0 0.0
    %7545 = vmatmul.mubr.f32.gmra.mxu0 %v7181
    %v7546 = vpop.f32.mrf.mxu0
    %v7547 = vadd.f32 0.0, %v7546
    %v7548 = vpop.f32.mrf.mxu0
    %7549 = vdwg.mxu0
    %7550 = vmatprep.subr.mxu0 0.0
    %7551 = vmatpush1.msra.mxu0 0.0
    %7552 = vmatprep.subr.mxu0 0.0
    %7553 = vmatpush1.msra.mxu0 0.0
    %7554 = vmatprep.subr.mxu0 0.0
    %7555 = vmatpush1.msra.mxu0 0.0
    %7556 = vmatprep.subr.mxu0 0.0
    %7557 = vmatpush1.msra.mxu0 0.0
    %7558 = vmatprep.subr.mxu0 0.0
    %7559 = vmatpush1.msra.mxu0 0.0
    %7560 = vmatprep.subr.mxu0 0.0
    %7561 = vmatpush1.msra.mxu0 0.0
    %7562 = vmatprep.subr.mxu0 0.0
    %7563 = vmatpush1.msra.mxu0 0.0
    %7564 = vmatprep.subr.mxu0 0.0
    %7565 = vmatpush1.msra.mxu0 0.0
    %7566 = vmatprep.subr.mxu0 0.0
    %7567 = vmatpush1.msra.mxu0 0.0
    %7568 = vmatprep.subr.mxu0 0.0
    %7569 = vmatpush1.msra.mxu0 0.0
    %7570 = vmatprep.subr.mxu0 0.0
    %7571 = vmatpush1.msra.mxu0 0.0
    %7572 = vmatprep.subr.mxu0 0.0
    %7573 = vmatpush1.msra.mxu0 0.0
    %7574 = vmatprep.subr.mxu0 0.0
    %7575 = vmatpush1.msra.mxu0 %v442
    %7576 = vmatprep.subr.mxu0 0.0
    %7577 = vmatpush1.msra.mxu0 %v441
    %7578 = vmatprep.subr.mxu0 0.0
    %7579 = vmatpush1.msra.mxu0 %v440
    %7580 = vmatprep.subr.mxu0 0.0
    %7581 = vmatpush1.msra.mxu0 %v439
    %7582 = vmatprep.subr.mxu0 0.0
    %7583 = vmatpush2.msra.mxu0 0.0
    %7584 = vmatprep.subr.mxu0 0.0
    %7585 = vmatpush2.msra.mxu0 0.0
    %7586 = vmatprep.subr.mxu0 0.0
    %7587 = vmatpush2.msra.mxu0 0.0
    %7588 = vmatprep.subr.mxu0 0.0
    %7589 = vmatpush2.msra.mxu0 0.0
    %7590 = vmatprep.subr.mxu0 0.0
    %7591 = vmatpush2.msra.mxu0 0.0
    %7592 = vmatprep.subr.mxu0 0.0
    %7593 = vmatpush2.msra.mxu0 0.0
    %7594 = vmatprep.subr.mxu0 0.0
    %7595 = vmatpush2.msra.mxu0 0.0
    %7596 = vmatprep.subr.mxu0 0.0
    %7597 = vmatpush2.msra.mxu0 0.0
    %7598 = vmatprep.subr.mxu0 0.0
    %7599 = vmatpush2.msra.mxu0 0.0
    %7600 = vmatprep.subr.mxu0 0.0
    %7601 = vmatpush2.msra.mxu0 0.0
    %7602 = vmatprep.subr.mxu0 0.0
    %7603 = vmatpush2.msra.mxu0 0.0
    %7604 = vmatprep.subr.mxu0 0.0
    %7605 = vmatpush2.msra.mxu0 0.0
    %7606 = vmatprep.subr.mxu0 0.0
    %7607 = vmatpush2.msra.mxu0 0.0
    %7608 = vmatprep.subr.mxu0 0.0
    %7609 = vmatpush2.msra.mxu0 0.0
    %7610 = vmatprep.subr.mxu0 0.0
    %7611 = vmatpush2.msra.mxu0 0.0
    %7612 = vmatprep.subr.mxu0 0.0
    %7613 = vmatpush2.msra.mxu0 0.0
    %7614 = vmatprep.mubr.f32.mxu0 0.0
    %7615 = vmatmul.mubr.f32.gmra.mxu0 %v7254
    %v7616 = vpop.f32.mrf.mxu0
    %v7617 = vadd.f32 %v7547, %v7616
    %v7618 = vpop.f32.mrf.mxu0
    %7619 = vdwg.mxu0
    %v7620 = vadd.f32 %v7617, %v488
    %v7621 = vtanh.pop %v7620
    %7622 = vmatprep.subr.mxu0 0.0
    %7623 = vmatpush1.msra.mxu0 0.0
    %7624 = vmatprep.subr.mxu0 0.0
    %7625 = vmatpush1.msra.mxu0 0.0
    %7626 = vmatprep.subr.mxu0 0.0
    %7627 = vmatpush1.msra.mxu0 0.0
    %7628 = vmatprep.subr.mxu0 0.0
    %7629 = vmatpush1.msra.mxu0 0.0
    %7630 = vmatprep.subr.mxu0 0.0
    %7631 = vmatpush1.msra.mxu0 0.0
    %7632 = vmatprep.subr.mxu0 0.0
    %7633 = vmatpush1.msra.mxu0 0.0
    %7634 = vmatprep.subr.mxu0 0.0
    %7635 = vmatpush1.msra.mxu0 0.0
    %7636 = vmatprep.subr.mxu0 0.0
    %7637 = vmatpush1.msra.mxu0 0.0
    %7638 = vmatprep.subr.mxu0 0.0
    %7639 = vmatpush1.msra.mxu0 0.0
    %7640 = vmatprep.subr.mxu0 0.0
    %7641 = vmatpush1.msra.mxu0 0.0
    %7642 = vmatprep.subr.mxu0 0.0
    %7643 = vmatpush1.msra.mxu0 0.0
    %7644 = vmatprep.subr.mxu0 0.0
    %7645 = vmatpush1.msra.mxu0 0.0
    %7646 = vmatprep.subr.mxu0 0.0
    %7647 = vmatpush1.msra.mxu0 %v466
    %7648 = vmatprep.subr.mxu0 0.0
    %7649 = vmatpush1.msra.mxu0 %v465
    %7650 = vmatprep.subr.mxu0 0.0
    %7651 = vmatpush1.msra.mxu0 %v464
    %7652 = vmatprep.subr.mxu0 0.0
    %7653 = vmatpush1.msra.mxu0 %v463
    %7654 = vmatprep.subr.mxu0 0.0
    %7655 = vmatpush2.msra.mxu0 0.0
    %7656 = vmatprep.subr.mxu0 0.0
    %7657 = vmatpush2.msra.mxu0 0.0
    %7658 = vmatprep.subr.mxu0 0.0
    %7659 = vmatpush2.msra.mxu0 0.0
    %7660 = vmatprep.subr.mxu0 0.0
    %7661 = vmatpush2.msra.mxu0 0.0
    %7662 = vmatprep.subr.mxu0 0.0
    %7663 = vmatpush2.msra.mxu0 0.0
    %7664 = vmatprep.subr.mxu0 0.0
    %7665 = vmatpush2.msra.mxu0 0.0
    %7666 = vmatprep.subr.mxu0 0.0
    %7667 = vmatpush2.msra.mxu0 0.0
    %7668 = vmatprep.subr.mxu0 0.0
    %7669 = vmatpush2.msra.mxu0 0.0
    %7670 = vmatprep.subr.mxu0 0.0
    %7671 = vmatpush2.msra.mxu0 0.0
    %7672 = vmatprep.subr.mxu0 0.0
    %7673 = vmatpush2.msra.mxu0 0.0
    %7674 = vmatprep.subr.mxu0 0.0
    %7675 = vmatpush2.msra.mxu0 0.0
    %7676 = vmatprep.subr.mxu0 0.0
    %7677 = vmatpush2.msra.mxu0 0.0
    %7678 = vmatprep.subr.mxu0 0.0
    %7679 = vmatpush2.msra.mxu0 0.0
    %7680 = vmatprep.subr.mxu0 0.0
    %7681 = vmatpush2.msra.mxu0 0.0
    %7682 = vmatprep.subr.mxu0 0.0
    %7683 = vmatpush2.msra.mxu0 0.0
    %7684 = vmatprep.subr.mxu0 0.0
    %7685 = vmatpush2.msra.mxu0 0.0
    %7686 = vmatprep.mubr.f32.mxu0 0.0
    %7687 = vmatmul.mubr.f32.gmra.mxu0 %v7181
    %v7688 = vpop.f32.mrf.mxu0
    %v7689 = vadd.f32 0.0, %v7688
    %v7690 = vpop.f32.mrf.mxu0
    %7691 = vdwg.mxu0
    %7692 = vmatprep.subr.mxu0 0.0
    %7693 = vmatpush1.msra.mxu0 0.0
    %7694 = vmatprep.subr.mxu0 0.0
    %7695 = vmatpush1.msra.mxu0 0.0
    %7696 = vmatprep.subr.mxu0 0.0
    %7697 = vmatpush1.msra.mxu0 0.0
    %7698 = vmatprep.subr.mxu0 0.0
    %7699 = vmatpush1.msra.mxu0 0.0
    %7700 = vmatprep.subr.mxu0 0.0
    %7701 = vmatpush1.msra.mxu0 0.0
    %7702 = vmatprep.subr.mxu0 0.0
    %7703 = vmatpush1.msra.mxu0 0.0
    %7704 = vmatprep.subr.mxu0 0.0
    %7705 = vmatpush1.msra.mxu0 0.0
    %7706 = vmatprep.subr.mxu0 0.0
    %7707 = vmatpush1.msra.mxu0 0.0
    %7708 = vmatprep.subr.mxu0 0.0
    %7709 = vmatpush1.msra.mxu0 0.0
    %7710 = vmatprep.subr.mxu0 0.0
    %7711 = vmatpush1.msra.mxu0 0.0
    %7712 = vmatprep.subr.mxu0 0.0
    %7713 = vmatpush1.msra.mxu0 0.0
    %7714 = vmatprep.subr.mxu0 0.0
    %7715 = vmatpush1.msra.mxu0 0.0
    %7716 = vmatprep.subr.mxu0 0.0
    %7717 = vmatpush1.msra.mxu0 %v447
    %7718 = vmatprep.subr.mxu0 0.0
    %7719 = vmatpush1.msra.mxu0 %v446
    %7720 = vmatprep.subr.mxu0 0.0
    %7721 = vmatpush1.msra.mxu0 %v445
    %7722 = vmatprep.subr.mxu0 0.0
    %7723 = vmatpush1.msra.mxu0 %v444
    %7724 = vmatprep.subr.mxu0 0.0
    %7725 = vmatpush2.msra.mxu0 0.0
    %7726 = vmatprep.subr.mxu0 0.0
    %7727 = vmatpush2.msra.mxu0 0.0
    %7728 = vmatprep.subr.mxu0 0.0
    %7729 = vmatpush2.msra.mxu0 0.0
    %7730 = vmatprep.subr.mxu0 0.0
    %7731 = vmatpush2.msra.mxu0 0.0
    %7732 = vmatprep.subr.mxu0 0.0
    %7733 = vmatpush2.msra.mxu0 0.0
    %7734 = vmatprep.subr.mxu0 0.0
    %7735 = vmatpush2.msra.mxu0 0.0
    %7736 = vmatprep.subr.mxu0 0.0
    %7737 = vmatpush2.msra.mxu0 0.0
    %7738 = vmatprep.subr.mxu0 0.0
    %7739 = vmatpush2.msra.mxu0 0.0
    %7740 = vmatprep.subr.mxu0 0.0
    %7741 = vmatpush2.msra.mxu0 0.0
    %7742 = vmatprep.subr.mxu0 0.0
    %7743 = vmatpush2.msra.mxu0 0.0
    %7744 = vmatprep.subr.mxu0 0.0
    %7745 = vmatpush2.msra.mxu0 0.0
    %7746 = vmatprep.subr.mxu0 0.0
    %7747 = vmatpush2.msra.mxu0 0.0
    %7748 = vmatprep.subr.mxu0 0.0
    %7749 = vmatpush2.msra.mxu0 0.0
    %7750 = vmatprep.subr.mxu0 0.0
    %7751 = vmatpush2.msra.mxu0 0.0
    %7752 = vmatprep.subr.mxu0 0.0
    %7753 = vmatpush2.msra.mxu0 0.0
    %7754 = vmatprep.subr.mxu0 0.0
    %7755 = vmatpush2.msra.mxu0 0.0
    %7756 = vmatprep.mubr.f32.mxu0 0.0
    %7757 = vmatmul.mubr.f32.gmra.mxu0 %v7254
    %v7758 = vpop.f32.mrf.mxu0
    %v7759 = vadd.f32 %v7689, %v7758
    %v7760 = vpop.f32.mrf.mxu0
    %7761 = vdwg.mxu0
    %v7762 = vadd.f32 %v7759, %v496
    %v7763 = vxor.u32 %v7762, 2147483648
    %v7764 = vmul.f32 %v7763, 1.442695
    %v7765 = vpow.pop %v7764
    %v7766 = vadd.f32 %v7765, 1.0
    %v7767 = vrcp.pop %v7766
    %v7768 = vmul.f32 1.0, %v7767
    %v7769 = vmul.f32 %v7479, %v6861
    %v7770 = vmul.f32 %v7332, %v7621
    %v7771 = vadd.f32 %v7769, %v7770
    %v7772 = vtanh.pop %v7771
    %v7773 = vmul.f32 %v7768, %v7772
    %s7774 = sld [smem:[#allocation4 + $0x7]]
    %v7775 = vstv %s7774
    %v7776 = vmul.f32 %v7775, %v7773
    %v7777 = vadd.f32 %v6867, %v7776
    %s7778 = sld [smem:[#allocation3]]
    %v7779 = vstv %s7778
    %v7780 = vadd.f32 %v7777, %v7779
    %v7781 = vmax.f32 %v7780, 0.0
    %vm7782 = vcmask 254976
    %7783 = vst.msk [vmem:[#allocation7] sm:$0x3] %vm7782, %v7781
    // Predicated region
    $region42: #{lstm_forward.1} parent=1 // pred_check
      _
    $region43: #{lstm_forward.1} parent=1 // pred_check_branch
      %7785 = sbr.rel (0) target = $region45
    $region44: #{lstm_forward.1} parent=1 // pred_region
      %s7787 = ssub.s32 32, 32
      %7788 = vsyncadd [#allocation5], %s7787
      %s7790 = sshll.u32 [#allocation7], 4
      %s7791 = int_to_ptr.vmem [resolvable:$true] %s7790
      %7793 = dma.vmem_to_hbm [thread:$0]  %s7791, 32, %s9, [#allocation5]
    $region45: #{lstm_forward.1} parent=1 // pred_fallthru
      _
    // Predicated region
    $region46: #{lstm_forward.1} parent=1 // pred_check
      _
    $region47: #{lstm_forward.1} parent=1 // pred_check_branch
      %7795 = sbr.rel (0) target = $region49
    $region48: #{lstm_forward.1} parent=1 // pred_region
      %7796 = dma.done [#allocation5], 32
    $region49: #{lstm_forward.1} parent=1 // pred_fallthru
      _
    %7797 = vsyncpa [#allocation5], 1
    %7798 = vsyncpa [#allocation6], 1

</llo_original>
